<compile_context>
chip_gen: v7x
topology: tpu7x:2x2x1
jax: 0.10.0
libtpu: 0.0.40
codegen_flags: <defaults>
</compile_context>

<pallas_src>
import functools

import jax
import jax.numpy as jnp
from jax import lax
from jax.experimental import pallas as pl
from jax.experimental.pallas import tpu as pltpu

EPS = 1e-5

_COMPILER_PARAMS = pltpu.CompilerParams(
    dimension_semantics=("parallel",),
    vmem_limit_bytes=32 * 1024 * 1024,
)


def _conv3x3_im2col(src, xpad_scr, cols_scr, w_ref, H, W, C):
    """3x3 'same' conv of one (H, W, C) f32 image as ONE im2col matmul.

    The 1-px halo lives in `xpad_scr` (f32, (H+2, W+2, C)); only its border is
    zeroed (the interior is always overwritten).  The 9 shifted taps are placed
    side by side along the contraction axis in `cols_scr` (bf16, (H*W, 9*C))
    and contracted against the pre-reshaped (9*C, Cout) bf16 weights in a
    single MXU dot with f32 accumulation.
    """
    # Zero only the 1-pixel border of the halo scratch.
    zrow = jnp.zeros((1, W + 2, C), jnp.float32)
    xpad_scr[0:1, :, :] = zrow
    xpad_scr[H + 1:H + 2, :, :] = zrow
    zcol = jnp.zeros((H, 1, C), jnp.float32)
    xpad_scr[1:H + 1, 0:1, :] = zcol
    xpad_scr[1:H + 1, W + 1:W + 2, :] = zcol
    # Interior <- source image.
    xpad_scr[1:H + 1, 1:W + 1, :] = src

    # im2col: tap (ky, kx) goes to contraction columns [k*C, (k+1)*C).
    k = 0
    for ky in range(3):
        for kx in range(3):
            tap = xpad_scr[ky:ky + H, kx:kx + W, :]
            cols_scr[:, k * C:(k + 1) * C] = (
                tap.reshape(H * W, C).astype(jnp.bfloat16))
            k += 1

    # One big matmul: (H*W, 9C) x (9C, Cout), bf16 in, f32 accumulate.
    return jnp.dot(cols_scr[...], w_ref[...],
                   preferred_element_type=jnp.float32)


def _write_stats(stats_ref, acc):
    """Row 0: per-channel sum, row 1: per-channel sum of squares (one pass)."""
    stats_ref[0, 0:1, :] = jnp.sum(acc, axis=0, keepdims=True)
    stats_ref[0, 1:2, :] = jnp.sum(acc * acc, axis=0, keepdims=True)


def _conv1_kernel(H, W, x_ref, w_ref, conv_ref, stats_ref, xpad_scr, cols_scr):
    C = x_ref.shape[-1]
    acc = _conv3x3_im2col(x_ref[0], xpad_scr, cols_scr, w_ref, H, W, C)
    conv_ref[0] = acc
    _write_stats(stats_ref, acc)


def _bnrelu_conv2_kernel(H, W, conv1_ref, aff_ref, w_ref, conv_ref, stats_ref,
                         xpad_scr, cols_scr):
    C = conv1_ref.shape[-1]
    # BN1 folded into per-channel scale/shift, then ReLU, all in f32.
    y = conv1_ref[0] * aff_ref[0:1, :] + aff_ref[1:2, :]
    y = jnp.maximum(y, 0.0).reshape(H, W, C)
    acc = _conv3x3_im2col(y, xpad_scr, cols_scr, w_ref, H, W, C)
    conv_ref[0] = acc
    _write_stats(stats_ref, acc)


def _bn2_residual_relu_kernel(H, W, conv2_ref, aff_ref, x_ref, out_ref):
    C = conv2_ref.shape[-1]
    y = conv2_ref[0] * aff_ref[0:1, :] + aff_ref[1:2, :]
    res = x_ref[0].reshape(H * W, C)
    out_ref[0] = (jnp.maximum(y + res, 0.0)
                  .reshape(H, W, C).astype(out_ref.dtype))


def _bn_affine(stats, gamma, beta, count):
    """Fold batch stats + (gamma, beta) into per-channel scale/shift: (2, C)."""
    s = jnp.sum(stats, axis=0)                            # (2, C)
    mean = s[0] / count
    var = jnp.maximum(s[1] / count - mean * mean, 0.0)    # biased variance
    scale = gamma * lax.rsqrt(var + EPS)
    shift = beta - mean * scale
    return jnp.stack([scale, shift], axis=0).astype(jnp.float32)


@jax.jit
def resblock(x_nhwc, w1, g1, b1, w2, g2, b2):
    """x_nhwc: (N,H,W,C) f32; w1/w2: (3,3,Cin,Cout) HWIO f32; g/b: (C,) f32."""
    N, H, W, C = x_nhwc.shape
    # TODO(synk): stride != 1 / downsample-projection ResBlock variant is not
    # implemented; this assumes in_planes == planes with an identity residual,
    # matching the module defaults.
    count = N * H * W
    w1p = w1.reshape(9 * C, C).astype(jnp.bfloat16)
    w2p = w2.reshape(9 * C, C).astype(jnp.bfloat16)

    scratch = [
        pltpu.VMEM((H + 2, W + 2, C), jnp.float32),   # halo-padded image
        pltpu.VMEM((H * W, 9 * C), jnp.bfloat16),     # im2col matrix
    ]

    img_spec = pl.BlockSpec((1, H, W, C), lambda n: (n, 0, 0, 0))
    conv_spec = pl.BlockSpec((1, H * W, C), lambda n: (n, 0, 0))
    stats_spec = pl.BlockSpec((1, 2, C), lambda n: (n, 0, 0))
    w_spec = pl.BlockSpec((9 * C, C), lambda n: (0, 0))
    aff_spec = pl.BlockSpec((2, C), lambda n: (0, 0))

    # --- conv1 + BN1 partial stats ------------------------------------------
    conv1, stats1 = pl.pallas_call(
        functools.partial(_conv1_kernel, H, W),
        grid=(N,),
        in_specs=[img_spec, w_spec],
        out_specs=[conv_spec, stats_spec],
        out_shape=[
            jax.ShapeDtypeStruct((N, H * W, C), jnp.float32),
            jax.ShapeDtypeStruct((N, 2, C), jnp.float32),
        ],
        scratch_shapes=scratch,
        compiler_params=_COMPILER_PARAMS,
    )(x_nhwc, w1p)

    affine1 = _bn_affine(stats1, g1, b1, count)   # tiny (C,)-sized glue

    # --- BN1 + ReLU + conv2 + BN2 partial stats ------------------------------
    conv2, stats2 = pl.pallas_call(
        functools.partial(_bnrelu_conv2_kernel, H, W),
        grid=(N,),
        in_specs=[conv_spec, aff_spec, w_spec],
        out_specs=[conv_spec, stats_spec],
        out_shape=[
            jax.ShapeDtypeStruct((N, H * W, C), jnp.float32),
            jax.ShapeDtypeStruct((N, 2, C), jnp.float32),
        ],
        scratch_shapes=scratch,
        compiler_params=_COMPILER_PARAMS,
    )(conv1, affine1, w2p)

    affine2 = _bn_affine(stats2, g2, b2, count)

    # --- BN2 + residual add + ReLU --------------------------------------------
    out = pl.pallas_call(
        functools.partial(_bn2_residual_relu_kernel, H, W),
        grid=(N,),
        in_specs=[conv_spec, aff_spec, img_spec],
        out_specs=img_spec,
        out_shape=jax.ShapeDtypeStruct((N, H, W, C), x_nhwc.dtype),
        compiler_params=_COMPILER_PARAMS,
    )(conv2, affine2, x_nhwc)
    return out


@jax.jit
def reference(x_nhwc, w1, g1, b1, w2, g2, b2):
    """Plain-JAX reference mirroring the PyTorch forward (train-mode BN).

    Convs use bf16 operands with f32 accumulation to match the kernel's MXU
    numerics (remaining differences are summation-order only).
    """
    def conv(x, w):
        return lax.conv_general_dilated(
            x.astype(jnp.bfloat16), w.astype(jnp.bfloat16),
            window_strides=(1, 1), padding="SAME",
            dimension_numbers=("NHWC", "HWIO", "NHWC"),
            preferred_element_type=jnp.float32)

    def bn(x, g, b):
        mean = jnp.mean(x, axis=(0, 1, 2), keepdims=True)
        var = jnp.mean((x - mean) ** 2, axis=(0, 1, 2), keepdims=True)
        return (x - mean) * lax.rsqrt(var + EPS) * g + b

    out = jax.nn.relu(bn(conv(x_nhwc, w1), g1, b1))
    out = bn(conv(out, w2), g2, b2)
    return jax.nn.relu(out + x_nhwc)


if __name__ == "__main__":
    # Module defaults: in_planes = planes = 128 (also gives a lane-dense C).
    N, C, H, W = 2, 128, 16, 16

    key = jax.random.PRNGKey(0)
    kx, kw1, kw2 = jax.random.split(key, 3)

    # PyTorch input is NCHW; generate NCHW then transpose to the kernel's NHWC.
    x_nchw = jax.random.normal(kx, (N, C, H, W), dtype=jnp.float32)
    x_nhwc = jnp.transpose(x_nchw, (0, 2, 3, 1))

    # Conv weights (no bias), deterministic init; stored HWIO for the kernel.
    fan_in = C * 3 * 3
    w1 = jax.random.normal(kw1, (3, 3, C, C), dtype=jnp.float32) / jnp.sqrt(fan_in)
    w2 = jax.random.normal(kw2, (3, 3, C, C), dtype=jnp.float32) / jnp.sqrt(fan_in)

    # BatchNorm affine params: PyTorch default init (gamma=1, beta=0).
    g1 = jnp.ones((C,), jnp.float32)
    b1 = jnp.zeros((C,), jnp.float32)
    g2 = jnp.ones((C,), jnp.float32)
    b2 = jnp.zeros((C,), jnp.float32)

    out = resblock(x_nhwc, w1, g1, b1, w2, g2, b2)
    out = jax.block_until_ready(out)

    ref = reference(x_nhwc, w1, g1, b1, w2, g2, b2)
    assert out.shape == (N, H, W, C)
    err = jnp.max(jnp.abs(out - ref))
    assert jnp.allclose(out, ref, atol=5e-3, rtol=5e-3), f"max abs err = {err}"

    print("KERNEL_OK")
</pallas_src>

<mosaic_0001>
module attributes {stable_mosaic.version = 11 : i64} {
  func.func @_conv1_kernel(%arg0: i32, %arg1: memref<1x16x16x128xf32, #tpu.memory_space<vmem>>, %arg2: memref<1152x128xbf16, #tpu.memory_space<vmem>>, %arg3: memref<1x256x128xf32, #tpu.memory_space<vmem>>, %arg4: memref<1x2x128xf32, #tpu.memory_space<vmem>>, %arg5: memref<18x18x128xf32, #tpu.memory_space<vmem>>, %arg6: memref<256x1152xbf16, #tpu.memory_space<vmem>>) attributes {dimension_semantics = [#tpu.dimension_semantics<parallel>], iteration_bounds = array<i64: 2>, scalar_prefetch = 0 : i64, scratch_operands = 2 : i64, tpu.core_type = #tpu.core_type<tc>, window_params = [{transform_indices = @transform_0, window_bounds = array<i64: 1, 16, 16, 128>}, {pipeline_mode = #tpu.pipeline_mode<synchronous>, transform_indices = @transform_1, window_bounds = array<i64: 1152, 128>}, {transform_indices = @transform_2, window_bounds = array<i64: 1, 256, 128>}, {transform_indices = @transform_3, window_bounds = array<i64: 1, 2, 128>}]} {
    %c0 = arith.constant 0 : index
    %c0_0 = arith.constant 0 : index
    %c0_1 = arith.constant 0 : index
    %c0_2 = arith.constant 0 : index
    %0 = vector.load %arg1[%c0, %c0_0, %c0_1, %c0_2] : memref<1x16x16x128xf32, #tpu.memory_space<vmem>>, vector<1x16x16x128xf32>
    %1 = vector.shape_cast %0 : vector<1x16x16x128xf32> to vector<16x16x128xf32>
    %cst = arith.constant 0.000000e+00 : f32
    %2 = vector.broadcast %cst : f32 to vector<1x18x128xf32>
    %c0_3 = arith.constant 0 : index
    %c0_4 = arith.constant 0 : index
    %c0_5 = arith.constant 0 : index
    %3 = vector.load %arg5[%c0_3, %c0_4, %c0_5] : memref<18x18x128xf32, #tpu.memory_space<vmem>>, vector<1x18x128xf32>
    tpu.vector_store %arg5[%c0_3, %c0_4, %c0_5], %2 {strides = array<i32>} : memref<18x18x128xf32, #tpu.memory_space<vmem>>, vector<1x18x128xf32>,
    %c17 = arith.constant 17 : index
    %c0_6 = arith.constant 0 : index
    %c0_7 = arith.constant 0 : index
    %4 = vector.load %arg5[%c17, %c0_6, %c0_7] : memref<18x18x128xf32, #tpu.memory_space<vmem>>, vector<1x18x128xf32>
    tpu.vector_store %arg5[%c17, %c0_6, %c0_7], %2 {strides = array<i32>} : memref<18x18x128xf32, #tpu.memory_space<vmem>>, vector<1x18x128xf32>,
    %cst_8 = arith.constant 0.000000e+00 : f32
    %5 = vector.broadcast %cst_8 : f32 to vector<16x1x128xf32>
    %c1 = arith.constant 1 : index
    %c0_9 = arith.constant 0 : index
    %c0_10 = arith.constant 0 : index
    %6 = vector.load %arg5[%c1, %c0_9, %c0_10] : memref<18x18x128xf32, #tpu.memory_space<vmem>>, vector<16x1x128xf32>
    tpu.vector_store %arg5[%c1, %c0_9, %c0_10], %5 {strides = array<i32>} : memref<18x18x128xf32, #tpu.memory_space<vmem>>, vector<16x1x128xf32>,
    %c1_11 = arith.constant 1 : index
    %c17_12 = arith.constant 17 : index
    %c0_13 = arith.constant 0 : index
    %7 = vector.load %arg5[%c1_11, %c17_12, %c0_13] : memref<18x18x128xf32, #tpu.memory_space<vmem>>, vector<16x1x128xf32>
    tpu.vector_store %arg5[%c1_11, %c17_12, %c0_13], %5 {strides = array<i32>} : memref<18x18x128xf32, #tpu.memory_space<vmem>>, vector<16x1x128xf32>,
    %c1_14 = arith.constant 1 : index
    %c1_15 = arith.constant 1 : index
    %c0_16 = arith.constant 0 : index
    %8 = vector.load %arg5[%c1_14, %c1_15, %c0_16] : memref<18x18x128xf32, #tpu.memory_space<vmem>>, vector<16x16x128xf32>
    tpu.vector_store %arg5[%c1_14, %c1_15, %c0_16], %1 {strides = array<i32>} : memref<18x18x128xf32, #tpu.memory_space<vmem>>, vector<16x16x128xf32>,
    %c0_17 = arith.constant 0 : index
    %c0_18 = arith.constant 0 : index
    %c0_19 = arith.constant 0 : index
    %9 = vector.load %arg5[%c0_17, %c0_18, %c0_19] : memref<18x18x128xf32, #tpu.memory_space<vmem>>, vector<16x16x128xf32>
    %10 = vector.shape_cast %9 : vector<16x16x128xf32> to vector<256x128xf32>
    %11 = arith.truncf %10 : vector<256x128xf32> to vector<256x128xbf16>
    %c0_20 = arith.constant 0 : index
    %c0_21 = arith.constant 0 : index
    %12 = vector.load %arg6[%c0_20, %c0_21] : memref<256x1152xbf16, #tpu.memory_space<vmem>>, vector<256x128xbf16>
    tpu.vector_store %arg6[%c0_20, %c0_21], %11 {strides = array<i32>} : memref<256x1152xbf16, #tpu.memory_space<vmem>>, vector<256x128xbf16>,
    %c0_22 = arith.constant 0 : index
    %c1_23 = arith.constant 1 : index
    %c0_24 = arith.constant 0 : index
    %13 = vector.load %arg5[%c0_22, %c1_23, %c0_24] : memref<18x18x128xf32, #tpu.memory_space<vmem>>, vector<16x16x128xf32>
    %14 = vector.shape_cast %13 : vector<16x16x128xf32> to vector<256x128xf32>
    %15 = arith.truncf %14 : vector<256x128xf32> to vector<256x128xbf16>
    %c0_25 = arith.constant 0 : index
    %c128 = arith.constant 128 : index
    %16 = vector.load %arg6[%c0_25, %c128] : memref<256x1152xbf16, #tpu.memory_space<vmem>>, vector<256x128xbf16>
    tpu.vector_store %arg6[%c0_25, %c128], %15 {strides = array<i32>} : memref<256x1152xbf16, #tpu.memory_space<vmem>>, vector<256x128xbf16>,
    %c0_26 = arith.constant 0 : index
    %c2 = arith.constant 2 : index
    %c0_27 = arith.constant 0 : index
    %17 = vector.load %arg5[%c0_26, %c2, %c0_27] : memref<18x18x128xf32, #tpu.memory_space<vmem>>, vector<16x16x128xf32>
    %18 = vector.shape_cast %17 : vector<16x16x128xf32> to vector<256x128xf32>
    %19 = arith.truncf %18 : vector<256x128xf32> to vector<256x128xbf16>
    %c0_28 = arith.constant 0 : index
    %c256 = arith.constant 256 : index
    %20 = vector.load %arg6[%c0_28, %c256] : memref<256x1152xbf16, #tpu.memory_space<vmem>>, vector<256x128xbf16>
    tpu.vector_store %arg6[%c0_28, %c256], %19 {strides = array<i32>} : memref<256x1152xbf16, #tpu.memory_space<vmem>>, vector<256x128xbf16>,
    %c1_29 = arith.constant 1 : index
    %c0_30 = arith.constant 0 : index
    %c0_31 = arith.constant 0 : index
    %21 = vector.load %arg5[%c1_29, %c0_30, %c0_31] : memref<18x18x128xf32, #tpu.memory_space<vmem>>, vector<16x16x128xf32>
    %22 = vector.shape_cast %21 : vector<16x16x128xf32> to vector<256x128xf32>
    %23 = arith.truncf %22 : vector<256x128xf32> to vector<256x128xbf16>
    %c0_32 = arith.constant 0 : index
    %c384 = arith.constant 384 : index
    %24 = vector.load %arg6[%c0_32, %c384] : memref<256x1152xbf16, #tpu.memory_space<vmem>>, vector<256x128xbf16>
    tpu.vector_store %arg6[%c0_32, %c384], %23 {strides = array<i32>} : memref<256x1152xbf16, #tpu.memory_space<vmem>>, vector<256x128xbf16>,
    %c1_33 = arith.constant 1 : index
    %c1_34 = arith.constant 1 : index
    %c0_35 = arith.constant 0 : index
    %25 = vector.load %arg5[%c1_33, %c1_34, %c0_35] : memref<18x18x128xf32, #tpu.memory_space<vmem>>, vector<16x16x128xf32>
    %26 = vector.shape_cast %25 : vector<16x16x128xf32> to vector<256x128xf32>
    %27 = arith.truncf %26 : vector<256x128xf32> to vector<256x128xbf16>
    %c0_36 = arith.constant 0 : index
    %c512 = arith.constant 512 : index
    %28 = vector.load %arg6[%c0_36, %c512] : memref<256x1152xbf16, #tpu.memory_space<vmem>>, vector<256x128xbf16>
    tpu.vector_store %arg6[%c0_36, %c512], %27 {strides = array<i32>} : memref<256x1152xbf16, #tpu.memory_space<vmem>>, vector<256x128xbf16>,
    %c1_37 = arith.constant 1 : index
    %c2_38 = arith.constant 2 : index
    %c0_39 = arith.constant 0 : index
    %29 = vector.load %arg5[%c1_37, %c2_38, %c0_39] : memref<18x18x128xf32, #tpu.memory_space<vmem>>, vector<16x16x128xf32>
    %30 = vector.shape_cast %29 : vector<16x16x128xf32> to vector<256x128xf32>
    %31 = arith.truncf %30 : vector<256x128xf32> to vector<256x128xbf16>
    %c0_40 = arith.constant 0 : index
    %c640 = arith.constant 640 : index
    %32 = vector.load %arg6[%c0_40, %c640] : memref<256x1152xbf16, #tpu.memory_space<vmem>>, vector<256x128xbf16>
    tpu.vector_store %arg6[%c0_40, %c640], %31 {strides = array<i32>} : memref<256x1152xbf16, #tpu.memory_space<vmem>>, vector<256x128xbf16>,
    %c2_41 = arith.constant 2 : index
    %c0_42 = arith.constant 0 : index
    %c0_43 = arith.constant 0 : index
    %33 = vector.load %arg5[%c2_41, %c0_42, %c0_43] : memref<18x18x128xf32, #tpu.memory_space<vmem>>, vector<16x16x128xf32>
    %34 = vector.shape_cast %33 : vector<16x16x128xf32> to vector<256x128xf32>
    %35 = arith.truncf %34 : vector<256x128xf32> to vector<256x128xbf16>
    %c0_44 = arith.constant 0 : index
    %c768 = arith.constant 768 : index
    %36 = vector.load %arg6[%c0_44, %c768] : memref<256x1152xbf16, #tpu.memory_space<vmem>>, vector<256x128xbf16>
    tpu.vector_store %arg6[%c0_44, %c768], %35 {strides = array<i32>} : memref<256x1152xbf16, #tpu.memory_space<vmem>>, vector<256x128xbf16>,
    %c2_45 = arith.constant 2 : index
    %c1_46 = arith.constant 1 : index
    %c0_47 = arith.constant 0 : index
    %37 = vector.load %arg5[%c2_45, %c1_46, %c0_47] : memref<18x18x128xf32, #tpu.memory_space<vmem>>, vector<16x16x128xf32>
    %38 = vector.shape_cast %37 : vector<16x16x128xf32> to vector<256x128xf32>
    %39 = arith.truncf %38 : vector<256x128xf32> to vector<256x128xbf16>
    %c0_48 = arith.constant 0 : index
    %c896 = arith.constant 896 : index
    %40 = vector.load %arg6[%c0_48, %c896] : memref<256x1152xbf16, #tpu.memory_space<vmem>>, vector<256x128xbf16>
    tpu.vector_store %arg6[%c0_48, %c896], %39 {strides = array<i32>} : memref<256x1152xbf16, #tpu.memory_space<vmem>>, vector<256x128xbf16>,
    %c2_49 = arith.constant 2 : index
    %c2_50 = arith.constant 2 : index
    %c0_51 = arith.constant 0 : index
    %41 = vector.load %arg5[%c2_49, %c2_50, %c0_51] : memref<18x18x128xf32, #tpu.memory_space<vmem>>, vector<16x16x128xf32>
    %42 = vector.shape_cast %41 : vector<16x16x128xf32> to vector<256x128xf32>
    %43 = arith.truncf %42 : vector<256x128xf32> to vector<256x128xbf16>
    %c0_52 = arith.constant 0 : index
    %c1024 = arith.constant 1024 : index
    %44 = vector.load %arg6[%c0_52, %c1024] : memref<256x1152xbf16, #tpu.memory_space<vmem>>, vector<256x128xbf16>
    tpu.vector_store %arg6[%c0_52, %c1024], %43 {strides = array<i32>} : memref<256x1152xbf16, #tpu.memory_space<vmem>>, vector<256x128xbf16>,
    %c0_53 = arith.constant 0 : index
    %c0_54 = arith.constant 0 : index
    %45 = vector.load %arg6[%c0_53, %c0_54] : memref<256x1152xbf16, #tpu.memory_space<vmem>>, vector<256x1152xbf16>
    %c0_55 = arith.constant 0 : index
    %c0_56 = arith.constant 0 : index
    %46 = vector.load %arg2[%c0_55, %c0_56] : memref<1152x128xbf16, #tpu.memory_space<vmem>>, vector<1152x128xbf16>
    %cst_57 = arith.constant dense<0.000000e+00> : vector<256x128xf32>
    %47 = tpu.matmul %45, %46, %cst_57 {dimension_numbers = #tpu.dot_dimension_numbers<[1], [0], [0], [1], [0, 0, 1, 1], [], []>} : vector<256x1152xbf16>, vector<1152x128xbf16>, vector<256x128xf32> -> vector<256x128xf32>
    %c0_58 = arith.constant 0 : index
    %c0_59 = arith.constant 0 : index
    %c0_60 = arith.constant 0 : index
    %48 = vector.load %arg3[%c0_58, %c0_59, %c0_60] : memref<1x256x128xf32, #tpu.memory_space<vmem>>, vector<1x256x128xf32>
    %49 = vector.shape_cast %48 : vector<1x256x128xf32> to vector<256x128xf32>
    %50 = vector.shape_cast %47 : vector<256x128xf32> to vector<1x256x128xf32>
    tpu.vector_store %arg3[%c0_58, %c0_59, %c0_60], %50 {strides = array<i32>} : memref<1x256x128xf32, #tpu.memory_space<vmem>>, vector<1x256x128xf32>,
    %cst_61 = arith.constant dense<0.000000e+00> : vector<128xf32>
    %51 = vector.multi_reduction <add>, %47, %cst_61 [0] : vector<256x128xf32> to vector<128xf32>
    %52 = vector.shape_cast %51 : vector<128xf32> to vector<1x128xf32>
    %c0_62 = arith.constant 0 : index
    %c0_63 = arith.constant 0 : index
    %c0_64 = arith.constant 0 : index
    %53 = vector.load %arg4[%c0_62, %c0_63, %c0_64] : memref<1x2x128xf32, #tpu.memory_space<vmem>>, vector<1x1x128xf32>
    %54 = vector.shape_cast %53 : vector<1x1x128xf32> to vector<1x128xf32>
    %55 = vector.shape_cast %52 : vector<1x128xf32> to vector<1x1x128xf32>
    tpu.vector_store %arg4[%c0_62, %c0_63, %c0_64], %55 {strides = array<i32>} : memref<1x2x128xf32, #tpu.memory_space<vmem>>, vector<1x1x128xf32>,
    %56 = arith.mulf %47, %47 : vector<256x128xf32>
    %cst_65 = arith.constant dense<0.000000e+00> : vector<128xf32>
    %57 = vector.multi_reduction <add>, %56, %cst_65 [0] : vector<256x128xf32> to vector<128xf32>
    %58 = vector.shape_cast %57 : vector<128xf32> to vector<1x128xf32>
    %c0_66 = arith.constant 0 : index
    %c1_67 = arith.constant 1 : index
    %c0_68 = arith.constant 0 : index
    %59 = vector.load %arg4[%c0_66, %c1_67, %c0_68] : memref<1x2x128xf32, #tpu.memory_space<vmem>>, vector<1x1x128xf32>
    %60 = vector.shape_cast %59 : vector<1x1x128xf32> to vector<1x128xf32>
    %61 = vector.shape_cast %58 : vector<1x128xf32> to vector<1x1x128xf32>
    tpu.vector_store %arg4[%c0_66, %c1_67, %c0_68], %61 {strides = array<i32>} : memref<1x2x128xf32, #tpu.memory_space<vmem>>, vector<1x1x128xf32>,
    return
  }
  func.func @transform_0(%arg0: i32) -> (i32, i32, i32, i32) {
    %c0_i32 = arith.constant 0 : i32
    %c0_i32_0 = arith.constant 0 : i32
    %c0_i32_1 = arith.constant 0 : i32
    %c0_i32_2 = arith.constant 0 : i32
    return %arg0, %c0_i32, %c0_i32_0, %c0_i32_1 : i32, i32, i32, i32
  }
  func.func @transform_1(%arg0: i32) -> (i32, i32) {
    %c0_i32 = arith.constant 0 : i32
    %c0_i32_0 = arith.constant 0 : i32
    %c0_i32_1 = arith.constant 0 : i32
    return %c0_i32, %c0_i32_0 : i32, i32
  }
  func.func @transform_2(%arg0: i32) -> (i32, i32, i32) {
    %c0_i32 = arith.constant 0 : i32
    %c0_i32_0 = arith.constant 0 : i32
    %c0_i32_1 = arith.constant 0 : i32
    return %arg0, %c0_i32, %c0_i32_0 : i32, i32, i32
  }
  func.func @transform_3(%arg0: i32) -> (i32, i32, i32) {
    %c0_i32 = arith.constant 0 : i32
    %c0_i32_0 = arith.constant 0 : i32
    %c0_i32_1 = arith.constant 0 : i32
    return %arg0, %c0_i32, %c0_i32_0 : i32, i32, i32
  }
}

module attributes {stable_mosaic.version = 11 : i64} {
  func.func @_bnrelu_conv2_kernel(%arg0: i32, %arg1: memref<1x256x128xf32, #tpu.memory_space<vmem>>, %arg2: memref<2x128xf32, #tpu.memory_space<vmem>>, %arg3: memref<1152x128xbf16, #tpu.memory_space<vmem>>, %arg4: memref<1x256x128xf32, #tpu.memory_space<vmem>>, %arg5: memref<1x2x128xf32, #tpu.memory_space<vmem>>, %arg6: memref<18x18x128xf32, #tpu.memory_space<vmem>>, %arg7: memref<256x1152xbf16, #tpu.memory_space<vmem>>) attributes {dimension_semantics = [#tpu.dimension_semantics<parallel>], iteration_bounds = array<i64: 2>, scalar_prefetch = 0 : i64, scratch_operands = 2 : i64, tpu.core_type = #tpu.core_type<tc>, window_params = [{transform_indices = @transform_0, window_bounds = array<i64: 1, 256, 128>}, {pipeline_mode = #tpu.pipeline_mode<synchronous>, transform_indices = @transform_1, window_bounds = array<i64: 2, 128>}, {pipeline_mode = #tpu.pipeline_mode<synchronous>, transform_indices = @transform_2, window_bounds = array<i64: 1152, 128>}, {transform_indices = @transform_3, window_bounds = array<i64: 1, 256, 128>}, {transform_indices = @transform_4, window_bounds = array<i64: 1, 2, 128>}]} {
    %c0 = arith.constant 0 : index
    %c0_0 = arith.constant 0 : index
    %c0_1 = arith.constant 0 : index
    %0 = vector.load %arg1[%c0, %c0_0, %c0_1] : memref<1x256x128xf32, #tpu.memory_space<vmem>>, vector<1x256x128xf32>
    %1 = vector.shape_cast %0 : vector<1x256x128xf32> to vector<256x128xf32>
    %c0_2 = arith.constant 0 : index
    %c0_3 = arith.constant 0 : index
    %2 = vector.load %arg2[%c0_2, %c0_3] : memref<2x128xf32, #tpu.memory_space<vmem>>, vector<1x128xf32>
    %3 = vector.broadcast %2 : vector<1x128xf32> to vector<256x128xf32>
    %4 = arith.mulf %1, %3 : vector<256x128xf32>
    %c1 = arith.constant 1 : index
    %c0_4 = arith.constant 0 : index
    %5 = vector.load %arg2[%c1, %c0_4] : memref<2x128xf32, #tpu.memory_space<vmem>>, vector<1x128xf32>
    %6 = vector.broadcast %5 : vector<1x128xf32> to vector<256x128xf32>
    %7 = arith.addf %4, %6 : vector<256x128xf32>
    %cst = arith.constant 0.000000e+00 : f32
    %8 = vector.broadcast %cst : f32 to vector<256x128xf32>
    %9 = arith.maximumf %7, %8 : vector<256x128xf32>
    %10 = vector.shape_cast %9 : vector<256x128xf32> to vector<16x16x128xf32>
    %cst_5 = arith.constant 0.000000e+00 : f32
    %11 = vector.broadcast %cst_5 : f32 to vector<1x18x128xf32>
    %c0_6 = arith.constant 0 : index
    %c0_7 = arith.constant 0 : index
    %c0_8 = arith.constant 0 : index
    %12 = vector.load %arg6[%c0_6, %c0_7, %c0_8] : memref<18x18x128xf32, #tpu.memory_space<vmem>>, vector<1x18x128xf32>
    tpu.vector_store %arg6[%c0_6, %c0_7, %c0_8], %11 {strides = array<i32>} : memref<18x18x128xf32, #tpu.memory_space<vmem>>, vector<1x18x128xf32>,
    %c17 = arith.constant 17 : index
    %c0_9 = arith.constant 0 : index
    %c0_10 = arith.constant 0 : index
    %13 = vector.load %arg6[%c17, %c0_9, %c0_10] : memref<18x18x128xf32, #tpu.memory_space<vmem>>, vector<1x18x128xf32>
    tpu.vector_store %arg6[%c17, %c0_9, %c0_10], %11 {strides = array<i32>} : memref<18x18x128xf32, #tpu.memory_space<vmem>>, vector<1x18x128xf32>,
    %cst_11 = arith.constant 0.000000e+00 : f32
    %14 = vector.broadcast %cst_11 : f32 to vector<16x1x128xf32>
    %c1_12 = arith.constant 1 : index
    %c0_13 = arith.constant 0 : index
    %c0_14 = arith.constant 0 : index
    %15 = vector.load %arg6[%c1_12, %c0_13, %c0_14] : memref<18x18x128xf32, #tpu.memory_space<vmem>>, vector<16x1x128xf32>
    tpu.vector_store %arg6[%c1_12, %c0_13, %c0_14], %14 {strides = array<i32>} : memref<18x18x128xf32, #tpu.memory_space<vmem>>, vector<16x1x128xf32>,
    %c1_15 = arith.constant 1 : index
    %c17_16 = arith.constant 17 : index
    %c0_17 = arith.constant 0 : index
    %16 = vector.load %arg6[%c1_15, %c17_16, %c0_17] : memref<18x18x128xf32, #tpu.memory_space<vmem>>, vector<16x1x128xf32>
    tpu.vector_store %arg6[%c1_15, %c17_16, %c0_17], %14 {strides = array<i32>} : memref<18x18x128xf32, #tpu.memory_space<vmem>>, vector<16x1x128xf32>,
    %c1_18 = arith.constant 1 : index
    %c1_19 = arith.constant 1 : index
    %c0_20 = arith.constant 0 : index
    %17 = vector.load %arg6[%c1_18, %c1_19, %c0_20] : memref<18x18x128xf32, #tpu.memory_space<vmem>>, vector<16x16x128xf32>
    tpu.vector_store %arg6[%c1_18, %c1_19, %c0_20], %10 {strides = array<i32>} : memref<18x18x128xf32, #tpu.memory_space<vmem>>, vector<16x16x128xf32>,
    %c0_21 = arith.constant 0 : index
    %c0_22 = arith.constant 0 : index
    %c0_23 = arith.constant 0 : index
    %18 = vector.load %arg6[%c0_21, %c0_22, %c0_23] : memref<18x18x128xf32, #tpu.memory_space<vmem>>, vector<16x16x128xf32>
    %19 = vector.shape_cast %18 : vector<16x16x128xf32> to vector<256x128xf32>
    %20 = arith.truncf %19 : vector<256x128xf32> to vector<256x128xbf16>
    %c0_24 = arith.constant 0 : index
    %c0_25 = arith.constant 0 : index
    %21 = vector.load %arg7[%c0_24, %c0_25] : memref<256x1152xbf16, #tpu.memory_space<vmem>>, vector<256x128xbf16>
    tpu.vector_store %arg7[%c0_24, %c0_25], %20 {strides = array<i32>} : memref<256x1152xbf16, #tpu.memory_space<vmem>>, vector<256x128xbf16>,
    %c0_26 = arith.constant 0 : index
    %c1_27 = arith.constant 1 : index
    %c0_28 = arith.constant 0 : index
    %22 = vector.load %arg6[%c0_26, %c1_27, %c0_28] : memref<18x18x128xf32, #tpu.memory_space<vmem>>, vector<16x16x128xf32>
    %23 = vector.shape_cast %22 : vector<16x16x128xf32> to vector<256x128xf32>
    %24 = arith.truncf %23 : vector<256x128xf32> to vector<256x128xbf16>
    %c0_29 = arith.constant 0 : index
    %c128 = arith.constant 128 : index
    %25 = vector.load %arg7[%c0_29, %c128] : memref<256x1152xbf16, #tpu.memory_space<vmem>>, vector<256x128xbf16>
    tpu.vector_store %arg7[%c0_29, %c128], %24 {strides = array<i32>} : memref<256x1152xbf16, #tpu.memory_space<vmem>>, vector<256x128xbf16>,
    %c0_30 = arith.constant 0 : index
    %c2 = arith.constant 2 : index
    %c0_31 = arith.constant 0 : index
    %26 = vector.load %arg6[%c0_30, %c2, %c0_31] : memref<18x18x128xf32, #tpu.memory_space<vmem>>, vector<16x16x128xf32>
    %27 = vector.shape_cast %26 : vector<16x16x128xf32> to vector<256x128xf32>
    %28 = arith.truncf %27 : vector<256x128xf32> to vector<256x128xbf16>
    %c0_32 = arith.constant 0 : index
    %c256 = arith.constant 256 : index
    %29 = vector.load %arg7[%c0_32, %c256] : memref<256x1152xbf16, #tpu.memory_space<vmem>>, vector<256x128xbf16>
    tpu.vector_store %arg7[%c0_32, %c256], %28 {strides = array<i32>} : memref<256x1152xbf16, #tpu.memory_space<vmem>>, vector<256x128xbf16>,
    %c1_33 = arith.constant 1 : index
    %c0_34 = arith.constant 0 : index
    %c0_35 = arith.constant 0 : index
    %30 = vector.load %arg6[%c1_33, %c0_34, %c0_35] : memref<18x18x128xf32, #tpu.memory_space<vmem>>, vector<16x16x128xf32>
    %31 = vector.shape_cast %30 : vector<16x16x128xf32> to vector<256x128xf32>
    %32 = arith.truncf %31 : vector<256x128xf32> to vector<256x128xbf16>
    %c0_36 = arith.constant 0 : index
    %c384 = arith.constant 384 : index
    %33 = vector.load %arg7[%c0_36, %c384] : memref<256x1152xbf16, #tpu.memory_space<vmem>>, vector<256x128xbf16>
    tpu.vector_store %arg7[%c0_36, %c384], %32 {strides = array<i32>} : memref<256x1152xbf16, #tpu.memory_space<vmem>>, vector<256x128xbf16>,
    %c1_37 = arith.constant 1 : index
    %c1_38 = arith.constant 1 : index
    %c0_39 = arith.constant 0 : index
    %34 = vector.load %arg6[%c1_37, %c1_38, %c0_39] : memref<18x18x128xf32, #tpu.memory_space<vmem>>, vector<16x16x128xf32>
    %35 = vector.shape_cast %34 : vector<16x16x128xf32> to vector<256x128xf32>
    %36 = arith.truncf %35 : vector<256x128xf32> to vector<256x128xbf16>
    %c0_40 = arith.constant 0 : index
    %c512 = arith.constant 512 : index
    %37 = vector.load %arg7[%c0_40, %c512] : memref<256x1152xbf16, #tpu.memory_space<vmem>>, vector<256x128xbf16>
    tpu.vector_store %arg7[%c0_40, %c512], %36 {strides = array<i32>} : memref<256x1152xbf16, #tpu.memory_space<vmem>>, vector<256x128xbf16>,
    %c1_41 = arith.constant 1 : index
    %c2_42 = arith.constant 2 : index
    %c0_43 = arith.constant 0 : index
    %38 = vector.load %arg6[%c1_41, %c2_42, %c0_43] : memref<18x18x128xf32, #tpu.memory_space<vmem>>, vector<16x16x128xf32>
    %39 = vector.shape_cast %38 : vector<16x16x128xf32> to vector<256x128xf32>
    %40 = arith.truncf %39 : vector<256x128xf32> to vector<256x128xbf16>
    %c0_44 = arith.constant 0 : index
    %c640 = arith.constant 640 : index
    %41 = vector.load %arg7[%c0_44, %c640] : memref<256x1152xbf16, #tpu.memory_space<vmem>>, vector<256x128xbf16>
    tpu.vector_store %arg7[%c0_44, %c640], %40 {strides = array<i32>} : memref<256x1152xbf16, #tpu.memory_space<vmem>>, vector<256x128xbf16>,
    %c2_45 = arith.constant 2 : index
    %c0_46 = arith.constant 0 : index
    %c0_47 = arith.constant 0 : index
    %42 = vector.load %arg6[%c2_45, %c0_46, %c0_47] : memref<18x18x128xf32, #tpu.memory_space<vmem>>, vector<16x16x128xf32>
    %43 = vector.shape_cast %42 : vector<16x16x128xf32> to vector<256x128xf32>
    %44 = arith.truncf %43 : vector<256x128xf32> to vector<256x128xbf16>
    %c0_48 = arith.constant 0 : index
    %c768 = arith.constant 768 : index
    %45 = vector.load %arg7[%c0_48, %c768] : memref<256x1152xbf16, #tpu.memory_space<vmem>>, vector<256x128xbf16>
    tpu.vector_store %arg7[%c0_48, %c768], %44 {strides = array<i32>} : memref<256x1152xbf16, #tpu.memory_space<vmem>>, vector<256x128xbf16>,
    %c2_49 = arith.constant 2 : index
    %c1_50 = arith.constant 1 : index
    %c0_51 = arith.constant 0 : index
    %46 = vector.load %arg6[%c2_49, %c1_50, %c0_51] : memref<18x18x128xf32, #tpu.memory_space<vmem>>, vector<16x16x128xf32>
    %47 = vector.shape_cast %46 : vector<16x16x128xf32> to vector<256x128xf32>
    %48 = arith.truncf %47 : vector<256x128xf32> to vector<256x128xbf16>
    %c0_52 = arith.constant 0 : index
    %c896 = arith.constant 896 : index
    %49 = vector.load %arg7[%c0_52, %c896] : memref<256x1152xbf16, #tpu.memory_space<vmem>>, vector<256x128xbf16>
    tpu.vector_store %arg7[%c0_52, %c896], %48 {strides = array<i32>} : memref<256x1152xbf16, #tpu.memory_space<vmem>>, vector<256x128xbf16>,
    %c2_53 = arith.constant 2 : index
    %c2_54 = arith.constant 2 : index
    %c0_55 = arith.constant 0 : index
    %50 = vector.load %arg6[%c2_53, %c2_54, %c0_55] : memref<18x18x128xf32, #tpu.memory_space<vmem>>, vector<16x16x128xf32>
    %51 = vector.shape_cast %50 : vector<16x16x128xf32> to vector<256x128xf32>
    %52 = arith.truncf %51 : vector<256x128xf32> to vector<256x128xbf16>
    %c0_56 = arith.constant 0 : index
    %c1024 = arith.constant 1024 : index
    %53 = vector.load %arg7[%c0_56, %c1024] : memref<256x1152xbf16, #tpu.memory_space<vmem>>, vector<256x128xbf16>
    tpu.vector_store %arg7[%c0_56, %c1024], %52 {strides = array<i32>} : memref<256x1152xbf16, #tpu.memory_space<vmem>>, vector<256x128xbf16>,
    %c0_57 = arith.constant 0 : index
    %c0_58 = arith.constant 0 : index
    %54 = vector.load %arg7[%c0_57, %c0_58] : memref<256x1152xbf16, #tpu.memory_space<vmem>>, vector<256x1152xbf16>
    %c0_59 = arith.constant 0 : index
    %c0_60 = arith.constant 0 : index
    %55 = vector.load %arg3[%c0_59, %c0_60] : memref<1152x128xbf16, #tpu.memory_space<vmem>>, vector<1152x128xbf16>
    %cst_61 = arith.constant dense<0.000000e+00> : vector<256x128xf32>
    %56 = tpu.matmul %54, %55, %cst_61 {dimension_numbers = #tpu.dot_dimension_numbers<[1], [0], [0], [1], [0, 0, 1, 1], [], []>} : vector<256x1152xbf16>, vector<1152x128xbf16>, vector<256x128xf32> -> vector<256x128xf32>
    %c0_62 = arith.constant 0 : index
    %c0_63 = arith.constant 0 : index
    %c0_64 = arith.constant 0 : index
    %57 = vector.load %arg4[%c0_62, %c0_63, %c0_64] : memref<1x256x128xf32, #tpu.memory_space<vmem>>, vector<1x256x128xf32>
    %58 = vector.shape_cast %57 : vector<1x256x128xf32> to vector<256x128xf32>
    %59 = vector.shape_cast %56 : vector<256x128xf32> to vector<1x256x128xf32>
    tpu.vector_store %arg4[%c0_62, %c0_63, %c0_64], %59 {strides = array<i32>} : memref<1x256x128xf32, #tpu.memory_space<vmem>>, vector<1x256x128xf32>,
    %cst_65 = arith.constant dense<0.000000e+00> : vector<128xf32>
    %60 = vector.multi_reduction <add>, %56, %cst_65 [0] : vector<256x128xf32> to vector<128xf32>
    %61 = vector.shape_cast %60 : vector<128xf32> to vector<1x128xf32>
    %c0_66 = arith.constant 0 : index
    %c0_67 = arith.constant 0 : index
    %c0_68 = arith.constant 0 : index
    %62 = vector.load %arg5[%c0_66, %c0_67, %c0_68] : memref<1x2x128xf32, #tpu.memory_space<vmem>>, vector<1x1x128xf32>
    %63 = vector.shape_cast %62 : vector<1x1x128xf32> to vector<1x128xf32>
    %64 = vector.shape_cast %61 : vector<1x128xf32> to vector<1x1x128xf32>
    tpu.vector_store %arg5[%c0_66, %c0_67, %c0_68], %64 {strides = array<i32>} : memref<1x2x128xf32, #tpu.memory_space<vmem>>, vector<1x1x128xf32>,
    %65 = arith.mulf %56, %56 : vector<256x128xf32>
    %cst_69 = arith.constant dense<0.000000e+00> : vector<128xf32>
    %66 = vector.multi_reduction <add>, %65, %cst_69 [0] : vector<256x128xf32> to vector<128xf32>
    %67 = vector.shape_cast %66 : vector<128xf32> to vector<1x128xf32>
    %c0_70 = arith.constant 0 : index
    %c1_71 = arith.constant 1 : index
    %c0_72 = arith.constant 0 : index
    %68 = vector.load %arg5[%c0_70, %c1_71, %c0_72] : memref<1x2x128xf32, #tpu.memory_space<vmem>>, vector<1x1x128xf32>
    %69 = vector.shape_cast %68 : vector<1x1x128xf32> to vector<1x128xf32>
    %70 = vector.shape_cast %67 : vector<1x128xf32> to vector<1x1x128xf32>
    tpu.vector_store %arg5[%c0_70, %c1_71, %c0_72], %70 {strides = array<i32>} : memref<1x2x128xf32, #tpu.memory_space<vmem>>, vector<1x1x128xf32>,
    return
  }
  func.func @transform_0(%arg0: i32) -> (i32, i32, i32) {
    %c0_i32 = arith.constant 0 : i32
    %c0_i32_0 = arith.constant 0 : i32
    %c0_i32_1 = arith.constant 0 : i32
    return %arg0, %c0_i32, %c0_i32_0 : i32, i32, i32
  }
  func.func @transform_1(%arg0: i32) -> (i32, i32) {
    %c0_i32 = arith.constant 0 : i32
    %c0_i32_0 = arith.constant 0 : i32
    %c0_i32_1 = arith.constant 0 : i32
    return %c0_i32, %c0_i32_0 : i32, i32
  }
  func.func @transform_2(%arg0: i32) -> (i32, i32) {
    %c0_i32 = arith.constant 0 : i32
    %c0_i32_0 = arith.constant 0 : i32
    %c0_i32_1 = arith.constant 0 : i32
    return %c0_i32, %c0_i32_0 : i32, i32
  }
  func.func @transform_3(%arg0: i32) -> (i32, i32, i32) {
    %c0_i32 = arith.constant 0 : i32
    %c0_i32_0 = arith.constant 0 : i32
    %c0_i32_1 = arith.constant 0 : i32
    return %arg0, %c0_i32, %c0_i32_0 : i32, i32, i32
  }
  func.func @transform_4(%arg0: i32) -> (i32, i32, i32) {
    %c0_i32 = arith.constant 0 : i32
    %c0_i32_0 = arith.constant 0 : i32
    %c0_i32_1 = arith.constant 0 : i32
    return %arg0, %c0_i32, %c0_i32_0 : i32, i32, i32
  }
}

module attributes {stable_mosaic.version = 11 : i64} {
  func.func @_bn2_residual_relu_kernel(%arg0: i32, %arg1: memref<1x256x128xf32, #tpu.memory_space<vmem>>, %arg2: memref<2x128xf32, #tpu.memory_space<vmem>>, %arg3: memref<1x16x16x128xf32, #tpu.memory_space<vmem>>, %arg4: memref<1x16x16x128xf32, #tpu.memory_space<vmem>>) attributes {dimension_semantics = [#tpu.dimension_semantics<parallel>], iteration_bounds = array<i64: 2>, scalar_prefetch = 0 : i64, scratch_operands = 0 : i64, tpu.core_type = #tpu.core_type<tc>, window_params = [{transform_indices = @transform_0, window_bounds = array<i64: 1, 256, 128>}, {pipeline_mode = #tpu.pipeline_mode<synchronous>, transform_indices = @transform_1, window_bounds = array<i64: 2, 128>}, {transform_indices = @transform_2, window_bounds = array<i64: 1, 16, 16, 128>}, {transform_indices = @transform_3, window_bounds = array<i64: 1, 16, 16, 128>}]} {
    %c0 = arith.constant 0 : index
    %c0_0 = arith.constant 0 : index
    %c0_1 = arith.constant 0 : index
    %0 = vector.load %arg1[%c0, %c0_0, %c0_1] : memref<1x256x128xf32, #tpu.memory_space<vmem>>, vector<1x256x128xf32>
    %1 = vector.shape_cast %0 : vector<1x256x128xf32> to vector<256x128xf32>
    %c0_2 = arith.constant 0 : index
    %c0_3 = arith.constant 0 : index
    %2 = vector.load %arg2[%c0_2, %c0_3] : memref<2x128xf32, #tpu.memory_space<vmem>>, vector<1x128xf32>
    %3 = vector.broadcast %2 : vector<1x128xf32> to vector<256x128xf32>
    %4 = arith.mulf %1, %3 : vector<256x128xf32>
    %c1 = arith.constant 1 : index
    %c0_4 = arith.constant 0 : index
    %5 = vector.load %arg2[%c1, %c0_4] : memref<2x128xf32, #tpu.memory_space<vmem>>, vector<1x128xf32>
    %6 = vector.broadcast %5 : vector<1x128xf32> to vector<256x128xf32>
    %7 = arith.addf %4, %6 : vector<256x128xf32>
    %c0_5 = arith.constant 0 : index
    %c0_6 = arith.constant 0 : index
    %c0_7 = arith.constant 0 : index
    %c0_8 = arith.constant 0 : index
    %8 = vector.load %arg3[%c0_5, %c0_6, %c0_7, %c0_8] : memref<1x16x16x128xf32, #tpu.memory_space<vmem>>, vector<1x16x16x128xf32>
    %9 = vector.shape_cast %8 : vector<1x16x16x128xf32> to vector<16x16x128xf32>
    %10 = vector.shape_cast %9 : vector<16x16x128xf32> to vector<256x128xf32>
    %11 = arith.addf %7, %10 : vector<256x128xf32>
    %cst = arith.constant 0.000000e+00 : f32
    %12 = vector.broadcast %cst : f32 to vector<256x128xf32>
    %13 = arith.maximumf %11, %12 : vector<256x128xf32>
    %14 = vector.shape_cast %13 : vector<256x128xf32> to vector<16x16x128xf32>
    %c0_9 = arith.constant 0 : index
    %c0_10 = arith.constant 0 : index
    %c0_11 = arith.constant 0 : index
    %c0_12 = arith.constant 0 : index
    %15 = vector.load %arg4[%c0_9, %c0_10, %c0_11, %c0_12] : memref<1x16x16x128xf32, #tpu.memory_space<vmem>>, vector<1x16x16x128xf32>
    %16 = vector.shape_cast %15 : vector<1x16x16x128xf32> to vector<16x16x128xf32>
    %17 = vector.shape_cast %14 : vector<16x16x128xf32> to vector<1x16x16x128xf32>
    tpu.vector_store %arg4[%c0_9, %c0_10, %c0_11, %c0_12], %17 {strides = array<i32>} : memref<1x16x16x128xf32, #tpu.memory_space<vmem>>, vector<1x16x16x128xf32>,
    return
  }
  func.func @transform_0(%arg0: i32) -> (i32, i32, i32) {
    %c0_i32 = arith.constant 0 : i32
    %c0_i32_0 = arith.constant 0 : i32
    %c0_i32_1 = arith.constant 0 : i32
    return %arg0, %c0_i32, %c0_i32_0 : i32, i32, i32
  }
  func.func @transform_1(%arg0: i32) -> (i32, i32) {
    %c0_i32 = arith.constant 0 : i32
    %c0_i32_0 = arith.constant 0 : i32
    %c0_i32_1 = arith.constant 0 : i32
    return %c0_i32, %c0_i32_0 : i32, i32
  }
  func.func @transform_2(%arg0: i32) -> (i32, i32, i32, i32) {
    %c0_i32 = arith.constant 0 : i32
    %c0_i32_0 = arith.constant 0 : i32
    %c0_i32_1 = arith.constant 0 : i32
    %c0_i32_2 = arith.constant 0 : i32
    return %arg0, %c0_i32, %c0_i32_0, %c0_i32_1 : i32, i32, i32, i32
  }
  func.func @transform_3(%arg0: i32) -> (i32, i32, i32, i32) {
    %c0_i32 = arith.constant 0 : i32
    %c0_i32_0 = arith.constant 0 : i32
    %c0_i32_1 = arith.constant 0 : i32
    %c0_i32_2 = arith.constant 0 : i32
    return %arg0, %c0_i32, %c0_i32_0, %c0_i32_1 : i32, i32, i32, i32
  }
}

</mosaic_0001>

<llo_original>
// kernel: resblock.5
$region0: #{resblock.5}
  #allocation0 [shape = 'u32[]', space=smem, size = 0x4, offset = 0x4, fixed_abs, tag = 'smem constant byte address 0x4 - core index']
  #allocation1 [shape = 'u32[144,128]{1,0:T(1,128)}', space=vmem, size = 0x12000, scoped, tag = 'internal scratch']
  %s0 = inlined_call_operand.vmem [shape: f32[2,256,128], index: 0, kind: input, shape index: {}]
  %s1 = inlined_call_operand.vmem [shape: f32[2,128], index: 1, kind: input, shape index: {}]
  %s2 = inlined_call_operand.vmem [shape: f32[2,16,16,128], index: 2, kind: input, shape index: {}]
  %s3 = inlined_call_operand.hbm [shape: f32[2,16,16,128], index: 3, kind: output, shape index: {}]
  %s4 = sld [smem:[#allocation0]]
  $region45: #{resblock.5} parent=0
    _
  %s6 = ssub.s32 1, %s4
  %s7 = scalar_select 0, %s6, %s4
  $region1: #{resblock.5} parent=0
    #allocation2 [shape = 'u8[262144]{0}', space=vmem, size = 0x40000, scoped, tag = 'output window, operand 0']
    #allocation3 [shape = 's32[2]{0}', space=sflag, size = 0x8, scoped, tag = 'scoped memory for resblock.5']
    %8 = vsyncpa [#allocation3], 0
    %s9 = scalar_lea.sflag [#allocation3], 1
    %10 = vsyncpa %s9, 0
    loop: start=0, step=1, limit=4
    $region2: #{resblock.5} parent=1 // loop_pre_header
      _
    $region3: #{resblock.5} parent=1 // loop_header
      %s12 = sphi 0, %s16
      %p13 = scmp.ge.s32.totalorder %s12, 4
      %s22 = sphi 0, %s24
      %s25 = sphi 0, %s22
      %s26 = sphi 0, %s25
      %s42 = sphi 0, %s26
      %s46 = sphi 0, %s46
      %s48 = sphi 0, %s46
      %s49 = sphi 0, %s48
      %s63 = sphi 0, %s49
      %s69 = sphi 0, %s71
      %s72 = sphi 0, %s69
      %s73 = sphi 0, %s72
      %s89 = sphi 0, %s73
      %s95 = sphi 0, %s97
      %s98 = sphi 0, %s95
      %s99 = sphi 0, %s98
      %s115 = sphi 0, %s99
    $region4: #{resblock.5} parent=1 // loop_header_branch
      %15 = sbr.rel (%p13) target = $region8
    $region5: #{resblock.5} parent=1 // loop_body
      %s17 = ssub.s32 %s12, 1
      %s18 = ssub.s32 %s12, 2
      %s19 = sadd.s32 %s12, 1
      %s20 = ssub.s32 %s12, %s19
      %p21 = scmp.eq.s32.totalorder %s20, 0
      %s23 = sadd.s32 %s22, 1
      %s24 = scalar_select %p21, %s22, %s23
      %p27 = pneg %p21
      %p28 = scmp.eq.s32.totalorder %s12, 1
      %p29 = por %p27, %p28
      %p30 = scmp.ne.s32.totalorder %s22, %s25
      %p31 = scmp.eq.s32.totalorder %s12, 0
      %p32 = por %p30, %p31
      %p33 = scmp.ne.s32.totalorder %s22, %s25
      %p34 = scmp.eq.s32.totalorder %s17, 1
      %p35 = por %p33, %p34
      %p36 = scmp.ne.s32.totalorder %s25, %s26
      %p37 = scmp.eq.s32.totalorder %s17, 0
      %p38 = por %p36, %p37
      %p39 = scmp.ne.s32.totalorder %s25, %s26
      %p40 = scmp.eq.s32.totalorder %s18, 1
      %p41 = por %p39, %p40
      %p43 = scmp.ne.s32.totalorder %s26, %s42
      %p44 = scmp.eq.s32.totalorder %s18, 0
      %p45 = por %p43, %p44
      %s47 = sadd.s32 %s46, 1
      %p50 = scmp.eq.s32.totalorder %s12, 1
      %p51 = scmp.ne.s32.totalorder %s46, %s48
      %p52 = scmp.eq.s32.totalorder %s12, 0
      %p53 = por %p51, %p52
      %p54 = scmp.ne.s32.totalorder %s46, %s48
      %p55 = scmp.eq.s32.totalorder %s17, 1
      %p56 = por %p54, %p55
      %p57 = scmp.ne.s32.totalorder %s48, %s49
      %p58 = scmp.eq.s32.totalorder %s17, 0
      %p59 = por %p57, %p58
      %p60 = scmp.ne.s32.totalorder %s48, %s49
      %p61 = scmp.eq.s32.totalorder %s18, 1
      %p62 = por %p60, %p61
      %p64 = scmp.ne.s32.totalorder %s49, %s63
      %p65 = scmp.eq.s32.totalorder %s18, 0
      %p66 = por %p64, %p65
      %s67 = ssub.s32 %s12, %s19
      %p68 = scmp.eq.s32.totalorder %s67, 0
      %s70 = sadd.s32 %s69, 1
      %s71 = scalar_select %p68, %s69, %s70
      %p74 = pneg %p68
      %p75 = scmp.eq.s32.totalorder %s12, 1
      %p76 = por %p74, %p75
      %p77 = scmp.ne.s32.totalorder %s69, %s72
      %p78 = scmp.eq.s32.totalorder %s12, 0
      %p79 = por %p77, %p78
      %p80 = scmp.ne.s32.totalorder %s69, %s72
      %p81 = scmp.eq.s32.totalorder %s17, 1
      %p82 = por %p80, %p81
      %p83 = scmp.ne.s32.totalorder %s72, %s73
      %p84 = scmp.eq.s32.totalorder %s17, 0
      %p85 = por %p83, %p84
      %p86 = scmp.ne.s32.totalorder %s72, %s73
      %p87 = scmp.eq.s32.totalorder %s18, 1
      %p88 = por %p86, %p87
      %p90 = scmp.ne.s32.totalorder %s73, %s89
      %p91 = scmp.eq.s32.totalorder %s18, 0
      %p92 = por %p90, %p91
      %s93 = ssub.s32 %s12, %s19
      %p94 = scmp.eq.s32.totalorder %s93, 0
      %s96 = sadd.s32 %s95, 1
      %s97 = scalar_select %p94, %s95, %s96
      %p100 = pneg %p94
      %p101 = scmp.eq.s32.totalorder %s12, 1
      %p102 = por %p100, %p101
      %p103 = scmp.ne.s32.totalorder %s95, %s98
      %p104 = scmp.eq.s32.totalorder %s12, 0
      %p105 = por %p103, %p104
      %p106 = scmp.ne.s32.totalorder %s95, %s98
      %p107 = scmp.eq.s32.totalorder %s17, 1
      %p108 = por %p106, %p107
      %p109 = scmp.ne.s32.totalorder %s98, %s99
      %p110 = scmp.eq.s32.totalorder %s17, 0
      %p111 = por %p109, %p110
      %p112 = scmp.ne.s32.totalorder %s98, %s99
      %p113 = scmp.eq.s32.totalorder %s18, 1
      %p114 = por %p112, %p113
      %p116 = scmp.ne.s32.totalorder %s99, %s115
      %p117 = scmp.eq.s32.totalorder %s18, 0
      %p118 = por %p116, %p117
      %p119 = scmp.le.s32.totalorder 1, %s12
      %p120 = scmp.lt.s32.totalorder %s12, 3
      %p121 = pnand %p119, %p120
      %p122 = pneg %p121
      // Predicated region
      $region9: #{resblock.5} parent=5 // pred_check
        _
      $region10: #{resblock.5} parent=5 // pred_check_branch
        %124 = sbr.rel (%p121) target = $region12
      $region11: #{resblock.5} parent=5 // pred_region
        %s125 = ssub.s32 %s12, 1
        // Predicated region
        $region13: #{resblock.5} parent=11 // pred_check
          %p126 = pneg %p59
        $region14: #{resblock.5} parent=11 // pred_check_branch
          %128 = sbr.rel (%p126) target = $region16
        $region15: #{resblock.5} parent=11 // pred_region
          _
        $region16: #{resblock.5} parent=11 // pred_fallthru
          _
      $region12: #{resblock.5} parent=5 // pred_fallthru
        _
      %p129 = scmp.lt.s32.totalorder %s12, 2
      // Predicated region
      $region17: #{resblock.5} parent=5 // pred_check
        %p130 = pneg %p129
      $region18: #{resblock.5} parent=5 // pred_check_branch
        %132 = sbr.rel (%p130) target = $region20
      $region19: #{resblock.5} parent=5 // pred_region
        // Predicated region
        $region21: #{resblock.5} parent=19 // pred_check
          %p133 = pneg %p32
        $region22: #{resblock.5} parent=19 // pred_check_branch
          %135 = sbr.rel (%p133) target = $region24
        $region23: #{resblock.5} parent=19 // pred_region
          %p136 = scmp.lt.s32.totalorder %s12, 1
          %s137 = scalar_select %p136, %s12, 1
          %s138 = smul.addr %s137, 32
          %s139 = smul.addr %s138, 8
          %s140 = scalar_lea.vmem %s0, %s139
        $region24: #{resblock.5} parent=19 // pred_fallthru
          _
        // Predicated region
        $region25: #{resblock.5} parent=19 // pred_check
          %p141 = pneg %p79
        $region26: #{resblock.5} parent=19 // pred_check_branch
          %143 = sbr.rel (%p141) target = $region28
        $region27: #{resblock.5} parent=19 // pred_region
          %p144 = scmp.lt.s32.totalorder %s12, 1
          %s145 = scalar_select %p144, %s12, 1
          %s146 = smul.addr %s145, 32
          %s147 = smul.addr %s146, 8
          %s148 = scalar_lea.vmem %s2, %s147
        $region28: #{resblock.5} parent=19 // pred_fallthru
          _
      $region20: #{resblock.5} parent=5 // pred_fallthru
        _
      %p149 = scmp.le.s32.totalorder 1, %s12
      %p150 = scmp.lt.s32.totalorder %s12, 3
      %p151 = pnand %p149, %p150
      %p152 = pneg %p151
      // Predicated region
      $region29: #{resblock.5} parent=5 // pred_check
        _
      $region30: #{resblock.5} parent=5 // pred_check_branch
        %154 = sbr.rel (%p151) target = $region32
      $region31: #{resblock.5} parent=5 // pred_region
        %s155 = ssub.s32 %s12, 1
        %p156 = scmp.lt.s32.totalorder %s17, 1
        %s157 = scalar_select %p156, %s17, 1
        %s158 = smul.addr %s157, 32
        %s159 = smul.addr %s158, 8
        %s160 = scalar_lea.vmem %s0, %s159
        %p161 = pneg %p38
        %p162 = pneg %p35
        %p163 = pneg %p59
        %p164 = pneg %p56
        %p165 = scmp.lt.s32.totalorder %s17, 1
        %s166 = scalar_select %p165, %s17, 1
        %s167 = smul.addr %s166, 32
        %s168 = smul.addr %s167, 8
        %s169 = scalar_lea.vmem %s2, %s168
        %p170 = pneg %p85
        %p171 = pneg %p82
        %p172 = pneg %p111
        %p173 = pneg %p108
        %s174 = sand.u32 %s98, 1
        %s175 = scalar_lea.sflag [#allocation3], %s174
        %s176 = sand.u32 %s98, 1
        %s177 = smul.addr %s176, 256
        %s178 = scalar_lea.vmem [#allocation2], %s177
        %p179 = scmp.lt.s32.totalorder %s17, 1
        %s180 = scalar_select %p179, %s17, 1
        %s181 = smul.addr %s180, 32
        %s182 = smul.addr %s181, 8
        %s183 = scalar_lea.vmem %s0, %s182
        %p184 = scmp.lt.s32.totalorder %s17, 1
        %s185 = scalar_select %p184, %s17, 1
        %s186 = smul.addr %s185, 32
        %s187 = smul.addr %s186, 8
        %s188 = scalar_lea.vmem %s2, %s187
        %v189 = vld [vmem:[%s183] sm:$0xff]
        %v190 = vld [vmem:[%s183 + $0x8] sm:$0xff]
        %v191 = vld [vmem:[%s183 + $0x10] sm:$0xff]
        %v192 = vld [vmem:[%s183 + $0x18] sm:$0xff]
        %v193 = vld [vmem:[%s183 + $0x20] sm:$0xff]
        %v194 = vld [vmem:[%s183 + $0x28] sm:$0xff]
        %v195 = vld [vmem:[%s183 + $0x30] sm:$0xff]
        %v196 = vld [vmem:[%s183 + $0x38] sm:$0xff]
        %v197 = vld [vmem:[%s183 + $0x40] sm:$0xff]
        %v198 = vld [vmem:[%s183 + $0x48] sm:$0xff]
        %v199 = vld [vmem:[%s183 + $0x50] sm:$0xff]
        %v200 = vld [vmem:[%s183 + $0x58] sm:$0xff]
        %v201 = vld [vmem:[%s183 + $0x60] sm:$0xff]
        %v202 = vld [vmem:[%s183 + $0x68] sm:$0xff]
        %v203 = vld [vmem:[%s183 + $0x70] sm:$0xff]
        %v204 = vld [vmem:[%s183 + $0x78] sm:$0xff]
        %v205 = vld [vmem:[%s183 + $0x80] sm:$0xff]
        %v206 = vld [vmem:[%s183 + $0x88] sm:$0xff]
        %v207 = vld [vmem:[%s183 + $0x90] sm:$0xff]
        %v208 = vld [vmem:[%s183 + $0x98] sm:$0xff]
        %v209 = vld [vmem:[%s183 + $0xa0] sm:$0xff]
        %v210 = vld [vmem:[%s183 + $0xa8] sm:$0xff]
        %v211 = vld [vmem:[%s183 + $0xb0] sm:$0xff]
        %v212 = vld [vmem:[%s183 + $0xb8] sm:$0xff]
        %v213 = vld [vmem:[%s183 + $0xc0] sm:$0xff]
        %v214 = vld [vmem:[%s183 + $0xc8] sm:$0xff]
        %v215 = vld [vmem:[%s183 + $0xd0] sm:$0xff]
        %v216 = vld [vmem:[%s183 + $0xd8] sm:$0xff]
        %v217 = vld [vmem:[%s183 + $0xe0] sm:$0xff]
        %v218 = vld [vmem:[%s183 + $0xe8] sm:$0xff]
        %v219 = vld [vmem:[%s183 + $0xf0] sm:$0xff]
        %v220 = vld [vmem:[%s183 + $0xf8] sm:$0xff]
        %v221 = vld [vmem:[%s1] sm:$0x1]
        %v222 = vlaneseq
        %v223 = vshrl.u32 %v222, 7
        %v224 = vsub.s32 0, %v223
        %v225 = vrot.slane %v221, %v224
        %v226 = vmul.f32 %v189, %v225
        %v227 = vmul.f32 %v190, %v225
        %v228 = vmul.f32 %v191, %v225
        %v229 = vmul.f32 %v192, %v225
        %v230 = vmul.f32 %v193, %v225
        %v231 = vmul.f32 %v194, %v225
        %v232 = vmul.f32 %v195, %v225
        %v233 = vmul.f32 %v196, %v225
        %v234 = vmul.f32 %v197, %v225
        %v235 = vmul.f32 %v198, %v225
        %v236 = vmul.f32 %v199, %v225
        %v237 = vmul.f32 %v200, %v225
        %v238 = vmul.f32 %v201, %v225
        %v239 = vmul.f32 %v202, %v225
        %v240 = vmul.f32 %v203, %v225
        %v241 = vmul.f32 %v204, %v225
        %v242 = vmul.f32 %v205, %v225
        %v243 = vmul.f32 %v206, %v225
        %v244 = vmul.f32 %v207, %v225
        %v245 = vmul.f32 %v208, %v225
        %v246 = vmul.f32 %v209, %v225
        %v247 = vmul.f32 %v210, %v225
        %v248 = vmul.f32 %v211, %v225
        %v249 = vmul.f32 %v212, %v225
        %v250 = vmul.f32 %v213, %v225
        %v251 = vmul.f32 %v214, %v225
        %v252 = vmul.f32 %v215, %v225
        %v253 = vmul.f32 %v216, %v225
        %v254 = vmul.f32 %v217, %v225
        %v255 = vmul.f32 %v218, %v225
        %v256 = vmul.f32 %v219, %v225
        %v257 = vmul.f32 %v220, %v225
        %v258 = vld [vmem:[%s1 + $0x1] sm:$0x1]
        %v259 = vlaneseq
        %v260 = vshrl.u32 %v259, 7
        %v261 = vsub.s32 0, %v260
        %v262 = vrot.slane %v258, %v261
        %v263 = vadd.f32 %v226, %v262
        %v264 = vadd.f32 %v227, %v262
        %v265 = vadd.f32 %v228, %v262
        %v266 = vadd.f32 %v229, %v262
        %v267 = vadd.f32 %v230, %v262
        %v268 = vadd.f32 %v231, %v262
        %v269 = vadd.f32 %v232, %v262
        %v270 = vadd.f32 %v233, %v262
        %v271 = vadd.f32 %v234, %v262
        %v272 = vadd.f32 %v235, %v262
        %v273 = vadd.f32 %v236, %v262
        %v274 = vadd.f32 %v237, %v262
        %v275 = vadd.f32 %v238, %v262
        %v276 = vadd.f32 %v239, %v262
        %v277 = vadd.f32 %v240, %v262
        %v278 = vadd.f32 %v241, %v262
        %v279 = vadd.f32 %v242, %v262
        %v280 = vadd.f32 %v243, %v262
        %v281 = vadd.f32 %v244, %v262
        %v282 = vadd.f32 %v245, %v262
        %v283 = vadd.f32 %v246, %v262
        %v284 = vadd.f32 %v247, %v262
        %v285 = vadd.f32 %v248, %v262
        %v286 = vadd.f32 %v249, %v262
        %v287 = vadd.f32 %v250, %v262
        %v288 = vadd.f32 %v251, %v262
        %v289 = vadd.f32 %v252, %v262
        %v290 = vadd.f32 %v253, %v262
        %v291 = vadd.f32 %v254, %v262
        %v292 = vadd.f32 %v255, %v262
        %v293 = vadd.f32 %v256, %v262
        %v294 = vadd.f32 %v257, %v262
        %v295 = vld [vmem:[%s188] sm:$0xff]
        %v296 = vld [vmem:[%s188 + $0x8] sm:$0xff]
        %v297 = vld [vmem:[%s188 + $0x10] sm:$0xff]
        %v298 = vld [vmem:[%s188 + $0x18] sm:$0xff]
        %v299 = vld [vmem:[%s188 + $0x20] sm:$0xff]
        %v300 = vld [vmem:[%s188 + $0x28] sm:$0xff]
        %v301 = vld [vmem:[%s188 + $0x30] sm:$0xff]
        %v302 = vld [vmem:[%s188 + $0x38] sm:$0xff]
        %v303 = vld [vmem:[%s188 + $0x40] sm:$0xff]
        %v304 = vld [vmem:[%s188 + $0x48] sm:$0xff]
        %v305 = vld [vmem:[%s188 + $0x50] sm:$0xff]
        %v306 = vld [vmem:[%s188 + $0x58] sm:$0xff]
        %v307 = vld [vmem:[%s188 + $0x60] sm:$0xff]
        %v308 = vld [vmem:[%s188 + $0x68] sm:$0xff]
        %v309 = vld [vmem:[%s188 + $0x70] sm:$0xff]
        %v310 = vld [vmem:[%s188 + $0x78] sm:$0xff]
        %v311 = vld [vmem:[%s188 + $0x80] sm:$0xff]
        %v312 = vld [vmem:[%s188 + $0x88] sm:$0xff]
        %v313 = vld [vmem:[%s188 + $0x90] sm:$0xff]
        %v314 = vld [vmem:[%s188 + $0x98] sm:$0xff]
        %v315 = vld [vmem:[%s188 + $0xa0] sm:$0xff]
        %v316 = vld [vmem:[%s188 + $0xa8] sm:$0xff]
        %v317 = vld [vmem:[%s188 + $0xb0] sm:$0xff]
        %v318 = vld [vmem:[%s188 + $0xb8] sm:$0xff]
        %v319 = vld [vmem:[%s188 + $0xc0] sm:$0xff]
        %v320 = vld [vmem:[%s188 + $0xc8] sm:$0xff]
        %v321 = vld [vmem:[%s188 + $0xd0] sm:$0xff]
        %v322 = vld [vmem:[%s188 + $0xd8] sm:$0xff]
        %v323 = vld [vmem:[%s188 + $0xe0] sm:$0xff]
        %v324 = vld [vmem:[%s188 + $0xe8] sm:$0xff]
        %v325 = vld [vmem:[%s188 + $0xf0] sm:$0xff]
        %v326 = vld [vmem:[%s188 + $0xf8] sm:$0xff]
        %v327 = vadd.f32 %v263, %v295
        %v328 = vadd.f32 %v264, %v296
        %v329 = vadd.f32 %v265, %v297
        %v330 = vadd.f32 %v266, %v298
        %v331 = vadd.f32 %v267, %v299
        %v332 = vadd.f32 %v268, %v300
        %v333 = vadd.f32 %v269, %v301
        %v334 = vadd.f32 %v270, %v302
        %v335 = vadd.f32 %v271, %v303
        %v336 = vadd.f32 %v272, %v304
        %v337 = vadd.f32 %v273, %v305
        %v338 = vadd.f32 %v274, %v306
        %v339 = vadd.f32 %v275, %v307
        %v340 = vadd.f32 %v276, %v308
        %v341 = vadd.f32 %v277, %v309
        %v342 = vadd.f32 %v278, %v310
        %v343 = vadd.f32 %v279, %v311
        %v344 = vadd.f32 %v280, %v312
        %v345 = vadd.f32 %v281, %v313
        %v346 = vadd.f32 %v282, %v314
        %v347 = vadd.f32 %v283, %v315
        %v348 = vadd.f32 %v284, %v316
        %v349 = vadd.f32 %v285, %v317
        %v350 = vadd.f32 %v286, %v318
        %v351 = vadd.f32 %v287, %v319
        %v352 = vadd.f32 %v288, %v320
        %v353 = vadd.f32 %v289, %v321
        %v354 = vadd.f32 %v290, %v322
        %v355 = vadd.f32 %v291, %v323
        %v356 = vadd.f32 %v292, %v324
        %v357 = vadd.f32 %v293, %v325
        %v358 = vadd.f32 %v294, %v326
        %v359 = vmax.f32 %v327, 0.0
        %v360 = vmax.f32 %v328, 0.0
        %v361 = vmax.f32 %v329, 0.0
        %v362 = vmax.f32 %v330, 0.0
        %v363 = vmax.f32 %v331, 0.0
        %v364 = vmax.f32 %v332, 0.0
        %v365 = vmax.f32 %v333, 0.0
        %v366 = vmax.f32 %v334, 0.0
        %v367 = vmax.f32 %v335, 0.0
        %v368 = vmax.f32 %v336, 0.0
        %v369 = vmax.f32 %v337, 0.0
        %v370 = vmax.f32 %v338, 0.0
        %v371 = vmax.f32 %v339, 0.0
        %v372 = vmax.f32 %v340, 0.0
        %v373 = vmax.f32 %v341, 0.0
        %v374 = vmax.f32 %v342, 0.0
        %v375 = vmax.f32 %v343, 0.0
        %v376 = vmax.f32 %v344, 0.0
        %v377 = vmax.f32 %v345, 0.0
        %v378 = vmax.f32 %v346, 0.0
        %v379 = vmax.f32 %v347, 0.0
        %v380 = vmax.f32 %v348, 0.0
        %v381 = vmax.f32 %v349, 0.0
        %v382 = vmax.f32 %v350, 0.0
        %v383 = vmax.f32 %v351, 0.0
        %v384 = vmax.f32 %v352, 0.0
        %v385 = vmax.f32 %v353, 0.0
        %v386 = vmax.f32 %v354, 0.0
        %v387 = vmax.f32 %v355, 0.0
        %v388 = vmax.f32 %v356, 0.0
        %v389 = vmax.f32 %v357, 0.0
        %v390 = vmax.f32 %v358, 0.0
        %391 = vst [vmem:[%s178] sm:$0xff] %v359
        %392 = vst [vmem:[%s178 + $0x8] sm:$0xff] %v360
        %393 = vst [vmem:[%s178 + $0x10] sm:$0xff] %v361
        %394 = vst [vmem:[%s178 + $0x18] sm:$0xff] %v362
        %395 = vst [vmem:[%s178 + $0x20] sm:$0xff] %v363
        %396 = vst [vmem:[%s178 + $0x28] sm:$0xff] %v364
        %397 = vst [vmem:[%s178 + $0x30] sm:$0xff] %v365
        %398 = vst [vmem:[%s178 + $0x38] sm:$0xff] %v366
        %399 = vst [vmem:[%s178 + $0x40] sm:$0xff] %v367
        %400 = vst [vmem:[%s178 + $0x48] sm:$0xff] %v368
        %401 = vst [vmem:[%s178 + $0x50] sm:$0xff] %v369
        %402 = vst [vmem:[%s178 + $0x58] sm:$0xff] %v370
        %403 = vst [vmem:[%s178 + $0x60] sm:$0xff] %v371
        %404 = vst [vmem:[%s178 + $0x68] sm:$0xff] %v372
        %405 = vst [vmem:[%s178 + $0x70] sm:$0xff] %v373
        %406 = vst [vmem:[%s178 + $0x78] sm:$0xff] %v374
        %407 = vst [vmem:[%s178 + $0x80] sm:$0xff] %v375
        %408 = vst [vmem:[%s178 + $0x88] sm:$0xff] %v376
        %409 = vst [vmem:[%s178 + $0x90] sm:$0xff] %v377
        %410 = vst [vmem:[%s178 + $0x98] sm:$0xff] %v378
        %411 = vst [vmem:[%s178 + $0xa0] sm:$0xff] %v379
        %412 = vst [vmem:[%s178 + $0xa8] sm:$0xff] %v380
        %413 = vst [vmem:[%s178 + $0xb0] sm:$0xff] %v381
        %414 = vst [vmem:[%s178 + $0xb8] sm:$0xff] %v382
        %415 = vst [vmem:[%s178 + $0xc0] sm:$0xff] %v383
        %416 = vst [vmem:[%s178 + $0xc8] sm:$0xff] %v384
        %417 = vst [vmem:[%s178 + $0xd0] sm:$0xff] %v385
        %418 = vst [vmem:[%s178 + $0xd8] sm:$0xff] %v386
        %419 = vst [vmem:[%s178 + $0xe0] sm:$0xff] %v387
        %420 = vst [vmem:[%s178 + $0xe8] sm:$0xff] %v388
        %421 = vst [vmem:[%s178 + $0xf0] sm:$0xff] %v389
        %422 = vst [vmem:[%s178 + $0xf8] sm:$0xff] %v390
        %s423 = sand.u32 %s98, 1
        %s424 = scalar_lea.sflag [#allocation3], %s423
        %s425 = sand.u32 %s98, 1
        %s426 = smul.addr %s425, 256
        %s427 = scalar_lea.vmem [#allocation2], %s426
        // Predicated region
        $region33: #{resblock.5} parent=31 // pred_check
          %p428 = pneg %p108
        $region34: #{resblock.5} parent=31 // pred_check_branch
          %430 = sbr.rel (%p428) target = $region36
        $region35: #{resblock.5} parent=31 // pred_region
          %s432 = ssub.s32 4096, 4096
          %433 = vsyncadd %s424, %s432
          %s434 = smul.addr %s17, 32
          %s435 = smul.addr %s434, 128
          %s436 = scalar_lea.hbm %s3, %s435
          %s437 = sshll.u32 %s427, 4
          %s438 = int_to_ptr.vmem [resolvable:$true] %s437
          %443 = dma.vmem_to_hbm [thread:$0]  %s438, 4096, %s436, %s424, 128, 128, 8
        $region36: #{resblock.5} parent=31 // pred_fallthru
          _
      $region32: #{resblock.5} parent=5 // pred_fallthru
        _
      %p444 = scmp.le.s32.totalorder 2, %s12
      // Predicated region
      $region37: #{resblock.5} parent=5 // pred_check
        %p445 = pneg %p444
      $region38: #{resblock.5} parent=5 // pred_check_branch
        %447 = sbr.rel (%p445) target = $region40
      $region39: #{resblock.5} parent=5 // pred_region
        %s448 = ssub.s32 %s12, 2
        // Predicated region
        $region41: #{resblock.5} parent=39 // pred_check
          %p449 = pneg %p114
        $region42: #{resblock.5} parent=39 // pred_check_branch
          %451 = sbr.rel (%p449) target = $region44
        $region43: #{resblock.5} parent=39 // pred_region
          %s452 = sand.u32 %s99, 1
          %s453 = scalar_lea.sflag [#allocation3], %s452
          %s454 = sand.u32 %s99, 1
          %s455 = smul.addr %s454, 256
          %s456 = scalar_lea.vmem [#allocation2], %s455
          %457 = dma.done %s453, 4096
        $region44: #{resblock.5} parent=39 // pred_fallthru
          _
      $region40: #{resblock.5} parent=5 // pred_fallthru
        _
    $region6: #{resblock.5} parent=1 // loop_footer
      %s16 = sadd.s32 1, %s12
    $region7: #{resblock.5} parent=1 // loop_footer_branch
      %11 = sbr.rel target = $region3
    $region8: #{resblock.5} parent=1 // loop_exit
      _
    %458 = vsyncpa [#allocation3], 1
    %s459 = scalar_lea.sflag [#allocation3], 1
    %460 = vsyncpa %s459, 1

// kernel: resblock.4
$region0: #{resblock.4}
  #allocation0 [shape = 'u32[]', space=smem, size = 0x4, offset = 0x4, fixed_abs, tag = 'smem constant byte address 0x4 - core index']
  #allocation1 [shape = 'u32[144,128]{1,0:T(1,128)}', space=vmem, size = 0x12000, scoped, tag = 'internal scratch']
  #allocation2 [shape = 'f32[18,18,128]{2,1,0:T(8,128)}', space=vmem, size = 0x36000, scoped, tag = 'scratch operand']
  #allocation3 [shape = 'bf16[256,1152]{1,0:T(16,128)(2,1)}', space=vmem, size = 0x90000, scoped, tag = 'scratch operand']
  %s0 = inlined_call_operand.vmem [shape: f32[2,256,128], index: 0, kind: input, shape index: {}]
  %s1 = inlined_call_operand.vmem [shape: f32[2,128], index: 1, kind: input, shape index: {}]
  %s2 = inlined_call_operand.vmem [shape: bf16[1152,128], index: 2, kind: input, shape index: {}]
  %s3 = inlined_call_operand.vmem [shape: f32[2,256,128], index: 3, kind: output, shape index: {0}]
  %s4 = inlined_call_operand.vmem [shape: f32[2,2,128], index: 4, kind: output, shape index: {1}]
  %5 = xla_tuple %s3, %s4
  %s6 = sld [smem:[#allocation0]]
  $region53: #{resblock.4} parent=0
    _
  %s8 = ssub.s32 1, %s6
  %s9 = scalar_select 0, %s8, %s6
  loop: start=0, step=1, limit=4
  $region2: #{resblock.4} parent=0 // loop_pre_header
    _
  $region3: #{resblock.4} parent=0 // loop_header
    %s11 = sphi 0, %s15
    %p12 = scmp.ge.s32.totalorder %s11, 4
    %s21 = sphi 0, %s23
    %s24 = sphi 0, %s21
    %s25 = sphi 0, %s24
    %s41 = sphi 0, %s25
    %s45 = sphi 0, %s45
    %s47 = sphi 0, %s45
    %s48 = sphi 0, %s47
    %s62 = sphi 0, %s48
    %s66 = sphi 0, %s66
    %s68 = sphi 0, %s66
    %s69 = sphi 0, %s68
    %s83 = sphi 0, %s69
    %s89 = sphi 0, %s91
    %s92 = sphi 0, %s89
    %s93 = sphi 0, %s92
    %s109 = sphi 0, %s93
    %s115 = sphi 0, %s117
    %s118 = sphi 0, %s115
    %s119 = sphi 0, %s118
    %s135 = sphi 0, %s119
  $region4: #{resblock.4} parent=0 // loop_header_branch
    %14 = sbr.rel (%p12) target = $region8
  $region5: #{resblock.4} parent=0 // loop_body
    %s16 = ssub.s32 %s11, 1
    %s17 = ssub.s32 %s11, 2
    %s18 = sadd.s32 %s11, 1
    %s19 = ssub.s32 %s11, %s18
    %p20 = scmp.eq.s32.totalorder %s19, 0
    %s22 = sadd.s32 %s21, 1
    %s23 = scalar_select %p20, %s21, %s22
    %p26 = pneg %p20
    %p27 = scmp.eq.s32.totalorder %s11, 1
    %p28 = por %p26, %p27
    %p29 = scmp.ne.s32.totalorder %s21, %s24
    %p30 = scmp.eq.s32.totalorder %s11, 0
    %p31 = por %p29, %p30
    %p32 = scmp.ne.s32.totalorder %s21, %s24
    %p33 = scmp.eq.s32.totalorder %s16, 1
    %p34 = por %p32, %p33
    %p35 = scmp.ne.s32.totalorder %s24, %s25
    %p36 = scmp.eq.s32.totalorder %s16, 0
    %p37 = por %p35, %p36
    %p38 = scmp.ne.s32.totalorder %s24, %s25
    %p39 = scmp.eq.s32.totalorder %s17, 1
    %p40 = por %p38, %p39
    %p42 = scmp.ne.s32.totalorder %s25, %s41
    %p43 = scmp.eq.s32.totalorder %s17, 0
    %p44 = por %p42, %p43
    %s46 = sadd.s32 %s45, 1
    %p49 = scmp.eq.s32.totalorder %s11, 1
    %p50 = scmp.ne.s32.totalorder %s45, %s47
    %p51 = scmp.eq.s32.totalorder %s11, 0
    %p52 = por %p50, %p51
    %p53 = scmp.ne.s32.totalorder %s45, %s47
    %p54 = scmp.eq.s32.totalorder %s16, 1
    %p55 = por %p53, %p54
    %p56 = scmp.ne.s32.totalorder %s47, %s48
    %p57 = scmp.eq.s32.totalorder %s16, 0
    %p58 = por %p56, %p57
    %p59 = scmp.ne.s32.totalorder %s47, %s48
    %p60 = scmp.eq.s32.totalorder %s17, 1
    %p61 = por %p59, %p60
    %p63 = scmp.ne.s32.totalorder %s48, %s62
    %p64 = scmp.eq.s32.totalorder %s17, 0
    %p65 = por %p63, %p64
    %s67 = sadd.s32 %s66, 1
    %p70 = scmp.eq.s32.totalorder %s11, 1
    %p71 = scmp.ne.s32.totalorder %s66, %s68
    %p72 = scmp.eq.s32.totalorder %s11, 0
    %p73 = por %p71, %p72
    %p74 = scmp.ne.s32.totalorder %s66, %s68
    %p75 = scmp.eq.s32.totalorder %s16, 1
    %p76 = por %p74, %p75
    %p77 = scmp.ne.s32.totalorder %s68, %s69
    %p78 = scmp.eq.s32.totalorder %s16, 0
    %p79 = por %p77, %p78
    %p80 = scmp.ne.s32.totalorder %s68, %s69
    %p81 = scmp.eq.s32.totalorder %s17, 1
    %p82 = por %p80, %p81
    %p84 = scmp.ne.s32.totalorder %s69, %s83
    %p85 = scmp.eq.s32.totalorder %s17, 0
    %p86 = por %p84, %p85
    %s87 = ssub.s32 %s11, %s18
    %p88 = scmp.eq.s32.totalorder %s87, 0
    %s90 = sadd.s32 %s89, 1
    %s91 = scalar_select %p88, %s89, %s90
    %p94 = pneg %p88
    %p95 = scmp.eq.s32.totalorder %s11, 1
    %p96 = por %p94, %p95
    %p97 = scmp.ne.s32.totalorder %s89, %s92
    %p98 = scmp.eq.s32.totalorder %s11, 0
    %p99 = por %p97, %p98
    %p100 = scmp.ne.s32.totalorder %s89, %s92
    %p101 = scmp.eq.s32.totalorder %s16, 1
    %p102 = por %p100, %p101
    %p103 = scmp.ne.s32.totalorder %s92, %s93
    %p104 = scmp.eq.s32.totalorder %s16, 0
    %p105 = por %p103, %p104
    %p106 = scmp.ne.s32.totalorder %s92, %s93
    %p107 = scmp.eq.s32.totalorder %s17, 1
    %p108 = por %p106, %p107
    %p110 = scmp.ne.s32.totalorder %s93, %s109
    %p111 = scmp.eq.s32.totalorder %s17, 0
    %p112 = por %p110, %p111
    %s113 = ssub.s32 %s11, %s18
    %p114 = scmp.eq.s32.totalorder %s113, 0
    %s116 = sadd.s32 %s115, 1
    %s117 = scalar_select %p114, %s115, %s116
    %p120 = pneg %p114
    %p121 = scmp.eq.s32.totalorder %s11, 1
    %p122 = por %p120, %p121
    %p123 = scmp.ne.s32.totalorder %s115, %s118
    %p124 = scmp.eq.s32.totalorder %s11, 0
    %p125 = por %p123, %p124
    %p126 = scmp.ne.s32.totalorder %s115, %s118
    %p127 = scmp.eq.s32.totalorder %s16, 1
    %p128 = por %p126, %p127
    %p129 = scmp.ne.s32.totalorder %s118, %s119
    %p130 = scmp.eq.s32.totalorder %s16, 0
    %p131 = por %p129, %p130
    %p132 = scmp.ne.s32.totalorder %s118, %s119
    %p133 = scmp.eq.s32.totalorder %s17, 1
    %p134 = por %p132, %p133
    %p136 = scmp.ne.s32.totalorder %s119, %s135
    %p137 = scmp.eq.s32.totalorder %s17, 0
    %p138 = por %p136, %p137
    %p139 = scmp.le.s32.totalorder 1, %s11
    %p140 = scmp.lt.s32.totalorder %s11, 3
    %p141 = pnand %p139, %p140
    %p142 = pneg %p141
    // Predicated region
    $region9: #{resblock.4} parent=5 // pred_check
      _
    $region10: #{resblock.4} parent=5 // pred_check_branch
      %144 = sbr.rel (%p141) target = $region12
    $region11: #{resblock.4} parent=5 // pred_region
      %s145 = ssub.s32 %s11, 1
      // Predicated region
      $region13: #{resblock.4} parent=11 // pred_check
        %p146 = pneg %p58
      $region14: #{resblock.4} parent=11 // pred_check_branch
        %148 = sbr.rel (%p146) target = $region16
      $region15: #{resblock.4} parent=11 // pred_region
        _
      $region16: #{resblock.4} parent=11 // pred_fallthru
        _
      // Predicated region
      $region17: #{resblock.4} parent=11 // pred_check
        %p149 = pneg %p79
      $region18: #{resblock.4} parent=11 // pred_check_branch
        %151 = sbr.rel (%p149) target = $region20
      $region19: #{resblock.4} parent=11 // pred_region
        _
      $region20: #{resblock.4} parent=11 // pred_fallthru
        _
    $region12: #{resblock.4} parent=5 // pred_fallthru
      _
    %p152 = scmp.lt.s32.totalorder %s11, 2
    // Predicated region
    $region21: #{resblock.4} parent=5 // pred_check
      %p153 = pneg %p152
    $region22: #{resblock.4} parent=5 // pred_check_branch
      %155 = sbr.rel (%p153) target = $region24
    $region23: #{resblock.4} parent=5 // pred_region
      // Predicated region
      $region25: #{resblock.4} parent=23 // pred_check
        %p156 = pneg %p31
      $region26: #{resblock.4} parent=23 // pred_check_branch
        %158 = sbr.rel (%p156) target = $region28
      $region27: #{resblock.4} parent=23 // pred_region
        %p159 = scmp.lt.s32.totalorder %s11, 1
        %s160 = scalar_select %p159, %s11, 1
        %s161 = smul.addr %s160, 32
        %s162 = smul.addr %s161, 8
        %s163 = scalar_lea.vmem %s0, %s162
      $region28: #{resblock.4} parent=23 // pred_fallthru
        _
    $region24: #{resblock.4} parent=5 // pred_fallthru
      _
    %p164 = scmp.le.s32.totalorder 1, %s11
    %p165 = scmp.lt.s32.totalorder %s11, 3
    %p166 = pnand %p164, %p165
    %p167 = pneg %p166
    // Predicated region
    $region29: #{resblock.4} parent=5 // pred_check
      _
    $region30: #{resblock.4} parent=5 // pred_check_branch
      %169 = sbr.rel (%p166) target = $region32
    $region31: #{resblock.4} parent=5 // pred_region
      %s170 = ssub.s32 %s11, 1
      %p171 = scmp.lt.s32.totalorder %s16, 1
      %s172 = scalar_select %p171, %s16, 1
      %s173 = smul.addr %s172, 32
      %s174 = smul.addr %s173, 8
      %s175 = scalar_lea.vmem %s0, %s174
      %p176 = pneg %p37
      %p177 = pneg %p34
      %p178 = pneg %p58
      %p179 = pneg %p55
      %p180 = pneg %p79
      %p181 = pneg %p76
      %p182 = pneg %p105
      %p183 = pneg %p102
      %p184 = scmp.lt.s32.totalorder %s16, 1
      %s185 = scalar_select %p184, %s16, 1
      %s186 = smul.addr %s185, 32
      %s187 = smul.addr %s186, 8
      %s188 = scalar_lea.vmem %s3, %s187
      %p189 = pneg %p131
      %p190 = pneg %p128
      %p191 = scmp.lt.s32.totalorder %s16, 1
      %s192 = scalar_select %p191, %s16, 1
      %s193 = smul.addr %s192, 2
      %s194 = scalar_lea.vmem %s4, %s193
      %p195 = scmp.lt.s32.totalorder %s16, 1
      %s196 = scalar_select %p195, %s16, 1
      %s197 = smul.addr %s196, 32
      %s198 = smul.addr %s197, 8
      %s199 = scalar_lea.vmem %s0, %s198
      %p200 = scmp.lt.s32.totalorder %s16, 1
      %s201 = scalar_select %p200, %s16, 1
      %s202 = smul.addr %s201, 32
      %s203 = smul.addr %s202, 8
      %s204 = scalar_lea.vmem %s3, %s203
      %p205 = scmp.lt.s32.totalorder %s16, 1
      %s206 = scalar_select %p205, %s16, 1
      %s207 = smul.addr %s206, 2
      %s208 = scalar_lea.vmem %s4, %s207
      %v210 = vld [vmem:[%s199] sm:$0xff]
      %v211 = vld [vmem:[%s199 + $0x8] sm:$0xff]
      %v212 = vld [vmem:[%s199 + $0x10] sm:$0xff]
      %v213 = vld [vmem:[%s199 + $0x18] sm:$0xff]
      %v214 = vld [vmem:[%s199 + $0x20] sm:$0xff]
      %v215 = vld [vmem:[%s199 + $0x28] sm:$0xff]
      %v216 = vld [vmem:[%s199 + $0x30] sm:$0xff]
      %v217 = vld [vmem:[%s199 + $0x38] sm:$0xff]
      %v218 = vld [vmem:[%s199 + $0x40] sm:$0xff]
      %v219 = vld [vmem:[%s199 + $0x48] sm:$0xff]
      %v220 = vld [vmem:[%s199 + $0x50] sm:$0xff]
      %v221 = vld [vmem:[%s199 + $0x58] sm:$0xff]
      %v222 = vld [vmem:[%s199 + $0x60] sm:$0xff]
      %v223 = vld [vmem:[%s199 + $0x68] sm:$0xff]
      %v224 = vld [vmem:[%s199 + $0x70] sm:$0xff]
      %v225 = vld [vmem:[%s199 + $0x78] sm:$0xff]
      %v226 = vld [vmem:[%s199 + $0x80] sm:$0xff]
      %v227 = vld [vmem:[%s199 + $0x88] sm:$0xff]
      %v228 = vld [vmem:[%s199 + $0x90] sm:$0xff]
      %v229 = vld [vmem:[%s199 + $0x98] sm:$0xff]
      %v230 = vld [vmem:[%s199 + $0xa0] sm:$0xff]
      %v231 = vld [vmem:[%s199 + $0xa8] sm:$0xff]
      %v232 = vld [vmem:[%s199 + $0xb0] sm:$0xff]
      %v233 = vld [vmem:[%s199 + $0xb8] sm:$0xff]
      %v234 = vld [vmem:[%s199 + $0xc0] sm:$0xff]
      %v235 = vld [vmem:[%s199 + $0xc8] sm:$0xff]
      %v236 = vld [vmem:[%s199 + $0xd0] sm:$0xff]
      %v237 = vld [vmem:[%s199 + $0xd8] sm:$0xff]
      %v238 = vld [vmem:[%s199 + $0xe0] sm:$0xff]
      %v239 = vld [vmem:[%s199 + $0xe8] sm:$0xff]
      %v240 = vld [vmem:[%s199 + $0xf0] sm:$0xff]
      %v241 = vld [vmem:[%s199 + $0xf8] sm:$0xff]
      %v242 = vld [vmem:[%s1] sm:$0x1]
      %v243 = vlaneseq
      %v244 = vshrl.u32 %v243, 7
      %v245 = vsub.s32 0, %v244
      %v246 = vrot.slane %v242, %v245
      %v247 = vmul.f32 %v210, %v246
      %v248 = vmul.f32 %v211, %v246
      %v249 = vmul.f32 %v212, %v246
      %v250 = vmul.f32 %v213, %v246
      %v251 = vmul.f32 %v214, %v246
      %v252 = vmul.f32 %v215, %v246
      %v253 = vmul.f32 %v216, %v246
      %v254 = vmul.f32 %v217, %v246
      %v255 = vmul.f32 %v218, %v246
      %v256 = vmul.f32 %v219, %v246
      %v257 = vmul.f32 %v220, %v246
      %v258 = vmul.f32 %v221, %v246
      %v259 = vmul.f32 %v222, %v246
      %v260 = vmul.f32 %v223, %v246
      %v261 = vmul.f32 %v224, %v246
      %v262 = vmul.f32 %v225, %v246
      %v263 = vmul.f32 %v226, %v246
      %v264 = vmul.f32 %v227, %v246
      %v265 = vmul.f32 %v228, %v246
      %v266 = vmul.f32 %v229, %v246
      %v267 = vmul.f32 %v230, %v246
      %v268 = vmul.f32 %v231, %v246
      %v269 = vmul.f32 %v232, %v246
      %v270 = vmul.f32 %v233, %v246
      %v271 = vmul.f32 %v234, %v246
      %v272 = vmul.f32 %v235, %v246
      %v273 = vmul.f32 %v236, %v246
      %v274 = vmul.f32 %v237, %v246
      %v275 = vmul.f32 %v238, %v246
      %v276 = vmul.f32 %v239, %v246
      %v277 = vmul.f32 %v240, %v246
      %v278 = vmul.f32 %v241, %v246
      %v279 = vld [vmem:[%s1 + $0x1] sm:$0x1]
      %v280 = vlaneseq
      %v281 = vshrl.u32 %v280, 7
      %v282 = vsub.s32 0, %v281
      %v283 = vrot.slane %v279, %v282
      %v284 = vadd.f32 %v247, %v283
      %v285 = vadd.f32 %v248, %v283
      %v286 = vadd.f32 %v249, %v283
      %v287 = vadd.f32 %v250, %v283
      %v288 = vadd.f32 %v251, %v283
      %v289 = vadd.f32 %v252, %v283
      %v290 = vadd.f32 %v253, %v283
      %v291 = vadd.f32 %v254, %v283
      %v292 = vadd.f32 %v255, %v283
      %v293 = vadd.f32 %v256, %v283
      %v294 = vadd.f32 %v257, %v283
      %v295 = vadd.f32 %v258, %v283
      %v296 = vadd.f32 %v259, %v283
      %v297 = vadd.f32 %v260, %v283
      %v298 = vadd.f32 %v261, %v283
      %v299 = vadd.f32 %v262, %v283
      %v300 = vadd.f32 %v263, %v283
      %v301 = vadd.f32 %v264, %v283
      %v302 = vadd.f32 %v265, %v283
      %v303 = vadd.f32 %v266, %v283
      %v304 = vadd.f32 %v267, %v283
      %v305 = vadd.f32 %v268, %v283
      %v306 = vadd.f32 %v269, %v283
      %v307 = vadd.f32 %v270, %v283
      %v308 = vadd.f32 %v271, %v283
      %v309 = vadd.f32 %v272, %v283
      %v310 = vadd.f32 %v273, %v283
      %v311 = vadd.f32 %v274, %v283
      %v312 = vadd.f32 %v275, %v283
      %v313 = vadd.f32 %v276, %v283
      %v314 = vadd.f32 %v277, %v283
      %v315 = vadd.f32 %v278, %v283
      %v316 = vmax.f32 %v284, 0.0
      %v317 = vmax.f32 %v285, 0.0
      %v318 = vmax.f32 %v286, 0.0
      %v319 = vmax.f32 %v287, 0.0
      %v320 = vmax.f32 %v288, 0.0
      %v321 = vmax.f32 %v289, 0.0
      %v322 = vmax.f32 %v290, 0.0
      %v323 = vmax.f32 %v291, 0.0
      %v324 = vmax.f32 %v292, 0.0
      %v325 = vmax.f32 %v293, 0.0
      %v326 = vmax.f32 %v294, 0.0
      %v327 = vmax.f32 %v295, 0.0
      %v328 = vmax.f32 %v296, 0.0
      %v329 = vmax.f32 %v297, 0.0
      %v330 = vmax.f32 %v298, 0.0
      %v331 = vmax.f32 %v299, 0.0
      %v332 = vmax.f32 %v300, 0.0
      %v333 = vmax.f32 %v301, 0.0
      %v334 = vmax.f32 %v302, 0.0
      %v335 = vmax.f32 %v303, 0.0
      %v336 = vmax.f32 %v304, 0.0
      %v337 = vmax.f32 %v305, 0.0
      %v338 = vmax.f32 %v306, 0.0
      %v339 = vmax.f32 %v307, 0.0
      %v340 = vmax.f32 %v308, 0.0
      %v341 = vmax.f32 %v309, 0.0
      %v342 = vmax.f32 %v310, 0.0
      %v343 = vmax.f32 %v311, 0.0
      %v344 = vmax.f32 %v312, 0.0
      %v345 = vmax.f32 %v313, 0.0
      %v346 = vmax.f32 %v314, 0.0
      %v347 = vmax.f32 %v315, 0.0
      %348 = vst [vmem:[#allocation2] sm:$0xff] 0.0
      %349 = vst [vmem:[#allocation2 + $0x8] sm:$0xff] 0.0
      %350 = vst [vmem:[#allocation2 + $0x10] sm:$0x3] 0.0
      %s351 = scalar_lea.vmem [#allocation2], 408
      %352 = vst [vmem:[%s351] sm:$0xff] 0.0
      %353 = vst [vmem:[%s351 + $0x8] sm:$0xff] 0.0
      %354 = vst [vmem:[%s351 + $0x10] sm:$0x3] 0.0
      %s355 = scalar_lea.vmem [#allocation2], 24
      %356 = vst [vmem:[%s355] sm:$0x1] 0.0
      %357 = vst [vmem:[%s355 + $0x18] sm:$0x1] 0.0
      %358 = vst [vmem:[%s355 + $0x30] sm:$0x1] 0.0
      %359 = vst [vmem:[%s355 + $0x48] sm:$0x1] 0.0
      %360 = vst [vmem:[%s355 + $0x60] sm:$0x1] 0.0
      %361 = vst [vmem:[%s355 + $0x78] sm:$0x1] 0.0
      %362 = vst [vmem:[%s355 + $0x90] sm:$0x1] 0.0
      %363 = vst [vmem:[%s355 + $0xa8] sm:$0x1] 0.0
      %364 = vst [vmem:[%s355 + $0xc0] sm:$0x1] 0.0
      %365 = vst [vmem:[%s355 + $0xd8] sm:$0x1] 0.0
      %366 = vst [vmem:[%s355 + $0xf0] sm:$0x1] 0.0
      %367 = vst [vmem:[%s355 + $0x108] sm:$0x1] 0.0
      %368 = vst [vmem:[%s355 + $0x120] sm:$0x1] 0.0
      %369 = vst [vmem:[%s355 + $0x138] sm:$0x1] 0.0
      %370 = vst [vmem:[%s355 + $0x150] sm:$0x1] 0.0
      %371 = vst [vmem:[%s355 + $0x168] sm:$0x1] 0.0
      %372 = vst [vmem:[%s355 + $0x11] sm:$0x1] 0.0
      %373 = vst [vmem:[%s355 + $0x29] sm:$0x1] 0.0
      %374 = vst [vmem:[%s355 + $0x41] sm:$0x1] 0.0
      %375 = vst [vmem:[%s355 + $0x59] sm:$0x1] 0.0
      %376 = vst [vmem:[%s355 + $0x71] sm:$0x1] 0.0
      %377 = vst [vmem:[%s355 + $0x89] sm:$0x1] 0.0
      %378 = vst [vmem:[%s355 + $0xa1] sm:$0x1] 0.0
      %379 = vst [vmem:[%s355 + $0xb9] sm:$0x1] 0.0
      %380 = vst [vmem:[%s355 + $0xd1] sm:$0x1] 0.0
      %381 = vst [vmem:[%s355 + $0xe9] sm:$0x1] 0.0
      %382 = vst [vmem:[%s355 + $0x101] sm:$0x1] 0.0
      %383 = vst [vmem:[%s355 + $0x119] sm:$0x1] 0.0
      %384 = vst [vmem:[%s355 + $0x131] sm:$0x1] 0.0
      %385 = vst [vmem:[%s355 + $0x149] sm:$0x1] 0.0
      %386 = vst [vmem:[%s355 + $0x161] sm:$0x1] 0.0
      %387 = vst [vmem:[%s355 + $0x179] sm:$0x1] 0.0
      %388 = vst [vmem:[%s355 + $0x1] sm:$0xff] %v316
      %389 = vst [vmem:[%s355 + $0x9] sm:$0xff] %v317
      %390 = vst [vmem:[%s355 + $0x19] sm:$0xff] %v318
      %391 = vst [vmem:[%s355 + $0x21] sm:$0xff] %v319
      %392 = vst [vmem:[%s355 + $0x31] sm:$0xff] %v320
      %393 = vst [vmem:[%s355 + $0x39] sm:$0xff] %v321
      %394 = vst [vmem:[%s355 + $0x49] sm:$0xff] %v322
      %395 = vst [vmem:[%s355 + $0x51] sm:$0xff] %v323
      %396 = vst [vmem:[%s355 + $0x61] sm:$0xff] %v324
      %397 = vst [vmem:[%s355 + $0x69] sm:$0xff] %v325
      %398 = vst [vmem:[%s355 + $0x79] sm:$0xff] %v326
      %399 = vst [vmem:[%s355 + $0x81] sm:$0xff] %v327
      %400 = vst [vmem:[%s355 + $0x91] sm:$0xff] %v328
      %401 = vst [vmem:[%s355 + $0x99] sm:$0xff] %v329
      %402 = vst [vmem:[%s355 + $0xa9] sm:$0xff] %v330
      %403 = vst [vmem:[%s355 + $0xb1] sm:$0xff] %v331
      %404 = vst [vmem:[%s355 + $0xc1] sm:$0xff] %v332
      %405 = vst [vmem:[%s355 + $0xc9] sm:$0xff] %v333
      %406 = vst [vmem:[%s355 + $0xd9] sm:$0xff] %v334
      %407 = vst [vmem:[%s355 + $0xe1] sm:$0xff] %v335
      %408 = vst [vmem:[%s355 + $0xf1] sm:$0xff] %v336
      %409 = vst [vmem:[%s355 + $0xf9] sm:$0xff] %v337
      %410 = vst [vmem:[%s355 + $0x109] sm:$0xff] %v338
      %411 = vst [vmem:[%s355 + $0x111] sm:$0xff] %v339
      %412 = vst [vmem:[%s355 + $0x121] sm:$0xff] %v340
      %413 = vst [vmem:[%s355 + $0x129] sm:$0xff] %v341
      %414 = vst [vmem:[%s355 + $0x139] sm:$0xff] %v342
      %415 = vst [vmem:[%s355 + $0x141] sm:$0xff] %v343
      %416 = vst [vmem:[%s355 + $0x151] sm:$0xff] %v344
      %417 = vst [vmem:[%s355 + $0x159] sm:$0xff] %v345
      %418 = vst [vmem:[%s355 + $0x169] sm:$0xff] %v346
      %419 = vst [vmem:[%s355 + $0x171] sm:$0xff] %v347
      %v420 = vld [vmem:[#allocation2] sm:$0xff]
      %v421 = vld [vmem:[#allocation2 + $0x8] sm:$0xff]
      %v422 = vld [vmem:[#allocation2 + $0x18] sm:$0xff]
      %v423 = vld [vmem:[#allocation2 + $0x20] sm:$0xff]
      %v424 = vld [vmem:[#allocation2 + $0x30] sm:$0xff]
      %v425 = vld [vmem:[#allocation2 + $0x38] sm:$0xff]
      %v426 = vld [vmem:[#allocation2 + $0x48] sm:$0xff]
      %v427 = vld [vmem:[#allocation2 + $0x50] sm:$0xff]
      %v428 = vld [vmem:[#allocation2 + $0x60] sm:$0xff]
      %v429 = vld [vmem:[#allocation2 + $0x68] sm:$0xff]
      %v430 = vld [vmem:[#allocation2 + $0x78] sm:$0xff]
      %v431 = vld [vmem:[#allocation2 + $0x80] sm:$0xff]
      %v432 = vld [vmem:[#allocation2 + $0x90] sm:$0xff]
      %v433 = vld [vmem:[#allocation2 + $0x98] sm:$0xff]
      %v434 = vld [vmem:[#allocation2 + $0xa8] sm:$0xff]
      %v435 = vld [vmem:[#allocation2 + $0xb0] sm:$0xff]
      %v436 = vld [vmem:[#allocation2 + $0xc0] sm:$0xff]
      %v437 = vld [vmem:[#allocation2 + $0xc8] sm:$0xff]
      %v438 = vld [vmem:[#allocation2 + $0xd8] sm:$0xff]
      %v439 = vld [vmem:[#allocation2 + $0xe0] sm:$0xff]
      %v440 = vld [vmem:[#allocation2 + $0xf0] sm:$0xff]
      %v441 = vld [vmem:[#allocation2 + $0xf8] sm:$0xff]
      %v442 = vld [vmem:[#allocation2 + $0x108] sm:$0xff]
      %v443 = vld [vmem:[#allocation2 + $0x110] sm:$0xff]
      %v444 = vld [vmem:[#allocation2 + $0x120] sm:$0xff]
      %v445 = vld [vmem:[#allocation2 + $0x128] sm:$0xff]
      %v446 = vld [vmem:[#allocation2 + $0x138] sm:$0xff]
      %v447 = vld [vmem:[#allocation2 + $0x140] sm:$0xff]
      %v448 = vld [vmem:[#allocation2 + $0x150] sm:$0xff]
      %v449 = vld [vmem:[#allocation2 + $0x158] sm:$0xff]
      %v450 = vld [vmem:[#allocation2 + $0x168] sm:$0xff]
      %v451 = vld [vmem:[#allocation2 + $0x170] sm:$0xff]
      %v452 = vpack.c.bf16 %v421, %v420
      %v453 = vpack.c.bf16 %v423, %v422
      %v454 = vpack.c.bf16 %v425, %v424
      %v455 = vpack.c.bf16 %v427, %v426
      %v456 = vpack.c.bf16 %v429, %v428
      %v457 = vpack.c.bf16 %v431, %v430
      %v458 = vpack.c.bf16 %v433, %v432
      %v459 = vpack.c.bf16 %v435, %v434
      %v460 = vpack.c.bf16 %v437, %v436
      %v461 = vpack.c.bf16 %v439, %v438
      %v462 = vpack.c.bf16 %v441, %v440
      %v463 = vpack.c.bf16 %v443, %v442
      %v464 = vpack.c.bf16 %v445, %v444
      %v465 = vpack.c.bf16 %v447, %v446
      %v466 = vpack.c.bf16 %v449, %v448
      %v467 = vpack.c.bf16 %v451, %v450
      %468 = vst [vmem:[#allocation3] sm:$0xff] %v452
      %469 = vst [vmem:[#allocation3 + $0x48] sm:$0xff] %v453
      %470 = vst [vmem:[#allocation3 + $0x90] sm:$0xff] %v454
      %471 = vst [vmem:[#allocation3 + $0xd8] sm:$0xff] %v455
      %472 = vst [vmem:[#allocation3 + $0x120] sm:$0xff] %v456
      %473 = vst [vmem:[#allocation3 + $0x168] sm:$0xff] %v457
      %474 = vst [vmem:[#allocation3 + $0x1b0] sm:$0xff] %v458
      %475 = vst [vmem:[#allocation3 + $0x1f8] sm:$0xff] %v459
      %476 = vst [vmem:[#allocation3 + $0x240] sm:$0xff] %v460
      %477 = vst [vmem:[#allocation3 + $0x288] sm:$0xff] %v461
      %478 = vst [vmem:[#allocation3 + $0x2d0] sm:$0xff] %v462
      %479 = vst [vmem:[#allocation3 + $0x318] sm:$0xff] %v463
      %480 = vst [vmem:[#allocation3 + $0x360] sm:$0xff] %v464
      %481 = vst [vmem:[#allocation3 + $0x3a8] sm:$0xff] %v465
      %482 = vst [vmem:[#allocation3 + $0x3f0] sm:$0xff] %v466
      %483 = vst [vmem:[#allocation3 + $0x438] sm:$0xff] %v467
      %v484 = vld [vmem:[#allocation2 + $0x1] sm:$0xff]
      %v485 = vld [vmem:[#allocation2 + $0x9] sm:$0xff]
      %v486 = vld [vmem:[#allocation2 + $0x19] sm:$0xff]
      %v487 = vld [vmem:[#allocation2 + $0x21] sm:$0xff]
      %v488 = vld [vmem:[#allocation2 + $0x31] sm:$0xff]
      %v489 = vld [vmem:[#allocation2 + $0x39] sm:$0xff]
      %v490 = vld [vmem:[#allocation2 + $0x49] sm:$0xff]
      %v491 = vld [vmem:[#allocation2 + $0x51] sm:$0xff]
      %v492 = vld [vmem:[#allocation2 + $0x61] sm:$0xff]
      %v493 = vld [vmem:[#allocation2 + $0x69] sm:$0xff]
      %v494 = vld [vmem:[#allocation2 + $0x79] sm:$0xff]
      %v495 = vld [vmem:[#allocation2 + $0x81] sm:$0xff]
      %v496 = vld [vmem:[#allocation2 + $0x91] sm:$0xff]
      %v497 = vld [vmem:[#allocation2 + $0x99] sm:$0xff]
      %v498 = vld [vmem:[#allocation2 + $0xa9] sm:$0xff]
      %v499 = vld [vmem:[#allocation2 + $0xb1] sm:$0xff]
      %v500 = vld [vmem:[#allocation2 + $0xc1] sm:$0xff]
      %v501 = vld [vmem:[#allocation2 + $0xc9] sm:$0xff]
      %v502 = vld [vmem:[#allocation2 + $0xd9] sm:$0xff]
      %v503 = vld [vmem:[#allocation2 + $0xe1] sm:$0xff]
      %v504 = vld [vmem:[#allocation2 + $0xf1] sm:$0xff]
      %v505 = vld [vmem:[#allocation2 + $0xf9] sm:$0xff]
      %v506 = vld [vmem:[#allocation2 + $0x109] sm:$0xff]
      %v507 = vld [vmem:[#allocation2 + $0x111] sm:$0xff]
      %v508 = vld [vmem:[#allocation2 + $0x121] sm:$0xff]
      %v509 = vld [vmem:[#allocation2 + $0x129] sm:$0xff]
      %v510 = vld [vmem:[#allocation2 + $0x139] sm:$0xff]
      %v511 = vld [vmem:[#allocation2 + $0x141] sm:$0xff]
      %v512 = vld [vmem:[#allocation2 + $0x151] sm:$0xff]
      %v513 = vld [vmem:[#allocation2 + $0x159] sm:$0xff]
      %v514 = vld [vmem:[#allocation2 + $0x169] sm:$0xff]
      %v515 = vld [vmem:[#allocation2 + $0x171] sm:$0xff]
      %v516 = vpack.c.bf16 %v485, %v484
      %v517 = vpack.c.bf16 %v487, %v486
      %v518 = vpack.c.bf16 %v489, %v488
      %v519 = vpack.c.bf16 %v491, %v490
      %v520 = vpack.c.bf16 %v493, %v492
      %v521 = vpack.c.bf16 %v495, %v494
      %v522 = vpack.c.bf16 %v497, %v496
      %v523 = vpack.c.bf16 %v499, %v498
      %v524 = vpack.c.bf16 %v501, %v500
      %v525 = vpack.c.bf16 %v503, %v502
      %v526 = vpack.c.bf16 %v505, %v504
      %v527 = vpack.c.bf16 %v507, %v506
      %v528 = vpack.c.bf16 %v509, %v508
      %v529 = vpack.c.bf16 %v511, %v510
      %v530 = vpack.c.bf16 %v513, %v512
      %v531 = vpack.c.bf16 %v515, %v514
      %532 = vst [vmem:[#allocation3 + $0x8] sm:$0xff] %v516
      %533 = vst [vmem:[#allocation3 + $0x50] sm:$0xff] %v517
      %534 = vst [vmem:[#allocation3 + $0x98] sm:$0xff] %v518
      %535 = vst [vmem:[#allocation3 + $0xe0] sm:$0xff] %v519
      %536 = vst [vmem:[#allocation3 + $0x128] sm:$0xff] %v520
      %537 = vst [vmem:[#allocation3 + $0x170] sm:$0xff] %v521
      %538 = vst [vmem:[#allocation3 + $0x1b8] sm:$0xff] %v522
      %539 = vst [vmem:[#allocation3 + $0x200] sm:$0xff] %v523
      %540 = vst [vmem:[#allocation3 + $0x248] sm:$0xff] %v524
      %541 = vst [vmem:[#allocation3 + $0x290] sm:$0xff] %v525
      %542 = vst [vmem:[#allocation3 + $0x2d8] sm:$0xff] %v526
      %543 = vst [vmem:[#allocation3 + $0x320] sm:$0xff] %v527
      %544 = vst [vmem:[#allocation3 + $0x368] sm:$0xff] %v528
      %545 = vst [vmem:[#allocation3 + $0x3b0] sm:$0xff] %v529
      %546 = vst [vmem:[#allocation3 + $0x3f8] sm:$0xff] %v530
      %547 = vst [vmem:[#allocation3 + $0x440] sm:$0xff] %v531
      %v548 = vld [vmem:[#allocation2 + $0x2] sm:$0xff]
      %v549 = vld [vmem:[#allocation2 + $0xa] sm:$0xff]
      %v550 = vld [vmem:[#allocation2 + $0x1a] sm:$0xff]
      %v551 = vld [vmem:[#allocation2 + $0x22] sm:$0xff]
      %v552 = vld [vmem:[#allocation2 + $0x32] sm:$0xff]
      %v553 = vld [vmem:[#allocation2 + $0x3a] sm:$0xff]
      %v554 = vld [vmem:[#allocation2 + $0x4a] sm:$0xff]
      %v555 = vld [vmem:[#allocation2 + $0x52] sm:$0xff]
      %v556 = vld [vmem:[#allocation2 + $0x62] sm:$0xff]
      %v557 = vld [vmem:[#allocation2 + $0x6a] sm:$0xff]
      %v558 = vld [vmem:[#allocation2 + $0x7a] sm:$0xff]
      %v559 = vld [vmem:[#allocation2 + $0x82] sm:$0xff]
      %v560 = vld [vmem:[#allocation2 + $0x92] sm:$0xff]
      %v561 = vld [vmem:[#allocation2 + $0x9a] sm:$0xff]
      %v562 = vld [vmem:[#allocation2 + $0xaa] sm:$0xff]
      %v563 = vld [vmem:[#allocation2 + $0xb2] sm:$0xff]
      %v564 = vld [vmem:[#allocation2 + $0xc2] sm:$0xff]
      %v565 = vld [vmem:[#allocation2 + $0xca] sm:$0xff]
      %v566 = vld [vmem:[#allocation2 + $0xda] sm:$0xff]
      %v567 = vld [vmem:[#allocation2 + $0xe2] sm:$0xff]
      %v568 = vld [vmem:[#allocation2 + $0xf2] sm:$0xff]
      %v569 = vld [vmem:[#allocation2 + $0xfa] sm:$0xff]
      %v570 = vld [vmem:[#allocation2 + $0x10a] sm:$0xff]
      %v571 = vld [vmem:[#allocation2 + $0x112] sm:$0xff]
      %v572 = vld [vmem:[#allocation2 + $0x122] sm:$0xff]
      %v573 = vld [vmem:[#allocation2 + $0x12a] sm:$0xff]
      %v574 = vld [vmem:[#allocation2 + $0x13a] sm:$0xff]
      %v575 = vld [vmem:[#allocation2 + $0x142] sm:$0xff]
      %v576 = vld [vmem:[#allocation2 + $0x152] sm:$0xff]
      %v577 = vld [vmem:[#allocation2 + $0x15a] sm:$0xff]
      %v578 = vld [vmem:[#allocation2 + $0x16a] sm:$0xff]
      %v579 = vld [vmem:[#allocation2 + $0x172] sm:$0xff]
      %v580 = vpack.c.bf16 %v549, %v548
      %v581 = vpack.c.bf16 %v551, %v550
      %v582 = vpack.c.bf16 %v553, %v552
      %v583 = vpack.c.bf16 %v555, %v554
      %v584 = vpack.c.bf16 %v557, %v556
      %v585 = vpack.c.bf16 %v559, %v558
      %v586 = vpack.c.bf16 %v561, %v560
      %v587 = vpack.c.bf16 %v563, %v562
      %v588 = vpack.c.bf16 %v565, %v564
      %v589 = vpack.c.bf16 %v567, %v566
      %v590 = vpack.c.bf16 %v569, %v568
      %v591 = vpack.c.bf16 %v571, %v570
      %v592 = vpack.c.bf16 %v573, %v572
      %v593 = vpack.c.bf16 %v575, %v574
      %v594 = vpack.c.bf16 %v577, %v576
      %v595 = vpack.c.bf16 %v579, %v578
      %596 = vst [vmem:[#allocation3 + $0x10] sm:$0xff] %v580
      %597 = vst [vmem:[#allocation3 + $0x58] sm:$0xff] %v581
      %598 = vst [vmem:[#allocation3 + $0xa0] sm:$0xff] %v582
      %599 = vst [vmem:[#allocation3 + $0xe8] sm:$0xff] %v583
      %600 = vst [vmem:[#allocation3 + $0x130] sm:$0xff] %v584
      %601 = vst [vmem:[#allocation3 + $0x178] sm:$0xff] %v585
      %602 = vst [vmem:[#allocation3 + $0x1c0] sm:$0xff] %v586
      %603 = vst [vmem:[#allocation3 + $0x208] sm:$0xff] %v587
      %604 = vst [vmem:[#allocation3 + $0x250] sm:$0xff] %v588
      %605 = vst [vmem:[#allocation3 + $0x298] sm:$0xff] %v589
      %606 = vst [vmem:[#allocation3 + $0x2e0] sm:$0xff] %v590
      %607 = vst [vmem:[#allocation3 + $0x328] sm:$0xff] %v591
      %608 = vst [vmem:[#allocation3 + $0x370] sm:$0xff] %v592
      %609 = vst [vmem:[#allocation3 + $0x3b8] sm:$0xff] %v593
      %610 = vst [vmem:[#allocation3 + $0x400] sm:$0xff] %v594
      %611 = vst [vmem:[#allocation3 + $0x448] sm:$0xff] %v595
      %v612 = vld [vmem:[%s355] sm:$0xff]
      %v613 = vld [vmem:[%s355 + $0x8] sm:$0xff]
      %v614 = vld [vmem:[%s355 + $0x18] sm:$0xff]
      %v615 = vld [vmem:[%s355 + $0x20] sm:$0xff]
      %v616 = vld [vmem:[%s355 + $0x30] sm:$0xff]
      %v617 = vld [vmem:[%s355 + $0x38] sm:$0xff]
      %v618 = vld [vmem:[%s355 + $0x48] sm:$0xff]
      %v619 = vld [vmem:[%s355 + $0x50] sm:$0xff]
      %v620 = vld [vmem:[%s355 + $0x60] sm:$0xff]
      %v621 = vld [vmem:[%s355 + $0x68] sm:$0xff]
      %v622 = vld [vmem:[%s355 + $0x78] sm:$0xff]
      %v623 = vld [vmem:[%s355 + $0x80] sm:$0xff]
      %v624 = vld [vmem:[%s355 + $0x90] sm:$0xff]
      %v625 = vld [vmem:[%s355 + $0x98] sm:$0xff]
      %v626 = vld [vmem:[%s355 + $0xa8] sm:$0xff]
      %v627 = vld [vmem:[%s355 + $0xb0] sm:$0xff]
      %v628 = vld [vmem:[%s355 + $0xc0] sm:$0xff]
      %v629 = vld [vmem:[%s355 + $0xc8] sm:$0xff]
      %v630 = vld [vmem:[%s355 + $0xd8] sm:$0xff]
      %v631 = vld [vmem:[%s355 + $0xe0] sm:$0xff]
      %v632 = vld [vmem:[%s355 + $0xf0] sm:$0xff]
      %v633 = vld [vmem:[%s355 + $0xf8] sm:$0xff]
      %v634 = vld [vmem:[%s355 + $0x108] sm:$0xff]
      %v635 = vld [vmem:[%s355 + $0x110] sm:$0xff]
      %v636 = vld [vmem:[%s355 + $0x120] sm:$0xff]
      %v637 = vld [vmem:[%s355 + $0x128] sm:$0xff]
      %v638 = vld [vmem:[%s355 + $0x138] sm:$0xff]
      %v639 = vld [vmem:[%s355 + $0x140] sm:$0xff]
      %v640 = vld [vmem:[%s355 + $0x150] sm:$0xff]
      %v641 = vld [vmem:[%s355 + $0x158] sm:$0xff]
      %v642 = vld [vmem:[%s355 + $0x168] sm:$0xff]
      %v643 = vld [vmem:[%s355 + $0x170] sm:$0xff]
      %v644 = vpack.c.bf16 %v613, %v612
      %v645 = vpack.c.bf16 %v615, %v614
      %v646 = vpack.c.bf16 %v617, %v616
      %v647 = vpack.c.bf16 %v619, %v618
      %v648 = vpack.c.bf16 %v621, %v620
      %v649 = vpack.c.bf16 %v623, %v622
      %v650 = vpack.c.bf16 %v625, %v624
      %v651 = vpack.c.bf16 %v627, %v626
      %v652 = vpack.c.bf16 %v629, %v628
      %v653 = vpack.c.bf16 %v631, %v630
      %v654 = vpack.c.bf16 %v633, %v632
      %v655 = vpack.c.bf16 %v635, %v634
      %v656 = vpack.c.bf16 %v637, %v636
      %v657 = vpack.c.bf16 %v639, %v638
      %v658 = vpack.c.bf16 %v641, %v640
      %v659 = vpack.c.bf16 %v643, %v642
      %660 = vst [vmem:[#allocation3 + $0x18] sm:$0xff] %v644
      %661 = vst [vmem:[#allocation3 + $0x60] sm:$0xff] %v645
      %662 = vst [vmem:[#allocation3 + $0xa8] sm:$0xff] %v646
      %663 = vst [vmem:[#allocation3 + $0xf0] sm:$0xff] %v647
      %664 = vst [vmem:[#allocation3 + $0x138] sm:$0xff] %v648
      %665 = vst [vmem:[#allocation3 + $0x180] sm:$0xff] %v649
      %666 = vst [vmem:[#allocation3 + $0x1c8] sm:$0xff] %v650
      %667 = vst [vmem:[#allocation3 + $0x210] sm:$0xff] %v651
      %668 = vst [vmem:[#allocation3 + $0x258] sm:$0xff] %v652
      %669 = vst [vmem:[#allocation3 + $0x2a0] sm:$0xff] %v653
      %670 = vst [vmem:[#allocation3 + $0x2e8] sm:$0xff] %v654
      %671 = vst [vmem:[#allocation3 + $0x330] sm:$0xff] %v655
      %672 = vst [vmem:[#allocation3 + $0x378] sm:$0xff] %v656
      %673 = vst [vmem:[#allocation3 + $0x3c0] sm:$0xff] %v657
      %674 = vst [vmem:[#allocation3 + $0x408] sm:$0xff] %v658
      %675 = vst [vmem:[#allocation3 + $0x450] sm:$0xff] %v659
      %v676 = vld [vmem:[%s355 + $0x1] sm:$0xff]
      %v677 = vld [vmem:[%s355 + $0x9] sm:$0xff]
      %v678 = vld [vmem:[%s355 + $0x19] sm:$0xff]
      %v679 = vld [vmem:[%s355 + $0x21] sm:$0xff]
      %v680 = vld [vmem:[%s355 + $0x31] sm:$0xff]
      %v681 = vld [vmem:[%s355 + $0x39] sm:$0xff]
      %v682 = vld [vmem:[%s355 + $0x49] sm:$0xff]
      %v683 = vld [vmem:[%s355 + $0x51] sm:$0xff]
      %v684 = vld [vmem:[%s355 + $0x61] sm:$0xff]
      %v685 = vld [vmem:[%s355 + $0x69] sm:$0xff]
      %v686 = vld [vmem:[%s355 + $0x79] sm:$0xff]
      %v687 = vld [vmem:[%s355 + $0x81] sm:$0xff]
      %v688 = vld [vmem:[%s355 + $0x91] sm:$0xff]
      %v689 = vld [vmem:[%s355 + $0x99] sm:$0xff]
      %v690 = vld [vmem:[%s355 + $0xa9] sm:$0xff]
      %v691 = vld [vmem:[%s355 + $0xb1] sm:$0xff]
      %v692 = vld [vmem:[%s355 + $0xc1] sm:$0xff]
      %v693 = vld [vmem:[%s355 + $0xc9] sm:$0xff]
      %v694 = vld [vmem:[%s355 + $0xd9] sm:$0xff]
      %v695 = vld [vmem:[%s355 + $0xe1] sm:$0xff]
      %v696 = vld [vmem:[%s355 + $0xf1] sm:$0xff]
      %v697 = vld [vmem:[%s355 + $0xf9] sm:$0xff]
      %v698 = vld [vmem:[%s355 + $0x109] sm:$0xff]
      %v699 = vld [vmem:[%s355 + $0x111] sm:$0xff]
      %v700 = vld [vmem:[%s355 + $0x121] sm:$0xff]
      %v701 = vld [vmem:[%s355 + $0x129] sm:$0xff]
      %v702 = vld [vmem:[%s355 + $0x139] sm:$0xff]
      %v703 = vld [vmem:[%s355 + $0x141] sm:$0xff]
      %v704 = vld [vmem:[%s355 + $0x151] sm:$0xff]
      %v705 = vld [vmem:[%s355 + $0x159] sm:$0xff]
      %v706 = vld [vmem:[%s355 + $0x169] sm:$0xff]
      %v707 = vld [vmem:[%s355 + $0x171] sm:$0xff]
      %v708 = vpack.c.bf16 %v677, %v676
      %v709 = vpack.c.bf16 %v679, %v678
      %v710 = vpack.c.bf16 %v681, %v680
      %v711 = vpack.c.bf16 %v683, %v682
      %v712 = vpack.c.bf16 %v685, %v684
      %v713 = vpack.c.bf16 %v687, %v686
      %v714 = vpack.c.bf16 %v689, %v688
      %v715 = vpack.c.bf16 %v691, %v690
      %v716 = vpack.c.bf16 %v693, %v692
      %v717 = vpack.c.bf16 %v695, %v694
      %v718 = vpack.c.bf16 %v697, %v696
      %v719 = vpack.c.bf16 %v699, %v698
      %v720 = vpack.c.bf16 %v701, %v700
      %v721 = vpack.c.bf16 %v703, %v702
      %v722 = vpack.c.bf16 %v705, %v704
      %v723 = vpack.c.bf16 %v707, %v706
      %724 = vst [vmem:[#allocation3 + $0x20] sm:$0xff] %v708
      %725 = vst [vmem:[#allocation3 + $0x68] sm:$0xff] %v709
      %726 = vst [vmem:[#allocation3 + $0xb0] sm:$0xff] %v710
      %727 = vst [vmem:[#allocation3 + $0xf8] sm:$0xff] %v711
      %728 = vst [vmem:[#allocation3 + $0x140] sm:$0xff] %v712
      %729 = vst [vmem:[#allocation3 + $0x188] sm:$0xff] %v713
      %730 = vst [vmem:[#allocation3 + $0x1d0] sm:$0xff] %v714
      %731 = vst [vmem:[#allocation3 + $0x218] sm:$0xff] %v715
      %732 = vst [vmem:[#allocation3 + $0x260] sm:$0xff] %v716
      %733 = vst [vmem:[#allocation3 + $0x2a8] sm:$0xff] %v717
      %734 = vst [vmem:[#allocation3 + $0x2f0] sm:$0xff] %v718
      %735 = vst [vmem:[#allocation3 + $0x338] sm:$0xff] %v719
      %736 = vst [vmem:[#allocation3 + $0x380] sm:$0xff] %v720
      %737 = vst [vmem:[#allocation3 + $0x3c8] sm:$0xff] %v721
      %738 = vst [vmem:[#allocation3 + $0x410] sm:$0xff] %v722
      %739 = vst [vmem:[#allocation3 + $0x458] sm:$0xff] %v723
      %v740 = vld [vmem:[%s355 + $0x2] sm:$0xff]
      %v741 = vld [vmem:[%s355 + $0xa] sm:$0xff]
      %v742 = vld [vmem:[%s355 + $0x1a] sm:$0xff]
      %v743 = vld [vmem:[%s355 + $0x22] sm:$0xff]
      %v744 = vld [vmem:[%s355 + $0x32] sm:$0xff]
      %v745 = vld [vmem:[%s355 + $0x3a] sm:$0xff]
      %v746 = vld [vmem:[%s355 + $0x4a] sm:$0xff]
      %v747 = vld [vmem:[%s355 + $0x52] sm:$0xff]
      %v748 = vld [vmem:[%s355 + $0x62] sm:$0xff]
      %v749 = vld [vmem:[%s355 + $0x6a] sm:$0xff]
      %v750 = vld [vmem:[%s355 + $0x7a] sm:$0xff]
      %v751 = vld [vmem:[%s355 + $0x82] sm:$0xff]
      %v752 = vld [vmem:[%s355 + $0x92] sm:$0xff]
      %v753 = vld [vmem:[%s355 + $0x9a] sm:$0xff]
      %v754 = vld [vmem:[%s355 + $0xaa] sm:$0xff]
      %v755 = vld [vmem:[%s355 + $0xb2] sm:$0xff]
      %v756 = vld [vmem:[%s355 + $0xc2] sm:$0xff]
      %v757 = vld [vmem:[%s355 + $0xca] sm:$0xff]
      %v758 = vld [vmem:[%s355 + $0xda] sm:$0xff]
      %v759 = vld [vmem:[%s355 + $0xe2] sm:$0xff]
      %v760 = vld [vmem:[%s355 + $0xf2] sm:$0xff]
      %v761 = vld [vmem:[%s355 + $0xfa] sm:$0xff]
      %v762 = vld [vmem:[%s355 + $0x10a] sm:$0xff]
      %v763 = vld [vmem:[%s355 + $0x112] sm:$0xff]
      %v764 = vld [vmem:[%s355 + $0x122] sm:$0xff]
      %v765 = vld [vmem:[%s355 + $0x12a] sm:$0xff]
      %v766 = vld [vmem:[%s355 + $0x13a] sm:$0xff]
      %v767 = vld [vmem:[%s355 + $0x142] sm:$0xff]
      %v768 = vld [vmem:[%s355 + $0x152] sm:$0xff]
      %v769 = vld [vmem:[%s355 + $0x15a] sm:$0xff]
      %v770 = vld [vmem:[%s355 + $0x16a] sm:$0xff]
      %v771 = vld [vmem:[%s355 + $0x172] sm:$0xff]
      %v772 = vpack.c.bf16 %v741, %v740
      %v773 = vpack.c.bf16 %v743, %v742
      %v774 = vpack.c.bf16 %v745, %v744
      %v775 = vpack.c.bf16 %v747, %v746
      %v776 = vpack.c.bf16 %v749, %v748
      %v777 = vpack.c.bf16 %v751, %v750
      %v778 = vpack.c.bf16 %v753, %v752
      %v779 = vpack.c.bf16 %v755, %v754
      %v780 = vpack.c.bf16 %v757, %v756
      %v781 = vpack.c.bf16 %v759, %v758
      %v782 = vpack.c.bf16 %v761, %v760
      %v783 = vpack.c.bf16 %v763, %v762
      %v784 = vpack.c.bf16 %v765, %v764
      %v785 = vpack.c.bf16 %v767, %v766
      %v786 = vpack.c.bf16 %v769, %v768
      %v787 = vpack.c.bf16 %v771, %v770
      %788 = vst [vmem:[#allocation3 + $0x28] sm:$0xff] %v772
      %789 = vst [vmem:[#allocation3 + $0x70] sm:$0xff] %v773
      %790 = vst [vmem:[#allocation3 + $0xb8] sm:$0xff] %v774
      %791 = vst [vmem:[#allocation3 + $0x100] sm:$0xff] %v775
      %792 = vst [vmem:[#allocation3 + $0x148] sm:$0xff] %v776
      %793 = vst [vmem:[#allocation3 + $0x190] sm:$0xff] %v777
      %794 = vst [vmem:[#allocation3 + $0x1d8] sm:$0xff] %v778
      %795 = vst [vmem:[#allocation3 + $0x220] sm:$0xff] %v779
      %796 = vst [vmem:[#allocation3 + $0x268] sm:$0xff] %v780
      %797 = vst [vmem:[#allocation3 + $0x2b0] sm:$0xff] %v781
      %798 = vst [vmem:[#allocation3 + $0x2f8] sm:$0xff] %v782
      %799 = vst [vmem:[#allocation3 + $0x340] sm:$0xff] %v783
      %800 = vst [vmem:[#allocation3 + $0x388] sm:$0xff] %v784
      %801 = vst [vmem:[#allocation3 + $0x3d0] sm:$0xff] %v785
      %802 = vst [vmem:[#allocation3 + $0x418] sm:$0xff] %v786
      %803 = vst [vmem:[#allocation3 + $0x460] sm:$0xff] %v787
      %s804 = scalar_lea.vmem [#allocation2], 48
      %v805 = vld [vmem:[%s804] sm:$0xff]
      %v806 = vld [vmem:[%s804 + $0x8] sm:$0xff]
      %v807 = vld [vmem:[%s804 + $0x18] sm:$0xff]
      %v808 = vld [vmem:[%s804 + $0x20] sm:$0xff]
      %v809 = vld [vmem:[%s804 + $0x30] sm:$0xff]
      %v810 = vld [vmem:[%s804 + $0x38] sm:$0xff]
      %v811 = vld [vmem:[%s804 + $0x48] sm:$0xff]
      %v812 = vld [vmem:[%s804 + $0x50] sm:$0xff]
      %v813 = vld [vmem:[%s804 + $0x60] sm:$0xff]
      %v814 = vld [vmem:[%s804 + $0x68] sm:$0xff]
      %v815 = vld [vmem:[%s804 + $0x78] sm:$0xff]
      %v816 = vld [vmem:[%s804 + $0x80] sm:$0xff]
      %v817 = vld [vmem:[%s804 + $0x90] sm:$0xff]
      %v818 = vld [vmem:[%s804 + $0x98] sm:$0xff]
      %v819 = vld [vmem:[%s804 + $0xa8] sm:$0xff]
      %v820 = vld [vmem:[%s804 + $0xb0] sm:$0xff]
      %v821 = vld [vmem:[%s804 + $0xc0] sm:$0xff]
      %v822 = vld [vmem:[%s804 + $0xc8] sm:$0xff]
      %v823 = vld [vmem:[%s804 + $0xd8] sm:$0xff]
      %v824 = vld [vmem:[%s804 + $0xe0] sm:$0xff]
      %v825 = vld [vmem:[%s804 + $0xf0] sm:$0xff]
      %v826 = vld [vmem:[%s804 + $0xf8] sm:$0xff]
      %v827 = vld [vmem:[%s804 + $0x108] sm:$0xff]
      %v828 = vld [vmem:[%s804 + $0x110] sm:$0xff]
      %v829 = vld [vmem:[%s804 + $0x120] sm:$0xff]
      %v830 = vld [vmem:[%s804 + $0x128] sm:$0xff]
      %v831 = vld [vmem:[%s804 + $0x138] sm:$0xff]
      %v832 = vld [vmem:[%s804 + $0x140] sm:$0xff]
      %v833 = vld [vmem:[%s804 + $0x150] sm:$0xff]
      %v834 = vld [vmem:[%s804 + $0x158] sm:$0xff]
      %v835 = vld [vmem:[%s804 + $0x168] sm:$0xff]
      %v836 = vld [vmem:[%s804 + $0x170] sm:$0xff]
      %v837 = vpack.c.bf16 %v806, %v805
      %v838 = vpack.c.bf16 %v808, %v807
      %v839 = vpack.c.bf16 %v810, %v809
      %v840 = vpack.c.bf16 %v812, %v811
      %v841 = vpack.c.bf16 %v814, %v813
      %v842 = vpack.c.bf16 %v816, %v815
      %v843 = vpack.c.bf16 %v818, %v817
      %v844 = vpack.c.bf16 %v820, %v819
      %v845 = vpack.c.bf16 %v822, %v821
      %v846 = vpack.c.bf16 %v824, %v823
      %v847 = vpack.c.bf16 %v826, %v825
      %v848 = vpack.c.bf16 %v828, %v827
      %v849 = vpack.c.bf16 %v830, %v829
      %v850 = vpack.c.bf16 %v832, %v831
      %v851 = vpack.c.bf16 %v834, %v833
      %v852 = vpack.c.bf16 %v836, %v835
      %853 = vst [vmem:[#allocation3 + $0x30] sm:$0xff] %v837
      %854 = vst [vmem:[#allocation3 + $0x78] sm:$0xff] %v838
      %855 = vst [vmem:[#allocation3 + $0xc0] sm:$0xff] %v839
      %856 = vst [vmem:[#allocation3 + $0x108] sm:$0xff] %v840
      %857 = vst [vmem:[#allocation3 + $0x150] sm:$0xff] %v841
      %858 = vst [vmem:[#allocation3 + $0x198] sm:$0xff] %v842
      %859 = vst [vmem:[#allocation3 + $0x1e0] sm:$0xff] %v843
      %860 = vst [vmem:[#allocation3 + $0x228] sm:$0xff] %v844
      %861 = vst [vmem:[#allocation3 + $0x270] sm:$0xff] %v845
      %862 = vst [vmem:[#allocation3 + $0x2b8] sm:$0xff] %v846
      %863 = vst [vmem:[#allocation3 + $0x300] sm:$0xff] %v847
      %864 = vst [vmem:[#allocation3 + $0x348] sm:$0xff] %v848
      %865 = vst [vmem:[#allocation3 + $0x390] sm:$0xff] %v849
      %866 = vst [vmem:[#allocation3 + $0x3d8] sm:$0xff] %v850
      %867 = vst [vmem:[#allocation3 + $0x420] sm:$0xff] %v851
      %868 = vst [vmem:[#allocation3 + $0x468] sm:$0xff] %v852
      %v869 = vld [vmem:[%s804 + $0x1] sm:$0xff]
      %v870 = vld [vmem:[%s804 + $0x9] sm:$0xff]
      %v871 = vld [vmem:[%s804 + $0x19] sm:$0xff]
      %v872 = vld [vmem:[%s804 + $0x21] sm:$0xff]
      %v873 = vld [vmem:[%s804 + $0x31] sm:$0xff]
      %v874 = vld [vmem:[%s804 + $0x39] sm:$0xff]
      %v875 = vld [vmem:[%s804 + $0x49] sm:$0xff]
      %v876 = vld [vmem:[%s804 + $0x51] sm:$0xff]
      %v877 = vld [vmem:[%s804 + $0x61] sm:$0xff]
      %v878 = vld [vmem:[%s804 + $0x69] sm:$0xff]
      %v879 = vld [vmem:[%s804 + $0x79] sm:$0xff]
      %v880 = vld [vmem:[%s804 + $0x81] sm:$0xff]
      %v881 = vld [vmem:[%s804 + $0x91] sm:$0xff]
      %v882 = vld [vmem:[%s804 + $0x99] sm:$0xff]
      %v883 = vld [vmem:[%s804 + $0xa9] sm:$0xff]
      %v884 = vld [vmem:[%s804 + $0xb1] sm:$0xff]
      %v885 = vld [vmem:[%s804 + $0xc1] sm:$0xff]
      %v886 = vld [vmem:[%s804 + $0xc9] sm:$0xff]
      %v887 = vld [vmem:[%s804 + $0xd9] sm:$0xff]
      %v888 = vld [vmem:[%s804 + $0xe1] sm:$0xff]
      %v889 = vld [vmem:[%s804 + $0xf1] sm:$0xff]
      %v890 = vld [vmem:[%s804 + $0xf9] sm:$0xff]
      %v891 = vld [vmem:[%s804 + $0x109] sm:$0xff]
      %v892 = vld [vmem:[%s804 + $0x111] sm:$0xff]
      %v893 = vld [vmem:[%s804 + $0x121] sm:$0xff]
      %v894 = vld [vmem:[%s804 + $0x129] sm:$0xff]
      %v895 = vld [vmem:[%s804 + $0x139] sm:$0xff]
      %v896 = vld [vmem:[%s804 + $0x141] sm:$0xff]
      %v897 = vld [vmem:[%s804 + $0x151] sm:$0xff]
      %v898 = vld [vmem:[%s804 + $0x159] sm:$0xff]
      %v899 = vld [vmem:[%s804 + $0x169] sm:$0xff]
      %v900 = vld [vmem:[%s804 + $0x171] sm:$0xff]
      %v901 = vpack.c.bf16 %v870, %v869
      %v902 = vpack.c.bf16 %v872, %v871
      %v903 = vpack.c.bf16 %v874, %v873
      %v904 = vpack.c.bf16 %v876, %v875
      %v905 = vpack.c.bf16 %v878, %v877
      %v906 = vpack.c.bf16 %v880, %v879
      %v907 = vpack.c.bf16 %v882, %v881
      %v908 = vpack.c.bf16 %v884, %v883
      %v909 = vpack.c.bf16 %v886, %v885
      %v910 = vpack.c.bf16 %v888, %v887
      %v911 = vpack.c.bf16 %v890, %v889
      %v912 = vpack.c.bf16 %v892, %v891
      %v913 = vpack.c.bf16 %v894, %v893
      %v914 = vpack.c.bf16 %v896, %v895
      %v915 = vpack.c.bf16 %v898, %v897
      %v916 = vpack.c.bf16 %v900, %v899
      %917 = vst [vmem:[#allocation3 + $0x38] sm:$0xff] %v901
      %918 = vst [vmem:[#allocation3 + $0x80] sm:$0xff] %v902
      %919 = vst [vmem:[#allocation3 + $0xc8] sm:$0xff] %v903
      %920 = vst [vmem:[#allocation3 + $0x110] sm:$0xff] %v904
      %921 = vst [vmem:[#allocation3 + $0x158] sm:$0xff] %v905
      %922 = vst [vmem:[#allocation3 + $0x1a0] sm:$0xff] %v906
      %923 = vst [vmem:[#allocation3 + $0x1e8] sm:$0xff] %v907
      %924 = vst [vmem:[#allocation3 + $0x230] sm:$0xff] %v908
      %925 = vst [vmem:[#allocation3 + $0x278] sm:$0xff] %v909
      %926 = vst [vmem:[#allocation3 + $0x2c0] sm:$0xff] %v910
      %927 = vst [vmem:[#allocation3 + $0x308] sm:$0xff] %v911
      %928 = vst [vmem:[#allocation3 + $0x350] sm:$0xff] %v912
      %929 = vst [vmem:[#allocation3 + $0x398] sm:$0xff] %v913
      %930 = vst [vmem:[#allocation3 + $0x3e0] sm:$0xff] %v914
      %931 = vst [vmem:[#allocation3 + $0x428] sm:$0xff] %v915
      %932 = vst [vmem:[#allocation3 + $0x470] sm:$0xff] %v916
      %v933 = vld [vmem:[%s804 + $0x2] sm:$0xff]
      %v934 = vld [vmem:[%s804 + $0xa] sm:$0xff]
      %v935 = vld [vmem:[%s804 + $0x1a] sm:$0xff]
      %v936 = vld [vmem:[%s804 + $0x22] sm:$0xff]
      %v937 = vld [vmem:[%s804 + $0x32] sm:$0xff]
      %v938 = vld [vmem:[%s804 + $0x3a] sm:$0xff]
      %v939 = vld [vmem:[%s804 + $0x4a] sm:$0xff]
      %v940 = vld [vmem:[%s804 + $0x52] sm:$0xff]
      %v941 = vld [vmem:[%s804 + $0x62] sm:$0xff]
      %v942 = vld [vmem:[%s804 + $0x6a] sm:$0xff]
      %v943 = vld [vmem:[%s804 + $0x7a] sm:$0xff]
      %v944 = vld [vmem:[%s804 + $0x82] sm:$0xff]
      %v945 = vld [vmem:[%s804 + $0x92] sm:$0xff]
      %v946 = vld [vmem:[%s804 + $0x9a] sm:$0xff]
      %v947 = vld [vmem:[%s804 + $0xaa] sm:$0xff]
      %v948 = vld [vmem:[%s804 + $0xb2] sm:$0xff]
      %v949 = vld [vmem:[%s804 + $0xc2] sm:$0xff]
      %v950 = vld [vmem:[%s804 + $0xca] sm:$0xff]
      %v951 = vld [vmem:[%s804 + $0xda] sm:$0xff]
      %v952 = vld [vmem:[%s804 + $0xe2] sm:$0xff]
      %v953 = vld [vmem:[%s804 + $0xf2] sm:$0xff]
      %v954 = vld [vmem:[%s804 + $0xfa] sm:$0xff]
      %v955 = vld [vmem:[%s804 + $0x10a] sm:$0xff]
      %v956 = vld [vmem:[%s804 + $0x112] sm:$0xff]
      %v957 = vld [vmem:[%s804 + $0x122] sm:$0xff]
      %v958 = vld [vmem:[%s804 + $0x12a] sm:$0xff]
      %v959 = vld [vmem:[%s804 + $0x13a] sm:$0xff]
      %v960 = vld [vmem:[%s804 + $0x142] sm:$0xff]
      %v961 = vld [vmem:[%s804 + $0x152] sm:$0xff]
      %v962 = vld [vmem:[%s804 + $0x15a] sm:$0xff]
      %v963 = vld [vmem:[%s804 + $0x16a] sm:$0xff]
      %v964 = vld [vmem:[%s804 + $0x172] sm:$0xff]
      %v965 = vpack.c.bf16 %v934, %v933
      %v966 = vpack.c.bf16 %v936, %v935
      %v967 = vpack.c.bf16 %v938, %v937
      %v968 = vpack.c.bf16 %v940, %v939
      %v969 = vpack.c.bf16 %v942, %v941
      %v970 = vpack.c.bf16 %v944, %v943
      %v971 = vpack.c.bf16 %v946, %v945
      %v972 = vpack.c.bf16 %v948, %v947
      %v973 = vpack.c.bf16 %v950, %v949
      %v974 = vpack.c.bf16 %v952, %v951
      %v975 = vpack.c.bf16 %v954, %v953
      %v976 = vpack.c.bf16 %v956, %v955
      %v977 = vpack.c.bf16 %v958, %v957
      %v978 = vpack.c.bf16 %v960, %v959
      %v979 = vpack.c.bf16 %v962, %v961
      %v980 = vpack.c.bf16 %v964, %v963
      %981 = vst [vmem:[#allocation3 + $0x40] sm:$0xff] %v965
      %982 = vst [vmem:[#allocation3 + $0x88] sm:$0xff] %v966
      %983 = vst [vmem:[#allocation3 + $0xd0] sm:$0xff] %v967
      %984 = vst [vmem:[#allocation3 + $0x118] sm:$0xff] %v968
      %985 = vst [vmem:[#allocation3 + $0x160] sm:$0xff] %v969
      %986 = vst [vmem:[#allocation3 + $0x1a8] sm:$0xff] %v970
      %987 = vst [vmem:[#allocation3 + $0x1f0] sm:$0xff] %v971
      %988 = vst [vmem:[#allocation3 + $0x238] sm:$0xff] %v972
      %989 = vst [vmem:[#allocation3 + $0x280] sm:$0xff] %v973
      %990 = vst [vmem:[#allocation3 + $0x2c8] sm:$0xff] %v974
      %991 = vst [vmem:[#allocation3 + $0x310] sm:$0xff] %v975
      %992 = vst [vmem:[#allocation3 + $0x358] sm:$0xff] %v976
      %993 = vst [vmem:[#allocation3 + $0x3a0] sm:$0xff] %v977
      %994 = vst [vmem:[#allocation3 + $0x3e8] sm:$0xff] %v978
      %995 = vst [vmem:[#allocation3 + $0x430] sm:$0xff] %v979
      %996 = vst [vmem:[#allocation3 + $0x478] sm:$0xff] %v980
      %v997 = vld [vmem:[#allocation3] sm:$0xff]
      %v998 = vld [vmem:[#allocation3 + $0x8] sm:$0xff]
      %v999 = vld [vmem:[#allocation3 + $0x10] sm:$0xff]
      %v1000 = vld [vmem:[#allocation3 + $0x18] sm:$0xff]
      %v1001 = vld [vmem:[#allocation3 + $0x20] sm:$0xff]
      %v1002 = vld [vmem:[#allocation3 + $0x28] sm:$0xff]
      %v1003 = vld [vmem:[#allocation3 + $0x30] sm:$0xff]
      %v1004 = vld [vmem:[#allocation3 + $0x38] sm:$0xff]
      %v1005 = vld [vmem:[#allocation3 + $0x40] sm:$0xff]
      %v1006 = vld [vmem:[#allocation3 + $0x48] sm:$0xff]
      %v1007 = vld [vmem:[#allocation3 + $0x50] sm:$0xff]
      %v1008 = vld [vmem:[#allocation3 + $0x58] sm:$0xff]
      %v1009 = vld [vmem:[#allocation3 + $0x60] sm:$0xff]
      %v1010 = vld [vmem:[#allocation3 + $0x68] sm:$0xff]
      %v1011 = vld [vmem:[#allocation3 + $0x70] sm:$0xff]
      %v1012 = vld [vmem:[#allocation3 + $0x78] sm:$0xff]
      %v1013 = vld [vmem:[#allocation3 + $0x80] sm:$0xff]
      %v1014 = vld [vmem:[#allocation3 + $0x88] sm:$0xff]
      %v1015 = vld [vmem:[#allocation3 + $0x90] sm:$0xff]
      %v1016 = vld [vmem:[#allocation3 + $0x98] sm:$0xff]
      %v1017 = vld [vmem:[#allocation3 + $0xa0] sm:$0xff]
      %v1018 = vld [vmem:[#allocation3 + $0xa8] sm:$0xff]
      %v1019 = vld [vmem:[#allocation3 + $0xb0] sm:$0xff]
      %v1020 = vld [vmem:[#allocation3 + $0xb8] sm:$0xff]
      %v1021 = vld [vmem:[#allocation3 + $0xc0] sm:$0xff]
      %v1022 = vld [vmem:[#allocation3 + $0xc8] sm:$0xff]
      %v1023 = vld [vmem:[#allocation3 + $0xd0] sm:$0xff]
      %v1024 = vld [vmem:[#allocation3 + $0xd8] sm:$0xff]
      %v1025 = vld [vmem:[#allocation3 + $0xe0] sm:$0xff]
      %v1026 = vld [vmem:[#allocation3 + $0xe8] sm:$0xff]
      %v1027 = vld [vmem:[#allocation3 + $0xf0] sm:$0xff]
      %v1028 = vld [vmem:[#allocation3 + $0xf8] sm:$0xff]
      %v1029 = vld [vmem:[#allocation3 + $0x100] sm:$0xff]
      %v1030 = vld [vmem:[#allocation3 + $0x108] sm:$0xff]
      %v1031 = vld [vmem:[#allocation3 + $0x110] sm:$0xff]
      %v1032 = vld [vmem:[#allocation3 + $0x118] sm:$0xff]
      %v1033 = vld [vmem:[#allocation3 + $0x120] sm:$0xff]
      %v1034 = vld [vmem:[#allocation3 + $0x128] sm:$0xff]
      %v1035 = vld [vmem:[#allocation3 + $0x130] sm:$0xff]
      %v1036 = vld [vmem:[#allocation3 + $0x138] sm:$0xff]
      %v1037 = vld [vmem:[#allocation3 + $0x140] sm:$0xff]
      %v1038 = vld [vmem:[#allocation3 + $0x148] sm:$0xff]
      %v1039 = vld [vmem:[#allocation3 + $0x150] sm:$0xff]
      %v1040 = vld [vmem:[#allocation3 + $0x158] sm:$0xff]
      %v1041 = vld [vmem:[#allocation3 + $0x160] sm:$0xff]
      %v1042 = vld [vmem:[#allocation3 + $0x168] sm:$0xff]
      %v1043 = vld [vmem:[#allocation3 + $0x170] sm:$0xff]
      %v1044 = vld [vmem:[#allocation3 + $0x178] sm:$0xff]
      %v1045 = vld [vmem:[#allocation3 + $0x180] sm:$0xff]
      %v1046 = vld [vmem:[#allocation3 + $0x188] sm:$0xff]
      %v1047 = vld [vmem:[#allocation3 + $0x190] sm:$0xff]
      %v1048 = vld [vmem:[#allocation3 + $0x198] sm:$0xff]
      %v1049 = vld [vmem:[#allocation3 + $0x1a0] sm:$0xff]
      %v1050 = vld [vmem:[#allocation3 + $0x1a8] sm:$0xff]
      %v1051 = vld [vmem:[#allocation3 + $0x1b0] sm:$0xff]
      %v1052 = vld [vmem:[#allocation3 + $0x1b8] sm:$0xff]
      %v1053 = vld [vmem:[#allocation3 + $0x1c0] sm:$0xff]
      %v1054 = vld [vmem:[#allocation3 + $0x1c8] sm:$0xff]
      %v1055 = vld [vmem:[#allocation3 + $0x1d0] sm:$0xff]
      %v1056 = vld [vmem:[#allocation3 + $0x1d8] sm:$0xff]
      %v1057 = vld [vmem:[#allocation3 + $0x1e0] sm:$0xff]
      %v1058 = vld [vmem:[#allocation3 + $0x1e8] sm:$0xff]
      %v1059 = vld [vmem:[#allocation3 + $0x1f0] sm:$0xff]
      %v1060 = vld [vmem:[#allocation3 + $0x1f8] sm:$0xff]
      %v1061 = vld [vmem:[#allocation3 + $0x200] sm:$0xff]
      %v1062 = vld [vmem:[#allocation3 + $0x208] sm:$0xff]
      %v1063 = vld [vmem:[#allocation3 + $0x210] sm:$0xff]
      %v1064 = vld [vmem:[#allocation3 + $0x218] sm:$0xff]
      %v1065 = vld [vmem:[#allocation3 + $0x220] sm:$0xff]
      %v1066 = vld [vmem:[#allocation3 + $0x228] sm:$0xff]
      %v1067 = vld [vmem:[#allocation3 + $0x230] sm:$0xff]
      %v1068 = vld [vmem:[#allocation3 + $0x238] sm:$0xff]
      %v1069 = vld [vmem:[#allocation3 + $0x240] sm:$0xff]
      %v1070 = vld [vmem:[#allocation3 + $0x248] sm:$0xff]
      %v1071 = vld [vmem:[#allocation3 + $0x250] sm:$0xff]
      %v1072 = vld [vmem:[#allocation3 + $0x258] sm:$0xff]
      %v1073 = vld [vmem:[#allocation3 + $0x260] sm:$0xff]
      %v1074 = vld [vmem:[#allocation3 + $0x268] sm:$0xff]
      %v1075 = vld [vmem:[#allocation3 + $0x270] sm:$0xff]
      %v1076 = vld [vmem:[#allocation3 + $0x278] sm:$0xff]
      %v1077 = vld [vmem:[#allocation3 + $0x280] sm:$0xff]
      %v1078 = vld [vmem:[#allocation3 + $0x288] sm:$0xff]
      %v1079 = vld [vmem:[#allocation3 + $0x290] sm:$0xff]
      %v1080 = vld [vmem:[#allocation3 + $0x298] sm:$0xff]
      %v1081 = vld [vmem:[#allocation3 + $0x2a0] sm:$0xff]
      %v1082 = vld [vmem:[#allocation3 + $0x2a8] sm:$0xff]
      %v1083 = vld [vmem:[#allocation3 + $0x2b0] sm:$0xff]
      %v1084 = vld [vmem:[#allocation3 + $0x2b8] sm:$0xff]
      %v1085 = vld [vmem:[#allocation3 + $0x2c0] sm:$0xff]
      %v1086 = vld [vmem:[#allocation3 + $0x2c8] sm:$0xff]
      %v1087 = vld [vmem:[#allocation3 + $0x2d0] sm:$0xff]
      %v1088 = vld [vmem:[#allocation3 + $0x2d8] sm:$0xff]
      %v1089 = vld [vmem:[#allocation3 + $0x2e0] sm:$0xff]
      %v1090 = vld [vmem:[#allocation3 + $0x2e8] sm:$0xff]
      %v1091 = vld [vmem:[#allocation3 + $0x2f0] sm:$0xff]
      %v1092 = vld [vmem:[#allocation3 + $0x2f8] sm:$0xff]
      %v1093 = vld [vmem:[#allocation3 + $0x300] sm:$0xff]
      %v1094 = vld [vmem:[#allocation3 + $0x308] sm:$0xff]
      %v1095 = vld [vmem:[#allocation3 + $0x310] sm:$0xff]
      %v1096 = vld [vmem:[#allocation3 + $0x318] sm:$0xff]
      %v1097 = vld [vmem:[#allocation3 + $0x320] sm:$0xff]
      %v1098 = vld [vmem:[#allocation3 + $0x328] sm:$0xff]
      %v1099 = vld [vmem:[#allocation3 + $0x330] sm:$0xff]
      %v1100 = vld [vmem:[#allocation3 + $0x338] sm:$0xff]
      %v1101 = vld [vmem:[#allocation3 + $0x340] sm:$0xff]
      %v1102 = vld [vmem:[#allocation3 + $0x348] sm:$0xff]
      %v1103 = vld [vmem:[#allocation3 + $0x350] sm:$0xff]
      %v1104 = vld [vmem:[#allocation3 + $0x358] sm:$0xff]
      %v1105 = vld [vmem:[#allocation3 + $0x360] sm:$0xff]
      %v1106 = vld [vmem:[#allocation3 + $0x368] sm:$0xff]
      %v1107 = vld [vmem:[#allocation3 + $0x370] sm:$0xff]
      %v1108 = vld [vmem:[#allocation3 + $0x378] sm:$0xff]
      %v1109 = vld [vmem:[#allocation3 + $0x380] sm:$0xff]
      %v1110 = vld [vmem:[#allocation3 + $0x388] sm:$0xff]
      %v1111 = vld [vmem:[#allocation3 + $0x390] sm:$0xff]
      %v1112 = vld [vmem:[#allocation3 + $0x398] sm:$0xff]
      %v1113 = vld [vmem:[#allocation3 + $0x3a0] sm:$0xff]
      %v1114 = vld [vmem:[#allocation3 + $0x3a8] sm:$0xff]
      %v1115 = vld [vmem:[#allocation3 + $0x3b0] sm:$0xff]
      %v1116 = vld [vmem:[#allocation3 + $0x3b8] sm:$0xff]
      %v1117 = vld [vmem:[#allocation3 + $0x3c0] sm:$0xff]
      %v1118 = vld [vmem:[#allocation3 + $0x3c8] sm:$0xff]
      %v1119 = vld [vmem:[#allocation3 + $0x3d0] sm:$0xff]
      %v1120 = vld [vmem:[#allocation3 + $0x3d8] sm:$0xff]
      %v1121 = vld [vmem:[#allocation3 + $0x3e0] sm:$0xff]
      %v1122 = vld [vmem:[#allocation3 + $0x3e8] sm:$0xff]
      %v1123 = vld [vmem:[#allocation3 + $0x3f0] sm:$0xff]
      %v1124 = vld [vmem:[#allocation3 + $0x3f8] sm:$0xff]
      %v1125 = vld [vmem:[#allocation3 + $0x400] sm:$0xff]
      %v1126 = vld [vmem:[#allocation3 + $0x408] sm:$0xff]
      %v1127 = vld [vmem:[#allocation3 + $0x410] sm:$0xff]
      %v1128 = vld [vmem:[#allocation3 + $0x418] sm:$0xff]
      %v1129 = vld [vmem:[#allocation3 + $0x420] sm:$0xff]
      %v1130 = vld [vmem:[#allocation3 + $0x428] sm:$0xff]
      %v1131 = vld [vmem:[#allocation3 + $0x430] sm:$0xff]
      %v1132 = vld [vmem:[#allocation3 + $0x438] sm:$0xff]
      %v1133 = vld [vmem:[#allocation3 + $0x440] sm:$0xff]
      %v1134 = vld [vmem:[#allocation3 + $0x448] sm:$0xff]
      %v1135 = vld [vmem:[#allocation3 + $0x450] sm:$0xff]
      %v1136 = vld [vmem:[#allocation3 + $0x458] sm:$0xff]
      %v1137 = vld [vmem:[#allocation3 + $0x460] sm:$0xff]
      %v1138 = vld [vmem:[#allocation3 + $0x468] sm:$0xff]
      %v1139 = vld [vmem:[#allocation3 + $0x470] sm:$0xff]
      %v1140 = vld [vmem:[#allocation3 + $0x478] sm:$0xff]
      %v1141 = vld [vmem:[%s2] sm:$0xf]
      %v1142 = vld [vmem:[%s2 + $0x4] sm:$0xf]
      %v1143 = vld [vmem:[%s2 + $0x8] sm:$0xf]
      %v1144 = vld [vmem:[%s2 + $0xc] sm:$0xf]
      %v1145 = vld [vmem:[%s2 + $0x10] sm:$0xf]
      %v1146 = vld [vmem:[%s2 + $0x14] sm:$0xf]
      %v1147 = vld [vmem:[%s2 + $0x18] sm:$0xf]
      %v1148 = vld [vmem:[%s2 + $0x1c] sm:$0xf]
      %v1149 = vld [vmem:[%s2 + $0x20] sm:$0xf]
      %v1150 = vld [vmem:[%s2 + $0x24] sm:$0xf]
      %v1151 = vld [vmem:[%s2 + $0x28] sm:$0xf]
      %v1152 = vld [vmem:[%s2 + $0x2c] sm:$0xf]
      %v1153 = vld [vmem:[%s2 + $0x30] sm:$0xf]
      %v1154 = vld [vmem:[%s2 + $0x34] sm:$0xf]
      %v1155 = vld [vmem:[%s2 + $0x38] sm:$0xf]
      %v1156 = vld [vmem:[%s2 + $0x3c] sm:$0xf]
      %v1157 = vld [vmem:[%s2 + $0x40] sm:$0xf]
      %v1158 = vld [vmem:[%s2 + $0x44] sm:$0xf]
      %v1159 = vld [vmem:[%s2 + $0x48] sm:$0xf]
      %v1160 = vld [vmem:[%s2 + $0x4c] sm:$0xf]
      %v1161 = vld [vmem:[%s2 + $0x50] sm:$0xf]
      %v1162 = vld [vmem:[%s2 + $0x54] sm:$0xf]
      %v1163 = vld [vmem:[%s2 + $0x58] sm:$0xf]
      %v1164 = vld [vmem:[%s2 + $0x5c] sm:$0xf]
      %v1165 = vld [vmem:[%s2 + $0x60] sm:$0xf]
      %v1166 = vld [vmem:[%s2 + $0x64] sm:$0xf]
      %v1167 = vld [vmem:[%s2 + $0x68] sm:$0xf]
      %v1168 = vld [vmem:[%s2 + $0x6c] sm:$0xf]
      %v1169 = vld [vmem:[%s2 + $0x70] sm:$0xf]
      %v1170 = vld [vmem:[%s2 + $0x74] sm:$0xf]
      %v1171 = vld [vmem:[%s2 + $0x78] sm:$0xf]
      %v1172 = vld [vmem:[%s2 + $0x7c] sm:$0xf]
      %v1173 = vld [vmem:[%s2 + $0x80] sm:$0xf]
      %v1174 = vld [vmem:[%s2 + $0x84] sm:$0xf]
      %v1175 = vld [vmem:[%s2 + $0x88] sm:$0xf]
      %v1176 = vld [vmem:[%s2 + $0x8c] sm:$0xf]
      %v1177 = vld [vmem:[%s2 + $0x90] sm:$0xf]
      %v1178 = vld [vmem:[%s2 + $0x94] sm:$0xf]
      %v1179 = vld [vmem:[%s2 + $0x98] sm:$0xf]
      %v1180 = vld [vmem:[%s2 + $0x9c] sm:$0xf]
      %v1181 = vld [vmem:[%s2 + $0xa0] sm:$0xf]
      %v1182 = vld [vmem:[%s2 + $0xa4] sm:$0xf]
      %v1183 = vld [vmem:[%s2 + $0xa8] sm:$0xf]
      %v1184 = vld [vmem:[%s2 + $0xac] sm:$0xf]
      %v1185 = vld [vmem:[%s2 + $0xb0] sm:$0xf]
      %v1186 = vld [vmem:[%s2 + $0xb4] sm:$0xf]
      %v1187 = vld [vmem:[%s2 + $0xb8] sm:$0xf]
      %v1188 = vld [vmem:[%s2 + $0xbc] sm:$0xf]
      %v1189 = vld [vmem:[%s2 + $0xc0] sm:$0xf]
      %v1190 = vld [vmem:[%s2 + $0xc4] sm:$0xf]
      %v1191 = vld [vmem:[%s2 + $0xc8] sm:$0xf]
      %v1192 = vld [vmem:[%s2 + $0xcc] sm:$0xf]
      %v1193 = vld [vmem:[%s2 + $0xd0] sm:$0xf]
      %v1194 = vld [vmem:[%s2 + $0xd4] sm:$0xf]
      %v1195 = vld [vmem:[%s2 + $0xd8] sm:$0xf]
      %v1196 = vld [vmem:[%s2 + $0xdc] sm:$0xf]
      %v1197 = vld [vmem:[%s2 + $0xe0] sm:$0xf]
      %v1198 = vld [vmem:[%s2 + $0xe4] sm:$0xf]
      %v1199 = vld [vmem:[%s2 + $0xe8] sm:$0xf]
      %v1200 = vld [vmem:[%s2 + $0xec] sm:$0xf]
      %v1201 = vld [vmem:[%s2 + $0xf0] sm:$0xf]
      %v1202 = vld [vmem:[%s2 + $0xf4] sm:$0xf]
      %v1203 = vld [vmem:[%s2 + $0xf8] sm:$0xf]
      %v1204 = vld [vmem:[%s2 + $0xfc] sm:$0xf]
      %v1205 = vld [vmem:[%s2 + $0x100] sm:$0xf]
      %v1206 = vld [vmem:[%s2 + $0x104] sm:$0xf]
      %v1207 = vld [vmem:[%s2 + $0x108] sm:$0xf]
      %v1208 = vld [vmem:[%s2 + $0x10c] sm:$0xf]
      %v1209 = vld [vmem:[%s2 + $0x110] sm:$0xf]
      %v1210 = vld [vmem:[%s2 + $0x114] sm:$0xf]
      %v1211 = vld [vmem:[%s2 + $0x118] sm:$0xf]
      %v1212 = vld [vmem:[%s2 + $0x11c] sm:$0xf]
      %v1213 = vld [vmem:[%s2 + $0x120] sm:$0xf]
      %v1214 = vld [vmem:[%s2 + $0x124] sm:$0xf]
      %v1215 = vld [vmem:[%s2 + $0x128] sm:$0xf]
      %v1216 = vld [vmem:[%s2 + $0x12c] sm:$0xf]
      %v1217 = vld [vmem:[%s2 + $0x130] sm:$0xf]
      %v1218 = vld [vmem:[%s2 + $0x134] sm:$0xf]
      %v1219 = vld [vmem:[%s2 + $0x138] sm:$0xf]
      %v1220 = vld [vmem:[%s2 + $0x13c] sm:$0xf]
      %v1221 = vld [vmem:[%s2 + $0x140] sm:$0xf]
      %v1222 = vld [vmem:[%s2 + $0x144] sm:$0xf]
      %v1223 = vld [vmem:[%s2 + $0x148] sm:$0xf]
      %v1224 = vld [vmem:[%s2 + $0x14c] sm:$0xf]
      %v1225 = vld [vmem:[%s2 + $0x150] sm:$0xf]
      %v1226 = vld [vmem:[%s2 + $0x154] sm:$0xf]
      %v1227 = vld [vmem:[%s2 + $0x158] sm:$0xf]
      %v1228 = vld [vmem:[%s2 + $0x15c] sm:$0xf]
      %v1229 = vld [vmem:[%s2 + $0x160] sm:$0xf]
      %v1230 = vld [vmem:[%s2 + $0x164] sm:$0xf]
      %v1231 = vld [vmem:[%s2 + $0x168] sm:$0xf]
      %v1232 = vld [vmem:[%s2 + $0x16c] sm:$0xf]
      %v1233 = vld [vmem:[%s2 + $0x170] sm:$0xf]
      %v1234 = vld [vmem:[%s2 + $0x174] sm:$0xf]
      %v1235 = vld [vmem:[%s2 + $0x178] sm:$0xf]
      %v1236 = vld [vmem:[%s2 + $0x17c] sm:$0xf]
      %v1237 = vld [vmem:[%s2 + $0x180] sm:$0xf]
      %v1238 = vld [vmem:[%s2 + $0x184] sm:$0xf]
      %v1239 = vld [vmem:[%s2 + $0x188] sm:$0xf]
      %v1240 = vld [vmem:[%s2 + $0x18c] sm:$0xf]
      %v1241 = vld [vmem:[%s2 + $0x190] sm:$0xf]
      %v1242 = vld [vmem:[%s2 + $0x194] sm:$0xf]
      %v1243 = vld [vmem:[%s2 + $0x198] sm:$0xf]
      %v1244 = vld [vmem:[%s2 + $0x19c] sm:$0xf]
      %v1245 = vld [vmem:[%s2 + $0x1a0] sm:$0xf]
      %v1246 = vld [vmem:[%s2 + $0x1a4] sm:$0xf]
      %v1247 = vld [vmem:[%s2 + $0x1a8] sm:$0xf]
      %v1248 = vld [vmem:[%s2 + $0x1ac] sm:$0xf]
      %v1249 = vld [vmem:[%s2 + $0x1b0] sm:$0xf]
      %v1250 = vld [vmem:[%s2 + $0x1b4] sm:$0xf]
      %v1251 = vld [vmem:[%s2 + $0x1b8] sm:$0xf]
      %v1252 = vld [vmem:[%s2 + $0x1bc] sm:$0xf]
      %v1253 = vld [vmem:[%s2 + $0x1c0] sm:$0xf]
      %v1254 = vld [vmem:[%s2 + $0x1c4] sm:$0xf]
      %v1255 = vld [vmem:[%s2 + $0x1c8] sm:$0xf]
      %v1256 = vld [vmem:[%s2 + $0x1cc] sm:$0xf]
      %v1257 = vld [vmem:[%s2 + $0x1d0] sm:$0xf]
      %v1258 = vld [vmem:[%s2 + $0x1d4] sm:$0xf]
      %v1259 = vld [vmem:[%s2 + $0x1d8] sm:$0xf]
      %v1260 = vld [vmem:[%s2 + $0x1dc] sm:$0xf]
      %v1261 = vld [vmem:[%s2 + $0x1e0] sm:$0xf]
      %v1262 = vld [vmem:[%s2 + $0x1e4] sm:$0xf]
      %v1263 = vld [vmem:[%s2 + $0x1e8] sm:$0xf]
      %v1264 = vld [vmem:[%s2 + $0x1ec] sm:$0xf]
      %v1265 = vld [vmem:[%s2 + $0x1f0] sm:$0xf]
      %v1266 = vld [vmem:[%s2 + $0x1f4] sm:$0xf]
      %v1267 = vld [vmem:[%s2 + $0x1f8] sm:$0xf]
      %v1268 = vld [vmem:[%s2 + $0x1fc] sm:$0xf]
      %v1269 = vld [vmem:[%s2 + $0x200] sm:$0xf]
      %v1270 = vld [vmem:[%s2 + $0x204] sm:$0xf]
      %v1271 = vld [vmem:[%s2 + $0x208] sm:$0xf]
      %v1272 = vld [vmem:[%s2 + $0x20c] sm:$0xf]
      %v1273 = vld [vmem:[%s2 + $0x210] sm:$0xf]
      %v1274 = vld [vmem:[%s2 + $0x214] sm:$0xf]
      %v1275 = vld [vmem:[%s2 + $0x218] sm:$0xf]
      %v1276 = vld [vmem:[%s2 + $0x21c] sm:$0xf]
      %v1277 = vld [vmem:[%s2 + $0x220] sm:$0xf]
      %v1278 = vld [vmem:[%s2 + $0x224] sm:$0xf]
      %v1279 = vld [vmem:[%s2 + $0x228] sm:$0xf]
      %v1280 = vld [vmem:[%s2 + $0x22c] sm:$0xf]
      %v1281 = vld [vmem:[%s2 + $0x230] sm:$0xf]
      %v1282 = vld [vmem:[%s2 + $0x234] sm:$0xf]
      %v1283 = vld [vmem:[%s2 + $0x238] sm:$0xf]
      %v1284 = vld [vmem:[%s2 + $0x23c] sm:$0xf]
      %v1429 = vunpack.c.l.b16 %v1141
      %v1430 = vunpack.c.l.b16 %v1142
      %v1431 = vunpack.c.l.b16 %v1143
      %v1432 = vunpack.c.l.b16 %v1144
      %v1433 = vunpack.c.l.b16 %v1145
      %v1434 = vunpack.c.l.b16 %v1146
      %v1435 = vunpack.c.l.b16 %v1147
      %v1436 = vunpack.c.l.b16 %v1148
      %v1437 = vunpack.c.l.b16 %v1149
      %v1438 = vunpack.c.l.b16 %v1150
      %v1439 = vunpack.c.l.b16 %v1151
      %v1440 = vunpack.c.l.b16 %v1152
      %v1441 = vunpack.c.l.b16 %v1153
      %v1442 = vunpack.c.l.b16 %v1154
      %v1443 = vunpack.c.l.b16 %v1155
      %v1444 = vunpack.c.l.b16 %v1156
      %v1445 = vunpack.c.l.b16 %v1157
      %v1446 = vunpack.c.l.b16 %v1158
      %v1447 = vunpack.c.l.b16 %v1159
      %v1448 = vunpack.c.l.b16 %v1160
      %v1449 = vunpack.c.l.b16 %v1161
      %v1450 = vunpack.c.l.b16 %v1162
      %v1451 = vunpack.c.l.b16 %v1163
      %v1452 = vunpack.c.l.b16 %v1164
      %v1453 = vunpack.c.l.b16 %v1165
      %v1454 = vunpack.c.l.b16 %v1166
      %v1455 = vunpack.c.l.b16 %v1167
      %v1456 = vunpack.c.l.b16 %v1168
      %v1457 = vunpack.c.l.b16 %v1169
      %v1458 = vunpack.c.l.b16 %v1170
      %v1459 = vunpack.c.l.b16 %v1171
      %v1460 = vunpack.c.l.b16 %v1172
      %v1461 = vunpack.c.l.b16 %v1173
      %v1462 = vunpack.c.l.b16 %v1174
      %v1463 = vunpack.c.l.b16 %v1175
      %v1464 = vunpack.c.l.b16 %v1176
      %v1465 = vunpack.c.l.b16 %v1177
      %v1466 = vunpack.c.l.b16 %v1178
      %v1467 = vunpack.c.l.b16 %v1179
      %v1468 = vunpack.c.l.b16 %v1180
      %v1469 = vunpack.c.l.b16 %v1181
      %v1470 = vunpack.c.l.b16 %v1182
      %v1471 = vunpack.c.l.b16 %v1183
      %v1472 = vunpack.c.l.b16 %v1184
      %v1473 = vunpack.c.l.b16 %v1185
      %v1474 = vunpack.c.l.b16 %v1186
      %v1475 = vunpack.c.l.b16 %v1187
      %v1476 = vunpack.c.l.b16 %v1188
      %v1477 = vunpack.c.l.b16 %v1189
      %v1478 = vunpack.c.l.b16 %v1190
      %v1479 = vunpack.c.l.b16 %v1191
      %v1480 = vunpack.c.l.b16 %v1192
      %v1481 = vunpack.c.l.b16 %v1193
      %v1482 = vunpack.c.l.b16 %v1194
      %v1483 = vunpack.c.l.b16 %v1195
      %v1484 = vunpack.c.l.b16 %v1196
      %v1485 = vunpack.c.l.b16 %v1197
      %v1486 = vunpack.c.l.b16 %v1198
      %v1487 = vunpack.c.l.b16 %v1199
      %v1488 = vunpack.c.l.b16 %v1200
      %v1489 = vunpack.c.l.b16 %v1201
      %v1490 = vunpack.c.l.b16 %v1202
      %v1491 = vunpack.c.l.b16 %v1203
      %v1492 = vunpack.c.l.b16 %v1204
      %v1493 = vunpack.c.l.b16 %v1205
      %v1494 = vunpack.c.l.b16 %v1206
      %v1495 = vunpack.c.l.b16 %v1207
      %v1496 = vunpack.c.l.b16 %v1208
      %v1497 = vunpack.c.l.b16 %v1209
      %v1498 = vunpack.c.l.b16 %v1210
      %v1499 = vunpack.c.l.b16 %v1211
      %v1500 = vunpack.c.l.b16 %v1212
      %v1501 = vunpack.c.l.b16 %v1213
      %v1502 = vunpack.c.l.b16 %v1214
      %v1503 = vunpack.c.l.b16 %v1215
      %v1504 = vunpack.c.l.b16 %v1216
      %v1505 = vunpack.c.l.b16 %v1217
      %v1506 = vunpack.c.l.b16 %v1218
      %v1507 = vunpack.c.l.b16 %v1219
      %v1508 = vunpack.c.l.b16 %v1220
      %v1509 = vunpack.c.l.b16 %v1221
      %v1510 = vunpack.c.l.b16 %v1222
      %v1511 = vunpack.c.l.b16 %v1223
      %v1512 = vunpack.c.l.b16 %v1224
      %v1513 = vunpack.c.l.b16 %v1225
      %v1514 = vunpack.c.l.b16 %v1226
      %v1515 = vunpack.c.l.b16 %v1227
      %v1516 = vunpack.c.l.b16 %v1228
      %v1517 = vunpack.c.l.b16 %v1229
      %v1518 = vunpack.c.l.b16 %v1230
      %v1519 = vunpack.c.l.b16 %v1231
      %v1520 = vunpack.c.l.b16 %v1232
      %v1521 = vunpack.c.l.b16 %v1233
      %v1522 = vunpack.c.l.b16 %v1234
      %v1523 = vunpack.c.l.b16 %v1235
      %v1524 = vunpack.c.l.b16 %v1236
      %v1525 = vunpack.c.l.b16 %v1237
      %v1526 = vunpack.c.l.b16 %v1238
      %v1527 = vunpack.c.l.b16 %v1239
      %v1528 = vunpack.c.l.b16 %v1240
      %v1529 = vunpack.c.l.b16 %v1241
      %v1530 = vunpack.c.l.b16 %v1242
      %v1531 = vunpack.c.l.b16 %v1243
      %v1532 = vunpack.c.l.b16 %v1244
      %v1533 = vunpack.c.l.b16 %v1245
      %v1534 = vunpack.c.l.b16 %v1246
      %v1535 = vunpack.c.l.b16 %v1247
      %v1536 = vunpack.c.l.b16 %v1248
      %v1537 = vunpack.c.l.b16 %v1249
      %v1538 = vunpack.c.l.b16 %v1250
      %v1539 = vunpack.c.l.b16 %v1251
      %v1540 = vunpack.c.l.b16 %v1252
      %v1541 = vunpack.c.l.b16 %v1253
      %v1542 = vunpack.c.l.b16 %v1254
      %v1543 = vunpack.c.l.b16 %v1255
      %v1544 = vunpack.c.l.b16 %v1256
      %v1545 = vunpack.c.l.b16 %v1257
      %v1546 = vunpack.c.l.b16 %v1258
      %v1547 = vunpack.c.l.b16 %v1259
      %v1548 = vunpack.c.l.b16 %v1260
      %v1549 = vunpack.c.l.b16 %v1261
      %v1550 = vunpack.c.l.b16 %v1262
      %v1551 = vunpack.c.l.b16 %v1263
      %v1552 = vunpack.c.l.b16 %v1264
      %v1553 = vunpack.c.l.b16 %v1265
      %v1554 = vunpack.c.l.b16 %v1266
      %v1555 = vunpack.c.l.b16 %v1267
      %v1556 = vunpack.c.l.b16 %v1268
      %v1557 = vunpack.c.l.b16 %v1269
      %v1558 = vunpack.c.l.b16 %v1270
      %v1559 = vunpack.c.l.b16 %v1271
      %v1560 = vunpack.c.l.b16 %v1272
      %v1561 = vunpack.c.l.b16 %v1273
      %v1562 = vunpack.c.l.b16 %v1274
      %v1563 = vunpack.c.l.b16 %v1275
      %v1564 = vunpack.c.l.b16 %v1276
      %v1565 = vunpack.c.l.b16 %v1277
      %v1566 = vunpack.c.l.b16 %v1278
      %v1567 = vunpack.c.l.b16 %v1279
      %v1568 = vunpack.c.l.b16 %v1280
      %v1569 = vunpack.c.l.b16 %v1281
      %v1570 = vunpack.c.l.b16 %v1282
      %v1571 = vunpack.c.l.b16 %v1283
      %v1572 = vunpack.c.l.b16 %v1284
      %v1573 = vpack.c.b16 %v1430, %v1429
      %v1574 = vpack.c.b16 %v1432, %v1431
      %v1575 = vpack.c.b16 %v1434, %v1433
      %v1576 = vpack.c.b16 %v1436, %v1435
      %v1577 = vpack.c.b16 %v1438, %v1437
      %v1578 = vpack.c.b16 %v1440, %v1439
      %v1579 = vpack.c.b16 %v1442, %v1441
      %v1580 = vpack.c.b16 %v1444, %v1443
      %v1581 = vpack.c.b16 %v1446, %v1445
      %v1582 = vpack.c.b16 %v1448, %v1447
      %v1583 = vpack.c.b16 %v1450, %v1449
      %v1584 = vpack.c.b16 %v1452, %v1451
      %v1585 = vpack.c.b16 %v1454, %v1453
      %v1586 = vpack.c.b16 %v1456, %v1455
      %v1587 = vpack.c.b16 %v1458, %v1457
      %v1588 = vpack.c.b16 %v1460, %v1459
      %v1589 = vpack.c.b16 %v1462, %v1461
      %v1590 = vpack.c.b16 %v1464, %v1463
      %v1591 = vpack.c.b16 %v1466, %v1465
      %v1592 = vpack.c.b16 %v1468, %v1467
      %v1593 = vpack.c.b16 %v1470, %v1469
      %v1594 = vpack.c.b16 %v1472, %v1471
      %v1595 = vpack.c.b16 %v1474, %v1473
      %v1596 = vpack.c.b16 %v1476, %v1475
      %v1597 = vpack.c.b16 %v1478, %v1477
      %v1598 = vpack.c.b16 %v1480, %v1479
      %v1599 = vpack.c.b16 %v1482, %v1481
      %v1600 = vpack.c.b16 %v1484, %v1483
      %v1601 = vpack.c.b16 %v1486, %v1485
      %v1602 = vpack.c.b16 %v1488, %v1487
      %v1603 = vpack.c.b16 %v1490, %v1489
      %v1604 = vpack.c.b16 %v1492, %v1491
      %v1605 = vpack.c.b16 %v1494, %v1493
      %v1606 = vpack.c.b16 %v1496, %v1495
      %v1607 = vpack.c.b16 %v1498, %v1497
      %v1608 = vpack.c.b16 %v1500, %v1499
      %v1609 = vpack.c.b16 %v1502, %v1501
      %v1610 = vpack.c.b16 %v1504, %v1503
      %v1611 = vpack.c.b16 %v1506, %v1505
      %v1612 = vpack.c.b16 %v1508, %v1507
      %v1613 = vpack.c.b16 %v1510, %v1509
      %v1614 = vpack.c.b16 %v1512, %v1511
      %v1615 = vpack.c.b16 %v1514, %v1513
      %v1616 = vpack.c.b16 %v1516, %v1515
      %v1617 = vpack.c.b16 %v1518, %v1517
      %v1618 = vpack.c.b16 %v1520, %v1519
      %v1619 = vpack.c.b16 %v1522, %v1521
      %v1620 = vpack.c.b16 %v1524, %v1523
      %v1621 = vpack.c.b16 %v1526, %v1525
      %v1622 = vpack.c.b16 %v1528, %v1527
      %v1623 = vpack.c.b16 %v1530, %v1529
      %v1624 = vpack.c.b16 %v1532, %v1531
      %v1625 = vpack.c.b16 %v1534, %v1533
      %v1626 = vpack.c.b16 %v1536, %v1535
      %v1627 = vpack.c.b16 %v1538, %v1537
      %v1628 = vpack.c.b16 %v1540, %v1539
      %v1629 = vpack.c.b16 %v1542, %v1541
      %v1630 = vpack.c.b16 %v1544, %v1543
      %v1631 = vpack.c.b16 %v1546, %v1545
      %v1632 = vpack.c.b16 %v1548, %v1547
      %v1633 = vpack.c.b16 %v1550, %v1549
      %v1634 = vpack.c.b16 %v1552, %v1551
      %v1635 = vpack.c.b16 %v1554, %v1553
      %v1636 = vpack.c.b16 %v1556, %v1555
      %v1637 = vpack.c.b16 %v1558, %v1557
      %v1638 = vpack.c.b16 %v1560, %v1559
      %v1639 = vpack.c.b16 %v1562, %v1561
      %v1640 = vpack.c.b16 %v1564, %v1563
      %v1641 = vpack.c.b16 %v1566, %v1565
      %v1642 = vpack.c.b16 %v1568, %v1567
      %v1643 = vpack.c.b16 %v1570, %v1569
      %v1644 = vpack.c.b16 %v1572, %v1571
      %1717 = vmatprep.subr.bf16.mxu0 0
      %1718 = vmatpush1.bf16.msra.mxu0 %v1573
      %1719 = vmatprep.subr.bf16.mxu0 0
      %1720 = vmatpush1.bf16.msra.mxu0 %v1574
      %1721 = vmatprep.subr.bf16.mxu0 0
      %1722 = vmatpush1.bf16.msra.mxu0 %v1575
      %1723 = vmatprep.subr.bf16.mxu0 0
      %1724 = vmatpush1.bf16.msra.mxu0 %v1576
      %1725 = vmatprep.subr.bf16.mxu0 0
      %1726 = vmatpush1.bf16.msra.mxu0 %v1577
      %1727 = vmatprep.subr.bf16.mxu0 0
      %1728 = vmatpush1.bf16.msra.mxu0 %v1578
      %1729 = vmatprep.subr.bf16.mxu0 0
      %1730 = vmatpush1.bf16.msra.mxu0 %v1579
      %1731 = vmatprep.subr.bf16.mxu0 0
      %1732 = vmatpush1.bf16.msra.mxu0 %v1580
      %1733 = vmatprep.subr.bf16.mxu0 0
      %1734 = vmatpush1.bf16.msra.mxu0 %v1581
      %1735 = vmatprep.subr.bf16.mxu0 0
      %1736 = vmatpush1.bf16.msra.mxu0 %v1582
      %1737 = vmatprep.subr.bf16.mxu0 0
      %1738 = vmatpush1.bf16.msra.mxu0 %v1583
      %1739 = vmatprep.subr.bf16.mxu0 0
      %1740 = vmatpush1.bf16.msra.mxu0 %v1584
      %1741 = vmatprep.subr.bf16.mxu0 0
      %1742 = vmatpush1.bf16.msra.mxu0 %v1585
      %1743 = vmatprep.subr.bf16.mxu0 0
      %1744 = vmatpush1.bf16.msra.mxu0 %v1586
      %1745 = vmatprep.subr.bf16.mxu0 0
      %1746 = vmatpush1.bf16.msra.mxu0 %v1587
      %1747 = vmatprep.subr.bf16.mxu0 0
      %1748 = vmatpush1.bf16.msra.mxu0 %v1588
      %1749 = vmatprep.mubr.bf16.mxu0 %v998
      %1750 = vmatmul.mubr.bf16.gmra.mrb[0].mxu0 %v997
      %v1751 = vpop.f32.mrb[0].mxu0
      %v1752 = vadd.f32 0.0, %v1751
      %v1753 = vpop.f32.mrb[0].mxu0
      %v1754 = vpop.f32.mrb[0].mxu0
      %v1755 = vadd.f32 0.0, %v1754
      %v1756 = vpop.f32.mrb[0].mxu0
      %1757 = vmatprep.mubr.bf16.mxu0 %v1007
      %1758 = vmatmul.mubr.bf16.gmra.mrb[0].mxu0 %v1006
      %v1759 = vpop.f32.mrb[0].mxu0
      %v1760 = vadd.f32 0.0, %v1759
      %v1761 = vpop.f32.mrb[0].mxu0
      %v1762 = vpop.f32.mrb[0].mxu0
      %v1763 = vadd.f32 0.0, %v1762
      %v1764 = vpop.f32.mrb[0].mxu0
      %1765 = vmatprep.mubr.bf16.mxu0 %v1016
      %1766 = vmatmul.mubr.bf16.gmra.mrb[0].mxu0 %v1015
      %v1767 = vpop.f32.mrb[0].mxu0
      %v1768 = vadd.f32 0.0, %v1767
      %v1769 = vpop.f32.mrb[0].mxu0
      %v1770 = vpop.f32.mrb[0].mxu0
      %v1771 = vadd.f32 0.0, %v1770
      %v1772 = vpop.f32.mrb[0].mxu0
      %1773 = vmatprep.mubr.bf16.mxu0 %v1025
      %1774 = vmatmul.mubr.bf16.gmra.mrb[0].mxu0 %v1024
      %v1775 = vpop.f32.mrb[0].mxu0
      %v1776 = vadd.f32 0.0, %v1775
      %v1777 = vpop.f32.mrb[0].mxu0
      %v1778 = vpop.f32.mrb[0].mxu0
      %v1779 = vadd.f32 0.0, %v1778
      %v1780 = vpop.f32.mrb[0].mxu0
      %1781 = vmatprep.mubr.bf16.mxu0 %v1034
      %1782 = vmatmul.mubr.bf16.gmra.mrb[0].mxu0 %v1033
      %v1783 = vpop.f32.mrb[0].mxu0
      %v1784 = vadd.f32 0.0, %v1783
      %v1785 = vpop.f32.mrb[0].mxu0
      %v1786 = vpop.f32.mrb[0].mxu0
      %v1787 = vadd.f32 0.0, %v1786
      %v1788 = vpop.f32.mrb[0].mxu0
      %1789 = vmatprep.mubr.bf16.mxu0 %v1043
      %1790 = vmatmul.mubr.bf16.gmra.mrb[0].mxu0 %v1042
      %v1791 = vpop.f32.mrb[0].mxu0
      %v1792 = vadd.f32 0.0, %v1791
      %v1793 = vpop.f32.mrb[0].mxu0
      %v1794 = vpop.f32.mrb[0].mxu0
      %v1795 = vadd.f32 0.0, %v1794
      %v1796 = vpop.f32.mrb[0].mxu0
      %1797 = vmatprep.mubr.bf16.mxu0 %v1052
      %1798 = vmatmul.mubr.bf16.gmra.mrb[0].mxu0 %v1051
      %v1799 = vpop.f32.mrb[0].mxu0
      %v1800 = vadd.f32 0.0, %v1799
      %v1801 = vpop.f32.mrb[0].mxu0
      %v1802 = vpop.f32.mrb[0].mxu0
      %v1803 = vadd.f32 0.0, %v1802
      %v1804 = vpop.f32.mrb[0].mxu0
      %1805 = vmatprep.mubr.bf16.mxu0 %v1061
      %1806 = vmatmul.mubr.bf16.gmra.mrb[0].mxu0 %v1060
      %v1807 = vpop.f32.mrb[0].mxu0
      %v1808 = vadd.f32 0.0, %v1807
      %v1809 = vpop.f32.mrb[0].mxu0
      %v1810 = vpop.f32.mrb[0].mxu0
      %v1811 = vadd.f32 0.0, %v1810
      %v1812 = vpop.f32.mrb[0].mxu0
      %1813 = vmatprep.mubr.bf16.mxu0 %v1070
      %1814 = vmatmul.mubr.bf16.gmra.mrb[0].mxu0 %v1069
      %v1815 = vpop.f32.mrb[0].mxu0
      %v1816 = vadd.f32 0.0, %v1815
      %v1817 = vpop.f32.mrb[0].mxu0
      %v1818 = vpop.f32.mrb[0].mxu0
      %v1819 = vadd.f32 0.0, %v1818
      %v1820 = vpop.f32.mrb[0].mxu0
      %1821 = vmatprep.mubr.bf16.mxu0 %v1079
      %1822 = vmatmul.mubr.bf16.gmra.mrb[0].mxu0 %v1078
      %v1823 = vpop.f32.mrb[0].mxu0
      %v1824 = vadd.f32 0.0, %v1823
      %v1825 = vpop.f32.mrb[0].mxu0
      %v1826 = vpop.f32.mrb[0].mxu0
      %v1827 = vadd.f32 0.0, %v1826
      %v1828 = vpop.f32.mrb[0].mxu0
      %1829 = vmatprep.mubr.bf16.mxu0 %v1088
      %1830 = vmatmul.mubr.bf16.gmra.mrb[0].mxu0 %v1087
      %v1831 = vpop.f32.mrb[0].mxu0
      %v1832 = vadd.f32 0.0, %v1831
      %v1833 = vpop.f32.mrb[0].mxu0
      %v1834 = vpop.f32.mrb[0].mxu0
      %v1835 = vadd.f32 0.0, %v1834
      %v1836 = vpop.f32.mrb[0].mxu0
      %1837 = vmatprep.mubr.bf16.mxu0 %v1097
      %1838 = vmatmul.mubr.bf16.gmra.mrb[0].mxu0 %v1096
      %v1839 = vpop.f32.mrb[0].mxu0
      %v1840 = vadd.f32 0.0, %v1839
      %v1841 = vpop.f32.mrb[0].mxu0
      %v1842 = vpop.f32.mrb[0].mxu0
      %v1843 = vadd.f32 0.0, %v1842
      %v1844 = vpop.f32.mrb[0].mxu0
      %1845 = vmatprep.mubr.bf16.mxu0 %v1106
      %1846 = vmatmul.mubr.bf16.gmra.mrb[0].mxu0 %v1105
      %v1847 = vpop.f32.mrb[0].mxu0
      %v1848 = vadd.f32 0.0, %v1847
      %v1849 = vpop.f32.mrb[0].mxu0
      %v1850 = vpop.f32.mrb[0].mxu0
      %v1851 = vadd.f32 0.0, %v1850
      %v1852 = vpop.f32.mrb[0].mxu0
      %1853 = vmatprep.mubr.bf16.mxu0 %v1115
      %1854 = vmatmul.mubr.bf16.gmra.mrb[0].mxu0 %v1114
      %v1855 = vpop.f32.mrb[0].mxu0
      %v1856 = vadd.f32 0.0, %v1855
      %v1857 = vpop.f32.mrb[0].mxu0
      %v1858 = vpop.f32.mrb[0].mxu0
      %v1859 = vadd.f32 0.0, %v1858
      %v1860 = vpop.f32.mrb[0].mxu0
      %1861 = vmatprep.mubr.bf16.mxu0 %v1124
      %1862 = vmatmul.mubr.bf16.gmra.mrb[0].mxu0 %v1123
      %v1863 = vpop.f32.mrb[0].mxu0
      %v1864 = vadd.f32 0.0, %v1863
      %v1865 = vpop.f32.mrb[0].mxu0
      %v1866 = vpop.f32.mrb[0].mxu0
      %v1867 = vadd.f32 0.0, %v1866
      %v1868 = vpop.f32.mrb[0].mxu0
      %1869 = vmatprep.mubr.bf16.mxu0 %v1133
      %1870 = vmatmul.mubr.bf16.gmra.mrb[0].mxu0 %v1132
      %v1871 = vpop.f32.mrb[0].mxu0
      %v1872 = vadd.f32 0.0, %v1871
      %v1873 = vpop.f32.mrb[0].mxu0
      %v1874 = vpop.f32.mrb[0].mxu0
      %v1875 = vadd.f32 0.0, %v1874
      %v1876 = vpop.f32.mrb[0].mxu0
      %1877 = vdwg.mxu0
      %1878 = vmatprep.subr.bf16.mxu0 0
      %1879 = vmatpush1.bf16.msra.mxu0 %v1589
      %1880 = vmatprep.subr.bf16.mxu0 0
      %1881 = vmatpush1.bf16.msra.mxu0 %v1590
      %1882 = vmatprep.subr.bf16.mxu0 0
      %1883 = vmatpush1.bf16.msra.mxu0 %v1591
      %1884 = vmatprep.subr.bf16.mxu0 0
      %1885 = vmatpush1.bf16.msra.mxu0 %v1592
      %1886 = vmatprep.subr.bf16.mxu0 0
      %1887 = vmatpush1.bf16.msra.mxu0 %v1593
      %1888 = vmatprep.subr.bf16.mxu0 0
      %1889 = vmatpush1.bf16.msra.mxu0 %v1594
      %1890 = vmatprep.subr.bf16.mxu0 0
      %1891 = vmatpush1.bf16.msra.mxu0 %v1595
      %1892 = vmatprep.subr.bf16.mxu0 0
      %1893 = vmatpush1.bf16.msra.mxu0 %v1596
      %1894 = vmatprep.subr.bf16.mxu0 0
      %1895 = vmatpush1.bf16.msra.mxu0 %v1597
      %1896 = vmatprep.subr.bf16.mxu0 0
      %1897 = vmatpush1.bf16.msra.mxu0 %v1598
      %1898 = vmatprep.subr.bf16.mxu0 0
      %1899 = vmatpush1.bf16.msra.mxu0 %v1599
      %1900 = vmatprep.subr.bf16.mxu0 0
      %1901 = vmatpush1.bf16.msra.mxu0 %v1600
      %1902 = vmatprep.subr.bf16.mxu0 0
      %1903 = vmatpush1.bf16.msra.mxu0 %v1601
      %1904 = vmatprep.subr.bf16.mxu0 0
      %1905 = vmatpush1.bf16.msra.mxu0 %v1602
      %1906 = vmatprep.subr.bf16.mxu0 0
      %1907 = vmatpush1.bf16.msra.mxu0 %v1603
      %1908 = vmatprep.subr.bf16.mxu0 0
      %1909 = vmatpush1.bf16.msra.mxu0 %v1604
      %1910 = vmatprep.mubr.bf16.mxu0 %v1000
      %1911 = vmatmul.mubr.bf16.gmra.mrb[0].mxu0 %v999
      %v1912 = vpop.f32.mrb[0].mxu0
      %v1913 = vadd.f32 %v1752, %v1912
      %v1914 = vpop.f32.mrb[0].mxu0
      %v1915 = vpop.f32.mrb[0].mxu0
      %v1916 = vadd.f32 %v1755, %v1915
      %v1917 = vpop.f32.mrb[0].mxu0
      %1918 = vmatprep.mubr.bf16.mxu0 %v1009
      %1919 = vmatmul.mubr.bf16.gmra.mrb[0].mxu0 %v1008
      %v1920 = vpop.f32.mrb[0].mxu0
      %v1921 = vadd.f32 %v1760, %v1920
      %v1922 = vpop.f32.mrb[0].mxu0
      %v1923 = vpop.f32.mrb[0].mxu0
      %v1924 = vadd.f32 %v1763, %v1923
      %v1925 = vpop.f32.mrb[0].mxu0
      %1926 = vmatprep.mubr.bf16.mxu0 %v1018
      %1927 = vmatmul.mubr.bf16.gmra.mrb[0].mxu0 %v1017
      %v1928 = vpop.f32.mrb[0].mxu0
      %v1929 = vadd.f32 %v1768, %v1928
      %v1930 = vpop.f32.mrb[0].mxu0
      %v1931 = vpop.f32.mrb[0].mxu0
      %v1932 = vadd.f32 %v1771, %v1931
      %v1933 = vpop.f32.mrb[0].mxu0
      %1934 = vmatprep.mubr.bf16.mxu0 %v1027
      %1935 = vmatmul.mubr.bf16.gmra.mrb[0].mxu0 %v1026
      %v1936 = vpop.f32.mrb[0].mxu0
      %v1937 = vadd.f32 %v1776, %v1936
      %v1938 = vpop.f32.mrb[0].mxu0
      %v1939 = vpop.f32.mrb[0].mxu0
      %v1940 = vadd.f32 %v1779, %v1939
      %v1941 = vpop.f32.mrb[0].mxu0
      %1942 = vmatprep.mubr.bf16.mxu0 %v1036
      %1943 = vmatmul.mubr.bf16.gmra.mrb[0].mxu0 %v1035
      %v1944 = vpop.f32.mrb[0].mxu0
      %v1945 = vadd.f32 %v1784, %v1944
      %v1946 = vpop.f32.mrb[0].mxu0
      %v1947 = vpop.f32.mrb[0].mxu0
      %v1948 = vadd.f32 %v1787, %v1947
      %v1949 = vpop.f32.mrb[0].mxu0
      %1950 = vmatprep.mubr.bf16.mxu0 %v1045
      %1951 = vmatmul.mubr.bf16.gmra.mrb[0].mxu0 %v1044
      %v1952 = vpop.f32.mrb[0].mxu0
      %v1953 = vadd.f32 %v1792, %v1952
      %v1954 = vpop.f32.mrb[0].mxu0
      %v1955 = vpop.f32.mrb[0].mxu0
      %v1956 = vadd.f32 %v1795, %v1955
      %v1957 = vpop.f32.mrb[0].mxu0
      %1958 = vmatprep.mubr.bf16.mxu0 %v1054
      %1959 = vmatmul.mubr.bf16.gmra.mrb[0].mxu0 %v1053
      %v1960 = vpop.f32.mrb[0].mxu0
      %v1961 = vadd.f32 %v1800, %v1960
      %v1962 = vpop.f32.mrb[0].mxu0
      %v1963 = vpop.f32.mrb[0].mxu0
      %v1964 = vadd.f32 %v1803, %v1963
      %v1965 = vpop.f32.mrb[0].mxu0
      %1966 = vmatprep.mubr.bf16.mxu0 %v1063
      %1967 = vmatmul.mubr.bf16.gmra.mrb[0].mxu0 %v1062
      %v1968 = vpop.f32.mrb[0].mxu0
      %v1969 = vadd.f32 %v1808, %v1968
      %v1970 = vpop.f32.mrb[0].mxu0
      %v1971 = vpop.f32.mrb[0].mxu0
      %v1972 = vadd.f32 %v1811, %v1971
      %v1973 = vpop.f32.mrb[0].mxu0
      %1974 = vmatprep.mubr.bf16.mxu0 %v1072
      %1975 = vmatmul.mubr.bf16.gmra.mrb[0].mxu0 %v1071
      %v1976 = vpop.f32.mrb[0].mxu0
      %v1977 = vadd.f32 %v1816, %v1976
      %v1978 = vpop.f32.mrb[0].mxu0
      %v1979 = vpop.f32.mrb[0].mxu0
      %v1980 = vadd.f32 %v1819, %v1979
      %v1981 = vpop.f32.mrb[0].mxu0
      %1982 = vmatprep.mubr.bf16.mxu0 %v1081
      %1983 = vmatmul.mubr.bf16.gmra.mrb[0].mxu0 %v1080
      %v1984 = vpop.f32.mrb[0].mxu0
      %v1985 = vadd.f32 %v1824, %v1984
      %v1986 = vpop.f32.mrb[0].mxu0
      %v1987 = vpop.f32.mrb[0].mxu0
      %v1988 = vadd.f32 %v1827, %v1987
      %v1989 = vpop.f32.mrb[0].mxu0
      %1990 = vmatprep.mubr.bf16.mxu0 %v1090
      %1991 = vmatmul.mubr.bf16.gmra.mrb[0].mxu0 %v1089
      %v1992 = vpop.f32.mrb[0].mxu0
      %v1993 = vadd.f32 %v1832, %v1992
      %v1994 = vpop.f32.mrb[0].mxu0
      %v1995 = vpop.f32.mrb[0].mxu0
      %v1996 = vadd.f32 %v1835, %v1995
      %v1997 = vpop.f32.mrb[0].mxu0
      %1998 = vmatprep.mubr.bf16.mxu0 %v1099
      %1999 = vmatmul.mubr.bf16.gmra.mrb[0].mxu0 %v1098
      %v2000 = vpop.f32.mrb[0].mxu0
      %v2001 = vadd.f32 %v1840, %v2000
      %v2002 = vpop.f32.mrb[0].mxu0
      %v2003 = vpop.f32.mrb[0].mxu0
      %v2004 = vadd.f32 %v1843, %v2003
      %v2005 = vpop.f32.mrb[0].mxu0
      %2006 = vmatprep.mubr.bf16.mxu0 %v1108
      %2007 = vmatmul.mubr.bf16.gmra.mrb[0].mxu0 %v1107
      %v2008 = vpop.f32.mrb[0].mxu0
      %v2009 = vadd.f32 %v1848, %v2008
      %v2010 = vpop.f32.mrb[0].mxu0
      %v2011 = vpop.f32.mrb[0].mxu0
      %v2012 = vadd.f32 %v1851, %v2011
      %v2013 = vpop.f32.mrb[0].mxu0
      %2014 = vmatprep.mubr.bf16.mxu0 %v1117
      %2015 = vmatmul.mubr.bf16.gmra.mrb[0].mxu0 %v1116
      %v2016 = vpop.f32.mrb[0].mxu0
      %v2017 = vadd.f32 %v1856, %v2016
      %v2018 = vpop.f32.mrb[0].mxu0
      %v2019 = vpop.f32.mrb[0].mxu0
      %v2020 = vadd.f32 %v1859, %v2019
      %v2021 = vpop.f32.mrb[0].mxu0
      %2022 = vmatprep.mubr.bf16.mxu0 %v1126
      %2023 = vmatmul.mubr.bf16.gmra.mrb[0].mxu0 %v1125
      %v2024 = vpop.f32.mrb[0].mxu0
      %v2025 = vadd.f32 %v1864, %v2024
      %v2026 = vpop.f32.mrb[0].mxu0
      %v2027 = vpop.f32.mrb[0].mxu0
      %v2028 = vadd.f32 %v1867, %v2027
      %v2029 = vpop.f32.mrb[0].mxu0
      %2030 = vmatprep.mubr.bf16.mxu0 %v1135
      %2031 = vmatmul.mubr.bf16.gmra.mrb[0].mxu0 %v1134
      %v2032 = vpop.f32.mrb[0].mxu0
      %v2033 = vadd.f32 %v1872, %v2032
      %v2034 = vpop.f32.mrb[0].mxu0
      %v2035 = vpop.f32.mrb[0].mxu0
      %v2036 = vadd.f32 %v1875, %v2035
      %v2037 = vpop.f32.mrb[0].mxu0
      %2038 = vdwg.mxu0
      %2039 = vmatprep.subr.bf16.mxu0 0
      %2040 = vmatpush1.bf16.msra.mxu0 %v1605
      %2041 = vmatprep.subr.bf16.mxu0 0
      %2042 = vmatpush1.bf16.msra.mxu0 %v1606
      %2043 = vmatprep.subr.bf16.mxu0 0
      %2044 = vmatpush1.bf16.msra.mxu0 %v1607
      %2045 = vmatprep.subr.bf16.mxu0 0
      %2046 = vmatpush1.bf16.msra.mxu0 %v1608
      %2047 = vmatprep.subr.bf16.mxu0 0
      %2048 = vmatpush1.bf16.msra.mxu0 %v1609
      %2049 = vmatprep.subr.bf16.mxu0 0
      %2050 = vmatpush1.bf16.msra.mxu0 %v1610
      %2051 = vmatprep.subr.bf16.mxu0 0
      %2052 = vmatpush1.bf16.msra.mxu0 %v1611
      %2053 = vmatprep.subr.bf16.mxu0 0
      %2054 = vmatpush1.bf16.msra.mxu0 %v1612
      %2055 = vmatprep.subr.bf16.mxu0 0
      %2056 = vmatpush1.bf16.msra.mxu0 %v1613
      %2057 = vmatprep.subr.bf16.mxu0 0
      %2058 = vmatpush1.bf16.msra.mxu0 %v1614
      %2059 = vmatprep.subr.bf16.mxu0 0
      %2060 = vmatpush1.bf16.msra.mxu0 %v1615
      %2061 = vmatprep.subr.bf16.mxu0 0
      %2062 = vmatpush1.bf16.msra.mxu0 %v1616
      %2063 = vmatprep.subr.bf16.mxu0 0
      %2064 = vmatpush1.bf16.msra.mxu0 %v1617
      %2065 = vmatprep.subr.bf16.mxu0 0
      %2066 = vmatpush1.bf16.msra.mxu0 %v1618
      %2067 = vmatprep.subr.bf16.mxu0 0
      %2068 = vmatpush1.bf16.msra.mxu0 %v1619
      %2069 = vmatprep.subr.bf16.mxu0 0
      %2070 = vmatpush1.bf16.msra.mxu0 %v1620
      %2071 = vmatprep.mubr.bf16.mxu0 %v1002
      %2072 = vmatmul.mubr.bf16.gmra.mrb[0].mxu0 %v1001
      %v2073 = vpop.f32.mrb[0].mxu0
      %v2074 = vadd.f32 %v1913, %v2073
      %v2075 = vpop.f32.mrb[0].mxu0
      %v2076 = vpop.f32.mrb[0].mxu0
      %v2077 = vadd.f32 %v1916, %v2076
      %v2078 = vpop.f32.mrb[0].mxu0
      %2079 = vmatprep.mubr.bf16.mxu0 %v1011
      %2080 = vmatmul.mubr.bf16.gmra.mrb[0].mxu0 %v1010
      %v2081 = vpop.f32.mrb[0].mxu0
      %v2082 = vadd.f32 %v1921, %v2081
      %v2083 = vpop.f32.mrb[0].mxu0
      %v2084 = vpop.f32.mrb[0].mxu0
      %v2085 = vadd.f32 %v1924, %v2084
      %v2086 = vpop.f32.mrb[0].mxu0
      %2087 = vmatprep.mubr.bf16.mxu0 %v1020
      %2088 = vmatmul.mubr.bf16.gmra.mrb[0].mxu0 %v1019
      %v2089 = vpop.f32.mrb[0].mxu0
      %v2090 = vadd.f32 %v1929, %v2089
      %v2091 = vpop.f32.mrb[0].mxu0
      %v2092 = vpop.f32.mrb[0].mxu0
      %v2093 = vadd.f32 %v1932, %v2092
      %v2094 = vpop.f32.mrb[0].mxu0
      %2095 = vmatprep.mubr.bf16.mxu0 %v1029
      %2096 = vmatmul.mubr.bf16.gmra.mrb[0].mxu0 %v1028
      %v2097 = vpop.f32.mrb[0].mxu0
      %v2098 = vadd.f32 %v1937, %v2097
      %v2099 = vpop.f32.mrb[0].mxu0
      %v2100 = vpop.f32.mrb[0].mxu0
      %v2101 = vadd.f32 %v1940, %v2100
      %v2102 = vpop.f32.mrb[0].mxu0
      %2103 = vmatprep.mubr.bf16.mxu0 %v1038
      %2104 = vmatmul.mubr.bf16.gmra.mrb[0].mxu0 %v1037
      %v2105 = vpop.f32.mrb[0].mxu0
      %v2106 = vadd.f32 %v1945, %v2105
      %v2107 = vpop.f32.mrb[0].mxu0
      %v2108 = vpop.f32.mrb[0].mxu0
      %v2109 = vadd.f32 %v1948, %v2108
      %v2110 = vpop.f32.mrb[0].mxu0
      %2111 = vmatprep.mubr.bf16.mxu0 %v1047
      %2112 = vmatmul.mubr.bf16.gmra.mrb[0].mxu0 %v1046
      %v2113 = vpop.f32.mrb[0].mxu0
      %v2114 = vadd.f32 %v1953, %v2113
      %v2115 = vpop.f32.mrb[0].mxu0
      %v2116 = vpop.f32.mrb[0].mxu0
      %v2117 = vadd.f32 %v1956, %v2116
      %v2118 = vpop.f32.mrb[0].mxu0
      %2119 = vmatprep.mubr.bf16.mxu0 %v1056
      %2120 = vmatmul.mubr.bf16.gmra.mrb[0].mxu0 %v1055
      %v2121 = vpop.f32.mrb[0].mxu0
      %v2122 = vadd.f32 %v1961, %v2121
      %v2123 = vpop.f32.mrb[0].mxu0
      %v2124 = vpop.f32.mrb[0].mxu0
      %v2125 = vadd.f32 %v1964, %v2124
      %v2126 = vpop.f32.mrb[0].mxu0
      %2127 = vmatprep.mubr.bf16.mxu0 %v1065
      %2128 = vmatmul.mubr.bf16.gmra.mrb[0].mxu0 %v1064
      %v2129 = vpop.f32.mrb[0].mxu0
      %v2130 = vadd.f32 %v1969, %v2129
      %v2131 = vpop.f32.mrb[0].mxu0
      %v2132 = vpop.f32.mrb[0].mxu0
      %v2133 = vadd.f32 %v1972, %v2132
      %v2134 = vpop.f32.mrb[0].mxu0
      %2135 = vmatprep.mubr.bf16.mxu0 %v1074
      %2136 = vmatmul.mubr.bf16.gmra.mrb[0].mxu0 %v1073
      %v2137 = vpop.f32.mrb[0].mxu0
      %v2138 = vadd.f32 %v1977, %v2137
      %v2139 = vpop.f32.mrb[0].mxu0
      %v2140 = vpop.f32.mrb[0].mxu0
      %v2141 = vadd.f32 %v1980, %v2140
      %v2142 = vpop.f32.mrb[0].mxu0
      %2143 = vmatprep.mubr.bf16.mxu0 %v1083
      %2144 = vmatmul.mubr.bf16.gmra.mrb[0].mxu0 %v1082
      %v2145 = vpop.f32.mrb[0].mxu0
      %v2146 = vadd.f32 %v1985, %v2145
      %v2147 = vpop.f32.mrb[0].mxu0
      %v2148 = vpop.f32.mrb[0].mxu0
      %v2149 = vadd.f32 %v1988, %v2148
      %v2150 = vpop.f32.mrb[0].mxu0
      %2151 = vmatprep.mubr.bf16.mxu0 %v1092
      %2152 = vmatmul.mubr.bf16.gmra.mrb[0].mxu0 %v1091
      %v2153 = vpop.f32.mrb[0].mxu0
      %v2154 = vadd.f32 %v1993, %v2153
      %v2155 = vpop.f32.mrb[0].mxu0
      %v2156 = vpop.f32.mrb[0].mxu0
      %v2157 = vadd.f32 %v1996, %v2156
      %v2158 = vpop.f32.mrb[0].mxu0
      %2159 = vmatprep.mubr.bf16.mxu0 %v1101
      %2160 = vmatmul.mubr.bf16.gmra.mrb[0].mxu0 %v1100
      %v2161 = vpop.f32.mrb[0].mxu0
      %v2162 = vadd.f32 %v2001, %v2161
      %v2163 = vpop.f32.mrb[0].mxu0
      %v2164 = vpop.f32.mrb[0].mxu0
      %v2165 = vadd.f32 %v2004, %v2164
      %v2166 = vpop.f32.mrb[0].mxu0
      %2167 = vmatprep.mubr.bf16.mxu0 %v1110
      %2168 = vmatmul.mubr.bf16.gmra.mrb[0].mxu0 %v1109
      %v2169 = vpop.f32.mrb[0].mxu0
      %v2170 = vadd.f32 %v2009, %v2169
      %v2171 = vpop.f32.mrb[0].mxu0
      %v2172 = vpop.f32.mrb[0].mxu0
      %v2173 = vadd.f32 %v2012, %v2172
      %v2174 = vpop.f32.mrb[0].mxu0
      %2175 = vmatprep.mubr.bf16.mxu0 %v1119
      %2176 = vmatmul.mubr.bf16.gmra.mrb[0].mxu0 %v1118
      %v2177 = vpop.f32.mrb[0].mxu0
      %v2178 = vadd.f32 %v2017, %v2177
      %v2179 = vpop.f32.mrb[0].mxu0
      %v2180 = vpop.f32.mrb[0].mxu0
      %v2181 = vadd.f32 %v2020, %v2180
      %v2182 = vpop.f32.mrb[0].mxu0
      %2183 = vmatprep.mubr.bf16.mxu0 %v1128
      %2184 = vmatmul.mubr.bf16.gmra.mrb[0].mxu0 %v1127
      %v2185 = vpop.f32.mrb[0].mxu0
      %v2186 = vadd.f32 %v2025, %v2185
      %v2187 = vpop.f32.mrb[0].mxu0
      %v2188 = vpop.f32.mrb[0].mxu0
      %v2189 = vadd.f32 %v2028, %v2188
      %v2190 = vpop.f32.mrb[0].mxu0
      %2191 = vmatprep.mubr.bf16.mxu0 %v1137
      %2192 = vmatmul.mubr.bf16.gmra.mrb[0].mxu0 %v1136
      %v2193 = vpop.f32.mrb[0].mxu0
      %v2194 = vadd.f32 %v2033, %v2193
      %v2195 = vpop.f32.mrb[0].mxu0
      %v2196 = vpop.f32.mrb[0].mxu0
      %v2197 = vadd.f32 %v2036, %v2196
      %v2198 = vpop.f32.mrb[0].mxu0
      %2199 = vdwg.mxu0
      %2200 = vmatprep.subr.bf16.mxu0 0
      %2201 = vmatpush1.bf16.msra.mxu0 %v1621
      %2202 = vmatprep.subr.bf16.mxu0 0
      %2203 = vmatpush1.bf16.msra.mxu0 %v1622
      %2204 = vmatprep.subr.bf16.mxu0 0
      %2205 = vmatpush1.bf16.msra.mxu0 %v1623
      %2206 = vmatprep.subr.bf16.mxu0 0
      %2207 = vmatpush1.bf16.msra.mxu0 %v1624
      %2208 = vmatprep.subr.bf16.mxu0 0
      %2209 = vmatpush1.bf16.msra.mxu0 %v1625
      %2210 = vmatprep.subr.bf16.mxu0 0
      %2211 = vmatpush1.bf16.msra.mxu0 %v1626
      %2212 = vmatprep.subr.bf16.mxu0 0
      %2213 = vmatpush1.bf16.msra.mxu0 %v1627
      %2214 = vmatprep.subr.bf16.mxu0 0
      %2215 = vmatpush1.bf16.msra.mxu0 %v1628
      %2216 = vmatprep.subr.bf16.mxu0 0
      %2217 = vmatpush1.bf16.msra.mxu0 %v1629
      %2218 = vmatprep.subr.bf16.mxu0 0
      %2219 = vmatpush1.bf16.msra.mxu0 %v1630
      %2220 = vmatprep.subr.bf16.mxu0 0
      %2221 = vmatpush1.bf16.msra.mxu0 %v1631
      %2222 = vmatprep.subr.bf16.mxu0 0
      %2223 = vmatpush1.bf16.msra.mxu0 %v1632
      %2224 = vmatprep.subr.bf16.mxu0 0
      %2225 = vmatpush1.bf16.msra.mxu0 %v1633
      %2226 = vmatprep.subr.bf16.mxu0 0
      %2227 = vmatpush1.bf16.msra.mxu0 %v1634
      %2228 = vmatprep.subr.bf16.mxu0 0
      %2229 = vmatpush1.bf16.msra.mxu0 %v1635
      %2230 = vmatprep.subr.bf16.mxu0 0
      %2231 = vmatpush1.bf16.msra.mxu0 %v1636
      %2232 = vmatprep.mubr.bf16.mxu0 %v1004
      %2233 = vmatmul.mubr.bf16.gmra.mrb[0].mxu0 %v1003
      %v2234 = vpop.f32.mrb[0].mxu0
      %v2235 = vadd.f32 %v2074, %v2234
      %v2236 = vpop.f32.mrb[0].mxu0
      %v2237 = vpop.f32.mrb[0].mxu0
      %v2238 = vadd.f32 %v2077, %v2237
      %v2239 = vpop.f32.mrb[0].mxu0
      %2240 = vmatprep.mubr.bf16.mxu0 %v1013
      %2241 = vmatmul.mubr.bf16.gmra.mrb[0].mxu0 %v1012
      %v2242 = vpop.f32.mrb[0].mxu0
      %v2243 = vadd.f32 %v2082, %v2242
      %v2244 = vpop.f32.mrb[0].mxu0
      %v2245 = vpop.f32.mrb[0].mxu0
      %v2246 = vadd.f32 %v2085, %v2245
      %v2247 = vpop.f32.mrb[0].mxu0
      %2248 = vmatprep.mubr.bf16.mxu0 %v1022
      %2249 = vmatmul.mubr.bf16.gmra.mrb[0].mxu0 %v1021
      %v2250 = vpop.f32.mrb[0].mxu0
      %v2251 = vadd.f32 %v2090, %v2250
      %v2252 = vpop.f32.mrb[0].mxu0
      %v2253 = vpop.f32.mrb[0].mxu0
      %v2254 = vadd.f32 %v2093, %v2253
      %v2255 = vpop.f32.mrb[0].mxu0
      %2256 = vmatprep.mubr.bf16.mxu0 %v1031
      %2257 = vmatmul.mubr.bf16.gmra.mrb[0].mxu0 %v1030
      %v2258 = vpop.f32.mrb[0].mxu0
      %v2259 = vadd.f32 %v2098, %v2258
      %v2260 = vpop.f32.mrb[0].mxu0
      %v2261 = vpop.f32.mrb[0].mxu0
      %v2262 = vadd.f32 %v2101, %v2261
      %v2263 = vpop.f32.mrb[0].mxu0
      %2264 = vmatprep.mubr.bf16.mxu0 %v1040
      %2265 = vmatmul.mubr.bf16.gmra.mrb[0].mxu0 %v1039
      %v2266 = vpop.f32.mrb[0].mxu0
      %v2267 = vadd.f32 %v2106, %v2266
      %v2268 = vpop.f32.mrb[0].mxu0
      %v2269 = vpop.f32.mrb[0].mxu0
      %v2270 = vadd.f32 %v2109, %v2269
      %v2271 = vpop.f32.mrb[0].mxu0
      %2272 = vmatprep.mubr.bf16.mxu0 %v1049
      %2273 = vmatmul.mubr.bf16.gmra.mrb[0].mxu0 %v1048
      %v2274 = vpop.f32.mrb[0].mxu0
      %v2275 = vadd.f32 %v2114, %v2274
      %v2276 = vpop.f32.mrb[0].mxu0
      %v2277 = vpop.f32.mrb[0].mxu0
      %v2278 = vadd.f32 %v2117, %v2277
      %v2279 = vpop.f32.mrb[0].mxu0
      %2280 = vmatprep.mubr.bf16.mxu0 %v1058
      %2281 = vmatmul.mubr.bf16.gmra.mrb[0].mxu0 %v1057
      %v2282 = vpop.f32.mrb[0].mxu0
      %v2283 = vadd.f32 %v2122, %v2282
      %v2284 = vpop.f32.mrb[0].mxu0
      %v2285 = vpop.f32.mrb[0].mxu0
      %v2286 = vadd.f32 %v2125, %v2285
      %v2287 = vpop.f32.mrb[0].mxu0
      %2288 = vmatprep.mubr.bf16.mxu0 %v1067
      %2289 = vmatmul.mubr.bf16.gmra.mrb[0].mxu0 %v1066
      %v2290 = vpop.f32.mrb[0].mxu0
      %v2291 = vadd.f32 %v2130, %v2290
      %v2292 = vpop.f32.mrb[0].mxu0
      %v2293 = vpop.f32.mrb[0].mxu0
      %v2294 = vadd.f32 %v2133, %v2293
      %v2295 = vpop.f32.mrb[0].mxu0
      %2296 = vmatprep.mubr.bf16.mxu0 %v1076
      %2297 = vmatmul.mubr.bf16.gmra.mrb[0].mxu0 %v1075
      %v2298 = vpop.f32.mrb[0].mxu0
      %v2299 = vadd.f32 %v2138, %v2298
      %v2300 = vpop.f32.mrb[0].mxu0
      %v2301 = vpop.f32.mrb[0].mxu0
      %v2302 = vadd.f32 %v2141, %v2301
      %v2303 = vpop.f32.mrb[0].mxu0
      %2304 = vmatprep.mubr.bf16.mxu0 %v1085
      %2305 = vmatmul.mubr.bf16.gmra.mrb[0].mxu0 %v1084
      %v2306 = vpop.f32.mrb[0].mxu0
      %v2307 = vadd.f32 %v2146, %v2306
      %v2308 = vpop.f32.mrb[0].mxu0
      %v2309 = vpop.f32.mrb[0].mxu0
      %v2310 = vadd.f32 %v2149, %v2309
      %v2311 = vpop.f32.mrb[0].mxu0
      %2312 = vmatprep.mubr.bf16.mxu0 %v1094
      %2313 = vmatmul.mubr.bf16.gmra.mrb[0].mxu0 %v1093
      %v2314 = vpop.f32.mrb[0].mxu0
      %v2315 = vadd.f32 %v2154, %v2314
      %v2316 = vpop.f32.mrb[0].mxu0
      %v2317 = vpop.f32.mrb[0].mxu0
      %v2318 = vadd.f32 %v2157, %v2317
      %v2319 = vpop.f32.mrb[0].mxu0
      %2320 = vmatprep.mubr.bf16.mxu0 %v1103
      %2321 = vmatmul.mubr.bf16.gmra.mrb[0].mxu0 %v1102
      %v2322 = vpop.f32.mrb[0].mxu0
      %v2323 = vadd.f32 %v2162, %v2322
      %v2324 = vpop.f32.mrb[0].mxu0
      %v2325 = vpop.f32.mrb[0].mxu0
      %v2326 = vadd.f32 %v2165, %v2325
      %v2327 = vpop.f32.mrb[0].mxu0
      %2328 = vmatprep.mubr.bf16.mxu0 %v1112
      %2329 = vmatmul.mubr.bf16.gmra.mrb[0].mxu0 %v1111
      %v2330 = vpop.f32.mrb[0].mxu0
      %v2331 = vadd.f32 %v2170, %v2330
      %v2332 = vpop.f32.mrb[0].mxu0
      %v2333 = vpop.f32.mrb[0].mxu0
      %v2334 = vadd.f32 %v2173, %v2333
      %v2335 = vpop.f32.mrb[0].mxu0
      %2336 = vmatprep.mubr.bf16.mxu0 %v1121
      %2337 = vmatmul.mubr.bf16.gmra.mrb[0].mxu0 %v1120
      %v2338 = vpop.f32.mrb[0].mxu0
      %v2339 = vadd.f32 %v2178, %v2338
      %v2340 = vpop.f32.mrb[0].mxu0
      %v2341 = vpop.f32.mrb[0].mxu0
      %v2342 = vadd.f32 %v2181, %v2341
      %v2343 = vpop.f32.mrb[0].mxu0
      %2344 = vmatprep.mubr.bf16.mxu0 %v1130
      %2345 = vmatmul.mubr.bf16.gmra.mrb[0].mxu0 %v1129
      %v2346 = vpop.f32.mrb[0].mxu0
      %v2347 = vadd.f32 %v2186, %v2346
      %v2348 = vpop.f32.mrb[0].mxu0
      %v2349 = vpop.f32.mrb[0].mxu0
      %v2350 = vadd.f32 %v2189, %v2349
      %v2351 = vpop.f32.mrb[0].mxu0
      %2352 = vmatprep.mubr.bf16.mxu0 %v1139
      %2353 = vmatmul.mubr.bf16.gmra.mrb[0].mxu0 %v1138
      %v2354 = vpop.f32.mrb[0].mxu0
      %v2355 = vadd.f32 %v2194, %v2354
      %v2356 = vpop.f32.mrb[0].mxu0
      %v2357 = vpop.f32.mrb[0].mxu0
      %v2358 = vadd.f32 %v2197, %v2357
      %v2359 = vpop.f32.mrb[0].mxu0
      %2360 = vdwg.mxu0
      %2361 = vmatprep.subr.bf16.mxu0 0
      %2362 = vmatpush1.bf16.msra.mxu0 %v1637
      %2363 = vmatprep.subr.bf16.mxu0 0
      %2364 = vmatpush1.bf16.msra.mxu0 %v1638
      %2365 = vmatprep.subr.bf16.mxu0 0
      %2366 = vmatpush1.bf16.msra.mxu0 %v1639
      %2367 = vmatprep.subr.bf16.mxu0 0
      %2368 = vmatpush1.bf16.msra.mxu0 %v1640
      %2369 = vmatprep.subr.bf16.mxu0 0
      %2370 = vmatpush1.bf16.msra.mxu0 %v1641
      %2371 = vmatprep.subr.bf16.mxu0 0
      %2372 = vmatpush1.bf16.msra.mxu0 %v1642
      %2373 = vmatprep.subr.bf16.mxu0 0
      %2374 = vmatpush1.bf16.msra.mxu0 %v1643
      %2375 = vmatprep.subr.bf16.mxu0 0
      %2376 = vmatpush1.bf16.msra.mxu0 %v1644
      %2377 = vmatprep.subr.bf16.mxu0 0
      %2378 = vmatpush1.bf16.msra.mxu0 0
      %2379 = vmatprep.subr.bf16.mxu0 0
      %2380 = vmatpush1.bf16.msra.mxu0 0
      %2381 = vmatprep.subr.bf16.mxu0 0
      %2382 = vmatpush1.bf16.msra.mxu0 0
      %2383 = vmatprep.subr.bf16.mxu0 0
      %2384 = vmatpush1.bf16.msra.mxu0 0
      %2385 = vmatprep.subr.bf16.mxu0 0
      %2386 = vmatpush1.bf16.msra.mxu0 0
      %2387 = vmatprep.subr.bf16.mxu0 0
      %2388 = vmatpush1.bf16.msra.mxu0 0
      %2389 = vmatprep.subr.bf16.mxu0 0
      %2390 = vmatpush1.bf16.msra.mxu0 0
      %2391 = vmatprep.subr.bf16.mxu0 0
      %2392 = vmatpush1.bf16.msra.mxu0 0
      %2393 = vmatprep.mubr.bf16.mxu0 0
      %2394 = vmatmul.mubr.bf16.gmra.mrb[0].mxu0 %v1005
      %v2395 = vpop.f32.mrb[0].mxu0
      %v2396 = vadd.f32 %v2235, %v2395
      %v2397 = vpop.f32.mrb[0].mxu0
      %v2398 = vpop.f32.mrb[0].mxu0
      %v2399 = vadd.f32 %v2238, %v2398
      %v2400 = vpop.f32.mrb[0].mxu0
      %2401 = vmatprep.mubr.bf16.mxu0 0
      %2402 = vmatmul.mubr.bf16.gmra.mrb[0].mxu0 %v1014
      %v2403 = vpop.f32.mrb[0].mxu0
      %v2404 = vadd.f32 %v2243, %v2403
      %v2405 = vpop.f32.mrb[0].mxu0
      %v2406 = vpop.f32.mrb[0].mxu0
      %v2407 = vadd.f32 %v2246, %v2406
      %v2408 = vpop.f32.mrb[0].mxu0
      %2409 = vmatprep.mubr.bf16.mxu0 0
      %2410 = vmatmul.mubr.bf16.gmra.mrb[0].mxu0 %v1023
      %v2411 = vpop.f32.mrb[0].mxu0
      %v2412 = vadd.f32 %v2251, %v2411
      %v2413 = vpop.f32.mrb[0].mxu0
      %v2414 = vpop.f32.mrb[0].mxu0
      %v2415 = vadd.f32 %v2254, %v2414
      %v2416 = vpop.f32.mrb[0].mxu0
      %2417 = vmatprep.mubr.bf16.mxu0 0
      %2418 = vmatmul.mubr.bf16.gmra.mrb[0].mxu0 %v1032
      %v2419 = vpop.f32.mrb[0].mxu0
      %v2420 = vadd.f32 %v2259, %v2419
      %v2421 = vpop.f32.mrb[0].mxu0
      %v2422 = vpop.f32.mrb[0].mxu0
      %v2423 = vadd.f32 %v2262, %v2422
      %v2424 = vpop.f32.mrb[0].mxu0
      %2425 = vmatprep.mubr.bf16.mxu0 0
      %2426 = vmatmul.mubr.bf16.gmra.mrb[0].mxu0 %v1041
      %v2427 = vpop.f32.mrb[0].mxu0
      %v2428 = vadd.f32 %v2267, %v2427
      %v2429 = vpop.f32.mrb[0].mxu0
      %v2430 = vpop.f32.mrb[0].mxu0
      %v2431 = vadd.f32 %v2270, %v2430
      %v2432 = vpop.f32.mrb[0].mxu0
      %2433 = vmatprep.mubr.bf16.mxu0 0
      %2434 = vmatmul.mubr.bf16.gmra.mrb[0].mxu0 %v1050
      %v2435 = vpop.f32.mrb[0].mxu0
      %v2436 = vadd.f32 %v2275, %v2435
      %v2437 = vpop.f32.mrb[0].mxu0
      %v2438 = vpop.f32.mrb[0].mxu0
      %v2439 = vadd.f32 %v2278, %v2438
      %v2440 = vpop.f32.mrb[0].mxu0
      %2441 = vmatprep.mubr.bf16.mxu0 0
      %2442 = vmatmul.mubr.bf16.gmra.mrb[0].mxu0 %v1059
      %v2443 = vpop.f32.mrb[0].mxu0
      %v2444 = vadd.f32 %v2283, %v2443
      %v2445 = vpop.f32.mrb[0].mxu0
      %v2446 = vpop.f32.mrb[0].mxu0
      %v2447 = vadd.f32 %v2286, %v2446
      %v2448 = vpop.f32.mrb[0].mxu0
      %2449 = vmatprep.mubr.bf16.mxu0 0
      %2450 = vmatmul.mubr.bf16.gmra.mrb[0].mxu0 %v1068
      %v2451 = vpop.f32.mrb[0].mxu0
      %v2452 = vadd.f32 %v2291, %v2451
      %v2453 = vpop.f32.mrb[0].mxu0
      %v2454 = vpop.f32.mrb[0].mxu0
      %v2455 = vadd.f32 %v2294, %v2454
      %v2456 = vpop.f32.mrb[0].mxu0
      %2457 = vmatprep.mubr.bf16.mxu0 0
      %2458 = vmatmul.mubr.bf16.gmra.mrb[0].mxu0 %v1077
      %v2459 = vpop.f32.mrb[0].mxu0
      %v2460 = vadd.f32 %v2299, %v2459
      %v2461 = vpop.f32.mrb[0].mxu0
      %v2462 = vpop.f32.mrb[0].mxu0
      %v2463 = vadd.f32 %v2302, %v2462
      %v2464 = vpop.f32.mrb[0].mxu0
      %2465 = vmatprep.mubr.bf16.mxu0 0
      %2466 = vmatmul.mubr.bf16.gmra.mrb[0].mxu0 %v1086
      %v2467 = vpop.f32.mrb[0].mxu0
      %v2468 = vadd.f32 %v2307, %v2467
      %v2469 = vpop.f32.mrb[0].mxu0
      %v2470 = vpop.f32.mrb[0].mxu0
      %v2471 = vadd.f32 %v2310, %v2470
      %v2472 = vpop.f32.mrb[0].mxu0
      %2473 = vmatprep.mubr.bf16.mxu0 0
      %2474 = vmatmul.mubr.bf16.gmra.mrb[0].mxu0 %v1095
      %v2475 = vpop.f32.mrb[0].mxu0
      %v2476 = vadd.f32 %v2315, %v2475
      %v2477 = vpop.f32.mrb[0].mxu0
      %v2478 = vpop.f32.mrb[0].mxu0
      %v2479 = vadd.f32 %v2318, %v2478
      %v2480 = vpop.f32.mrb[0].mxu0
      %2481 = vmatprep.mubr.bf16.mxu0 0
      %2482 = vmatmul.mubr.bf16.gmra.mrb[0].mxu0 %v1104
      %v2483 = vpop.f32.mrb[0].mxu0
      %v2484 = vadd.f32 %v2323, %v2483
      %v2485 = vpop.f32.mrb[0].mxu0
      %v2486 = vpop.f32.mrb[0].mxu0
      %v2487 = vadd.f32 %v2326, %v2486
      %v2488 = vpop.f32.mrb[0].mxu0
      %2489 = vmatprep.mubr.bf16.mxu0 0
      %2490 = vmatmul.mubr.bf16.gmra.mrb[0].mxu0 %v1113
      %v2491 = vpop.f32.mrb[0].mxu0
      %v2492 = vadd.f32 %v2331, %v2491
      %v2493 = vpop.f32.mrb[0].mxu0
      %v2494 = vpop.f32.mrb[0].mxu0
      %v2495 = vadd.f32 %v2334, %v2494
      %v2496 = vpop.f32.mrb[0].mxu0
      %2497 = vmatprep.mubr.bf16.mxu0 0
      %2498 = vmatmul.mubr.bf16.gmra.mrb[0].mxu0 %v1122
      %v2499 = vpop.f32.mrb[0].mxu0
      %v2500 = vadd.f32 %v2339, %v2499
      %v2501 = vpop.f32.mrb[0].mxu0
      %v2502 = vpop.f32.mrb[0].mxu0
      %v2503 = vadd.f32 %v2342, %v2502
      %v2504 = vpop.f32.mrb[0].mxu0
      %2505 = vmatprep.mubr.bf16.mxu0 0
      %2506 = vmatmul.mubr.bf16.gmra.mrb[0].mxu0 %v1131
      %v2507 = vpop.f32.mrb[0].mxu0
      %v2508 = vadd.f32 %v2347, %v2507
      %v2509 = vpop.f32.mrb[0].mxu0
      %v2510 = vpop.f32.mrb[0].mxu0
      %v2511 = vadd.f32 %v2350, %v2510
      %v2512 = vpop.f32.mrb[0].mxu0
      %2513 = vmatprep.mubr.bf16.mxu0 0
      %2514 = vmatmul.mubr.bf16.gmra.mrb[0].mxu0 %v1140
      %v2515 = vpop.f32.mrb[0].mxu0
      %v2516 = vadd.f32 %v2355, %v2515
      %v2517 = vpop.f32.mrb[0].mxu0
      %v2518 = vpop.f32.mrb[0].mxu0
      %v2519 = vadd.f32 %v2358, %v2518
      %v2520 = vpop.f32.mrb[0].mxu0
      %2521 = vdwg.mxu0
      %2522 = vst [vmem:[%s204] sm:$0xff] %v2396
      %2523 = vst [vmem:[%s204 + $0x8] sm:$0xff] %v2399
      %2524 = vst [vmem:[%s204 + $0x10] sm:$0xff] %v2404
      %2525 = vst [vmem:[%s204 + $0x18] sm:$0xff] %v2407
      %2526 = vst [vmem:[%s204 + $0x20] sm:$0xff] %v2412
      %2527 = vst [vmem:[%s204 + $0x28] sm:$0xff] %v2415
      %2528 = vst [vmem:[%s204 + $0x30] sm:$0xff] %v2420
      %2529 = vst [vmem:[%s204 + $0x38] sm:$0xff] %v2423
      %2530 = vst [vmem:[%s204 + $0x40] sm:$0xff] %v2428
      %2531 = vst [vmem:[%s204 + $0x48] sm:$0xff] %v2431
      %2532 = vst [vmem:[%s204 + $0x50] sm:$0xff] %v2436
      %2533 = vst [vmem:[%s204 + $0x58] sm:$0xff] %v2439
      %2534 = vst [vmem:[%s204 + $0x60] sm:$0xff] %v2444
      %2535 = vst [vmem:[%s204 + $0x68] sm:$0xff] %v2447
      %2536 = vst [vmem:[%s204 + $0x70] sm:$0xff] %v2452
      %2537 = vst [vmem:[%s204 + $0x78] sm:$0xff] %v2455
      %2538 = vst [vmem:[%s204 + $0x80] sm:$0xff] %v2460
      %2539 = vst [vmem:[%s204 + $0x88] sm:$0xff] %v2463
      %2540 = vst [vmem:[%s204 + $0x90] sm:$0xff] %v2468
      %2541 = vst [vmem:[%s204 + $0x98] sm:$0xff] %v2471
      %2542 = vst [vmem:[%s204 + $0xa0] sm:$0xff] %v2476
      %2543 = vst [vmem:[%s204 + $0xa8] sm:$0xff] %v2479
      %2544 = vst [vmem:[%s204 + $0xb0] sm:$0xff] %v2484
      %2545 = vst [vmem:[%s204 + $0xb8] sm:$0xff] %v2487
      %2546 = vst [vmem:[%s204 + $0xc0] sm:$0xff] %v2492
      %2547 = vst [vmem:[%s204 + $0xc8] sm:$0xff] %v2495
      %2548 = vst [vmem:[%s204 + $0xd0] sm:$0xff] %v2500
      %2549 = vst [vmem:[%s204 + $0xd8] sm:$0xff] %v2503
      %2550 = vst [vmem:[%s204 + $0xe0] sm:$0xff] %v2508
      %2551 = vst [vmem:[%s204 + $0xe8] sm:$0xff] %v2511
      %2552 = vst [vmem:[%s204 + $0xf0] sm:$0xff] %v2516
      %2553 = vst [vmem:[%s204 + $0xf8] sm:$0xff] %v2519
      %v2554 = vadd.f32 %v2396, %v2399
      %v2555 = vadd.f32 %v2554, %v2404
      %v2556 = vadd.f32 %v2555, %v2407
      %v2557 = vadd.f32 %v2556, %v2412
      %v2558 = vadd.f32 %v2557, %v2415
      %v2559 = vadd.f32 %v2558, %v2420
      %v2560 = vadd.f32 %v2559, %v2423
      %v2561 = vadd.f32 %v2560, %v2428
      %v2562 = vadd.f32 %v2561, %v2431
      %v2563 = vadd.f32 %v2562, %v2436
      %v2564 = vadd.f32 %v2563, %v2439
      %v2565 = vadd.f32 %v2564, %v2444
      %v2566 = vadd.f32 %v2565, %v2447
      %v2567 = vadd.f32 %v2566, %v2452
      %v2568 = vadd.f32 %v2567, %v2455
      %v2569 = vadd.f32 %v2568, %v2460
      %v2570 = vadd.f32 %v2569, %v2463
      %v2571 = vadd.f32 %v2570, %v2468
      %v2572 = vadd.f32 %v2571, %v2471
      %v2573 = vadd.f32 %v2572, %v2476
      %v2574 = vadd.f32 %v2573, %v2479
      %v2575 = vadd.f32 %v2574, %v2484
      %v2576 = vadd.f32 %v2575, %v2487
      %v2577 = vadd.f32 %v2576, %v2492
      %v2578 = vadd.f32 %v2577, %v2495
      %v2579 = vadd.f32 %v2578, %v2500
      %v2580 = vadd.f32 %v2579, %v2503
      %v2581 = vadd.f32 %v2580, %v2508
      %v2582 = vadd.f32 %v2581, %v2511
      %v2583 = vadd.f32 %v2582, %v2516
      %v2584 = vadd.f32 %v2583, %v2519
      %v2585 = vrot.slane %v2584, 4
      %v2586 = vadd.f32 %v2584, %v2585
      %v2587 = vrot.slane %v2586, 2
      %v2588 = vadd.f32 %v2586, %v2587
      %v2589 = vrot.slane %v2588, 1
      %v2590 = vadd.f32 %v2588, %v2589
      %2591 = vst [vmem:[%s208] sm:$0x1] %v2590
      %v2592 = vmul.f32 %v2396, %v2396
      %v2593 = vmul.f32 %v2399, %v2399
      %v2594 = vmul.f32 %v2404, %v2404
      %v2595 = vmul.f32 %v2407, %v2407
      %v2596 = vmul.f32 %v2412, %v2412
      %v2597 = vmul.f32 %v2415, %v2415
      %v2598 = vmul.f32 %v2420, %v2420
      %v2599 = vmul.f32 %v2423, %v2423
      %v2600 = vmul.f32 %v2428, %v2428
      %v2601 = vmul.f32 %v2431, %v2431
      %v2602 = vmul.f32 %v2436, %v2436
      %v2603 = vmul.f32 %v2439, %v2439
      %v2604 = vmul.f32 %v2444, %v2444
      %v2605 = vmul.f32 %v2447, %v2447
      %v2606 = vmul.f32 %v2452, %v2452
      %v2607 = vmul.f32 %v2455, %v2455
      %v2608 = vmul.f32 %v2460, %v2460
      %v2609 = vmul.f32 %v2463, %v2463
      %v2610 = vmul.f32 %v2468, %v2468
      %v2611 = vmul.f32 %v2471, %v2471
      %v2612 = vmul.f32 %v2476, %v2476
      %v2613 = vmul.f32 %v2479, %v2479
      %v2614 = vmul.f32 %v2484, %v2484
      %v2615 = vmul.f32 %v2487, %v2487
      %v2616 = vmul.f32 %v2492, %v2492
      %v2617 = vmul.f32 %v2495, %v2495
      %v2618 = vmul.f32 %v2500, %v2500
      %v2619 = vmul.f32 %v2503, %v2503
      %v2620 = vmul.f32 %v2508, %v2508
      %v2621 = vmul.f32 %v2511, %v2511
      %v2622 = vmul.f32 %v2516, %v2516
      %v2623 = vmul.f32 %v2519, %v2519
      %v2624 = vadd.f32 %v2592, %v2593
      %v2625 = vadd.f32 %v2624, %v2594
      %v2626 = vadd.f32 %v2625, %v2595
      %v2627 = vadd.f32 %v2626, %v2596
      %v2628 = vadd.f32 %v2627, %v2597
      %v2629 = vadd.f32 %v2628, %v2598
      %v2630 = vadd.f32 %v2629, %v2599
      %v2631 = vadd.f32 %v2630, %v2600
      %v2632 = vadd.f32 %v2631, %v2601
      %v2633 = vadd.f32 %v2632, %v2602
      %v2634 = vadd.f32 %v2633, %v2603
      %v2635 = vadd.f32 %v2634, %v2604
      %v2636 = vadd.f32 %v2635, %v2605
      %v2637 = vadd.f32 %v2636, %v2606
      %v2638 = vadd.f32 %v2637, %v2607
      %v2639 = vadd.f32 %v2638, %v2608
      %v2640 = vadd.f32 %v2639, %v2609
      %v2641 = vadd.f32 %v2640, %v2610
      %v2642 = vadd.f32 %v2641, %v2611
      %v2643 = vadd.f32 %v2642, %v2612
      %v2644 = vadd.f32 %v2643, %v2613
      %v2645 = vadd.f32 %v2644, %v2614
      %v2646 = vadd.f32 %v2645, %v2615
      %v2647 = vadd.f32 %v2646, %v2616
      %v2648 = vadd.f32 %v2647, %v2617
      %v2649 = vadd.f32 %v2648, %v2618
      %v2650 = vadd.f32 %v2649, %v2619
      %v2651 = vadd.f32 %v2650, %v2620
      %v2652 = vadd.f32 %v2651, %v2621
      %v2653 = vadd.f32 %v2652, %v2622
      %v2654 = vadd.f32 %v2653, %v2623
      %v2655 = vrot.slane %v2654, 4
      %v2656 = vadd.f32 %v2654, %v2655
      %v2657 = vrot.slane %v2656, 2
      %v2658 = vadd.f32 %v2656, %v2657
      %v2659 = vrot.slane %v2658, 1
      %v2660 = vadd.f32 %v2658, %v2659
      %2661 = vst [vmem:[%s208 + $0x1] sm:$0x1] %v2660
      %p2662 = scmp.lt.s32.totalorder %s16, 1
      %s2663 = scalar_select %p2662, %s16, 1
      %s2664 = smul.addr %s2663, 32
      %s2665 = smul.addr %s2664, 8
      %s2666 = scalar_lea.vmem %s3, %s2665
      %p2667 = scmp.lt.s32.totalorder %s16, 1
      %s2668 = scalar_select %p2667, %s16, 1
      %s2669 = smul.addr %s2668, 2
      %s2670 = scalar_lea.vmem %s4, %s2669
      // Predicated region
      $region33: #{resblock.4} parent=31 // pred_check
        %p2671 = pneg %p102
      $region34: #{resblock.4} parent=31 // pred_check_branch
        %2673 = sbr.rel (%p2671) target = $region36
      $region35: #{resblock.4} parent=31 // pred_region
        _
      $region36: #{resblock.4} parent=31 // pred_fallthru
        _
      // Predicated region
      $region37: #{resblock.4} parent=31 // pred_check
        %p2674 = pneg %p128
      $region38: #{resblock.4} parent=31 // pred_check_branch
        %2676 = sbr.rel (%p2674) target = $region40
      $region39: #{resblock.4} parent=31 // pred_region
        _
      $region40: #{resblock.4} parent=31 // pred_fallthru
        _
    $region32: #{resblock.4} parent=5 // pred_fallthru
      _
    %p2677 = scmp.le.s32.totalorder 2, %s11
    // Predicated region
    $region41: #{resblock.4} parent=5 // pred_check
      %p2678 = pneg %p2677
    $region42: #{resblock.4} parent=5 // pred_check_branch
      %2680 = sbr.rel (%p2678) target = $region44
    $region43: #{resblock.4} parent=5 // pred_region
      %s2681 = ssub.s32 %s11, 2
      // Predicated region
      $region45: #{resblock.4} parent=43 // pred_check
        %p2682 = pneg %p108
      $region46: #{resblock.4} parent=43 // pred_check_branch
        %2684 = sbr.rel (%p2682) target = $region48
      $region47: #{resblock.4} parent=43 // pred_region
        %p2685 = scmp.lt.s32.totalorder %s17, 1
        %s2686 = scalar_select %p2685, %s17, 1
        %s2687 = smul.addr %s2686, 32
        %s2688 = smul.addr %s2687, 8
        %s2689 = scalar_lea.vmem %s3, %s2688
      $region48: #{resblock.4} parent=43 // pred_fallthru
        _
      // Predicated region
      $region49: #{resblock.4} parent=43 // pred_check
        %p2690 = pneg %p134
      $region50: #{resblock.4} parent=43 // pred_check_branch
        %2692 = sbr.rel (%p2690) target = $region52
      $region51: #{resblock.4} parent=43 // pred_region
        %p2693 = scmp.lt.s32.totalorder %s17, 1
        %s2694 = scalar_select %p2693, %s17, 1
        %s2695 = smul.addr %s2694, 2
        %s2696 = scalar_lea.vmem %s4, %s2695
      $region52: #{resblock.4} parent=43 // pred_fallthru
        _
    $region44: #{resblock.4} parent=5 // pred_fallthru
      _
  $region6: #{resblock.4} parent=0 // loop_footer
    %s15 = sadd.s32 1, %s11
  $region7: #{resblock.4} parent=0 // loop_footer_branch
    %10 = sbr.rel target = $region3
  $region8: #{resblock.4} parent=0 // loop_exit
    _

// kernel: resblock.3
$region0: #{resblock.3}
  #allocation0 [shape = 'u32[]', space=smem, size = 0x4, offset = 0x4, fixed_abs, tag = 'smem constant byte address 0x4 - core index']
  #allocation1 [shape = 'u32[144,128]{1,0:T(1,128)}', space=vmem, size = 0x12000, scoped, tag = 'internal scratch']
  #allocation2 [shape = 'f32[18,18,128]{2,1,0:T(8,128)}', space=vmem, size = 0x36000, scoped, tag = 'scratch operand']
  #allocation3 [shape = 'bf16[256,1152]{1,0:T(16,128)(2,1)}', space=vmem, size = 0x90000, scoped, tag = 'scratch operand']
  %s0 = inlined_call_operand.vmem [shape: f32[2,16,16,128], index: 0, kind: input, shape index: {}]
  %s1 = inlined_call_operand.vmem [shape: bf16[1152,128], index: 1, kind: input, shape index: {}]
  %s2 = inlined_call_operand.vmem [shape: f32[2,256,128], index: 2, kind: output, shape index: {0}]
  %s3 = inlined_call_operand.vmem [shape: f32[2,2,128], index: 3, kind: output, shape index: {1}]
  %4 = xla_tuple %s2, %s3
  %s5 = sld [smem:[#allocation0]]
  $region49: #{resblock.3} parent=0
    _
  %s7 = ssub.s32 1, %s5
  %s8 = scalar_select 0, %s7, %s5
  loop: start=0, step=1, limit=4
  $region2: #{resblock.3} parent=0 // loop_pre_header
    _
  $region3: #{resblock.3} parent=0 // loop_header
    %s10 = sphi 0, %s14
    %p11 = scmp.ge.s32.totalorder %s10, 4
    %s20 = sphi 0, %s22
    %s23 = sphi 0, %s20
    %s24 = sphi 0, %s23
    %s40 = sphi 0, %s24
    %s44 = sphi 0, %s44
    %s46 = sphi 0, %s44
    %s47 = sphi 0, %s46
    %s61 = sphi 0, %s47
    %s67 = sphi 0, %s69
    %s70 = sphi 0, %s67
    %s71 = sphi 0, %s70
    %s87 = sphi 0, %s71
    %s93 = sphi 0, %s95
    %s96 = sphi 0, %s93
    %s97 = sphi 0, %s96
    %s113 = sphi 0, %s97
  $region4: #{resblock.3} parent=0 // loop_header_branch
    %13 = sbr.rel (%p11) target = $region8
  $region5: #{resblock.3} parent=0 // loop_body
    %s15 = ssub.s32 %s10, 1
    %s16 = ssub.s32 %s10, 2
    %s17 = sadd.s32 %s10, 1
    %s18 = ssub.s32 %s10, %s17
    %p19 = scmp.eq.s32.totalorder %s18, 0
    %s21 = sadd.s32 %s20, 1
    %s22 = scalar_select %p19, %s20, %s21
    %p25 = pneg %p19
    %p26 = scmp.eq.s32.totalorder %s10, 1
    %p27 = por %p25, %p26
    %p28 = scmp.ne.s32.totalorder %s20, %s23
    %p29 = scmp.eq.s32.totalorder %s10, 0
    %p30 = por %p28, %p29
    %p31 = scmp.ne.s32.totalorder %s20, %s23
    %p32 = scmp.eq.s32.totalorder %s15, 1
    %p33 = por %p31, %p32
    %p34 = scmp.ne.s32.totalorder %s23, %s24
    %p35 = scmp.eq.s32.totalorder %s15, 0
    %p36 = por %p34, %p35
    %p37 = scmp.ne.s32.totalorder %s23, %s24
    %p38 = scmp.eq.s32.totalorder %s16, 1
    %p39 = por %p37, %p38
    %p41 = scmp.ne.s32.totalorder %s24, %s40
    %p42 = scmp.eq.s32.totalorder %s16, 0
    %p43 = por %p41, %p42
    %s45 = sadd.s32 %s44, 1
    %p48 = scmp.eq.s32.totalorder %s10, 1
    %p49 = scmp.ne.s32.totalorder %s44, %s46
    %p50 = scmp.eq.s32.totalorder %s10, 0
    %p51 = por %p49, %p50
    %p52 = scmp.ne.s32.totalorder %s44, %s46
    %p53 = scmp.eq.s32.totalorder %s15, 1
    %p54 = por %p52, %p53
    %p55 = scmp.ne.s32.totalorder %s46, %s47
    %p56 = scmp.eq.s32.totalorder %s15, 0
    %p57 = por %p55, %p56
    %p58 = scmp.ne.s32.totalorder %s46, %s47
    %p59 = scmp.eq.s32.totalorder %s16, 1
    %p60 = por %p58, %p59
    %p62 = scmp.ne.s32.totalorder %s47, %s61
    %p63 = scmp.eq.s32.totalorder %s16, 0
    %p64 = por %p62, %p63
    %s65 = ssub.s32 %s10, %s17
    %p66 = scmp.eq.s32.totalorder %s65, 0
    %s68 = sadd.s32 %s67, 1
    %s69 = scalar_select %p66, %s67, %s68
    %p72 = pneg %p66
    %p73 = scmp.eq.s32.totalorder %s10, 1
    %p74 = por %p72, %p73
    %p75 = scmp.ne.s32.totalorder %s67, %s70
    %p76 = scmp.eq.s32.totalorder %s10, 0
    %p77 = por %p75, %p76
    %p78 = scmp.ne.s32.totalorder %s67, %s70
    %p79 = scmp.eq.s32.totalorder %s15, 1
    %p80 = por %p78, %p79
    %p81 = scmp.ne.s32.totalorder %s70, %s71
    %p82 = scmp.eq.s32.totalorder %s15, 0
    %p83 = por %p81, %p82
    %p84 = scmp.ne.s32.totalorder %s70, %s71
    %p85 = scmp.eq.s32.totalorder %s16, 1
    %p86 = por %p84, %p85
    %p88 = scmp.ne.s32.totalorder %s71, %s87
    %p89 = scmp.eq.s32.totalorder %s16, 0
    %p90 = por %p88, %p89
    %s91 = ssub.s32 %s10, %s17
    %p92 = scmp.eq.s32.totalorder %s91, 0
    %s94 = sadd.s32 %s93, 1
    %s95 = scalar_select %p92, %s93, %s94
    %p98 = pneg %p92
    %p99 = scmp.eq.s32.totalorder %s10, 1
    %p100 = por %p98, %p99
    %p101 = scmp.ne.s32.totalorder %s93, %s96
    %p102 = scmp.eq.s32.totalorder %s10, 0
    %p103 = por %p101, %p102
    %p104 = scmp.ne.s32.totalorder %s93, %s96
    %p105 = scmp.eq.s32.totalorder %s15, 1
    %p106 = por %p104, %p105
    %p107 = scmp.ne.s32.totalorder %s96, %s97
    %p108 = scmp.eq.s32.totalorder %s15, 0
    %p109 = por %p107, %p108
    %p110 = scmp.ne.s32.totalorder %s96, %s97
    %p111 = scmp.eq.s32.totalorder %s16, 1
    %p112 = por %p110, %p111
    %p114 = scmp.ne.s32.totalorder %s97, %s113
    %p115 = scmp.eq.s32.totalorder %s16, 0
    %p116 = por %p114, %p115
    %p117 = scmp.le.s32.totalorder 1, %s10
    %p118 = scmp.lt.s32.totalorder %s10, 3
    %p119 = pnand %p117, %p118
    %p120 = pneg %p119
    // Predicated region
    $region9: #{resblock.3} parent=5 // pred_check
      _
    $region10: #{resblock.3} parent=5 // pred_check_branch
      %122 = sbr.rel (%p119) target = $region12
    $region11: #{resblock.3} parent=5 // pred_region
      %s123 = ssub.s32 %s10, 1
      // Predicated region
      $region13: #{resblock.3} parent=11 // pred_check
        %p124 = pneg %p57
      $region14: #{resblock.3} parent=11 // pred_check_branch
        %126 = sbr.rel (%p124) target = $region16
      $region15: #{resblock.3} parent=11 // pred_region
        _
      $region16: #{resblock.3} parent=11 // pred_fallthru
        _
    $region12: #{resblock.3} parent=5 // pred_fallthru
      _
    %p127 = scmp.lt.s32.totalorder %s10, 2
    // Predicated region
    $region17: #{resblock.3} parent=5 // pred_check
      %p128 = pneg %p127
    $region18: #{resblock.3} parent=5 // pred_check_branch
      %130 = sbr.rel (%p128) target = $region20
    $region19: #{resblock.3} parent=5 // pred_region
      // Predicated region
      $region21: #{resblock.3} parent=19 // pred_check
        %p131 = pneg %p30
      $region22: #{resblock.3} parent=19 // pred_check_branch
        %133 = sbr.rel (%p131) target = $region24
      $region23: #{resblock.3} parent=19 // pred_region
        %p134 = scmp.lt.s32.totalorder %s10, 1
        %s135 = scalar_select %p134, %s10, 1
        %s136 = smul.addr %s135, 32
        %s137 = smul.addr %s136, 8
        %s138 = scalar_lea.vmem %s0, %s137
      $region24: #{resblock.3} parent=19 // pred_fallthru
        _
    $region20: #{resblock.3} parent=5 // pred_fallthru
      _
    %p139 = scmp.le.s32.totalorder 1, %s10
    %p140 = scmp.lt.s32.totalorder %s10, 3
    %p141 = pnand %p139, %p140
    %p142 = pneg %p141
    // Predicated region
    $region25: #{resblock.3} parent=5 // pred_check
      _
    $region26: #{resblock.3} parent=5 // pred_check_branch
      %144 = sbr.rel (%p141) target = $region28
    $region27: #{resblock.3} parent=5 // pred_region
      %s145 = ssub.s32 %s10, 1
      %p146 = scmp.lt.s32.totalorder %s15, 1
      %s147 = scalar_select %p146, %s15, 1
      %s148 = smul.addr %s147, 32
      %s149 = smul.addr %s148, 8
      %s150 = scalar_lea.vmem %s0, %s149
      %p151 = pneg %p36
      %p152 = pneg %p33
      %p153 = pneg %p57
      %p154 = pneg %p54
      %p155 = pneg %p83
      %p156 = pneg %p80
      %p157 = scmp.lt.s32.totalorder %s15, 1
      %s158 = scalar_select %p157, %s15, 1
      %s159 = smul.addr %s158, 32
      %s160 = smul.addr %s159, 8
      %s161 = scalar_lea.vmem %s2, %s160
      %p162 = pneg %p109
      %p163 = pneg %p106
      %p164 = scmp.lt.s32.totalorder %s15, 1
      %s165 = scalar_select %p164, %s15, 1
      %s166 = smul.addr %s165, 2
      %s167 = scalar_lea.vmem %s3, %s166
      %p168 = scmp.lt.s32.totalorder %s15, 1
      %s169 = scalar_select %p168, %s15, 1
      %s170 = smul.addr %s169, 32
      %s171 = smul.addr %s170, 8
      %s172 = scalar_lea.vmem %s0, %s171
      %p173 = scmp.lt.s32.totalorder %s15, 1
      %s174 = scalar_select %p173, %s15, 1
      %s175 = smul.addr %s174, 32
      %s176 = smul.addr %s175, 8
      %s177 = scalar_lea.vmem %s2, %s176
      %p178 = scmp.lt.s32.totalorder %s15, 1
      %s179 = scalar_select %p178, %s15, 1
      %s180 = smul.addr %s179, 2
      %s181 = scalar_lea.vmem %s3, %s180
      %v183 = vld [vmem:[%s172] sm:$0xff]
      %v184 = vld [vmem:[%s172 + $0x8] sm:$0xff]
      %v185 = vld [vmem:[%s172 + $0x10] sm:$0xff]
      %v186 = vld [vmem:[%s172 + $0x18] sm:$0xff]
      %v187 = vld [vmem:[%s172 + $0x20] sm:$0xff]
      %v188 = vld [vmem:[%s172 + $0x28] sm:$0xff]
      %v189 = vld [vmem:[%s172 + $0x30] sm:$0xff]
      %v190 = vld [vmem:[%s172 + $0x38] sm:$0xff]
      %v191 = vld [vmem:[%s172 + $0x40] sm:$0xff]
      %v192 = vld [vmem:[%s172 + $0x48] sm:$0xff]
      %v193 = vld [vmem:[%s172 + $0x50] sm:$0xff]
      %v194 = vld [vmem:[%s172 + $0x58] sm:$0xff]
      %v195 = vld [vmem:[%s172 + $0x60] sm:$0xff]
      %v196 = vld [vmem:[%s172 + $0x68] sm:$0xff]
      %v197 = vld [vmem:[%s172 + $0x70] sm:$0xff]
      %v198 = vld [vmem:[%s172 + $0x78] sm:$0xff]
      %v199 = vld [vmem:[%s172 + $0x80] sm:$0xff]
      %v200 = vld [vmem:[%s172 + $0x88] sm:$0xff]
      %v201 = vld [vmem:[%s172 + $0x90] sm:$0xff]
      %v202 = vld [vmem:[%s172 + $0x98] sm:$0xff]
      %v203 = vld [vmem:[%s172 + $0xa0] sm:$0xff]
      %v204 = vld [vmem:[%s172 + $0xa8] sm:$0xff]
      %v205 = vld [vmem:[%s172 + $0xb0] sm:$0xff]
      %v206 = vld [vmem:[%s172 + $0xb8] sm:$0xff]
      %v207 = vld [vmem:[%s172 + $0xc0] sm:$0xff]
      %v208 = vld [vmem:[%s172 + $0xc8] sm:$0xff]
      %v209 = vld [vmem:[%s172 + $0xd0] sm:$0xff]
      %v210 = vld [vmem:[%s172 + $0xd8] sm:$0xff]
      %v211 = vld [vmem:[%s172 + $0xe0] sm:$0xff]
      %v212 = vld [vmem:[%s172 + $0xe8] sm:$0xff]
      %v213 = vld [vmem:[%s172 + $0xf0] sm:$0xff]
      %v214 = vld [vmem:[%s172 + $0xf8] sm:$0xff]
      %215 = vst [vmem:[#allocation2] sm:$0xff] 0.0
      %216 = vst [vmem:[#allocation2 + $0x8] sm:$0xff] 0.0
      %217 = vst [vmem:[#allocation2 + $0x10] sm:$0x3] 0.0
      %s218 = scalar_lea.vmem [#allocation2], 408
      %219 = vst [vmem:[%s218] sm:$0xff] 0.0
      %220 = vst [vmem:[%s218 + $0x8] sm:$0xff] 0.0
      %221 = vst [vmem:[%s218 + $0x10] sm:$0x3] 0.0
      %s222 = scalar_lea.vmem [#allocation2], 24
      %223 = vst [vmem:[%s222] sm:$0x1] 0.0
      %224 = vst [vmem:[%s222 + $0x18] sm:$0x1] 0.0
      %225 = vst [vmem:[%s222 + $0x30] sm:$0x1] 0.0
      %226 = vst [vmem:[%s222 + $0x48] sm:$0x1] 0.0
      %227 = vst [vmem:[%s222 + $0x60] sm:$0x1] 0.0
      %228 = vst [vmem:[%s222 + $0x78] sm:$0x1] 0.0
      %229 = vst [vmem:[%s222 + $0x90] sm:$0x1] 0.0
      %230 = vst [vmem:[%s222 + $0xa8] sm:$0x1] 0.0
      %231 = vst [vmem:[%s222 + $0xc0] sm:$0x1] 0.0
      %232 = vst [vmem:[%s222 + $0xd8] sm:$0x1] 0.0
      %233 = vst [vmem:[%s222 + $0xf0] sm:$0x1] 0.0
      %234 = vst [vmem:[%s222 + $0x108] sm:$0x1] 0.0
      %235 = vst [vmem:[%s222 + $0x120] sm:$0x1] 0.0
      %236 = vst [vmem:[%s222 + $0x138] sm:$0x1] 0.0
      %237 = vst [vmem:[%s222 + $0x150] sm:$0x1] 0.0
      %238 = vst [vmem:[%s222 + $0x168] sm:$0x1] 0.0
      %239 = vst [vmem:[%s222 + $0x11] sm:$0x1] 0.0
      %240 = vst [vmem:[%s222 + $0x29] sm:$0x1] 0.0
      %241 = vst [vmem:[%s222 + $0x41] sm:$0x1] 0.0
      %242 = vst [vmem:[%s222 + $0x59] sm:$0x1] 0.0
      %243 = vst [vmem:[%s222 + $0x71] sm:$0x1] 0.0
      %244 = vst [vmem:[%s222 + $0x89] sm:$0x1] 0.0
      %245 = vst [vmem:[%s222 + $0xa1] sm:$0x1] 0.0
      %246 = vst [vmem:[%s222 + $0xb9] sm:$0x1] 0.0
      %247 = vst [vmem:[%s222 + $0xd1] sm:$0x1] 0.0
      %248 = vst [vmem:[%s222 + $0xe9] sm:$0x1] 0.0
      %249 = vst [vmem:[%s222 + $0x101] sm:$0x1] 0.0
      %250 = vst [vmem:[%s222 + $0x119] sm:$0x1] 0.0
      %251 = vst [vmem:[%s222 + $0x131] sm:$0x1] 0.0
      %252 = vst [vmem:[%s222 + $0x149] sm:$0x1] 0.0
      %253 = vst [vmem:[%s222 + $0x161] sm:$0x1] 0.0
      %254 = vst [vmem:[%s222 + $0x179] sm:$0x1] 0.0
      %255 = vst [vmem:[%s222 + $0x1] sm:$0xff] %v183
      %256 = vst [vmem:[%s222 + $0x9] sm:$0xff] %v184
      %257 = vst [vmem:[%s222 + $0x19] sm:$0xff] %v185
      %258 = vst [vmem:[%s222 + $0x21] sm:$0xff] %v186
      %259 = vst [vmem:[%s222 + $0x31] sm:$0xff] %v187
      %260 = vst [vmem:[%s222 + $0x39] sm:$0xff] %v188
      %261 = vst [vmem:[%s222 + $0x49] sm:$0xff] %v189
      %262 = vst [vmem:[%s222 + $0x51] sm:$0xff] %v190
      %263 = vst [vmem:[%s222 + $0x61] sm:$0xff] %v191
      %264 = vst [vmem:[%s222 + $0x69] sm:$0xff] %v192
      %265 = vst [vmem:[%s222 + $0x79] sm:$0xff] %v193
      %266 = vst [vmem:[%s222 + $0x81] sm:$0xff] %v194
      %267 = vst [vmem:[%s222 + $0x91] sm:$0xff] %v195
      %268 = vst [vmem:[%s222 + $0x99] sm:$0xff] %v196
      %269 = vst [vmem:[%s222 + $0xa9] sm:$0xff] %v197
      %270 = vst [vmem:[%s222 + $0xb1] sm:$0xff] %v198
      %271 = vst [vmem:[%s222 + $0xc1] sm:$0xff] %v199
      %272 = vst [vmem:[%s222 + $0xc9] sm:$0xff] %v200
      %273 = vst [vmem:[%s222 + $0xd9] sm:$0xff] %v201
      %274 = vst [vmem:[%s222 + $0xe1] sm:$0xff] %v202
      %275 = vst [vmem:[%s222 + $0xf1] sm:$0xff] %v203
      %276 = vst [vmem:[%s222 + $0xf9] sm:$0xff] %v204
      %277 = vst [vmem:[%s222 + $0x109] sm:$0xff] %v205
      %278 = vst [vmem:[%s222 + $0x111] sm:$0xff] %v206
      %279 = vst [vmem:[%s222 + $0x121] sm:$0xff] %v207
      %280 = vst [vmem:[%s222 + $0x129] sm:$0xff] %v208
      %281 = vst [vmem:[%s222 + $0x139] sm:$0xff] %v209
      %282 = vst [vmem:[%s222 + $0x141] sm:$0xff] %v210
      %283 = vst [vmem:[%s222 + $0x151] sm:$0xff] %v211
      %284 = vst [vmem:[%s222 + $0x159] sm:$0xff] %v212
      %285 = vst [vmem:[%s222 + $0x169] sm:$0xff] %v213
      %286 = vst [vmem:[%s222 + $0x171] sm:$0xff] %v214
      %v287 = vld [vmem:[#allocation2] sm:$0xff]
      %v288 = vld [vmem:[#allocation2 + $0x8] sm:$0xff]
      %v289 = vld [vmem:[#allocation2 + $0x18] sm:$0xff]
      %v290 = vld [vmem:[#allocation2 + $0x20] sm:$0xff]
      %v291 = vld [vmem:[#allocation2 + $0x30] sm:$0xff]
      %v292 = vld [vmem:[#allocation2 + $0x38] sm:$0xff]
      %v293 = vld [vmem:[#allocation2 + $0x48] sm:$0xff]
      %v294 = vld [vmem:[#allocation2 + $0x50] sm:$0xff]
      %v295 = vld [vmem:[#allocation2 + $0x60] sm:$0xff]
      %v296 = vld [vmem:[#allocation2 + $0x68] sm:$0xff]
      %v297 = vld [vmem:[#allocation2 + $0x78] sm:$0xff]
      %v298 = vld [vmem:[#allocation2 + $0x80] sm:$0xff]
      %v299 = vld [vmem:[#allocation2 + $0x90] sm:$0xff]
      %v300 = vld [vmem:[#allocation2 + $0x98] sm:$0xff]
      %v301 = vld [vmem:[#allocation2 + $0xa8] sm:$0xff]
      %v302 = vld [vmem:[#allocation2 + $0xb0] sm:$0xff]
      %v303 = vld [vmem:[#allocation2 + $0xc0] sm:$0xff]
      %v304 = vld [vmem:[#allocation2 + $0xc8] sm:$0xff]
      %v305 = vld [vmem:[#allocation2 + $0xd8] sm:$0xff]
      %v306 = vld [vmem:[#allocation2 + $0xe0] sm:$0xff]
      %v307 = vld [vmem:[#allocation2 + $0xf0] sm:$0xff]
      %v308 = vld [vmem:[#allocation2 + $0xf8] sm:$0xff]
      %v309 = vld [vmem:[#allocation2 + $0x108] sm:$0xff]
      %v310 = vld [vmem:[#allocation2 + $0x110] sm:$0xff]
      %v311 = vld [vmem:[#allocation2 + $0x120] sm:$0xff]
      %v312 = vld [vmem:[#allocation2 + $0x128] sm:$0xff]
      %v313 = vld [vmem:[#allocation2 + $0x138] sm:$0xff]
      %v314 = vld [vmem:[#allocation2 + $0x140] sm:$0xff]
      %v315 = vld [vmem:[#allocation2 + $0x150] sm:$0xff]
      %v316 = vld [vmem:[#allocation2 + $0x158] sm:$0xff]
      %v317 = vld [vmem:[#allocation2 + $0x168] sm:$0xff]
      %v318 = vld [vmem:[#allocation2 + $0x170] sm:$0xff]
      %v319 = vpack.c.bf16 %v288, %v287
      %v320 = vpack.c.bf16 %v290, %v289
      %v321 = vpack.c.bf16 %v292, %v291
      %v322 = vpack.c.bf16 %v294, %v293
      %v323 = vpack.c.bf16 %v296, %v295
      %v324 = vpack.c.bf16 %v298, %v297
      %v325 = vpack.c.bf16 %v300, %v299
      %v326 = vpack.c.bf16 %v302, %v301
      %v327 = vpack.c.bf16 %v304, %v303
      %v328 = vpack.c.bf16 %v306, %v305
      %v329 = vpack.c.bf16 %v308, %v307
      %v330 = vpack.c.bf16 %v310, %v309
      %v331 = vpack.c.bf16 %v312, %v311
      %v332 = vpack.c.bf16 %v314, %v313
      %v333 = vpack.c.bf16 %v316, %v315
      %v334 = vpack.c.bf16 %v318, %v317
      %335 = vst [vmem:[#allocation3] sm:$0xff] %v319
      %336 = vst [vmem:[#allocation3 + $0x48] sm:$0xff] %v320
      %337 = vst [vmem:[#allocation3 + $0x90] sm:$0xff] %v321
      %338 = vst [vmem:[#allocation3 + $0xd8] sm:$0xff] %v322
      %339 = vst [vmem:[#allocation3 + $0x120] sm:$0xff] %v323
      %340 = vst [vmem:[#allocation3 + $0x168] sm:$0xff] %v324
      %341 = vst [vmem:[#allocation3 + $0x1b0] sm:$0xff] %v325
      %342 = vst [vmem:[#allocation3 + $0x1f8] sm:$0xff] %v326
      %343 = vst [vmem:[#allocation3 + $0x240] sm:$0xff] %v327
      %344 = vst [vmem:[#allocation3 + $0x288] sm:$0xff] %v328
      %345 = vst [vmem:[#allocation3 + $0x2d0] sm:$0xff] %v329
      %346 = vst [vmem:[#allocation3 + $0x318] sm:$0xff] %v330
      %347 = vst [vmem:[#allocation3 + $0x360] sm:$0xff] %v331
      %348 = vst [vmem:[#allocation3 + $0x3a8] sm:$0xff] %v332
      %349 = vst [vmem:[#allocation3 + $0x3f0] sm:$0xff] %v333
      %350 = vst [vmem:[#allocation3 + $0x438] sm:$0xff] %v334
      %v351 = vld [vmem:[#allocation2 + $0x1] sm:$0xff]
      %v352 = vld [vmem:[#allocation2 + $0x9] sm:$0xff]
      %v353 = vld [vmem:[#allocation2 + $0x19] sm:$0xff]
      %v354 = vld [vmem:[#allocation2 + $0x21] sm:$0xff]
      %v355 = vld [vmem:[#allocation2 + $0x31] sm:$0xff]
      %v356 = vld [vmem:[#allocation2 + $0x39] sm:$0xff]
      %v357 = vld [vmem:[#allocation2 + $0x49] sm:$0xff]
      %v358 = vld [vmem:[#allocation2 + $0x51] sm:$0xff]
      %v359 = vld [vmem:[#allocation2 + $0x61] sm:$0xff]
      %v360 = vld [vmem:[#allocation2 + $0x69] sm:$0xff]
      %v361 = vld [vmem:[#allocation2 + $0x79] sm:$0xff]
      %v362 = vld [vmem:[#allocation2 + $0x81] sm:$0xff]
      %v363 = vld [vmem:[#allocation2 + $0x91] sm:$0xff]
      %v364 = vld [vmem:[#allocation2 + $0x99] sm:$0xff]
      %v365 = vld [vmem:[#allocation2 + $0xa9] sm:$0xff]
      %v366 = vld [vmem:[#allocation2 + $0xb1] sm:$0xff]
      %v367 = vld [vmem:[#allocation2 + $0xc1] sm:$0xff]
      %v368 = vld [vmem:[#allocation2 + $0xc9] sm:$0xff]
      %v369 = vld [vmem:[#allocation2 + $0xd9] sm:$0xff]
      %v370 = vld [vmem:[#allocation2 + $0xe1] sm:$0xff]
      %v371 = vld [vmem:[#allocation2 + $0xf1] sm:$0xff]
      %v372 = vld [vmem:[#allocation2 + $0xf9] sm:$0xff]
      %v373 = vld [vmem:[#allocation2 + $0x109] sm:$0xff]
      %v374 = vld [vmem:[#allocation2 + $0x111] sm:$0xff]
      %v375 = vld [vmem:[#allocation2 + $0x121] sm:$0xff]
      %v376 = vld [vmem:[#allocation2 + $0x129] sm:$0xff]
      %v377 = vld [vmem:[#allocation2 + $0x139] sm:$0xff]
      %v378 = vld [vmem:[#allocation2 + $0x141] sm:$0xff]
      %v379 = vld [vmem:[#allocation2 + $0x151] sm:$0xff]
      %v380 = vld [vmem:[#allocation2 + $0x159] sm:$0xff]
      %v381 = vld [vmem:[#allocation2 + $0x169] sm:$0xff]
      %v382 = vld [vmem:[#allocation2 + $0x171] sm:$0xff]
      %v383 = vpack.c.bf16 %v352, %v351
      %v384 = vpack.c.bf16 %v354, %v353
      %v385 = vpack.c.bf16 %v356, %v355
      %v386 = vpack.c.bf16 %v358, %v357
      %v387 = vpack.c.bf16 %v360, %v359
      %v388 = vpack.c.bf16 %v362, %v361
      %v389 = vpack.c.bf16 %v364, %v363
      %v390 = vpack.c.bf16 %v366, %v365
      %v391 = vpack.c.bf16 %v368, %v367
      %v392 = vpack.c.bf16 %v370, %v369
      %v393 = vpack.c.bf16 %v372, %v371
      %v394 = vpack.c.bf16 %v374, %v373
      %v395 = vpack.c.bf16 %v376, %v375
      %v396 = vpack.c.bf16 %v378, %v377
      %v397 = vpack.c.bf16 %v380, %v379
      %v398 = vpack.c.bf16 %v382, %v381
      %399 = vst [vmem:[#allocation3 + $0x8] sm:$0xff] %v383
      %400 = vst [vmem:[#allocation3 + $0x50] sm:$0xff] %v384
      %401 = vst [vmem:[#allocation3 + $0x98] sm:$0xff] %v385
      %402 = vst [vmem:[#allocation3 + $0xe0] sm:$0xff] %v386
      %403 = vst [vmem:[#allocation3 + $0x128] sm:$0xff] %v387
      %404 = vst [vmem:[#allocation3 + $0x170] sm:$0xff] %v388
      %405 = vst [vmem:[#allocation3 + $0x1b8] sm:$0xff] %v389
      %406 = vst [vmem:[#allocation3 + $0x200] sm:$0xff] %v390
      %407 = vst [vmem:[#allocation3 + $0x248] sm:$0xff] %v391
      %408 = vst [vmem:[#allocation3 + $0x290] sm:$0xff] %v392
      %409 = vst [vmem:[#allocation3 + $0x2d8] sm:$0xff] %v393
      %410 = vst [vmem:[#allocation3 + $0x320] sm:$0xff] %v394
      %411 = vst [vmem:[#allocation3 + $0x368] sm:$0xff] %v395
      %412 = vst [vmem:[#allocation3 + $0x3b0] sm:$0xff] %v396
      %413 = vst [vmem:[#allocation3 + $0x3f8] sm:$0xff] %v397
      %414 = vst [vmem:[#allocation3 + $0x440] sm:$0xff] %v398
      %v415 = vld [vmem:[#allocation2 + $0x2] sm:$0xff]
      %v416 = vld [vmem:[#allocation2 + $0xa] sm:$0xff]
      %v417 = vld [vmem:[#allocation2 + $0x1a] sm:$0xff]
      %v418 = vld [vmem:[#allocation2 + $0x22] sm:$0xff]
      %v419 = vld [vmem:[#allocation2 + $0x32] sm:$0xff]
      %v420 = vld [vmem:[#allocation2 + $0x3a] sm:$0xff]
      %v421 = vld [vmem:[#allocation2 + $0x4a] sm:$0xff]
      %v422 = vld [vmem:[#allocation2 + $0x52] sm:$0xff]
      %v423 = vld [vmem:[#allocation2 + $0x62] sm:$0xff]
      %v424 = vld [vmem:[#allocation2 + $0x6a] sm:$0xff]
      %v425 = vld [vmem:[#allocation2 + $0x7a] sm:$0xff]
      %v426 = vld [vmem:[#allocation2 + $0x82] sm:$0xff]
      %v427 = vld [vmem:[#allocation2 + $0x92] sm:$0xff]
      %v428 = vld [vmem:[#allocation2 + $0x9a] sm:$0xff]
      %v429 = vld [vmem:[#allocation2 + $0xaa] sm:$0xff]
      %v430 = vld [vmem:[#allocation2 + $0xb2] sm:$0xff]
      %v431 = vld [vmem:[#allocation2 + $0xc2] sm:$0xff]
      %v432 = vld [vmem:[#allocation2 + $0xca] sm:$0xff]
      %v433 = vld [vmem:[#allocation2 + $0xda] sm:$0xff]
      %v434 = vld [vmem:[#allocation2 + $0xe2] sm:$0xff]
      %v435 = vld [vmem:[#allocation2 + $0xf2] sm:$0xff]
      %v436 = vld [vmem:[#allocation2 + $0xfa] sm:$0xff]
      %v437 = vld [vmem:[#allocation2 + $0x10a] sm:$0xff]
      %v438 = vld [vmem:[#allocation2 + $0x112] sm:$0xff]
      %v439 = vld [vmem:[#allocation2 + $0x122] sm:$0xff]
      %v440 = vld [vmem:[#allocation2 + $0x12a] sm:$0xff]
      %v441 = vld [vmem:[#allocation2 + $0x13a] sm:$0xff]
      %v442 = vld [vmem:[#allocation2 + $0x142] sm:$0xff]
      %v443 = vld [vmem:[#allocation2 + $0x152] sm:$0xff]
      %v444 = vld [vmem:[#allocation2 + $0x15a] sm:$0xff]
      %v445 = vld [vmem:[#allocation2 + $0x16a] sm:$0xff]
      %v446 = vld [vmem:[#allocation2 + $0x172] sm:$0xff]
      %v447 = vpack.c.bf16 %v416, %v415
      %v448 = vpack.c.bf16 %v418, %v417
      %v449 = vpack.c.bf16 %v420, %v419
      %v450 = vpack.c.bf16 %v422, %v421
      %v451 = vpack.c.bf16 %v424, %v423
      %v452 = vpack.c.bf16 %v426, %v425
      %v453 = vpack.c.bf16 %v428, %v427
      %v454 = vpack.c.bf16 %v430, %v429
      %v455 = vpack.c.bf16 %v432, %v431
      %v456 = vpack.c.bf16 %v434, %v433
      %v457 = vpack.c.bf16 %v436, %v435
      %v458 = vpack.c.bf16 %v438, %v437
      %v459 = vpack.c.bf16 %v440, %v439
      %v460 = vpack.c.bf16 %v442, %v441
      %v461 = vpack.c.bf16 %v444, %v443
      %v462 = vpack.c.bf16 %v446, %v445
      %463 = vst [vmem:[#allocation3 + $0x10] sm:$0xff] %v447
      %464 = vst [vmem:[#allocation3 + $0x58] sm:$0xff] %v448
      %465 = vst [vmem:[#allocation3 + $0xa0] sm:$0xff] %v449
      %466 = vst [vmem:[#allocation3 + $0xe8] sm:$0xff] %v450
      %467 = vst [vmem:[#allocation3 + $0x130] sm:$0xff] %v451
      %468 = vst [vmem:[#allocation3 + $0x178] sm:$0xff] %v452
      %469 = vst [vmem:[#allocation3 + $0x1c0] sm:$0xff] %v453
      %470 = vst [vmem:[#allocation3 + $0x208] sm:$0xff] %v454
      %471 = vst [vmem:[#allocation3 + $0x250] sm:$0xff] %v455
      %472 = vst [vmem:[#allocation3 + $0x298] sm:$0xff] %v456
      %473 = vst [vmem:[#allocation3 + $0x2e0] sm:$0xff] %v457
      %474 = vst [vmem:[#allocation3 + $0x328] sm:$0xff] %v458
      %475 = vst [vmem:[#allocation3 + $0x370] sm:$0xff] %v459
      %476 = vst [vmem:[#allocation3 + $0x3b8] sm:$0xff] %v460
      %477 = vst [vmem:[#allocation3 + $0x400] sm:$0xff] %v461
      %478 = vst [vmem:[#allocation3 + $0x448] sm:$0xff] %v462
      %v479 = vld [vmem:[%s222] sm:$0xff]
      %v480 = vld [vmem:[%s222 + $0x8] sm:$0xff]
      %v481 = vld [vmem:[%s222 + $0x18] sm:$0xff]
      %v482 = vld [vmem:[%s222 + $0x20] sm:$0xff]
      %v483 = vld [vmem:[%s222 + $0x30] sm:$0xff]
      %v484 = vld [vmem:[%s222 + $0x38] sm:$0xff]
      %v485 = vld [vmem:[%s222 + $0x48] sm:$0xff]
      %v486 = vld [vmem:[%s222 + $0x50] sm:$0xff]
      %v487 = vld [vmem:[%s222 + $0x60] sm:$0xff]
      %v488 = vld [vmem:[%s222 + $0x68] sm:$0xff]
      %v489 = vld [vmem:[%s222 + $0x78] sm:$0xff]
      %v490 = vld [vmem:[%s222 + $0x80] sm:$0xff]
      %v491 = vld [vmem:[%s222 + $0x90] sm:$0xff]
      %v492 = vld [vmem:[%s222 + $0x98] sm:$0xff]
      %v493 = vld [vmem:[%s222 + $0xa8] sm:$0xff]
      %v494 = vld [vmem:[%s222 + $0xb0] sm:$0xff]
      %v495 = vld [vmem:[%s222 + $0xc0] sm:$0xff]
      %v496 = vld [vmem:[%s222 + $0xc8] sm:$0xff]
      %v497 = vld [vmem:[%s222 + $0xd8] sm:$0xff]
      %v498 = vld [vmem:[%s222 + $0xe0] sm:$0xff]
      %v499 = vld [vmem:[%s222 + $0xf0] sm:$0xff]
      %v500 = vld [vmem:[%s222 + $0xf8] sm:$0xff]
      %v501 = vld [vmem:[%s222 + $0x108] sm:$0xff]
      %v502 = vld [vmem:[%s222 + $0x110] sm:$0xff]
      %v503 = vld [vmem:[%s222 + $0x120] sm:$0xff]
      %v504 = vld [vmem:[%s222 + $0x128] sm:$0xff]
      %v505 = vld [vmem:[%s222 + $0x138] sm:$0xff]
      %v506 = vld [vmem:[%s222 + $0x140] sm:$0xff]
      %v507 = vld [vmem:[%s222 + $0x150] sm:$0xff]
      %v508 = vld [vmem:[%s222 + $0x158] sm:$0xff]
      %v509 = vld [vmem:[%s222 + $0x168] sm:$0xff]
      %v510 = vld [vmem:[%s222 + $0x170] sm:$0xff]
      %v511 = vpack.c.bf16 %v480, %v479
      %v512 = vpack.c.bf16 %v482, %v481
      %v513 = vpack.c.bf16 %v484, %v483
      %v514 = vpack.c.bf16 %v486, %v485
      %v515 = vpack.c.bf16 %v488, %v487
      %v516 = vpack.c.bf16 %v490, %v489
      %v517 = vpack.c.bf16 %v492, %v491
      %v518 = vpack.c.bf16 %v494, %v493
      %v519 = vpack.c.bf16 %v496, %v495
      %v520 = vpack.c.bf16 %v498, %v497
      %v521 = vpack.c.bf16 %v500, %v499
      %v522 = vpack.c.bf16 %v502, %v501
      %v523 = vpack.c.bf16 %v504, %v503
      %v524 = vpack.c.bf16 %v506, %v505
      %v525 = vpack.c.bf16 %v508, %v507
      %v526 = vpack.c.bf16 %v510, %v509
      %527 = vst [vmem:[#allocation3 + $0x18] sm:$0xff] %v511
      %528 = vst [vmem:[#allocation3 + $0x60] sm:$0xff] %v512
      %529 = vst [vmem:[#allocation3 + $0xa8] sm:$0xff] %v513
      %530 = vst [vmem:[#allocation3 + $0xf0] sm:$0xff] %v514
      %531 = vst [vmem:[#allocation3 + $0x138] sm:$0xff] %v515
      %532 = vst [vmem:[#allocation3 + $0x180] sm:$0xff] %v516
      %533 = vst [vmem:[#allocation3 + $0x1c8] sm:$0xff] %v517
      %534 = vst [vmem:[#allocation3 + $0x210] sm:$0xff] %v518
      %535 = vst [vmem:[#allocation3 + $0x258] sm:$0xff] %v519
      %536 = vst [vmem:[#allocation3 + $0x2a0] sm:$0xff] %v520
      %537 = vst [vmem:[#allocation3 + $0x2e8] sm:$0xff] %v521
      %538 = vst [vmem:[#allocation3 + $0x330] sm:$0xff] %v522
      %539 = vst [vmem:[#allocation3 + $0x378] sm:$0xff] %v523
      %540 = vst [vmem:[#allocation3 + $0x3c0] sm:$0xff] %v524
      %541 = vst [vmem:[#allocation3 + $0x408] sm:$0xff] %v525
      %542 = vst [vmem:[#allocation3 + $0x450] sm:$0xff] %v526
      %v543 = vld [vmem:[%s222 + $0x1] sm:$0xff]
      %v544 = vld [vmem:[%s222 + $0x9] sm:$0xff]
      %v545 = vld [vmem:[%s222 + $0x19] sm:$0xff]
      %v546 = vld [vmem:[%s222 + $0x21] sm:$0xff]
      %v547 = vld [vmem:[%s222 + $0x31] sm:$0xff]
      %v548 = vld [vmem:[%s222 + $0x39] sm:$0xff]
      %v549 = vld [vmem:[%s222 + $0x49] sm:$0xff]
      %v550 = vld [vmem:[%s222 + $0x51] sm:$0xff]
      %v551 = vld [vmem:[%s222 + $0x61] sm:$0xff]
      %v552 = vld [vmem:[%s222 + $0x69] sm:$0xff]
      %v553 = vld [vmem:[%s222 + $0x79] sm:$0xff]
      %v554 = vld [vmem:[%s222 + $0x81] sm:$0xff]
      %v555 = vld [vmem:[%s222 + $0x91] sm:$0xff]
      %v556 = vld [vmem:[%s222 + $0x99] sm:$0xff]
      %v557 = vld [vmem:[%s222 + $0xa9] sm:$0xff]
      %v558 = vld [vmem:[%s222 + $0xb1] sm:$0xff]
      %v559 = vld [vmem:[%s222 + $0xc1] sm:$0xff]
      %v560 = vld [vmem:[%s222 + $0xc9] sm:$0xff]
      %v561 = vld [vmem:[%s222 + $0xd9] sm:$0xff]
      %v562 = vld [vmem:[%s222 + $0xe1] sm:$0xff]
      %v563 = vld [vmem:[%s222 + $0xf1] sm:$0xff]
      %v564 = vld [vmem:[%s222 + $0xf9] sm:$0xff]
      %v565 = vld [vmem:[%s222 + $0x109] sm:$0xff]
      %v566 = vld [vmem:[%s222 + $0x111] sm:$0xff]
      %v567 = vld [vmem:[%s222 + $0x121] sm:$0xff]
      %v568 = vld [vmem:[%s222 + $0x129] sm:$0xff]
      %v569 = vld [vmem:[%s222 + $0x139] sm:$0xff]
      %v570 = vld [vmem:[%s222 + $0x141] sm:$0xff]
      %v571 = vld [vmem:[%s222 + $0x151] sm:$0xff]
      %v572 = vld [vmem:[%s222 + $0x159] sm:$0xff]
      %v573 = vld [vmem:[%s222 + $0x169] sm:$0xff]
      %v574 = vld [vmem:[%s222 + $0x171] sm:$0xff]
      %v575 = vpack.c.bf16 %v544, %v543
      %v576 = vpack.c.bf16 %v546, %v545
      %v577 = vpack.c.bf16 %v548, %v547
      %v578 = vpack.c.bf16 %v550, %v549
      %v579 = vpack.c.bf16 %v552, %v551
      %v580 = vpack.c.bf16 %v554, %v553
      %v581 = vpack.c.bf16 %v556, %v555
      %v582 = vpack.c.bf16 %v558, %v557
      %v583 = vpack.c.bf16 %v560, %v559
      %v584 = vpack.c.bf16 %v562, %v561
      %v585 = vpack.c.bf16 %v564, %v563
      %v586 = vpack.c.bf16 %v566, %v565
      %v587 = vpack.c.bf16 %v568, %v567
      %v588 = vpack.c.bf16 %v570, %v569
      %v589 = vpack.c.bf16 %v572, %v571
      %v590 = vpack.c.bf16 %v574, %v573
      %591 = vst [vmem:[#allocation3 + $0x20] sm:$0xff] %v575
      %592 = vst [vmem:[#allocation3 + $0x68] sm:$0xff] %v576
      %593 = vst [vmem:[#allocation3 + $0xb0] sm:$0xff] %v577
      %594 = vst [vmem:[#allocation3 + $0xf8] sm:$0xff] %v578
      %595 = vst [vmem:[#allocation3 + $0x140] sm:$0xff] %v579
      %596 = vst [vmem:[#allocation3 + $0x188] sm:$0xff] %v580
      %597 = vst [vmem:[#allocation3 + $0x1d0] sm:$0xff] %v581
      %598 = vst [vmem:[#allocation3 + $0x218] sm:$0xff] %v582
      %599 = vst [vmem:[#allocation3 + $0x260] sm:$0xff] %v583
      %600 = vst [vmem:[#allocation3 + $0x2a8] sm:$0xff] %v584
      %601 = vst [vmem:[#allocation3 + $0x2f0] sm:$0xff] %v585
      %602 = vst [vmem:[#allocation3 + $0x338] sm:$0xff] %v586
      %603 = vst [vmem:[#allocation3 + $0x380] sm:$0xff] %v587
      %604 = vst [vmem:[#allocation3 + $0x3c8] sm:$0xff] %v588
      %605 = vst [vmem:[#allocation3 + $0x410] sm:$0xff] %v589
      %606 = vst [vmem:[#allocation3 + $0x458] sm:$0xff] %v590
      %v607 = vld [vmem:[%s222 + $0x2] sm:$0xff]
      %v608 = vld [vmem:[%s222 + $0xa] sm:$0xff]
      %v609 = vld [vmem:[%s222 + $0x1a] sm:$0xff]
      %v610 = vld [vmem:[%s222 + $0x22] sm:$0xff]
      %v611 = vld [vmem:[%s222 + $0x32] sm:$0xff]
      %v612 = vld [vmem:[%s222 + $0x3a] sm:$0xff]
      %v613 = vld [vmem:[%s222 + $0x4a] sm:$0xff]
      %v614 = vld [vmem:[%s222 + $0x52] sm:$0xff]
      %v615 = vld [vmem:[%s222 + $0x62] sm:$0xff]
      %v616 = vld [vmem:[%s222 + $0x6a] sm:$0xff]
      %v617 = vld [vmem:[%s222 + $0x7a] sm:$0xff]
      %v618 = vld [vmem:[%s222 + $0x82] sm:$0xff]
      %v619 = vld [vmem:[%s222 + $0x92] sm:$0xff]
      %v620 = vld [vmem:[%s222 + $0x9a] sm:$0xff]
      %v621 = vld [vmem:[%s222 + $0xaa] sm:$0xff]
      %v622 = vld [vmem:[%s222 + $0xb2] sm:$0xff]
      %v623 = vld [vmem:[%s222 + $0xc2] sm:$0xff]
      %v624 = vld [vmem:[%s222 + $0xca] sm:$0xff]
      %v625 = vld [vmem:[%s222 + $0xda] sm:$0xff]
      %v626 = vld [vmem:[%s222 + $0xe2] sm:$0xff]
      %v627 = vld [vmem:[%s222 + $0xf2] sm:$0xff]
      %v628 = vld [vmem:[%s222 + $0xfa] sm:$0xff]
      %v629 = vld [vmem:[%s222 + $0x10a] sm:$0xff]
      %v630 = vld [vmem:[%s222 + $0x112] sm:$0xff]
      %v631 = vld [vmem:[%s222 + $0x122] sm:$0xff]
      %v632 = vld [vmem:[%s222 + $0x12a] sm:$0xff]
      %v633 = vld [vmem:[%s222 + $0x13a] sm:$0xff]
      %v634 = vld [vmem:[%s222 + $0x142] sm:$0xff]
      %v635 = vld [vmem:[%s222 + $0x152] sm:$0xff]
      %v636 = vld [vmem:[%s222 + $0x15a] sm:$0xff]
      %v637 = vld [vmem:[%s222 + $0x16a] sm:$0xff]
      %v638 = vld [vmem:[%s222 + $0x172] sm:$0xff]
      %v639 = vpack.c.bf16 %v608, %v607
      %v640 = vpack.c.bf16 %v610, %v609
      %v641 = vpack.c.bf16 %v612, %v611
      %v642 = vpack.c.bf16 %v614, %v613
      %v643 = vpack.c.bf16 %v616, %v615
      %v644 = vpack.c.bf16 %v618, %v617
      %v645 = vpack.c.bf16 %v620, %v619
      %v646 = vpack.c.bf16 %v622, %v621
      %v647 = vpack.c.bf16 %v624, %v623
      %v648 = vpack.c.bf16 %v626, %v625
      %v649 = vpack.c.bf16 %v628, %v627
      %v650 = vpack.c.bf16 %v630, %v629
      %v651 = vpack.c.bf16 %v632, %v631
      %v652 = vpack.c.bf16 %v634, %v633
      %v653 = vpack.c.bf16 %v636, %v635
      %v654 = vpack.c.bf16 %v638, %v637
      %655 = vst [vmem:[#allocation3 + $0x28] sm:$0xff] %v639
      %656 = vst [vmem:[#allocation3 + $0x70] sm:$0xff] %v640
      %657 = vst [vmem:[#allocation3 + $0xb8] sm:$0xff] %v641
      %658 = vst [vmem:[#allocation3 + $0x100] sm:$0xff] %v642
      %659 = vst [vmem:[#allocation3 + $0x148] sm:$0xff] %v643
      %660 = vst [vmem:[#allocation3 + $0x190] sm:$0xff] %v644
      %661 = vst [vmem:[#allocation3 + $0x1d8] sm:$0xff] %v645
      %662 = vst [vmem:[#allocation3 + $0x220] sm:$0xff] %v646
      %663 = vst [vmem:[#allocation3 + $0x268] sm:$0xff] %v647
      %664 = vst [vmem:[#allocation3 + $0x2b0] sm:$0xff] %v648
      %665 = vst [vmem:[#allocation3 + $0x2f8] sm:$0xff] %v649
      %666 = vst [vmem:[#allocation3 + $0x340] sm:$0xff] %v650
      %667 = vst [vmem:[#allocation3 + $0x388] sm:$0xff] %v651
      %668 = vst [vmem:[#allocation3 + $0x3d0] sm:$0xff] %v652
      %669 = vst [vmem:[#allocation3 + $0x418] sm:$0xff] %v653
      %670 = vst [vmem:[#allocation3 + $0x460] sm:$0xff] %v654
      %s671 = scalar_lea.vmem [#allocation2], 48
      %v672 = vld [vmem:[%s671] sm:$0xff]
      %v673 = vld [vmem:[%s671 + $0x8] sm:$0xff]
      %v674 = vld [vmem:[%s671 + $0x18] sm:$0xff]
      %v675 = vld [vmem:[%s671 + $0x20] sm:$0xff]
      %v676 = vld [vmem:[%s671 + $0x30] sm:$0xff]
      %v677 = vld [vmem:[%s671 + $0x38] sm:$0xff]
      %v678 = vld [vmem:[%s671 + $0x48] sm:$0xff]
      %v679 = vld [vmem:[%s671 + $0x50] sm:$0xff]
      %v680 = vld [vmem:[%s671 + $0x60] sm:$0xff]
      %v681 = vld [vmem:[%s671 + $0x68] sm:$0xff]
      %v682 = vld [vmem:[%s671 + $0x78] sm:$0xff]
      %v683 = vld [vmem:[%s671 + $0x80] sm:$0xff]
      %v684 = vld [vmem:[%s671 + $0x90] sm:$0xff]
      %v685 = vld [vmem:[%s671 + $0x98] sm:$0xff]
      %v686 = vld [vmem:[%s671 + $0xa8] sm:$0xff]
      %v687 = vld [vmem:[%s671 + $0xb0] sm:$0xff]
      %v688 = vld [vmem:[%s671 + $0xc0] sm:$0xff]
      %v689 = vld [vmem:[%s671 + $0xc8] sm:$0xff]
      %v690 = vld [vmem:[%s671 + $0xd8] sm:$0xff]
      %v691 = vld [vmem:[%s671 + $0xe0] sm:$0xff]
      %v692 = vld [vmem:[%s671 + $0xf0] sm:$0xff]
      %v693 = vld [vmem:[%s671 + $0xf8] sm:$0xff]
      %v694 = vld [vmem:[%s671 + $0x108] sm:$0xff]
      %v695 = vld [vmem:[%s671 + $0x110] sm:$0xff]
      %v696 = vld [vmem:[%s671 + $0x120] sm:$0xff]
      %v697 = vld [vmem:[%s671 + $0x128] sm:$0xff]
      %v698 = vld [vmem:[%s671 + $0x138] sm:$0xff]
      %v699 = vld [vmem:[%s671 + $0x140] sm:$0xff]
      %v700 = vld [vmem:[%s671 + $0x150] sm:$0xff]
      %v701 = vld [vmem:[%s671 + $0x158] sm:$0xff]
      %v702 = vld [vmem:[%s671 + $0x168] sm:$0xff]
      %v703 = vld [vmem:[%s671 + $0x170] sm:$0xff]
      %v704 = vpack.c.bf16 %v673, %v672
      %v705 = vpack.c.bf16 %v675, %v674
      %v706 = vpack.c.bf16 %v677, %v676
      %v707 = vpack.c.bf16 %v679, %v678
      %v708 = vpack.c.bf16 %v681, %v680
      %v709 = vpack.c.bf16 %v683, %v682
      %v710 = vpack.c.bf16 %v685, %v684
      %v711 = vpack.c.bf16 %v687, %v686
      %v712 = vpack.c.bf16 %v689, %v688
      %v713 = vpack.c.bf16 %v691, %v690
      %v714 = vpack.c.bf16 %v693, %v692
      %v715 = vpack.c.bf16 %v695, %v694
      %v716 = vpack.c.bf16 %v697, %v696
      %v717 = vpack.c.bf16 %v699, %v698
      %v718 = vpack.c.bf16 %v701, %v700
      %v719 = vpack.c.bf16 %v703, %v702
      %720 = vst [vmem:[#allocation3 + $0x30] sm:$0xff] %v704
      %721 = vst [vmem:[#allocation3 + $0x78] sm:$0xff] %v705
      %722 = vst [vmem:[#allocation3 + $0xc0] sm:$0xff] %v706
      %723 = vst [vmem:[#allocation3 + $0x108] sm:$0xff] %v707
      %724 = vst [vmem:[#allocation3 + $0x150] sm:$0xff] %v708
      %725 = vst [vmem:[#allocation3 + $0x198] sm:$0xff] %v709
      %726 = vst [vmem:[#allocation3 + $0x1e0] sm:$0xff] %v710
      %727 = vst [vmem:[#allocation3 + $0x228] sm:$0xff] %v711
      %728 = vst [vmem:[#allocation3 + $0x270] sm:$0xff] %v712
      %729 = vst [vmem:[#allocation3 + $0x2b8] sm:$0xff] %v713
      %730 = vst [vmem:[#allocation3 + $0x300] sm:$0xff] %v714
      %731 = vst [vmem:[#allocation3 + $0x348] sm:$0xff] %v715
      %732 = vst [vmem:[#allocation3 + $0x390] sm:$0xff] %v716
      %733 = vst [vmem:[#allocation3 + $0x3d8] sm:$0xff] %v717
      %734 = vst [vmem:[#allocation3 + $0x420] sm:$0xff] %v718
      %735 = vst [vmem:[#allocation3 + $0x468] sm:$0xff] %v719
      %v736 = vld [vmem:[%s671 + $0x1] sm:$0xff]
      %v737 = vld [vmem:[%s671 + $0x9] sm:$0xff]
      %v738 = vld [vmem:[%s671 + $0x19] sm:$0xff]
      %v739 = vld [vmem:[%s671 + $0x21] sm:$0xff]
      %v740 = vld [vmem:[%s671 + $0x31] sm:$0xff]
      %v741 = vld [vmem:[%s671 + $0x39] sm:$0xff]
      %v742 = vld [vmem:[%s671 + $0x49] sm:$0xff]
      %v743 = vld [vmem:[%s671 + $0x51] sm:$0xff]
      %v744 = vld [vmem:[%s671 + $0x61] sm:$0xff]
      %v745 = vld [vmem:[%s671 + $0x69] sm:$0xff]
      %v746 = vld [vmem:[%s671 + $0x79] sm:$0xff]
      %v747 = vld [vmem:[%s671 + $0x81] sm:$0xff]
      %v748 = vld [vmem:[%s671 + $0x91] sm:$0xff]
      %v749 = vld [vmem:[%s671 + $0x99] sm:$0xff]
      %v750 = vld [vmem:[%s671 + $0xa9] sm:$0xff]
      %v751 = vld [vmem:[%s671 + $0xb1] sm:$0xff]
      %v752 = vld [vmem:[%s671 + $0xc1] sm:$0xff]
      %v753 = vld [vmem:[%s671 + $0xc9] sm:$0xff]
      %v754 = vld [vmem:[%s671 + $0xd9] sm:$0xff]
      %v755 = vld [vmem:[%s671 + $0xe1] sm:$0xff]
      %v756 = vld [vmem:[%s671 + $0xf1] sm:$0xff]
      %v757 = vld [vmem:[%s671 + $0xf9] sm:$0xff]
      %v758 = vld [vmem:[%s671 + $0x109] sm:$0xff]
      %v759 = vld [vmem:[%s671 + $0x111] sm:$0xff]
      %v760 = vld [vmem:[%s671 + $0x121] sm:$0xff]
      %v761 = vld [vmem:[%s671 + $0x129] sm:$0xff]
      %v762 = vld [vmem:[%s671 + $0x139] sm:$0xff]
      %v763 = vld [vmem:[%s671 + $0x141] sm:$0xff]
      %v764 = vld [vmem:[%s671 + $0x151] sm:$0xff]
      %v765 = vld [vmem:[%s671 + $0x159] sm:$0xff]
      %v766 = vld [vmem:[%s671 + $0x169] sm:$0xff]
      %v767 = vld [vmem:[%s671 + $0x171] sm:$0xff]
      %v768 = vpack.c.bf16 %v737, %v736
      %v769 = vpack.c.bf16 %v739, %v738
      %v770 = vpack.c.bf16 %v741, %v740
      %v771 = vpack.c.bf16 %v743, %v742
      %v772 = vpack.c.bf16 %v745, %v744
      %v773 = vpack.c.bf16 %v747, %v746
      %v774 = vpack.c.bf16 %v749, %v748
      %v775 = vpack.c.bf16 %v751, %v750
      %v776 = vpack.c.bf16 %v753, %v752
      %v777 = vpack.c.bf16 %v755, %v754
      %v778 = vpack.c.bf16 %v757, %v756
      %v779 = vpack.c.bf16 %v759, %v758
      %v780 = vpack.c.bf16 %v761, %v760
      %v781 = vpack.c.bf16 %v763, %v762
      %v782 = vpack.c.bf16 %v765, %v764
      %v783 = vpack.c.bf16 %v767, %v766
      %784 = vst [vmem:[#allocation3 + $0x38] sm:$0xff] %v768
      %785 = vst [vmem:[#allocation3 + $0x80] sm:$0xff] %v769
      %786 = vst [vmem:[#allocation3 + $0xc8] sm:$0xff] %v770
      %787 = vst [vmem:[#allocation3 + $0x110] sm:$0xff] %v771
      %788 = vst [vmem:[#allocation3 + $0x158] sm:$0xff] %v772
      %789 = vst [vmem:[#allocation3 + $0x1a0] sm:$0xff] %v773
      %790 = vst [vmem:[#allocation3 + $0x1e8] sm:$0xff] %v774
      %791 = vst [vmem:[#allocation3 + $0x230] sm:$0xff] %v775
      %792 = vst [vmem:[#allocation3 + $0x278] sm:$0xff] %v776
      %793 = vst [vmem:[#allocation3 + $0x2c0] sm:$0xff] %v777
      %794 = vst [vmem:[#allocation3 + $0x308] sm:$0xff] %v778
      %795 = vst [vmem:[#allocation3 + $0x350] sm:$0xff] %v779
      %796 = vst [vmem:[#allocation3 + $0x398] sm:$0xff] %v780
      %797 = vst [vmem:[#allocation3 + $0x3e0] sm:$0xff] %v781
      %798 = vst [vmem:[#allocation3 + $0x428] sm:$0xff] %v782
      %799 = vst [vmem:[#allocation3 + $0x470] sm:$0xff] %v783
      %v800 = vld [vmem:[%s671 + $0x2] sm:$0xff]
      %v801 = vld [vmem:[%s671 + $0xa] sm:$0xff]
      %v802 = vld [vmem:[%s671 + $0x1a] sm:$0xff]
      %v803 = vld [vmem:[%s671 + $0x22] sm:$0xff]
      %v804 = vld [vmem:[%s671 + $0x32] sm:$0xff]
      %v805 = vld [vmem:[%s671 + $0x3a] sm:$0xff]
      %v806 = vld [vmem:[%s671 + $0x4a] sm:$0xff]
      %v807 = vld [vmem:[%s671 + $0x52] sm:$0xff]
      %v808 = vld [vmem:[%s671 + $0x62] sm:$0xff]
      %v809 = vld [vmem:[%s671 + $0x6a] sm:$0xff]
      %v810 = vld [vmem:[%s671 + $0x7a] sm:$0xff]
      %v811 = vld [vmem:[%s671 + $0x82] sm:$0xff]
      %v812 = vld [vmem:[%s671 + $0x92] sm:$0xff]
      %v813 = vld [vmem:[%s671 + $0x9a] sm:$0xff]
      %v814 = vld [vmem:[%s671 + $0xaa] sm:$0xff]
      %v815 = vld [vmem:[%s671 + $0xb2] sm:$0xff]
      %v816 = vld [vmem:[%s671 + $0xc2] sm:$0xff]
      %v817 = vld [vmem:[%s671 + $0xca] sm:$0xff]
      %v818 = vld [vmem:[%s671 + $0xda] sm:$0xff]
      %v819 = vld [vmem:[%s671 + $0xe2] sm:$0xff]
      %v820 = vld [vmem:[%s671 + $0xf2] sm:$0xff]
      %v821 = vld [vmem:[%s671 + $0xfa] sm:$0xff]
      %v822 = vld [vmem:[%s671 + $0x10a] sm:$0xff]
      %v823 = vld [vmem:[%s671 + $0x112] sm:$0xff]
      %v824 = vld [vmem:[%s671 + $0x122] sm:$0xff]
      %v825 = vld [vmem:[%s671 + $0x12a] sm:$0xff]
      %v826 = vld [vmem:[%s671 + $0x13a] sm:$0xff]
      %v827 = vld [vmem:[%s671 + $0x142] sm:$0xff]
      %v828 = vld [vmem:[%s671 + $0x152] sm:$0xff]
      %v829 = vld [vmem:[%s671 + $0x15a] sm:$0xff]
      %v830 = vld [vmem:[%s671 + $0x16a] sm:$0xff]
      %v831 = vld [vmem:[%s671 + $0x172] sm:$0xff]
      %v832 = vpack.c.bf16 %v801, %v800
      %v833 = vpack.c.bf16 %v803, %v802
      %v834 = vpack.c.bf16 %v805, %v804
      %v835 = vpack.c.bf16 %v807, %v806
      %v836 = vpack.c.bf16 %v809, %v808
      %v837 = vpack.c.bf16 %v811, %v810
      %v838 = vpack.c.bf16 %v813, %v812
      %v839 = vpack.c.bf16 %v815, %v814
      %v840 = vpack.c.bf16 %v817, %v816
      %v841 = vpack.c.bf16 %v819, %v818
      %v842 = vpack.c.bf16 %v821, %v820
      %v843 = vpack.c.bf16 %v823, %v822
      %v844 = vpack.c.bf16 %v825, %v824
      %v845 = vpack.c.bf16 %v827, %v826
      %v846 = vpack.c.bf16 %v829, %v828
      %v847 = vpack.c.bf16 %v831, %v830
      %848 = vst [vmem:[#allocation3 + $0x40] sm:$0xff] %v832
      %849 = vst [vmem:[#allocation3 + $0x88] sm:$0xff] %v833
      %850 = vst [vmem:[#allocation3 + $0xd0] sm:$0xff] %v834
      %851 = vst [vmem:[#allocation3 + $0x118] sm:$0xff] %v835
      %852 = vst [vmem:[#allocation3 + $0x160] sm:$0xff] %v836
      %853 = vst [vmem:[#allocation3 + $0x1a8] sm:$0xff] %v837
      %854 = vst [vmem:[#allocation3 + $0x1f0] sm:$0xff] %v838
      %855 = vst [vmem:[#allocation3 + $0x238] sm:$0xff] %v839
      %856 = vst [vmem:[#allocation3 + $0x280] sm:$0xff] %v840
      %857 = vst [vmem:[#allocation3 + $0x2c8] sm:$0xff] %v841
      %858 = vst [vmem:[#allocation3 + $0x310] sm:$0xff] %v842
      %859 = vst [vmem:[#allocation3 + $0x358] sm:$0xff] %v843
      %860 = vst [vmem:[#allocation3 + $0x3a0] sm:$0xff] %v844
      %861 = vst [vmem:[#allocation3 + $0x3e8] sm:$0xff] %v845
      %862 = vst [vmem:[#allocation3 + $0x430] sm:$0xff] %v846
      %863 = vst [vmem:[#allocation3 + $0x478] sm:$0xff] %v847
      %v864 = vld [vmem:[#allocation3] sm:$0xff]
      %v865 = vld [vmem:[#allocation3 + $0x8] sm:$0xff]
      %v866 = vld [vmem:[#allocation3 + $0x10] sm:$0xff]
      %v867 = vld [vmem:[#allocation3 + $0x18] sm:$0xff]
      %v868 = vld [vmem:[#allocation3 + $0x20] sm:$0xff]
      %v869 = vld [vmem:[#allocation3 + $0x28] sm:$0xff]
      %v870 = vld [vmem:[#allocation3 + $0x30] sm:$0xff]
      %v871 = vld [vmem:[#allocation3 + $0x38] sm:$0xff]
      %v872 = vld [vmem:[#allocation3 + $0x40] sm:$0xff]
      %v873 = vld [vmem:[#allocation3 + $0x48] sm:$0xff]
      %v874 = vld [vmem:[#allocation3 + $0x50] sm:$0xff]
      %v875 = vld [vmem:[#allocation3 + $0x58] sm:$0xff]
      %v876 = vld [vmem:[#allocation3 + $0x60] sm:$0xff]
      %v877 = vld [vmem:[#allocation3 + $0x68] sm:$0xff]
      %v878 = vld [vmem:[#allocation3 + $0x70] sm:$0xff]
      %v879 = vld [vmem:[#allocation3 + $0x78] sm:$0xff]
      %v880 = vld [vmem:[#allocation3 + $0x80] sm:$0xff]
      %v881 = vld [vmem:[#allocation3 + $0x88] sm:$0xff]
      %v882 = vld [vmem:[#allocation3 + $0x90] sm:$0xff]
      %v883 = vld [vmem:[#allocation3 + $0x98] sm:$0xff]
      %v884 = vld [vmem:[#allocation3 + $0xa0] sm:$0xff]
      %v885 = vld [vmem:[#allocation3 + $0xa8] sm:$0xff]
      %v886 = vld [vmem:[#allocation3 + $0xb0] sm:$0xff]
      %v887 = vld [vmem:[#allocation3 + $0xb8] sm:$0xff]
      %v888 = vld [vmem:[#allocation3 + $0xc0] sm:$0xff]
      %v889 = vld [vmem:[#allocation3 + $0xc8] sm:$0xff]
      %v890 = vld [vmem:[#allocation3 + $0xd0] sm:$0xff]
      %v891 = vld [vmem:[#allocation3 + $0xd8] sm:$0xff]
      %v892 = vld [vmem:[#allocation3 + $0xe0] sm:$0xff]
      %v893 = vld [vmem:[#allocation3 + $0xe8] sm:$0xff]
      %v894 = vld [vmem:[#allocation3 + $0xf0] sm:$0xff]
      %v895 = vld [vmem:[#allocation3 + $0xf8] sm:$0xff]
      %v896 = vld [vmem:[#allocation3 + $0x100] sm:$0xff]
      %v897 = vld [vmem:[#allocation3 + $0x108] sm:$0xff]
      %v898 = vld [vmem:[#allocation3 + $0x110] sm:$0xff]
      %v899 = vld [vmem:[#allocation3 + $0x118] sm:$0xff]
      %v900 = vld [vmem:[#allocation3 + $0x120] sm:$0xff]
      %v901 = vld [vmem:[#allocation3 + $0x128] sm:$0xff]
      %v902 = vld [vmem:[#allocation3 + $0x130] sm:$0xff]
      %v903 = vld [vmem:[#allocation3 + $0x138] sm:$0xff]
      %v904 = vld [vmem:[#allocation3 + $0x140] sm:$0xff]
      %v905 = vld [vmem:[#allocation3 + $0x148] sm:$0xff]
      %v906 = vld [vmem:[#allocation3 + $0x150] sm:$0xff]
      %v907 = vld [vmem:[#allocation3 + $0x158] sm:$0xff]
      %v908 = vld [vmem:[#allocation3 + $0x160] sm:$0xff]
      %v909 = vld [vmem:[#allocation3 + $0x168] sm:$0xff]
      %v910 = vld [vmem:[#allocation3 + $0x170] sm:$0xff]
      %v911 = vld [vmem:[#allocation3 + $0x178] sm:$0xff]
      %v912 = vld [vmem:[#allocation3 + $0x180] sm:$0xff]
      %v913 = vld [vmem:[#allocation3 + $0x188] sm:$0xff]
      %v914 = vld [vmem:[#allocation3 + $0x190] sm:$0xff]
      %v915 = vld [vmem:[#allocation3 + $0x198] sm:$0xff]
      %v916 = vld [vmem:[#allocation3 + $0x1a0] sm:$0xff]
      %v917 = vld [vmem:[#allocation3 + $0x1a8] sm:$0xff]
      %v918 = vld [vmem:[#allocation3 + $0x1b0] sm:$0xff]
      %v919 = vld [vmem:[#allocation3 + $0x1b8] sm:$0xff]
      %v920 = vld [vmem:[#allocation3 + $0x1c0] sm:$0xff]
      %v921 = vld [vmem:[#allocation3 + $0x1c8] sm:$0xff]
      %v922 = vld [vmem:[#allocation3 + $0x1d0] sm:$0xff]
      %v923 = vld [vmem:[#allocation3 + $0x1d8] sm:$0xff]
      %v924 = vld [vmem:[#allocation3 + $0x1e0] sm:$0xff]
      %v925 = vld [vmem:[#allocation3 + $0x1e8] sm:$0xff]
      %v926 = vld [vmem:[#allocation3 + $0x1f0] sm:$0xff]
      %v927 = vld [vmem:[#allocation3 + $0x1f8] sm:$0xff]
      %v928 = vld [vmem:[#allocation3 + $0x200] sm:$0xff]
      %v929 = vld [vmem:[#allocation3 + $0x208] sm:$0xff]
      %v930 = vld [vmem:[#allocation3 + $0x210] sm:$0xff]
      %v931 = vld [vmem:[#allocation3 + $0x218] sm:$0xff]
      %v932 = vld [vmem:[#allocation3 + $0x220] sm:$0xff]
      %v933 = vld [vmem:[#allocation3 + $0x228] sm:$0xff]
      %v934 = vld [vmem:[#allocation3 + $0x230] sm:$0xff]
      %v935 = vld [vmem:[#allocation3 + $0x238] sm:$0xff]
      %v936 = vld [vmem:[#allocation3 + $0x240] sm:$0xff]
      %v937 = vld [vmem:[#allocation3 + $0x248] sm:$0xff]
      %v938 = vld [vmem:[#allocation3 + $0x250] sm:$0xff]
      %v939 = vld [vmem:[#allocation3 + $0x258] sm:$0xff]
      %v940 = vld [vmem:[#allocation3 + $0x260] sm:$0xff]
      %v941 = vld [vmem:[#allocation3 + $0x268] sm:$0xff]
      %v942 = vld [vmem:[#allocation3 + $0x270] sm:$0xff]
      %v943 = vld [vmem:[#allocation3 + $0x278] sm:$0xff]
      %v944 = vld [vmem:[#allocation3 + $0x280] sm:$0xff]
      %v945 = vld [vmem:[#allocation3 + $0x288] sm:$0xff]
      %v946 = vld [vmem:[#allocation3 + $0x290] sm:$0xff]
      %v947 = vld [vmem:[#allocation3 + $0x298] sm:$0xff]
      %v948 = vld [vmem:[#allocation3 + $0x2a0] sm:$0xff]
      %v949 = vld [vmem:[#allocation3 + $0x2a8] sm:$0xff]
      %v950 = vld [vmem:[#allocation3 + $0x2b0] sm:$0xff]
      %v951 = vld [vmem:[#allocation3 + $0x2b8] sm:$0xff]
      %v952 = vld [vmem:[#allocation3 + $0x2c0] sm:$0xff]
      %v953 = vld [vmem:[#allocation3 + $0x2c8] sm:$0xff]
      %v954 = vld [vmem:[#allocation3 + $0x2d0] sm:$0xff]
      %v955 = vld [vmem:[#allocation3 + $0x2d8] sm:$0xff]
      %v956 = vld [vmem:[#allocation3 + $0x2e0] sm:$0xff]
      %v957 = vld [vmem:[#allocation3 + $0x2e8] sm:$0xff]
      %v958 = vld [vmem:[#allocation3 + $0x2f0] sm:$0xff]
      %v959 = vld [vmem:[#allocation3 + $0x2f8] sm:$0xff]
      %v960 = vld [vmem:[#allocation3 + $0x300] sm:$0xff]
      %v961 = vld [vmem:[#allocation3 + $0x308] sm:$0xff]
      %v962 = vld [vmem:[#allocation3 + $0x310] sm:$0xff]
      %v963 = vld [vmem:[#allocation3 + $0x318] sm:$0xff]
      %v964 = vld [vmem:[#allocation3 + $0x320] sm:$0xff]
      %v965 = vld [vmem:[#allocation3 + $0x328] sm:$0xff]
      %v966 = vld [vmem:[#allocation3 + $0x330] sm:$0xff]
      %v967 = vld [vmem:[#allocation3 + $0x338] sm:$0xff]
      %v968 = vld [vmem:[#allocation3 + $0x340] sm:$0xff]
      %v969 = vld [vmem:[#allocation3 + $0x348] sm:$0xff]
      %v970 = vld [vmem:[#allocation3 + $0x350] sm:$0xff]
      %v971 = vld [vmem:[#allocation3 + $0x358] sm:$0xff]
      %v972 = vld [vmem:[#allocation3 + $0x360] sm:$0xff]
      %v973 = vld [vmem:[#allocation3 + $0x368] sm:$0xff]
      %v974 = vld [vmem:[#allocation3 + $0x370] sm:$0xff]
      %v975 = vld [vmem:[#allocation3 + $0x378] sm:$0xff]
      %v976 = vld [vmem:[#allocation3 + $0x380] sm:$0xff]
      %v977 = vld [vmem:[#allocation3 + $0x388] sm:$0xff]
      %v978 = vld [vmem:[#allocation3 + $0x390] sm:$0xff]
      %v979 = vld [vmem:[#allocation3 + $0x398] sm:$0xff]
      %v980 = vld [vmem:[#allocation3 + $0x3a0] sm:$0xff]
      %v981 = vld [vmem:[#allocation3 + $0x3a8] sm:$0xff]
      %v982 = vld [vmem:[#allocation3 + $0x3b0] sm:$0xff]
      %v983 = vld [vmem:[#allocation3 + $0x3b8] sm:$0xff]
      %v984 = vld [vmem:[#allocation3 + $0x3c0] sm:$0xff]
      %v985 = vld [vmem:[#allocation3 + $0x3c8] sm:$0xff]
      %v986 = vld [vmem:[#allocation3 + $0x3d0] sm:$0xff]
      %v987 = vld [vmem:[#allocation3 + $0x3d8] sm:$0xff]
      %v988 = vld [vmem:[#allocation3 + $0x3e0] sm:$0xff]
      %v989 = vld [vmem:[#allocation3 + $0x3e8] sm:$0xff]
      %v990 = vld [vmem:[#allocation3 + $0x3f0] sm:$0xff]
      %v991 = vld [vmem:[#allocation3 + $0x3f8] sm:$0xff]
      %v992 = vld [vmem:[#allocation3 + $0x400] sm:$0xff]
      %v993 = vld [vmem:[#allocation3 + $0x408] sm:$0xff]
      %v994 = vld [vmem:[#allocation3 + $0x410] sm:$0xff]
      %v995 = vld [vmem:[#allocation3 + $0x418] sm:$0xff]
      %v996 = vld [vmem:[#allocation3 + $0x420] sm:$0xff]
      %v997 = vld [vmem:[#allocation3 + $0x428] sm:$0xff]
      %v998 = vld [vmem:[#allocation3 + $0x430] sm:$0xff]
      %v999 = vld [vmem:[#allocation3 + $0x438] sm:$0xff]
      %v1000 = vld [vmem:[#allocation3 + $0x440] sm:$0xff]
      %v1001 = vld [vmem:[#allocation3 + $0x448] sm:$0xff]
      %v1002 = vld [vmem:[#allocation3 + $0x450] sm:$0xff]
      %v1003 = vld [vmem:[#allocation3 + $0x458] sm:$0xff]
      %v1004 = vld [vmem:[#allocation3 + $0x460] sm:$0xff]
      %v1005 = vld [vmem:[#allocation3 + $0x468] sm:$0xff]
      %v1006 = vld [vmem:[#allocation3 + $0x470] sm:$0xff]
      %v1007 = vld [vmem:[#allocation3 + $0x478] sm:$0xff]
      %v1008 = vld [vmem:[%s1] sm:$0xf]
      %v1009 = vld [vmem:[%s1 + $0x4] sm:$0xf]
      %v1010 = vld [vmem:[%s1 + $0x8] sm:$0xf]
      %v1011 = vld [vmem:[%s1 + $0xc] sm:$0xf]
      %v1012 = vld [vmem:[%s1 + $0x10] sm:$0xf]
      %v1013 = vld [vmem:[%s1 + $0x14] sm:$0xf]
      %v1014 = vld [vmem:[%s1 + $0x18] sm:$0xf]
      %v1015 = vld [vmem:[%s1 + $0x1c] sm:$0xf]
      %v1016 = vld [vmem:[%s1 + $0x20] sm:$0xf]
      %v1017 = vld [vmem:[%s1 + $0x24] sm:$0xf]
      %v1018 = vld [vmem:[%s1 + $0x28] sm:$0xf]
      %v1019 = vld [vmem:[%s1 + $0x2c] sm:$0xf]
      %v1020 = vld [vmem:[%s1 + $0x30] sm:$0xf]
      %v1021 = vld [vmem:[%s1 + $0x34] sm:$0xf]
      %v1022 = vld [vmem:[%s1 + $0x38] sm:$0xf]
      %v1023 = vld [vmem:[%s1 + $0x3c] sm:$0xf]
      %v1024 = vld [vmem:[%s1 + $0x40] sm:$0xf]
      %v1025 = vld [vmem:[%s1 + $0x44] sm:$0xf]
      %v1026 = vld [vmem:[%s1 + $0x48] sm:$0xf]
      %v1027 = vld [vmem:[%s1 + $0x4c] sm:$0xf]
      %v1028 = vld [vmem:[%s1 + $0x50] sm:$0xf]
      %v1029 = vld [vmem:[%s1 + $0x54] sm:$0xf]
      %v1030 = vld [vmem:[%s1 + $0x58] sm:$0xf]
      %v1031 = vld [vmem:[%s1 + $0x5c] sm:$0xf]
      %v1032 = vld [vmem:[%s1 + $0x60] sm:$0xf]
      %v1033 = vld [vmem:[%s1 + $0x64] sm:$0xf]
      %v1034 = vld [vmem:[%s1 + $0x68] sm:$0xf]
      %v1035 = vld [vmem:[%s1 + $0x6c] sm:$0xf]
      %v1036 = vld [vmem:[%s1 + $0x70] sm:$0xf]
      %v1037 = vld [vmem:[%s1 + $0x74] sm:$0xf]
      %v1038 = vld [vmem:[%s1 + $0x78] sm:$0xf]
      %v1039 = vld [vmem:[%s1 + $0x7c] sm:$0xf]
      %v1040 = vld [vmem:[%s1 + $0x80] sm:$0xf]
      %v1041 = vld [vmem:[%s1 + $0x84] sm:$0xf]
      %v1042 = vld [vmem:[%s1 + $0x88] sm:$0xf]
      %v1043 = vld [vmem:[%s1 + $0x8c] sm:$0xf]
      %v1044 = vld [vmem:[%s1 + $0x90] sm:$0xf]
      %v1045 = vld [vmem:[%s1 + $0x94] sm:$0xf]
      %v1046 = vld [vmem:[%s1 + $0x98] sm:$0xf]
      %v1047 = vld [vmem:[%s1 + $0x9c] sm:$0xf]
      %v1048 = vld [vmem:[%s1 + $0xa0] sm:$0xf]
      %v1049 = vld [vmem:[%s1 + $0xa4] sm:$0xf]
      %v1050 = vld [vmem:[%s1 + $0xa8] sm:$0xf]
      %v1051 = vld [vmem:[%s1 + $0xac] sm:$0xf]
      %v1052 = vld [vmem:[%s1 + $0xb0] sm:$0xf]
      %v1053 = vld [vmem:[%s1 + $0xb4] sm:$0xf]
      %v1054 = vld [vmem:[%s1 + $0xb8] sm:$0xf]
      %v1055 = vld [vmem:[%s1 + $0xbc] sm:$0xf]
      %v1056 = vld [vmem:[%s1 + $0xc0] sm:$0xf]
      %v1057 = vld [vmem:[%s1 + $0xc4] sm:$0xf]
      %v1058 = vld [vmem:[%s1 + $0xc8] sm:$0xf]
      %v1059 = vld [vmem:[%s1 + $0xcc] sm:$0xf]
      %v1060 = vld [vmem:[%s1 + $0xd0] sm:$0xf]
      %v1061 = vld [vmem:[%s1 + $0xd4] sm:$0xf]
      %v1062 = vld [vmem:[%s1 + $0xd8] sm:$0xf]
      %v1063 = vld [vmem:[%s1 + $0xdc] sm:$0xf]
      %v1064 = vld [vmem:[%s1 + $0xe0] sm:$0xf]
      %v1065 = vld [vmem:[%s1 + $0xe4] sm:$0xf]
      %v1066 = vld [vmem:[%s1 + $0xe8] sm:$0xf]
      %v1067 = vld [vmem:[%s1 + $0xec] sm:$0xf]
      %v1068 = vld [vmem:[%s1 + $0xf0] sm:$0xf]
      %v1069 = vld [vmem:[%s1 + $0xf4] sm:$0xf]
      %v1070 = vld [vmem:[%s1 + $0xf8] sm:$0xf]
      %v1071 = vld [vmem:[%s1 + $0xfc] sm:$0xf]
      %v1072 = vld [vmem:[%s1 + $0x100] sm:$0xf]
      %v1073 = vld [vmem:[%s1 + $0x104] sm:$0xf]
      %v1074 = vld [vmem:[%s1 + $0x108] sm:$0xf]
      %v1075 = vld [vmem:[%s1 + $0x10c] sm:$0xf]
      %v1076 = vld [vmem:[%s1 + $0x110] sm:$0xf]
      %v1077 = vld [vmem:[%s1 + $0x114] sm:$0xf]
      %v1078 = vld [vmem:[%s1 + $0x118] sm:$0xf]
      %v1079 = vld [vmem:[%s1 + $0x11c] sm:$0xf]
      %v1080 = vld [vmem:[%s1 + $0x120] sm:$0xf]
      %v1081 = vld [vmem:[%s1 + $0x124] sm:$0xf]
      %v1082 = vld [vmem:[%s1 + $0x128] sm:$0xf]
      %v1083 = vld [vmem:[%s1 + $0x12c] sm:$0xf]
      %v1084 = vld [vmem:[%s1 + $0x130] sm:$0xf]
      %v1085 = vld [vmem:[%s1 + $0x134] sm:$0xf]
      %v1086 = vld [vmem:[%s1 + $0x138] sm:$0xf]
      %v1087 = vld [vmem:[%s1 + $0x13c] sm:$0xf]
      %v1088 = vld [vmem:[%s1 + $0x140] sm:$0xf]
      %v1089 = vld [vmem:[%s1 + $0x144] sm:$0xf]
      %v1090 = vld [vmem:[%s1 + $0x148] sm:$0xf]
      %v1091 = vld [vmem:[%s1 + $0x14c] sm:$0xf]
      %v1092 = vld [vmem:[%s1 + $0x150] sm:$0xf]
      %v1093 = vld [vmem:[%s1 + $0x154] sm:$0xf]
      %v1094 = vld [vmem:[%s1 + $0x158] sm:$0xf]
      %v1095 = vld [vmem:[%s1 + $0x15c] sm:$0xf]
      %v1096 = vld [vmem:[%s1 + $0x160] sm:$0xf]
      %v1097 = vld [vmem:[%s1 + $0x164] sm:$0xf]
      %v1098 = vld [vmem:[%s1 + $0x168] sm:$0xf]
      %v1099 = vld [vmem:[%s1 + $0x16c] sm:$0xf]
      %v1100 = vld [vmem:[%s1 + $0x170] sm:$0xf]
      %v1101 = vld [vmem:[%s1 + $0x174] sm:$0xf]
      %v1102 = vld [vmem:[%s1 + $0x178] sm:$0xf]
      %v1103 = vld [vmem:[%s1 + $0x17c] sm:$0xf]
      %v1104 = vld [vmem:[%s1 + $0x180] sm:$0xf]
      %v1105 = vld [vmem:[%s1 + $0x184] sm:$0xf]
      %v1106 = vld [vmem:[%s1 + $0x188] sm:$0xf]
      %v1107 = vld [vmem:[%s1 + $0x18c] sm:$0xf]
      %v1108 = vld [vmem:[%s1 + $0x190] sm:$0xf]
      %v1109 = vld [vmem:[%s1 + $0x194] sm:$0xf]
      %v1110 = vld [vmem:[%s1 + $0x198] sm:$0xf]
      %v1111 = vld [vmem:[%s1 + $0x19c] sm:$0xf]
      %v1112 = vld [vmem:[%s1 + $0x1a0] sm:$0xf]
      %v1113 = vld [vmem:[%s1 + $0x1a4] sm:$0xf]
      %v1114 = vld [vmem:[%s1 + $0x1a8] sm:$0xf]
      %v1115 = vld [vmem:[%s1 + $0x1ac] sm:$0xf]
      %v1116 = vld [vmem:[%s1 + $0x1b0] sm:$0xf]
      %v1117 = vld [vmem:[%s1 + $0x1b4] sm:$0xf]
      %v1118 = vld [vmem:[%s1 + $0x1b8] sm:$0xf]
      %v1119 = vld [vmem:[%s1 + $0x1bc] sm:$0xf]
      %v1120 = vld [vmem:[%s1 + $0x1c0] sm:$0xf]
      %v1121 = vld [vmem:[%s1 + $0x1c4] sm:$0xf]
      %v1122 = vld [vmem:[%s1 + $0x1c8] sm:$0xf]
      %v1123 = vld [vmem:[%s1 + $0x1cc] sm:$0xf]
      %v1124 = vld [vmem:[%s1 + $0x1d0] sm:$0xf]
      %v1125 = vld [vmem:[%s1 + $0x1d4] sm:$0xf]
      %v1126 = vld [vmem:[%s1 + $0x1d8] sm:$0xf]
      %v1127 = vld [vmem:[%s1 + $0x1dc] sm:$0xf]
      %v1128 = vld [vmem:[%s1 + $0x1e0] sm:$0xf]
      %v1129 = vld [vmem:[%s1 + $0x1e4] sm:$0xf]
      %v1130 = vld [vmem:[%s1 + $0x1e8] sm:$0xf]
      %v1131 = vld [vmem:[%s1 + $0x1ec] sm:$0xf]
      %v1132 = vld [vmem:[%s1 + $0x1f0] sm:$0xf]
      %v1133 = vld [vmem:[%s1 + $0x1f4] sm:$0xf]
      %v1134 = vld [vmem:[%s1 + $0x1f8] sm:$0xf]
      %v1135 = vld [vmem:[%s1 + $0x1fc] sm:$0xf]
      %v1136 = vld [vmem:[%s1 + $0x200] sm:$0xf]
      %v1137 = vld [vmem:[%s1 + $0x204] sm:$0xf]
      %v1138 = vld [vmem:[%s1 + $0x208] sm:$0xf]
      %v1139 = vld [vmem:[%s1 + $0x20c] sm:$0xf]
      %v1140 = vld [vmem:[%s1 + $0x210] sm:$0xf]
      %v1141 = vld [vmem:[%s1 + $0x214] sm:$0xf]
      %v1142 = vld [vmem:[%s1 + $0x218] sm:$0xf]
      %v1143 = vld [vmem:[%s1 + $0x21c] sm:$0xf]
      %v1144 = vld [vmem:[%s1 + $0x220] sm:$0xf]
      %v1145 = vld [vmem:[%s1 + $0x224] sm:$0xf]
      %v1146 = vld [vmem:[%s1 + $0x228] sm:$0xf]
      %v1147 = vld [vmem:[%s1 + $0x22c] sm:$0xf]
      %v1148 = vld [vmem:[%s1 + $0x230] sm:$0xf]
      %v1149 = vld [vmem:[%s1 + $0x234] sm:$0xf]
      %v1150 = vld [vmem:[%s1 + $0x238] sm:$0xf]
      %v1151 = vld [vmem:[%s1 + $0x23c] sm:$0xf]
      %v1296 = vunpack.c.l.b16 %v1008
      %v1297 = vunpack.c.l.b16 %v1009
      %v1298 = vunpack.c.l.b16 %v1010
      %v1299 = vunpack.c.l.b16 %v1011
      %v1300 = vunpack.c.l.b16 %v1012
      %v1301 = vunpack.c.l.b16 %v1013
      %v1302 = vunpack.c.l.b16 %v1014
      %v1303 = vunpack.c.l.b16 %v1015
      %v1304 = vunpack.c.l.b16 %v1016
      %v1305 = vunpack.c.l.b16 %v1017
      %v1306 = vunpack.c.l.b16 %v1018
      %v1307 = vunpack.c.l.b16 %v1019
      %v1308 = vunpack.c.l.b16 %v1020
      %v1309 = vunpack.c.l.b16 %v1021
      %v1310 = vunpack.c.l.b16 %v1022
      %v1311 = vunpack.c.l.b16 %v1023
      %v1312 = vunpack.c.l.b16 %v1024
      %v1313 = vunpack.c.l.b16 %v1025
      %v1314 = vunpack.c.l.b16 %v1026
      %v1315 = vunpack.c.l.b16 %v1027
      %v1316 = vunpack.c.l.b16 %v1028
      %v1317 = vunpack.c.l.b16 %v1029
      %v1318 = vunpack.c.l.b16 %v1030
      %v1319 = vunpack.c.l.b16 %v1031
      %v1320 = vunpack.c.l.b16 %v1032
      %v1321 = vunpack.c.l.b16 %v1033
      %v1322 = vunpack.c.l.b16 %v1034
      %v1323 = vunpack.c.l.b16 %v1035
      %v1324 = vunpack.c.l.b16 %v1036
      %v1325 = vunpack.c.l.b16 %v1037
      %v1326 = vunpack.c.l.b16 %v1038
      %v1327 = vunpack.c.l.b16 %v1039
      %v1328 = vunpack.c.l.b16 %v1040
      %v1329 = vunpack.c.l.b16 %v1041
      %v1330 = vunpack.c.l.b16 %v1042
      %v1331 = vunpack.c.l.b16 %v1043
      %v1332 = vunpack.c.l.b16 %v1044
      %v1333 = vunpack.c.l.b16 %v1045
      %v1334 = vunpack.c.l.b16 %v1046
      %v1335 = vunpack.c.l.b16 %v1047
      %v1336 = vunpack.c.l.b16 %v1048
      %v1337 = vunpack.c.l.b16 %v1049
      %v1338 = vunpack.c.l.b16 %v1050
      %v1339 = vunpack.c.l.b16 %v1051
      %v1340 = vunpack.c.l.b16 %v1052
      %v1341 = vunpack.c.l.b16 %v1053
      %v1342 = vunpack.c.l.b16 %v1054
      %v1343 = vunpack.c.l.b16 %v1055
      %v1344 = vunpack.c.l.b16 %v1056
      %v1345 = vunpack.c.l.b16 %v1057
      %v1346 = vunpack.c.l.b16 %v1058
      %v1347 = vunpack.c.l.b16 %v1059
      %v1348 = vunpack.c.l.b16 %v1060
      %v1349 = vunpack.c.l.b16 %v1061
      %v1350 = vunpack.c.l.b16 %v1062
      %v1351 = vunpack.c.l.b16 %v1063
      %v1352 = vunpack.c.l.b16 %v1064
      %v1353 = vunpack.c.l.b16 %v1065
      %v1354 = vunpack.c.l.b16 %v1066
      %v1355 = vunpack.c.l.b16 %v1067
      %v1356 = vunpack.c.l.b16 %v1068
      %v1357 = vunpack.c.l.b16 %v1069
      %v1358 = vunpack.c.l.b16 %v1070
      %v1359 = vunpack.c.l.b16 %v1071
      %v1360 = vunpack.c.l.b16 %v1072
      %v1361 = vunpack.c.l.b16 %v1073
      %v1362 = vunpack.c.l.b16 %v1074
      %v1363 = vunpack.c.l.b16 %v1075
      %v1364 = vunpack.c.l.b16 %v1076
      %v1365 = vunpack.c.l.b16 %v1077
      %v1366 = vunpack.c.l.b16 %v1078
      %v1367 = vunpack.c.l.b16 %v1079
      %v1368 = vunpack.c.l.b16 %v1080
      %v1369 = vunpack.c.l.b16 %v1081
      %v1370 = vunpack.c.l.b16 %v1082
      %v1371 = vunpack.c.l.b16 %v1083
      %v1372 = vunpack.c.l.b16 %v1084
      %v1373 = vunpack.c.l.b16 %v1085
      %v1374 = vunpack.c.l.b16 %v1086
      %v1375 = vunpack.c.l.b16 %v1087
      %v1376 = vunpack.c.l.b16 %v1088
      %v1377 = vunpack.c.l.b16 %v1089
      %v1378 = vunpack.c.l.b16 %v1090
      %v1379 = vunpack.c.l.b16 %v1091
      %v1380 = vunpack.c.l.b16 %v1092
      %v1381 = vunpack.c.l.b16 %v1093
      %v1382 = vunpack.c.l.b16 %v1094
      %v1383 = vunpack.c.l.b16 %v1095
      %v1384 = vunpack.c.l.b16 %v1096
      %v1385 = vunpack.c.l.b16 %v1097
      %v1386 = vunpack.c.l.b16 %v1098
      %v1387 = vunpack.c.l.b16 %v1099
      %v1388 = vunpack.c.l.b16 %v1100
      %v1389 = vunpack.c.l.b16 %v1101
      %v1390 = vunpack.c.l.b16 %v1102
      %v1391 = vunpack.c.l.b16 %v1103
      %v1392 = vunpack.c.l.b16 %v1104
      %v1393 = vunpack.c.l.b16 %v1105
      %v1394 = vunpack.c.l.b16 %v1106
      %v1395 = vunpack.c.l.b16 %v1107
      %v1396 = vunpack.c.l.b16 %v1108
      %v1397 = vunpack.c.l.b16 %v1109
      %v1398 = vunpack.c.l.b16 %v1110
      %v1399 = vunpack.c.l.b16 %v1111
      %v1400 = vunpack.c.l.b16 %v1112
      %v1401 = vunpack.c.l.b16 %v1113
      %v1402 = vunpack.c.l.b16 %v1114
      %v1403 = vunpack.c.l.b16 %v1115
      %v1404 = vunpack.c.l.b16 %v1116
      %v1405 = vunpack.c.l.b16 %v1117
      %v1406 = vunpack.c.l.b16 %v1118
      %v1407 = vunpack.c.l.b16 %v1119
      %v1408 = vunpack.c.l.b16 %v1120
      %v1409 = vunpack.c.l.b16 %v1121
      %v1410 = vunpack.c.l.b16 %v1122
      %v1411 = vunpack.c.l.b16 %v1123
      %v1412 = vunpack.c.l.b16 %v1124
      %v1413 = vunpack.c.l.b16 %v1125
      %v1414 = vunpack.c.l.b16 %v1126
      %v1415 = vunpack.c.l.b16 %v1127
      %v1416 = vunpack.c.l.b16 %v1128
      %v1417 = vunpack.c.l.b16 %v1129
      %v1418 = vunpack.c.l.b16 %v1130
      %v1419 = vunpack.c.l.b16 %v1131
      %v1420 = vunpack.c.l.b16 %v1132
      %v1421 = vunpack.c.l.b16 %v1133
      %v1422 = vunpack.c.l.b16 %v1134
      %v1423 = vunpack.c.l.b16 %v1135
      %v1424 = vunpack.c.l.b16 %v1136
      %v1425 = vunpack.c.l.b16 %v1137
      %v1426 = vunpack.c.l.b16 %v1138
      %v1427 = vunpack.c.l.b16 %v1139
      %v1428 = vunpack.c.l.b16 %v1140
      %v1429 = vunpack.c.l.b16 %v1141
      %v1430 = vunpack.c.l.b16 %v1142
      %v1431 = vunpack.c.l.b16 %v1143
      %v1432 = vunpack.c.l.b16 %v1144
      %v1433 = vunpack.c.l.b16 %v1145
      %v1434 = vunpack.c.l.b16 %v1146
      %v1435 = vunpack.c.l.b16 %v1147
      %v1436 = vunpack.c.l.b16 %v1148
      %v1437 = vunpack.c.l.b16 %v1149
      %v1438 = vunpack.c.l.b16 %v1150
      %v1439 = vunpack.c.l.b16 %v1151
      %v1440 = vpack.c.b16 %v1297, %v1296
      %v1441 = vpack.c.b16 %v1299, %v1298
      %v1442 = vpack.c.b16 %v1301, %v1300
      %v1443 = vpack.c.b16 %v1303, %v1302
      %v1444 = vpack.c.b16 %v1305, %v1304
      %v1445 = vpack.c.b16 %v1307, %v1306
      %v1446 = vpack.c.b16 %v1309, %v1308
      %v1447 = vpack.c.b16 %v1311, %v1310
      %v1448 = vpack.c.b16 %v1313, %v1312
      %v1449 = vpack.c.b16 %v1315, %v1314
      %v1450 = vpack.c.b16 %v1317, %v1316
      %v1451 = vpack.c.b16 %v1319, %v1318
      %v1452 = vpack.c.b16 %v1321, %v1320
      %v1453 = vpack.c.b16 %v1323, %v1322
      %v1454 = vpack.c.b16 %v1325, %v1324
      %v1455 = vpack.c.b16 %v1327, %v1326
      %v1456 = vpack.c.b16 %v1329, %v1328
      %v1457 = vpack.c.b16 %v1331, %v1330
      %v1458 = vpack.c.b16 %v1333, %v1332
      %v1459 = vpack.c.b16 %v1335, %v1334
      %v1460 = vpack.c.b16 %v1337, %v1336
      %v1461 = vpack.c.b16 %v1339, %v1338
      %v1462 = vpack.c.b16 %v1341, %v1340
      %v1463 = vpack.c.b16 %v1343, %v1342
      %v1464 = vpack.c.b16 %v1345, %v1344
      %v1465 = vpack.c.b16 %v1347, %v1346
      %v1466 = vpack.c.b16 %v1349, %v1348
      %v1467 = vpack.c.b16 %v1351, %v1350
      %v1468 = vpack.c.b16 %v1353, %v1352
      %v1469 = vpack.c.b16 %v1355, %v1354
      %v1470 = vpack.c.b16 %v1357, %v1356
      %v1471 = vpack.c.b16 %v1359, %v1358
      %v1472 = vpack.c.b16 %v1361, %v1360
      %v1473 = vpack.c.b16 %v1363, %v1362
      %v1474 = vpack.c.b16 %v1365, %v1364
      %v1475 = vpack.c.b16 %v1367, %v1366
      %v1476 = vpack.c.b16 %v1369, %v1368
      %v1477 = vpack.c.b16 %v1371, %v1370
      %v1478 = vpack.c.b16 %v1373, %v1372
      %v1479 = vpack.c.b16 %v1375, %v1374
      %v1480 = vpack.c.b16 %v1377, %v1376
      %v1481 = vpack.c.b16 %v1379, %v1378
      %v1482 = vpack.c.b16 %v1381, %v1380
      %v1483 = vpack.c.b16 %v1383, %v1382
      %v1484 = vpack.c.b16 %v1385, %v1384
      %v1485 = vpack.c.b16 %v1387, %v1386
      %v1486 = vpack.c.b16 %v1389, %v1388
      %v1487 = vpack.c.b16 %v1391, %v1390
      %v1488 = vpack.c.b16 %v1393, %v1392
      %v1489 = vpack.c.b16 %v1395, %v1394
      %v1490 = vpack.c.b16 %v1397, %v1396
      %v1491 = vpack.c.b16 %v1399, %v1398
      %v1492 = vpack.c.b16 %v1401, %v1400
      %v1493 = vpack.c.b16 %v1403, %v1402
      %v1494 = vpack.c.b16 %v1405, %v1404
      %v1495 = vpack.c.b16 %v1407, %v1406
      %v1496 = vpack.c.b16 %v1409, %v1408
      %v1497 = vpack.c.b16 %v1411, %v1410
      %v1498 = vpack.c.b16 %v1413, %v1412
      %v1499 = vpack.c.b16 %v1415, %v1414
      %v1500 = vpack.c.b16 %v1417, %v1416
      %v1501 = vpack.c.b16 %v1419, %v1418
      %v1502 = vpack.c.b16 %v1421, %v1420
      %v1503 = vpack.c.b16 %v1423, %v1422
      %v1504 = vpack.c.b16 %v1425, %v1424
      %v1505 = vpack.c.b16 %v1427, %v1426
      %v1506 = vpack.c.b16 %v1429, %v1428
      %v1507 = vpack.c.b16 %v1431, %v1430
      %v1508 = vpack.c.b16 %v1433, %v1432
      %v1509 = vpack.c.b16 %v1435, %v1434
      %v1510 = vpack.c.b16 %v1437, %v1436
      %v1511 = vpack.c.b16 %v1439, %v1438
      %1584 = vmatprep.subr.bf16.mxu0 0
      %1585 = vmatpush1.bf16.msra.mxu0 %v1440
      %1586 = vmatprep.subr.bf16.mxu0 0
      %1587 = vmatpush1.bf16.msra.mxu0 %v1441
      %1588 = vmatprep.subr.bf16.mxu0 0
      %1589 = vmatpush1.bf16.msra.mxu0 %v1442
      %1590 = vmatprep.subr.bf16.mxu0 0
      %1591 = vmatpush1.bf16.msra.mxu0 %v1443
      %1592 = vmatprep.subr.bf16.mxu0 0
      %1593 = vmatpush1.bf16.msra.mxu0 %v1444
      %1594 = vmatprep.subr.bf16.mxu0 0
      %1595 = vmatpush1.bf16.msra.mxu0 %v1445
      %1596 = vmatprep.subr.bf16.mxu0 0
      %1597 = vmatpush1.bf16.msra.mxu0 %v1446
      %1598 = vmatprep.subr.bf16.mxu0 0
      %1599 = vmatpush1.bf16.msra.mxu0 %v1447
      %1600 = vmatprep.subr.bf16.mxu0 0
      %1601 = vmatpush1.bf16.msra.mxu0 %v1448
      %1602 = vmatprep.subr.bf16.mxu0 0
      %1603 = vmatpush1.bf16.msra.mxu0 %v1449
      %1604 = vmatprep.subr.bf16.mxu0 0
      %1605 = vmatpush1.bf16.msra.mxu0 %v1450
      %1606 = vmatprep.subr.bf16.mxu0 0
      %1607 = vmatpush1.bf16.msra.mxu0 %v1451
      %1608 = vmatprep.subr.bf16.mxu0 0
      %1609 = vmatpush1.bf16.msra.mxu0 %v1452
      %1610 = vmatprep.subr.bf16.mxu0 0
      %1611 = vmatpush1.bf16.msra.mxu0 %v1453
      %1612 = vmatprep.subr.bf16.mxu0 0
      %1613 = vmatpush1.bf16.msra.mxu0 %v1454
      %1614 = vmatprep.subr.bf16.mxu0 0
      %1615 = vmatpush1.bf16.msra.mxu0 %v1455
      %1616 = vmatprep.mubr.bf16.mxu0 %v865
      %1617 = vmatmul.mubr.bf16.gmra.mrb[0].mxu0 %v864
      %v1618 = vpop.f32.mrb[0].mxu0
      %v1619 = vadd.f32 0.0, %v1618
      %v1620 = vpop.f32.mrb[0].mxu0
      %v1621 = vpop.f32.mrb[0].mxu0
      %v1622 = vadd.f32 0.0, %v1621
      %v1623 = vpop.f32.mrb[0].mxu0
      %1624 = vmatprep.mubr.bf16.mxu0 %v874
      %1625 = vmatmul.mubr.bf16.gmra.mrb[0].mxu0 %v873
      %v1626 = vpop.f32.mrb[0].mxu0
      %v1627 = vadd.f32 0.0, %v1626
      %v1628 = vpop.f32.mrb[0].mxu0
      %v1629 = vpop.f32.mrb[0].mxu0
      %v1630 = vadd.f32 0.0, %v1629
      %v1631 = vpop.f32.mrb[0].mxu0
      %1632 = vmatprep.mubr.bf16.mxu0 %v883
      %1633 = vmatmul.mubr.bf16.gmra.mrb[0].mxu0 %v882
      %v1634 = vpop.f32.mrb[0].mxu0
      %v1635 = vadd.f32 0.0, %v1634
      %v1636 = vpop.f32.mrb[0].mxu0
      %v1637 = vpop.f32.mrb[0].mxu0
      %v1638 = vadd.f32 0.0, %v1637
      %v1639 = vpop.f32.mrb[0].mxu0
      %1640 = vmatprep.mubr.bf16.mxu0 %v892
      %1641 = vmatmul.mubr.bf16.gmra.mrb[0].mxu0 %v891
      %v1642 = vpop.f32.mrb[0].mxu0
      %v1643 = vadd.f32 0.0, %v1642
      %v1644 = vpop.f32.mrb[0].mxu0
      %v1645 = vpop.f32.mrb[0].mxu0
      %v1646 = vadd.f32 0.0, %v1645
      %v1647 = vpop.f32.mrb[0].mxu0
      %1648 = vmatprep.mubr.bf16.mxu0 %v901
      %1649 = vmatmul.mubr.bf16.gmra.mrb[0].mxu0 %v900
      %v1650 = vpop.f32.mrb[0].mxu0
      %v1651 = vadd.f32 0.0, %v1650
      %v1652 = vpop.f32.mrb[0].mxu0
      %v1653 = vpop.f32.mrb[0].mxu0
      %v1654 = vadd.f32 0.0, %v1653
      %v1655 = vpop.f32.mrb[0].mxu0
      %1656 = vmatprep.mubr.bf16.mxu0 %v910
      %1657 = vmatmul.mubr.bf16.gmra.mrb[0].mxu0 %v909
      %v1658 = vpop.f32.mrb[0].mxu0
      %v1659 = vadd.f32 0.0, %v1658
      %v1660 = vpop.f32.mrb[0].mxu0
      %v1661 = vpop.f32.mrb[0].mxu0
      %v1662 = vadd.f32 0.0, %v1661
      %v1663 = vpop.f32.mrb[0].mxu0
      %1664 = vmatprep.mubr.bf16.mxu0 %v919
      %1665 = vmatmul.mubr.bf16.gmra.mrb[0].mxu0 %v918
      %v1666 = vpop.f32.mrb[0].mxu0
      %v1667 = vadd.f32 0.0, %v1666
      %v1668 = vpop.f32.mrb[0].mxu0
      %v1669 = vpop.f32.mrb[0].mxu0
      %v1670 = vadd.f32 0.0, %v1669
      %v1671 = vpop.f32.mrb[0].mxu0
      %1672 = vmatprep.mubr.bf16.mxu0 %v928
      %1673 = vmatmul.mubr.bf16.gmra.mrb[0].mxu0 %v927
      %v1674 = vpop.f32.mrb[0].mxu0
      %v1675 = vadd.f32 0.0, %v1674
      %v1676 = vpop.f32.mrb[0].mxu0
      %v1677 = vpop.f32.mrb[0].mxu0
      %v1678 = vadd.f32 0.0, %v1677
      %v1679 = vpop.f32.mrb[0].mxu0
      %1680 = vmatprep.mubr.bf16.mxu0 %v937
      %1681 = vmatmul.mubr.bf16.gmra.mrb[0].mxu0 %v936
      %v1682 = vpop.f32.mrb[0].mxu0
      %v1683 = vadd.f32 0.0, %v1682
      %v1684 = vpop.f32.mrb[0].mxu0
      %v1685 = vpop.f32.mrb[0].mxu0
      %v1686 = vadd.f32 0.0, %v1685
      %v1687 = vpop.f32.mrb[0].mxu0
      %1688 = vmatprep.mubr.bf16.mxu0 %v946
      %1689 = vmatmul.mubr.bf16.gmra.mrb[0].mxu0 %v945
      %v1690 = vpop.f32.mrb[0].mxu0
      %v1691 = vadd.f32 0.0, %v1690
      %v1692 = vpop.f32.mrb[0].mxu0
      %v1693 = vpop.f32.mrb[0].mxu0
      %v1694 = vadd.f32 0.0, %v1693
      %v1695 = vpop.f32.mrb[0].mxu0
      %1696 = vmatprep.mubr.bf16.mxu0 %v955
      %1697 = vmatmul.mubr.bf16.gmra.mrb[0].mxu0 %v954
      %v1698 = vpop.f32.mrb[0].mxu0
      %v1699 = vadd.f32 0.0, %v1698
      %v1700 = vpop.f32.mrb[0].mxu0
      %v1701 = vpop.f32.mrb[0].mxu0
      %v1702 = vadd.f32 0.0, %v1701
      %v1703 = vpop.f32.mrb[0].mxu0
      %1704 = vmatprep.mubr.bf16.mxu0 %v964
      %1705 = vmatmul.mubr.bf16.gmra.mrb[0].mxu0 %v963
      %v1706 = vpop.f32.mrb[0].mxu0
      %v1707 = vadd.f32 0.0, %v1706
      %v1708 = vpop.f32.mrb[0].mxu0
      %v1709 = vpop.f32.mrb[0].mxu0
      %v1710 = vadd.f32 0.0, %v1709
      %v1711 = vpop.f32.mrb[0].mxu0
      %1712 = vmatprep.mubr.bf16.mxu0 %v973
      %1713 = vmatmul.mubr.bf16.gmra.mrb[0].mxu0 %v972
      %v1714 = vpop.f32.mrb[0].mxu0
      %v1715 = vadd.f32 0.0, %v1714
      %v1716 = vpop.f32.mrb[0].mxu0
      %v1717 = vpop.f32.mrb[0].mxu0
      %v1718 = vadd.f32 0.0, %v1717
      %v1719 = vpop.f32.mrb[0].mxu0
      %1720 = vmatprep.mubr.bf16.mxu0 %v982
      %1721 = vmatmul.mubr.bf16.gmra.mrb[0].mxu0 %v981
      %v1722 = vpop.f32.mrb[0].mxu0
      %v1723 = vadd.f32 0.0, %v1722
      %v1724 = vpop.f32.mrb[0].mxu0
      %v1725 = vpop.f32.mrb[0].mxu0
      %v1726 = vadd.f32 0.0, %v1725
      %v1727 = vpop.f32.mrb[0].mxu0
      %1728 = vmatprep.mubr.bf16.mxu0 %v991
      %1729 = vmatmul.mubr.bf16.gmra.mrb[0].mxu0 %v990
      %v1730 = vpop.f32.mrb[0].mxu0
      %v1731 = vadd.f32 0.0, %v1730
      %v1732 = vpop.f32.mrb[0].mxu0
      %v1733 = vpop.f32.mrb[0].mxu0
      %v1734 = vadd.f32 0.0, %v1733
      %v1735 = vpop.f32.mrb[0].mxu0
      %1736 = vmatprep.mubr.bf16.mxu0 %v1000
      %1737 = vmatmul.mubr.bf16.gmra.mrb[0].mxu0 %v999
      %v1738 = vpop.f32.mrb[0].mxu0
      %v1739 = vadd.f32 0.0, %v1738
      %v1740 = vpop.f32.mrb[0].mxu0
      %v1741 = vpop.f32.mrb[0].mxu0
      %v1742 = vadd.f32 0.0, %v1741
      %v1743 = vpop.f32.mrb[0].mxu0
      %1744 = vdwg.mxu0
      %1745 = vmatprep.subr.bf16.mxu0 0
      %1746 = vmatpush1.bf16.msra.mxu0 %v1456
      %1747 = vmatprep.subr.bf16.mxu0 0
      %1748 = vmatpush1.bf16.msra.mxu0 %v1457
      %1749 = vmatprep.subr.bf16.mxu0 0
      %1750 = vmatpush1.bf16.msra.mxu0 %v1458
      %1751 = vmatprep.subr.bf16.mxu0 0
      %1752 = vmatpush1.bf16.msra.mxu0 %v1459
      %1753 = vmatprep.subr.bf16.mxu0 0
      %1754 = vmatpush1.bf16.msra.mxu0 %v1460
      %1755 = vmatprep.subr.bf16.mxu0 0
      %1756 = vmatpush1.bf16.msra.mxu0 %v1461
      %1757 = vmatprep.subr.bf16.mxu0 0
      %1758 = vmatpush1.bf16.msra.mxu0 %v1462
      %1759 = vmatprep.subr.bf16.mxu0 0
      %1760 = vmatpush1.bf16.msra.mxu0 %v1463
      %1761 = vmatprep.subr.bf16.mxu0 0
      %1762 = vmatpush1.bf16.msra.mxu0 %v1464
      %1763 = vmatprep.subr.bf16.mxu0 0
      %1764 = vmatpush1.bf16.msra.mxu0 %v1465
      %1765 = vmatprep.subr.bf16.mxu0 0
      %1766 = vmatpush1.bf16.msra.mxu0 %v1466
      %1767 = vmatprep.subr.bf16.mxu0 0
      %1768 = vmatpush1.bf16.msra.mxu0 %v1467
      %1769 = vmatprep.subr.bf16.mxu0 0
      %1770 = vmatpush1.bf16.msra.mxu0 %v1468
      %1771 = vmatprep.subr.bf16.mxu0 0
      %1772 = vmatpush1.bf16.msra.mxu0 %v1469
      %1773 = vmatprep.subr.bf16.mxu0 0
      %1774 = vmatpush1.bf16.msra.mxu0 %v1470
      %1775 = vmatprep.subr.bf16.mxu0 0
      %1776 = vmatpush1.bf16.msra.mxu0 %v1471
      %1777 = vmatprep.mubr.bf16.mxu0 %v867
      %1778 = vmatmul.mubr.bf16.gmra.mrb[0].mxu0 %v866
      %v1779 = vpop.f32.mrb[0].mxu0
      %v1780 = vadd.f32 %v1619, %v1779
      %v1781 = vpop.f32.mrb[0].mxu0
      %v1782 = vpop.f32.mrb[0].mxu0
      %v1783 = vadd.f32 %v1622, %v1782
      %v1784 = vpop.f32.mrb[0].mxu0
      %1785 = vmatprep.mubr.bf16.mxu0 %v876
      %1786 = vmatmul.mubr.bf16.gmra.mrb[0].mxu0 %v875
      %v1787 = vpop.f32.mrb[0].mxu0
      %v1788 = vadd.f32 %v1627, %v1787
      %v1789 = vpop.f32.mrb[0].mxu0
      %v1790 = vpop.f32.mrb[0].mxu0
      %v1791 = vadd.f32 %v1630, %v1790
      %v1792 = vpop.f32.mrb[0].mxu0
      %1793 = vmatprep.mubr.bf16.mxu0 %v885
      %1794 = vmatmul.mubr.bf16.gmra.mrb[0].mxu0 %v884
      %v1795 = vpop.f32.mrb[0].mxu0
      %v1796 = vadd.f32 %v1635, %v1795
      %v1797 = vpop.f32.mrb[0].mxu0
      %v1798 = vpop.f32.mrb[0].mxu0
      %v1799 = vadd.f32 %v1638, %v1798
      %v1800 = vpop.f32.mrb[0].mxu0
      %1801 = vmatprep.mubr.bf16.mxu0 %v894
      %1802 = vmatmul.mubr.bf16.gmra.mrb[0].mxu0 %v893
      %v1803 = vpop.f32.mrb[0].mxu0
      %v1804 = vadd.f32 %v1643, %v1803
      %v1805 = vpop.f32.mrb[0].mxu0
      %v1806 = vpop.f32.mrb[0].mxu0
      %v1807 = vadd.f32 %v1646, %v1806
      %v1808 = vpop.f32.mrb[0].mxu0
      %1809 = vmatprep.mubr.bf16.mxu0 %v903
      %1810 = vmatmul.mubr.bf16.gmra.mrb[0].mxu0 %v902
      %v1811 = vpop.f32.mrb[0].mxu0
      %v1812 = vadd.f32 %v1651, %v1811
      %v1813 = vpop.f32.mrb[0].mxu0
      %v1814 = vpop.f32.mrb[0].mxu0
      %v1815 = vadd.f32 %v1654, %v1814
      %v1816 = vpop.f32.mrb[0].mxu0
      %1817 = vmatprep.mubr.bf16.mxu0 %v912
      %1818 = vmatmul.mubr.bf16.gmra.mrb[0].mxu0 %v911
      %v1819 = vpop.f32.mrb[0].mxu0
      %v1820 = vadd.f32 %v1659, %v1819
      %v1821 = vpop.f32.mrb[0].mxu0
      %v1822 = vpop.f32.mrb[0].mxu0
      %v1823 = vadd.f32 %v1662, %v1822
      %v1824 = vpop.f32.mrb[0].mxu0
      %1825 = vmatprep.mubr.bf16.mxu0 %v921
      %1826 = vmatmul.mubr.bf16.gmra.mrb[0].mxu0 %v920
      %v1827 = vpop.f32.mrb[0].mxu0
      %v1828 = vadd.f32 %v1667, %v1827
      %v1829 = vpop.f32.mrb[0].mxu0
      %v1830 = vpop.f32.mrb[0].mxu0
      %v1831 = vadd.f32 %v1670, %v1830
      %v1832 = vpop.f32.mrb[0].mxu0
      %1833 = vmatprep.mubr.bf16.mxu0 %v930
      %1834 = vmatmul.mubr.bf16.gmra.mrb[0].mxu0 %v929
      %v1835 = vpop.f32.mrb[0].mxu0
      %v1836 = vadd.f32 %v1675, %v1835
      %v1837 = vpop.f32.mrb[0].mxu0
      %v1838 = vpop.f32.mrb[0].mxu0
      %v1839 = vadd.f32 %v1678, %v1838
      %v1840 = vpop.f32.mrb[0].mxu0
      %1841 = vmatprep.mubr.bf16.mxu0 %v939
      %1842 = vmatmul.mubr.bf16.gmra.mrb[0].mxu0 %v938
      %v1843 = vpop.f32.mrb[0].mxu0
      %v1844 = vadd.f32 %v1683, %v1843
      %v1845 = vpop.f32.mrb[0].mxu0
      %v1846 = vpop.f32.mrb[0].mxu0
      %v1847 = vadd.f32 %v1686, %v1846
      %v1848 = vpop.f32.mrb[0].mxu0
      %1849 = vmatprep.mubr.bf16.mxu0 %v948
      %1850 = vmatmul.mubr.bf16.gmra.mrb[0].mxu0 %v947
      %v1851 = vpop.f32.mrb[0].mxu0
      %v1852 = vadd.f32 %v1691, %v1851
      %v1853 = vpop.f32.mrb[0].mxu0
      %v1854 = vpop.f32.mrb[0].mxu0
      %v1855 = vadd.f32 %v1694, %v1854
      %v1856 = vpop.f32.mrb[0].mxu0
      %1857 = vmatprep.mubr.bf16.mxu0 %v957
      %1858 = vmatmul.mubr.bf16.gmra.mrb[0].mxu0 %v956
      %v1859 = vpop.f32.mrb[0].mxu0
      %v1860 = vadd.f32 %v1699, %v1859
      %v1861 = vpop.f32.mrb[0].mxu0
      %v1862 = vpop.f32.mrb[0].mxu0
      %v1863 = vadd.f32 %v1702, %v1862
      %v1864 = vpop.f32.mrb[0].mxu0
      %1865 = vmatprep.mubr.bf16.mxu0 %v966
      %1866 = vmatmul.mubr.bf16.gmra.mrb[0].mxu0 %v965
      %v1867 = vpop.f32.mrb[0].mxu0
      %v1868 = vadd.f32 %v1707, %v1867
      %v1869 = vpop.f32.mrb[0].mxu0
      %v1870 = vpop.f32.mrb[0].mxu0
      %v1871 = vadd.f32 %v1710, %v1870
      %v1872 = vpop.f32.mrb[0].mxu0
      %1873 = vmatprep.mubr.bf16.mxu0 %v975
      %1874 = vmatmul.mubr.bf16.gmra.mrb[0].mxu0 %v974
      %v1875 = vpop.f32.mrb[0].mxu0
      %v1876 = vadd.f32 %v1715, %v1875
      %v1877 = vpop.f32.mrb[0].mxu0
      %v1878 = vpop.f32.mrb[0].mxu0
      %v1879 = vadd.f32 %v1718, %v1878
      %v1880 = vpop.f32.mrb[0].mxu0
      %1881 = vmatprep.mubr.bf16.mxu0 %v984
      %1882 = vmatmul.mubr.bf16.gmra.mrb[0].mxu0 %v983
      %v1883 = vpop.f32.mrb[0].mxu0
      %v1884 = vadd.f32 %v1723, %v1883
      %v1885 = vpop.f32.mrb[0].mxu0
      %v1886 = vpop.f32.mrb[0].mxu0
      %v1887 = vadd.f32 %v1726, %v1886
      %v1888 = vpop.f32.mrb[0].mxu0
      %1889 = vmatprep.mubr.bf16.mxu0 %v993
      %1890 = vmatmul.mubr.bf16.gmra.mrb[0].mxu0 %v992
      %v1891 = vpop.f32.mrb[0].mxu0
      %v1892 = vadd.f32 %v1731, %v1891
      %v1893 = vpop.f32.mrb[0].mxu0
      %v1894 = vpop.f32.mrb[0].mxu0
      %v1895 = vadd.f32 %v1734, %v1894
      %v1896 = vpop.f32.mrb[0].mxu0
      %1897 = vmatprep.mubr.bf16.mxu0 %v1002
      %1898 = vmatmul.mubr.bf16.gmra.mrb[0].mxu0 %v1001
      %v1899 = vpop.f32.mrb[0].mxu0
      %v1900 = vadd.f32 %v1739, %v1899
      %v1901 = vpop.f32.mrb[0].mxu0
      %v1902 = vpop.f32.mrb[0].mxu0
      %v1903 = vadd.f32 %v1742, %v1902
      %v1904 = vpop.f32.mrb[0].mxu0
      %1905 = vdwg.mxu0
      %1906 = vmatprep.subr.bf16.mxu0 0
      %1907 = vmatpush1.bf16.msra.mxu0 %v1472
      %1908 = vmatprep.subr.bf16.mxu0 0
      %1909 = vmatpush1.bf16.msra.mxu0 %v1473
      %1910 = vmatprep.subr.bf16.mxu0 0
      %1911 = vmatpush1.bf16.msra.mxu0 %v1474
      %1912 = vmatprep.subr.bf16.mxu0 0
      %1913 = vmatpush1.bf16.msra.mxu0 %v1475
      %1914 = vmatprep.subr.bf16.mxu0 0
      %1915 = vmatpush1.bf16.msra.mxu0 %v1476
      %1916 = vmatprep.subr.bf16.mxu0 0
      %1917 = vmatpush1.bf16.msra.mxu0 %v1477
      %1918 = vmatprep.subr.bf16.mxu0 0
      %1919 = vmatpush1.bf16.msra.mxu0 %v1478
      %1920 = vmatprep.subr.bf16.mxu0 0
      %1921 = vmatpush1.bf16.msra.mxu0 %v1479
      %1922 = vmatprep.subr.bf16.mxu0 0
      %1923 = vmatpush1.bf16.msra.mxu0 %v1480
      %1924 = vmatprep.subr.bf16.mxu0 0
      %1925 = vmatpush1.bf16.msra.mxu0 %v1481
      %1926 = vmatprep.subr.bf16.mxu0 0
      %1927 = vmatpush1.bf16.msra.mxu0 %v1482
      %1928 = vmatprep.subr.bf16.mxu0 0
      %1929 = vmatpush1.bf16.msra.mxu0 %v1483
      %1930 = vmatprep.subr.bf16.mxu0 0
      %1931 = vmatpush1.bf16.msra.mxu0 %v1484
      %1932 = vmatprep.subr.bf16.mxu0 0
      %1933 = vmatpush1.bf16.msra.mxu0 %v1485
      %1934 = vmatprep.subr.bf16.mxu0 0
      %1935 = vmatpush1.bf16.msra.mxu0 %v1486
      %1936 = vmatprep.subr.bf16.mxu0 0
      %1937 = vmatpush1.bf16.msra.mxu0 %v1487
      %1938 = vmatprep.mubr.bf16.mxu0 %v869
      %1939 = vmatmul.mubr.bf16.gmra.mrb[0].mxu0 %v868
      %v1940 = vpop.f32.mrb[0].mxu0
      %v1941 = vadd.f32 %v1780, %v1940
      %v1942 = vpop.f32.mrb[0].mxu0
      %v1943 = vpop.f32.mrb[0].mxu0
      %v1944 = vadd.f32 %v1783, %v1943
      %v1945 = vpop.f32.mrb[0].mxu0
      %1946 = vmatprep.mubr.bf16.mxu0 %v878
      %1947 = vmatmul.mubr.bf16.gmra.mrb[0].mxu0 %v877
      %v1948 = vpop.f32.mrb[0].mxu0
      %v1949 = vadd.f32 %v1788, %v1948
      %v1950 = vpop.f32.mrb[0].mxu0
      %v1951 = vpop.f32.mrb[0].mxu0
      %v1952 = vadd.f32 %v1791, %v1951
      %v1953 = vpop.f32.mrb[0].mxu0
      %1954 = vmatprep.mubr.bf16.mxu0 %v887
      %1955 = vmatmul.mubr.bf16.gmra.mrb[0].mxu0 %v886
      %v1956 = vpop.f32.mrb[0].mxu0
      %v1957 = vadd.f32 %v1796, %v1956
      %v1958 = vpop.f32.mrb[0].mxu0
      %v1959 = vpop.f32.mrb[0].mxu0
      %v1960 = vadd.f32 %v1799, %v1959
      %v1961 = vpop.f32.mrb[0].mxu0
      %1962 = vmatprep.mubr.bf16.mxu0 %v896
      %1963 = vmatmul.mubr.bf16.gmra.mrb[0].mxu0 %v895
      %v1964 = vpop.f32.mrb[0].mxu0
      %v1965 = vadd.f32 %v1804, %v1964
      %v1966 = vpop.f32.mrb[0].mxu0
      %v1967 = vpop.f32.mrb[0].mxu0
      %v1968 = vadd.f32 %v1807, %v1967
      %v1969 = vpop.f32.mrb[0].mxu0
      %1970 = vmatprep.mubr.bf16.mxu0 %v905
      %1971 = vmatmul.mubr.bf16.gmra.mrb[0].mxu0 %v904
      %v1972 = vpop.f32.mrb[0].mxu0
      %v1973 = vadd.f32 %v1812, %v1972
      %v1974 = vpop.f32.mrb[0].mxu0
      %v1975 = vpop.f32.mrb[0].mxu0
      %v1976 = vadd.f32 %v1815, %v1975
      %v1977 = vpop.f32.mrb[0].mxu0
      %1978 = vmatprep.mubr.bf16.mxu0 %v914
      %1979 = vmatmul.mubr.bf16.gmra.mrb[0].mxu0 %v913
      %v1980 = vpop.f32.mrb[0].mxu0
      %v1981 = vadd.f32 %v1820, %v1980
      %v1982 = vpop.f32.mrb[0].mxu0
      %v1983 = vpop.f32.mrb[0].mxu0
      %v1984 = vadd.f32 %v1823, %v1983
      %v1985 = vpop.f32.mrb[0].mxu0
      %1986 = vmatprep.mubr.bf16.mxu0 %v923
      %1987 = vmatmul.mubr.bf16.gmra.mrb[0].mxu0 %v922
      %v1988 = vpop.f32.mrb[0].mxu0
      %v1989 = vadd.f32 %v1828, %v1988
      %v1990 = vpop.f32.mrb[0].mxu0
      %v1991 = vpop.f32.mrb[0].mxu0
      %v1992 = vadd.f32 %v1831, %v1991
      %v1993 = vpop.f32.mrb[0].mxu0
      %1994 = vmatprep.mubr.bf16.mxu0 %v932
      %1995 = vmatmul.mubr.bf16.gmra.mrb[0].mxu0 %v931
      %v1996 = vpop.f32.mrb[0].mxu0
      %v1997 = vadd.f32 %v1836, %v1996
      %v1998 = vpop.f32.mrb[0].mxu0
      %v1999 = vpop.f32.mrb[0].mxu0
      %v2000 = vadd.f32 %v1839, %v1999
      %v2001 = vpop.f32.mrb[0].mxu0
      %2002 = vmatprep.mubr.bf16.mxu0 %v941
      %2003 = vmatmul.mubr.bf16.gmra.mrb[0].mxu0 %v940
      %v2004 = vpop.f32.mrb[0].mxu0
      %v2005 = vadd.f32 %v1844, %v2004
      %v2006 = vpop.f32.mrb[0].mxu0
      %v2007 = vpop.f32.mrb[0].mxu0
      %v2008 = vadd.f32 %v1847, %v2007
      %v2009 = vpop.f32.mrb[0].mxu0
      %2010 = vmatprep.mubr.bf16.mxu0 %v950
      %2011 = vmatmul.mubr.bf16.gmra.mrb[0].mxu0 %v949
      %v2012 = vpop.f32.mrb[0].mxu0
      %v2013 = vadd.f32 %v1852, %v2012
      %v2014 = vpop.f32.mrb[0].mxu0
      %v2015 = vpop.f32.mrb[0].mxu0
      %v2016 = vadd.f32 %v1855, %v2015
      %v2017 = vpop.f32.mrb[0].mxu0
      %2018 = vmatprep.mubr.bf16.mxu0 %v959
      %2019 = vmatmul.mubr.bf16.gmra.mrb[0].mxu0 %v958
      %v2020 = vpop.f32.mrb[0].mxu0
      %v2021 = vadd.f32 %v1860, %v2020
      %v2022 = vpop.f32.mrb[0].mxu0
      %v2023 = vpop.f32.mrb[0].mxu0
      %v2024 = vadd.f32 %v1863, %v2023
      %v2025 = vpop.f32.mrb[0].mxu0
      %2026 = vmatprep.mubr.bf16.mxu0 %v968
      %2027 = vmatmul.mubr.bf16.gmra.mrb[0].mxu0 %v967
      %v2028 = vpop.f32.mrb[0].mxu0
      %v2029 = vadd.f32 %v1868, %v2028
      %v2030 = vpop.f32.mrb[0].mxu0
      %v2031 = vpop.f32.mrb[0].mxu0
      %v2032 = vadd.f32 %v1871, %v2031
      %v2033 = vpop.f32.mrb[0].mxu0
      %2034 = vmatprep.mubr.bf16.mxu0 %v977
      %2035 = vmatmul.mubr.bf16.gmra.mrb[0].mxu0 %v976
      %v2036 = vpop.f32.mrb[0].mxu0
      %v2037 = vadd.f32 %v1876, %v2036
      %v2038 = vpop.f32.mrb[0].mxu0
      %v2039 = vpop.f32.mrb[0].mxu0
      %v2040 = vadd.f32 %v1879, %v2039
      %v2041 = vpop.f32.mrb[0].mxu0
      %2042 = vmatprep.mubr.bf16.mxu0 %v986
      %2043 = vmatmul.mubr.bf16.gmra.mrb[0].mxu0 %v985
      %v2044 = vpop.f32.mrb[0].mxu0
      %v2045 = vadd.f32 %v1884, %v2044
      %v2046 = vpop.f32.mrb[0].mxu0
      %v2047 = vpop.f32.mrb[0].mxu0
      %v2048 = vadd.f32 %v1887, %v2047
      %v2049 = vpop.f32.mrb[0].mxu0
      %2050 = vmatprep.mubr.bf16.mxu0 %v995
      %2051 = vmatmul.mubr.bf16.gmra.mrb[0].mxu0 %v994
      %v2052 = vpop.f32.mrb[0].mxu0
      %v2053 = vadd.f32 %v1892, %v2052
      %v2054 = vpop.f32.mrb[0].mxu0
      %v2055 = vpop.f32.mrb[0].mxu0
      %v2056 = vadd.f32 %v1895, %v2055
      %v2057 = vpop.f32.mrb[0].mxu0
      %2058 = vmatprep.mubr.bf16.mxu0 %v1004
      %2059 = vmatmul.mubr.bf16.gmra.mrb[0].mxu0 %v1003
      %v2060 = vpop.f32.mrb[0].mxu0
      %v2061 = vadd.f32 %v1900, %v2060
      %v2062 = vpop.f32.mrb[0].mxu0
      %v2063 = vpop.f32.mrb[0].mxu0
      %v2064 = vadd.f32 %v1903, %v2063
      %v2065 = vpop.f32.mrb[0].mxu0
      %2066 = vdwg.mxu0
      %2067 = vmatprep.subr.bf16.mxu0 0
      %2068 = vmatpush1.bf16.msra.mxu0 %v1488
      %2069 = vmatprep.subr.bf16.mxu0 0
      %2070 = vmatpush1.bf16.msra.mxu0 %v1489
      %2071 = vmatprep.subr.bf16.mxu0 0
      %2072 = vmatpush1.bf16.msra.mxu0 %v1490
      %2073 = vmatprep.subr.bf16.mxu0 0
      %2074 = vmatpush1.bf16.msra.mxu0 %v1491
      %2075 = vmatprep.subr.bf16.mxu0 0
      %2076 = vmatpush1.bf16.msra.mxu0 %v1492
      %2077 = vmatprep.subr.bf16.mxu0 0
      %2078 = vmatpush1.bf16.msra.mxu0 %v1493
      %2079 = vmatprep.subr.bf16.mxu0 0
      %2080 = vmatpush1.bf16.msra.mxu0 %v1494
      %2081 = vmatprep.subr.bf16.mxu0 0
      %2082 = vmatpush1.bf16.msra.mxu0 %v1495
      %2083 = vmatprep.subr.bf16.mxu0 0
      %2084 = vmatpush1.bf16.msra.mxu0 %v1496
      %2085 = vmatprep.subr.bf16.mxu0 0
      %2086 = vmatpush1.bf16.msra.mxu0 %v1497
      %2087 = vmatprep.subr.bf16.mxu0 0
      %2088 = vmatpush1.bf16.msra.mxu0 %v1498
      %2089 = vmatprep.subr.bf16.mxu0 0
      %2090 = vmatpush1.bf16.msra.mxu0 %v1499
      %2091 = vmatprep.subr.bf16.mxu0 0
      %2092 = vmatpush1.bf16.msra.mxu0 %v1500
      %2093 = vmatprep.subr.bf16.mxu0 0
      %2094 = vmatpush1.bf16.msra.mxu0 %v1501
      %2095 = vmatprep.subr.bf16.mxu0 0
      %2096 = vmatpush1.bf16.msra.mxu0 %v1502
      %2097 = vmatprep.subr.bf16.mxu0 0
      %2098 = vmatpush1.bf16.msra.mxu0 %v1503
      %2099 = vmatprep.mubr.bf16.mxu0 %v871
      %2100 = vmatmul.mubr.bf16.gmra.mrb[0].mxu0 %v870
      %v2101 = vpop.f32.mrb[0].mxu0
      %v2102 = vadd.f32 %v1941, %v2101
      %v2103 = vpop.f32.mrb[0].mxu0
      %v2104 = vpop.f32.mrb[0].mxu0
      %v2105 = vadd.f32 %v1944, %v2104
      %v2106 = vpop.f32.mrb[0].mxu0
      %2107 = vmatprep.mubr.bf16.mxu0 %v880
      %2108 = vmatmul.mubr.bf16.gmra.mrb[0].mxu0 %v879
      %v2109 = vpop.f32.mrb[0].mxu0
      %v2110 = vadd.f32 %v1949, %v2109
      %v2111 = vpop.f32.mrb[0].mxu0
      %v2112 = vpop.f32.mrb[0].mxu0
      %v2113 = vadd.f32 %v1952, %v2112
      %v2114 = vpop.f32.mrb[0].mxu0
      %2115 = vmatprep.mubr.bf16.mxu0 %v889
      %2116 = vmatmul.mubr.bf16.gmra.mrb[0].mxu0 %v888
      %v2117 = vpop.f32.mrb[0].mxu0
      %v2118 = vadd.f32 %v1957, %v2117
      %v2119 = vpop.f32.mrb[0].mxu0
      %v2120 = vpop.f32.mrb[0].mxu0
      %v2121 = vadd.f32 %v1960, %v2120
      %v2122 = vpop.f32.mrb[0].mxu0
      %2123 = vmatprep.mubr.bf16.mxu0 %v898
      %2124 = vmatmul.mubr.bf16.gmra.mrb[0].mxu0 %v897
      %v2125 = vpop.f32.mrb[0].mxu0
      %v2126 = vadd.f32 %v1965, %v2125
      %v2127 = vpop.f32.mrb[0].mxu0
      %v2128 = vpop.f32.mrb[0].mxu0
      %v2129 = vadd.f32 %v1968, %v2128
      %v2130 = vpop.f32.mrb[0].mxu0
      %2131 = vmatprep.mubr.bf16.mxu0 %v907
      %2132 = vmatmul.mubr.bf16.gmra.mrb[0].mxu0 %v906
      %v2133 = vpop.f32.mrb[0].mxu0
      %v2134 = vadd.f32 %v1973, %v2133
      %v2135 = vpop.f32.mrb[0].mxu0
      %v2136 = vpop.f32.mrb[0].mxu0
      %v2137 = vadd.f32 %v1976, %v2136
      %v2138 = vpop.f32.mrb[0].mxu0
      %2139 = vmatprep.mubr.bf16.mxu0 %v916
      %2140 = vmatmul.mubr.bf16.gmra.mrb[0].mxu0 %v915
      %v2141 = vpop.f32.mrb[0].mxu0
      %v2142 = vadd.f32 %v1981, %v2141
      %v2143 = vpop.f32.mrb[0].mxu0
      %v2144 = vpop.f32.mrb[0].mxu0
      %v2145 = vadd.f32 %v1984, %v2144
      %v2146 = vpop.f32.mrb[0].mxu0
      %2147 = vmatprep.mubr.bf16.mxu0 %v925
      %2148 = vmatmul.mubr.bf16.gmra.mrb[0].mxu0 %v924
      %v2149 = vpop.f32.mrb[0].mxu0
      %v2150 = vadd.f32 %v1989, %v2149
      %v2151 = vpop.f32.mrb[0].mxu0
      %v2152 = vpop.f32.mrb[0].mxu0
      %v2153 = vadd.f32 %v1992, %v2152
      %v2154 = vpop.f32.mrb[0].mxu0
      %2155 = vmatprep.mubr.bf16.mxu0 %v934
      %2156 = vmatmul.mubr.bf16.gmra.mrb[0].mxu0 %v933
      %v2157 = vpop.f32.mrb[0].mxu0
      %v2158 = vadd.f32 %v1997, %v2157
      %v2159 = vpop.f32.mrb[0].mxu0
      %v2160 = vpop.f32.mrb[0].mxu0
      %v2161 = vadd.f32 %v2000, %v2160
      %v2162 = vpop.f32.mrb[0].mxu0
      %2163 = vmatprep.mubr.bf16.mxu0 %v943
      %2164 = vmatmul.mubr.bf16.gmra.mrb[0].mxu0 %v942
      %v2165 = vpop.f32.mrb[0].mxu0
      %v2166 = vadd.f32 %v2005, %v2165
      %v2167 = vpop.f32.mrb[0].mxu0
      %v2168 = vpop.f32.mrb[0].mxu0
      %v2169 = vadd.f32 %v2008, %v2168
      %v2170 = vpop.f32.mrb[0].mxu0
      %2171 = vmatprep.mubr.bf16.mxu0 %v952
      %2172 = vmatmul.mubr.bf16.gmra.mrb[0].mxu0 %v951
      %v2173 = vpop.f32.mrb[0].mxu0
      %v2174 = vadd.f32 %v2013, %v2173
      %v2175 = vpop.f32.mrb[0].mxu0
      %v2176 = vpop.f32.mrb[0].mxu0
      %v2177 = vadd.f32 %v2016, %v2176
      %v2178 = vpop.f32.mrb[0].mxu0
      %2179 = vmatprep.mubr.bf16.mxu0 %v961
      %2180 = vmatmul.mubr.bf16.gmra.mrb[0].mxu0 %v960
      %v2181 = vpop.f32.mrb[0].mxu0
      %v2182 = vadd.f32 %v2021, %v2181
      %v2183 = vpop.f32.mrb[0].mxu0
      %v2184 = vpop.f32.mrb[0].mxu0
      %v2185 = vadd.f32 %v2024, %v2184
      %v2186 = vpop.f32.mrb[0].mxu0
      %2187 = vmatprep.mubr.bf16.mxu0 %v970
      %2188 = vmatmul.mubr.bf16.gmra.mrb[0].mxu0 %v969
      %v2189 = vpop.f32.mrb[0].mxu0
      %v2190 = vadd.f32 %v2029, %v2189
      %v2191 = vpop.f32.mrb[0].mxu0
      %v2192 = vpop.f32.mrb[0].mxu0
      %v2193 = vadd.f32 %v2032, %v2192
      %v2194 = vpop.f32.mrb[0].mxu0
      %2195 = vmatprep.mubr.bf16.mxu0 %v979
      %2196 = vmatmul.mubr.bf16.gmra.mrb[0].mxu0 %v978
      %v2197 = vpop.f32.mrb[0].mxu0
      %v2198 = vadd.f32 %v2037, %v2197
      %v2199 = vpop.f32.mrb[0].mxu0
      %v2200 = vpop.f32.mrb[0].mxu0
      %v2201 = vadd.f32 %v2040, %v2200
      %v2202 = vpop.f32.mrb[0].mxu0
      %2203 = vmatprep.mubr.bf16.mxu0 %v988
      %2204 = vmatmul.mubr.bf16.gmra.mrb[0].mxu0 %v987
      %v2205 = vpop.f32.mrb[0].mxu0
      %v2206 = vadd.f32 %v2045, %v2205
      %v2207 = vpop.f32.mrb[0].mxu0
      %v2208 = vpop.f32.mrb[0].mxu0
      %v2209 = vadd.f32 %v2048, %v2208
      %v2210 = vpop.f32.mrb[0].mxu0
      %2211 = vmatprep.mubr.bf16.mxu0 %v997
      %2212 = vmatmul.mubr.bf16.gmra.mrb[0].mxu0 %v996
      %v2213 = vpop.f32.mrb[0].mxu0
      %v2214 = vadd.f32 %v2053, %v2213
      %v2215 = vpop.f32.mrb[0].mxu0
      %v2216 = vpop.f32.mrb[0].mxu0
      %v2217 = vadd.f32 %v2056, %v2216
      %v2218 = vpop.f32.mrb[0].mxu0
      %2219 = vmatprep.mubr.bf16.mxu0 %v1006
      %2220 = vmatmul.mubr.bf16.gmra.mrb[0].mxu0 %v1005
      %v2221 = vpop.f32.mrb[0].mxu0
      %v2222 = vadd.f32 %v2061, %v2221
      %v2223 = vpop.f32.mrb[0].mxu0
      %v2224 = vpop.f32.mrb[0].mxu0
      %v2225 = vadd.f32 %v2064, %v2224
      %v2226 = vpop.f32.mrb[0].mxu0
      %2227 = vdwg.mxu0
      %2228 = vmatprep.subr.bf16.mxu0 0
      %2229 = vmatpush1.bf16.msra.mxu0 %v1504
      %2230 = vmatprep.subr.bf16.mxu0 0
      %2231 = vmatpush1.bf16.msra.mxu0 %v1505
      %2232 = vmatprep.subr.bf16.mxu0 0
      %2233 = vmatpush1.bf16.msra.mxu0 %v1506
      %2234 = vmatprep.subr.bf16.mxu0 0
      %2235 = vmatpush1.bf16.msra.mxu0 %v1507
      %2236 = vmatprep.subr.bf16.mxu0 0
      %2237 = vmatpush1.bf16.msra.mxu0 %v1508
      %2238 = vmatprep.subr.bf16.mxu0 0
      %2239 = vmatpush1.bf16.msra.mxu0 %v1509
      %2240 = vmatprep.subr.bf16.mxu0 0
      %2241 = vmatpush1.bf16.msra.mxu0 %v1510
      %2242 = vmatprep.subr.bf16.mxu0 0
      %2243 = vmatpush1.bf16.msra.mxu0 %v1511
      %2244 = vmatprep.subr.bf16.mxu0 0
      %2245 = vmatpush1.bf16.msra.mxu0 0
      %2246 = vmatprep.subr.bf16.mxu0 0
      %2247 = vmatpush1.bf16.msra.mxu0 0
      %2248 = vmatprep.subr.bf16.mxu0 0
      %2249 = vmatpush1.bf16.msra.mxu0 0
      %2250 = vmatprep.subr.bf16.mxu0 0
      %2251 = vmatpush1.bf16.msra.mxu0 0
      %2252 = vmatprep.subr.bf16.mxu0 0
      %2253 = vmatpush1.bf16.msra.mxu0 0
      %2254 = vmatprep.subr.bf16.mxu0 0
      %2255 = vmatpush1.bf16.msra.mxu0 0
      %2256 = vmatprep.subr.bf16.mxu0 0
      %2257 = vmatpush1.bf16.msra.mxu0 0
      %2258 = vmatprep.subr.bf16.mxu0 0
      %2259 = vmatpush1.bf16.msra.mxu0 0
      %2260 = vmatprep.mubr.bf16.mxu0 0
      %2261 = vmatmul.mubr.bf16.gmra.mrb[0].mxu0 %v872
      %v2262 = vpop.f32.mrb[0].mxu0
      %v2263 = vadd.f32 %v2102, %v2262
      %v2264 = vpop.f32.mrb[0].mxu0
      %v2265 = vpop.f32.mrb[0].mxu0
      %v2266 = vadd.f32 %v2105, %v2265
      %v2267 = vpop.f32.mrb[0].mxu0
      %2268 = vmatprep.mubr.bf16.mxu0 0
      %2269 = vmatmul.mubr.bf16.gmra.mrb[0].mxu0 %v881
      %v2270 = vpop.f32.mrb[0].mxu0
      %v2271 = vadd.f32 %v2110, %v2270
      %v2272 = vpop.f32.mrb[0].mxu0
      %v2273 = vpop.f32.mrb[0].mxu0
      %v2274 = vadd.f32 %v2113, %v2273
      %v2275 = vpop.f32.mrb[0].mxu0
      %2276 = vmatprep.mubr.bf16.mxu0 0
      %2277 = vmatmul.mubr.bf16.gmra.mrb[0].mxu0 %v890
      %v2278 = vpop.f32.mrb[0].mxu0
      %v2279 = vadd.f32 %v2118, %v2278
      %v2280 = vpop.f32.mrb[0].mxu0
      %v2281 = vpop.f32.mrb[0].mxu0
      %v2282 = vadd.f32 %v2121, %v2281
      %v2283 = vpop.f32.mrb[0].mxu0
      %2284 = vmatprep.mubr.bf16.mxu0 0
      %2285 = vmatmul.mubr.bf16.gmra.mrb[0].mxu0 %v899
      %v2286 = vpop.f32.mrb[0].mxu0
      %v2287 = vadd.f32 %v2126, %v2286
      %v2288 = vpop.f32.mrb[0].mxu0
      %v2289 = vpop.f32.mrb[0].mxu0
      %v2290 = vadd.f32 %v2129, %v2289
      %v2291 = vpop.f32.mrb[0].mxu0
      %2292 = vmatprep.mubr.bf16.mxu0 0
      %2293 = vmatmul.mubr.bf16.gmra.mrb[0].mxu0 %v908
      %v2294 = vpop.f32.mrb[0].mxu0
      %v2295 = vadd.f32 %v2134, %v2294
      %v2296 = vpop.f32.mrb[0].mxu0
      %v2297 = vpop.f32.mrb[0].mxu0
      %v2298 = vadd.f32 %v2137, %v2297
      %v2299 = vpop.f32.mrb[0].mxu0
      %2300 = vmatprep.mubr.bf16.mxu0 0
      %2301 = vmatmul.mubr.bf16.gmra.mrb[0].mxu0 %v917
      %v2302 = vpop.f32.mrb[0].mxu0
      %v2303 = vadd.f32 %v2142, %v2302
      %v2304 = vpop.f32.mrb[0].mxu0
      %v2305 = vpop.f32.mrb[0].mxu0
      %v2306 = vadd.f32 %v2145, %v2305
      %v2307 = vpop.f32.mrb[0].mxu0
      %2308 = vmatprep.mubr.bf16.mxu0 0
      %2309 = vmatmul.mubr.bf16.gmra.mrb[0].mxu0 %v926
      %v2310 = vpop.f32.mrb[0].mxu0
      %v2311 = vadd.f32 %v2150, %v2310
      %v2312 = vpop.f32.mrb[0].mxu0
      %v2313 = vpop.f32.mrb[0].mxu0
      %v2314 = vadd.f32 %v2153, %v2313
      %v2315 = vpop.f32.mrb[0].mxu0
      %2316 = vmatprep.mubr.bf16.mxu0 0
      %2317 = vmatmul.mubr.bf16.gmra.mrb[0].mxu0 %v935
      %v2318 = vpop.f32.mrb[0].mxu0
      %v2319 = vadd.f32 %v2158, %v2318
      %v2320 = vpop.f32.mrb[0].mxu0
      %v2321 = vpop.f32.mrb[0].mxu0
      %v2322 = vadd.f32 %v2161, %v2321
      %v2323 = vpop.f32.mrb[0].mxu0
      %2324 = vmatprep.mubr.bf16.mxu0 0
      %2325 = vmatmul.mubr.bf16.gmra.mrb[0].mxu0 %v944
      %v2326 = vpop.f32.mrb[0].mxu0
      %v2327 = vadd.f32 %v2166, %v2326
      %v2328 = vpop.f32.mrb[0].mxu0
      %v2329 = vpop.f32.mrb[0].mxu0
      %v2330 = vadd.f32 %v2169, %v2329
      %v2331 = vpop.f32.mrb[0].mxu0
      %2332 = vmatprep.mubr.bf16.mxu0 0
      %2333 = vmatmul.mubr.bf16.gmra.mrb[0].mxu0 %v953
      %v2334 = vpop.f32.mrb[0].mxu0
      %v2335 = vadd.f32 %v2174, %v2334
      %v2336 = vpop.f32.mrb[0].mxu0
      %v2337 = vpop.f32.mrb[0].mxu0
      %v2338 = vadd.f32 %v2177, %v2337
      %v2339 = vpop.f32.mrb[0].mxu0
      %2340 = vmatprep.mubr.bf16.mxu0 0
      %2341 = vmatmul.mubr.bf16.gmra.mrb[0].mxu0 %v962
      %v2342 = vpop.f32.mrb[0].mxu0
      %v2343 = vadd.f32 %v2182, %v2342
      %v2344 = vpop.f32.mrb[0].mxu0
      %v2345 = vpop.f32.mrb[0].mxu0
      %v2346 = vadd.f32 %v2185, %v2345
      %v2347 = vpop.f32.mrb[0].mxu0
      %2348 = vmatprep.mubr.bf16.mxu0 0
      %2349 = vmatmul.mubr.bf16.gmra.mrb[0].mxu0 %v971
      %v2350 = vpop.f32.mrb[0].mxu0
      %v2351 = vadd.f32 %v2190, %v2350
      %v2352 = vpop.f32.mrb[0].mxu0
      %v2353 = vpop.f32.mrb[0].mxu0
      %v2354 = vadd.f32 %v2193, %v2353
      %v2355 = vpop.f32.mrb[0].mxu0
      %2356 = vmatprep.mubr.bf16.mxu0 0
      %2357 = vmatmul.mubr.bf16.gmra.mrb[0].mxu0 %v980
      %v2358 = vpop.f32.mrb[0].mxu0
      %v2359 = vadd.f32 %v2198, %v2358
      %v2360 = vpop.f32.mrb[0].mxu0
      %v2361 = vpop.f32.mrb[0].mxu0
      %v2362 = vadd.f32 %v2201, %v2361
      %v2363 = vpop.f32.mrb[0].mxu0
      %2364 = vmatprep.mubr.bf16.mxu0 0
      %2365 = vmatmul.mubr.bf16.gmra.mrb[0].mxu0 %v989
      %v2366 = vpop.f32.mrb[0].mxu0
      %v2367 = vadd.f32 %v2206, %v2366
      %v2368 = vpop.f32.mrb[0].mxu0
      %v2369 = vpop.f32.mrb[0].mxu0
      %v2370 = vadd.f32 %v2209, %v2369
      %v2371 = vpop.f32.mrb[0].mxu0
      %2372 = vmatprep.mubr.bf16.mxu0 0
      %2373 = vmatmul.mubr.bf16.gmra.mrb[0].mxu0 %v998
      %v2374 = vpop.f32.mrb[0].mxu0
      %v2375 = vadd.f32 %v2214, %v2374
      %v2376 = vpop.f32.mrb[0].mxu0
      %v2377 = vpop.f32.mrb[0].mxu0
      %v2378 = vadd.f32 %v2217, %v2377
      %v2379 = vpop.f32.mrb[0].mxu0
      %2380 = vmatprep.mubr.bf16.mxu0 0
      %2381 = vmatmul.mubr.bf16.gmra.mrb[0].mxu0 %v1007
      %v2382 = vpop.f32.mrb[0].mxu0
      %v2383 = vadd.f32 %v2222, %v2382
      %v2384 = vpop.f32.mrb[0].mxu0
      %v2385 = vpop.f32.mrb[0].mxu0
      %v2386 = vadd.f32 %v2225, %v2385
      %v2387 = vpop.f32.mrb[0].mxu0
      %2388 = vdwg.mxu0
      %2389 = vst [vmem:[%s177] sm:$0xff] %v2263
      %2390 = vst [vmem:[%s177 + $0x8] sm:$0xff] %v2266
      %2391 = vst [vmem:[%s177 + $0x10] sm:$0xff] %v2271
      %2392 = vst [vmem:[%s177 + $0x18] sm:$0xff] %v2274
      %2393 = vst [vmem:[%s177 + $0x20] sm:$0xff] %v2279
      %2394 = vst [vmem:[%s177 + $0x28] sm:$0xff] %v2282
      %2395 = vst [vmem:[%s177 + $0x30] sm:$0xff] %v2287
      %2396 = vst [vmem:[%s177 + $0x38] sm:$0xff] %v2290
      %2397 = vst [vmem:[%s177 + $0x40] sm:$0xff] %v2295
      %2398 = vst [vmem:[%s177 + $0x48] sm:$0xff] %v2298
      %2399 = vst [vmem:[%s177 + $0x50] sm:$0xff] %v2303
      %2400 = vst [vmem:[%s177 + $0x58] sm:$0xff] %v2306
      %2401 = vst [vmem:[%s177 + $0x60] sm:$0xff] %v2311
      %2402 = vst [vmem:[%s177 + $0x68] sm:$0xff] %v2314
      %2403 = vst [vmem:[%s177 + $0x70] sm:$0xff] %v2319
      %2404 = vst [vmem:[%s177 + $0x78] sm:$0xff] %v2322
      %2405 = vst [vmem:[%s177 + $0x80] sm:$0xff] %v2327
      %2406 = vst [vmem:[%s177 + $0x88] sm:$0xff] %v2330
      %2407 = vst [vmem:[%s177 + $0x90] sm:$0xff] %v2335
      %2408 = vst [vmem:[%s177 + $0x98] sm:$0xff] %v2338
      %2409 = vst [vmem:[%s177 + $0xa0] sm:$0xff] %v2343
      %2410 = vst [vmem:[%s177 + $0xa8] sm:$0xff] %v2346
      %2411 = vst [vmem:[%s177 + $0xb0] sm:$0xff] %v2351
      %2412 = vst [vmem:[%s177 + $0xb8] sm:$0xff] %v2354
      %2413 = vst [vmem:[%s177 + $0xc0] sm:$0xff] %v2359
      %2414 = vst [vmem:[%s177 + $0xc8] sm:$0xff] %v2362
      %2415 = vst [vmem:[%s177 + $0xd0] sm:$0xff] %v2367
      %2416 = vst [vmem:[%s177 + $0xd8] sm:$0xff] %v2370
      %2417 = vst [vmem:[%s177 + $0xe0] sm:$0xff] %v2375
      %2418 = vst [vmem:[%s177 + $0xe8] sm:$0xff] %v2378
      %2419 = vst [vmem:[%s177 + $0xf0] sm:$0xff] %v2383
      %2420 = vst [vmem:[%s177 + $0xf8] sm:$0xff] %v2386
      %v2421 = vadd.f32 %v2263, %v2266
      %v2422 = vadd.f32 %v2421, %v2271
      %v2423 = vadd.f32 %v2422, %v2274
      %v2424 = vadd.f32 %v2423, %v2279
      %v2425 = vadd.f32 %v2424, %v2282
      %v2426 = vadd.f32 %v2425, %v2287
      %v2427 = vadd.f32 %v2426, %v2290
      %v2428 = vadd.f32 %v2427, %v2295
      %v2429 = vadd.f32 %v2428, %v2298
      %v2430 = vadd.f32 %v2429, %v2303
      %v2431 = vadd.f32 %v2430, %v2306
      %v2432 = vadd.f32 %v2431, %v2311
      %v2433 = vadd.f32 %v2432, %v2314
      %v2434 = vadd.f32 %v2433, %v2319
      %v2435 = vadd.f32 %v2434, %v2322
      %v2436 = vadd.f32 %v2435, %v2327
      %v2437 = vadd.f32 %v2436, %v2330
      %v2438 = vadd.f32 %v2437, %v2335
      %v2439 = vadd.f32 %v2438, %v2338
      %v2440 = vadd.f32 %v2439, %v2343
      %v2441 = vadd.f32 %v2440, %v2346
      %v2442 = vadd.f32 %v2441, %v2351
      %v2443 = vadd.f32 %v2442, %v2354
      %v2444 = vadd.f32 %v2443, %v2359
      %v2445 = vadd.f32 %v2444, %v2362
      %v2446 = vadd.f32 %v2445, %v2367
      %v2447 = vadd.f32 %v2446, %v2370
      %v2448 = vadd.f32 %v2447, %v2375
      %v2449 = vadd.f32 %v2448, %v2378
      %v2450 = vadd.f32 %v2449, %v2383
      %v2451 = vadd.f32 %v2450, %v2386
      %v2452 = vrot.slane %v2451, 4
      %v2453 = vadd.f32 %v2451, %v2452
      %v2454 = vrot.slane %v2453, 2
      %v2455 = vadd.f32 %v2453, %v2454
      %v2456 = vrot.slane %v2455, 1
      %v2457 = vadd.f32 %v2455, %v2456
      %2458 = vst [vmem:[%s181] sm:$0x1] %v2457
      %v2459 = vmul.f32 %v2263, %v2263
      %v2460 = vmul.f32 %v2266, %v2266
      %v2461 = vmul.f32 %v2271, %v2271
      %v2462 = vmul.f32 %v2274, %v2274
      %v2463 = vmul.f32 %v2279, %v2279
      %v2464 = vmul.f32 %v2282, %v2282
      %v2465 = vmul.f32 %v2287, %v2287
      %v2466 = vmul.f32 %v2290, %v2290
      %v2467 = vmul.f32 %v2295, %v2295
      %v2468 = vmul.f32 %v2298, %v2298
      %v2469 = vmul.f32 %v2303, %v2303
      %v2470 = vmul.f32 %v2306, %v2306
      %v2471 = vmul.f32 %v2311, %v2311
      %v2472 = vmul.f32 %v2314, %v2314
      %v2473 = vmul.f32 %v2319, %v2319
      %v2474 = vmul.f32 %v2322, %v2322
      %v2475 = vmul.f32 %v2327, %v2327
      %v2476 = vmul.f32 %v2330, %v2330
      %v2477 = vmul.f32 %v2335, %v2335
      %v2478 = vmul.f32 %v2338, %v2338
      %v2479 = vmul.f32 %v2343, %v2343
      %v2480 = vmul.f32 %v2346, %v2346
      %v2481 = vmul.f32 %v2351, %v2351
      %v2482 = vmul.f32 %v2354, %v2354
      %v2483 = vmul.f32 %v2359, %v2359
      %v2484 = vmul.f32 %v2362, %v2362
      %v2485 = vmul.f32 %v2367, %v2367
      %v2486 = vmul.f32 %v2370, %v2370
      %v2487 = vmul.f32 %v2375, %v2375
      %v2488 = vmul.f32 %v2378, %v2378
      %v2489 = vmul.f32 %v2383, %v2383
      %v2490 = vmul.f32 %v2386, %v2386
      %v2491 = vadd.f32 %v2459, %v2460
      %v2492 = vadd.f32 %v2491, %v2461
      %v2493 = vadd.f32 %v2492, %v2462
      %v2494 = vadd.f32 %v2493, %v2463
      %v2495 = vadd.f32 %v2494, %v2464
      %v2496 = vadd.f32 %v2495, %v2465
      %v2497 = vadd.f32 %v2496, %v2466
      %v2498 = vadd.f32 %v2497, %v2467
      %v2499 = vadd.f32 %v2498, %v2468
      %v2500 = vadd.f32 %v2499, %v2469
      %v2501 = vadd.f32 %v2500, %v2470
      %v2502 = vadd.f32 %v2501, %v2471
      %v2503 = vadd.f32 %v2502, %v2472
      %v2504 = vadd.f32 %v2503, %v2473
      %v2505 = vadd.f32 %v2504, %v2474
      %v2506 = vadd.f32 %v2505, %v2475
      %v2507 = vadd.f32 %v2506, %v2476
      %v2508 = vadd.f32 %v2507, %v2477
      %v2509 = vadd.f32 %v2508, %v2478
      %v2510 = vadd.f32 %v2509, %v2479
      %v2511 = vadd.f32 %v2510, %v2480
      %v2512 = vadd.f32 %v2511, %v2481
      %v2513 = vadd.f32 %v2512, %v2482
      %v2514 = vadd.f32 %v2513, %v2483
      %v2515 = vadd.f32 %v2514, %v2484
      %v2516 = vadd.f32 %v2515, %v2485
      %v2517 = vadd.f32 %v2516, %v2486
      %v2518 = vadd.f32 %v2517, %v2487
      %v2519 = vadd.f32 %v2518, %v2488
      %v2520 = vadd.f32 %v2519, %v2489
      %v2521 = vadd.f32 %v2520, %v2490
      %v2522 = vrot.slane %v2521, 4
      %v2523 = vadd.f32 %v2521, %v2522
      %v2524 = vrot.slane %v2523, 2
      %v2525 = vadd.f32 %v2523, %v2524
      %v2526 = vrot.slane %v2525, 1
      %v2527 = vadd.f32 %v2525, %v2526
      %2528 = vst [vmem:[%s181 + $0x1] sm:$0x1] %v2527
      %p2529 = scmp.lt.s32.totalorder %s15, 1
      %s2530 = scalar_select %p2529, %s15, 1
      %s2531 = smul.addr %s2530, 32
      %s2532 = smul.addr %s2531, 8
      %s2533 = scalar_lea.vmem %s2, %s2532
      %p2534 = scmp.lt.s32.totalorder %s15, 1
      %s2535 = scalar_select %p2534, %s15, 1
      %s2536 = smul.addr %s2535, 2
      %s2537 = scalar_lea.vmem %s3, %s2536
      // Predicated region
      $region29: #{resblock.3} parent=27 // pred_check
        %p2538 = pneg %p80
      $region30: #{resblock.3} parent=27 // pred_check_branch
        %2540 = sbr.rel (%p2538) target = $region32
      $region31: #{resblock.3} parent=27 // pred_region
        _
      $region32: #{resblock.3} parent=27 // pred_fallthru
        _
      // Predicated region
      $region33: #{resblock.3} parent=27 // pred_check
        %p2541 = pneg %p106
      $region34: #{resblock.3} parent=27 // pred_check_branch
        %2543 = sbr.rel (%p2541) target = $region36
      $region35: #{resblock.3} parent=27 // pred_region
        _
      $region36: #{resblock.3} parent=27 // pred_fallthru
        _
    $region28: #{resblock.3} parent=5 // pred_fallthru
      _
    %p2544 = scmp.le.s32.totalorder 2, %s10
    // Predicated region
    $region37: #{resblock.3} parent=5 // pred_check
      %p2545 = pneg %p2544
    $region38: #{resblock.3} parent=5 // pred_check_branch
      %2547 = sbr.rel (%p2545) target = $region40
    $region39: #{resblock.3} parent=5 // pred_region
      %s2548 = ssub.s32 %s10, 2
      // Predicated region
      $region41: #{resblock.3} parent=39 // pred_check
        %p2549 = pneg %p86
      $region42: #{resblock.3} parent=39 // pred_check_branch
        %2551 = sbr.rel (%p2549) target = $region44
      $region43: #{resblock.3} parent=39 // pred_region
        %p2552 = scmp.lt.s32.totalorder %s16, 1
        %s2553 = scalar_select %p2552, %s16, 1
        %s2554 = smul.addr %s2553, 32
        %s2555 = smul.addr %s2554, 8
        %s2556 = scalar_lea.vmem %s2, %s2555
      $region44: #{resblock.3} parent=39 // pred_fallthru
        _
      // Predicated region
      $region45: #{resblock.3} parent=39 // pred_check
        %p2557 = pneg %p112
      $region46: #{resblock.3} parent=39 // pred_check_branch
        %2559 = sbr.rel (%p2557) target = $region48
      $region47: #{resblock.3} parent=39 // pred_region
        %p2560 = scmp.lt.s32.totalorder %s16, 1
        %s2561 = scalar_select %p2560, %s16, 1
        %s2562 = smul.addr %s2561, 2
        %s2563 = scalar_lea.vmem %s3, %s2562
      $region48: #{resblock.3} parent=39 // pred_fallthru
        _
    $region40: #{resblock.3} parent=5 // pred_fallthru
      _
  $region6: #{resblock.3} parent=0 // loop_footer
    %s14 = sadd.s32 1, %s10
  $region7: #{resblock.3} parent=0 // loop_footer_branch
    %9 = sbr.rel target = $region3
  $region8: #{resblock.3} parent=0 // loop_exit
    _

</llo_original>
